<compile_context>
chip_gen: v7x
topology: tpu7x:2x2x1
jax: 0.10.0
libtpu: 0.0.40
codegen_flags: <defaults>
</compile_context>

<pallas_src>
import jax
import jax.numpy as jnp
from jax import lax
from jax.experimental import pallas as pl
from jax.experimental.pallas import tpu as pltpu


# ----------------------------------------------------------------------------
# In-kernel helpers
# ----------------------------------------------------------------------------
def _layernorm(x, w, b, eps=1e-5):
    mu = jnp.mean(x, axis=-1, keepdims=True)
    var = jnp.mean((x - mu) ** 2, axis=-1, keepdims=True)
    return (x - mu) * lax.rsqrt(var + eps) * w + b


# ----------------------------------------------------------------------------
# Fused kernel: title encoder + content encoder + (concat -> Linear -> ReLU -> Linear)
# ----------------------------------------------------------------------------
def fused_kernel(
    # activations
    t_x, c_x,
    # title encoder params (d=32, nhead=2); w1/w2 arrive as raw HBM refs
    t_ln1w, t_ln1b, t_wq, t_bq, t_wk, t_bk, t_wv, t_bv, t_wo, t_bo,
    t_ln2w, t_ln2b, t_b1, t_b2, t_w1_hbm, t_w2_hbm,
    # content encoder params (d=128, nhead=4)
    c_ln1w, c_ln1b, c_wq, c_bq, c_wk, c_bk, c_wv, c_bv, c_wo, c_bo,
    c_ln2w, c_ln2b, c_b1, c_b2, c_w1_hbm, c_w2_hbm,
    # MLP head (feature-concat fused via row-split of W1; W2 padded to 128 cols)
    h_w1t, h_w1c, h_b1, h_w2, h_b2,
    # output (N, 128) lane-dense
    o_ref,
    # scratch: VMEM landing buffers for the FFN weights + DMA semaphores
    t_w1_v, t_w2_v, c_w1_v, c_w2_v, sems,
):
    bf16 = jnp.bfloat16

    # Kick off the FFN-weight DMAs immediately so they overlap the attention math.
    copies = (
        pltpu.make_async_copy(t_w1_hbm, t_w1_v, sems.at[0]),
        pltpu.make_async_copy(t_w2_hbm, t_w2_v, sems.at[1]),
        pltpu.make_async_copy(c_w1_hbm, c_w1_v, sems.at[2]),
        pltpu.make_async_copy(c_w2_hbm, c_w2_v, sems.at[3]),
    )
    for cp in copies:
        cp.start()

    def attention_block(x, ln_w, ln_b, wq, bq, wk, bk, wv, bv, wo, bo):
        nhead = wq.shape[0]                       # per-head weights stacked on axis 0
        xn = _layernorm(x, ln_w[...], ln_b[...])
        xb = xn.astype(bf16)
        attn = jnp.zeros_like(x)
        for h in range(nhead):                    # static unroll over heads
            qh = jnp.dot(xb, wq[h], preferred_element_type=jnp.float32) + bq[h]
            kh = jnp.dot(xb, wk[h], preferred_element_type=jnp.float32) + bk[h]
            vh = jnp.dot(xb, wv[h], preferred_element_type=jnp.float32) + bv[h]
            s = jnp.dot(qh, kh.T, preferred_element_type=jnp.float32)     # (N, N)
            s = s - jnp.max(s, axis=-1, keepdims=True)
            e = jnp.exp(s)
            p = e * pl.reciprocal(jnp.sum(e, axis=-1, keepdims=True), approx=True)
            oh = jnp.dot(p, vh, preferred_element_type=jnp.float32)       # (N, hd)
            # concat(heads) @ Wout  ==  sum_h  oh @ Wout_h
            attn = attn + jnp.dot(oh.astype(bf16), wo[h],
                                  preferred_element_type=jnp.float32)
        return x + attn + bo[...]

    def ffn_block(x, ln_w, ln_b, w1_v, b1, w2_v, b2):
        xn = _layernorm(x, ln_w[...], ln_b[...])
        hid = jnp.dot(xn.astype(bf16), w1_v[...],
                      preferred_element_type=jnp.float32) + b1[...]
        hid = jnp.maximum(hid, 0.0)
        out = jnp.dot(hid.astype(bf16), w2_v[...],
                      preferred_element_type=jnp.float32) + b2[...]
        return x + out

    # ---- attention blocks (FFN weight DMAs still in flight) -----------------
    t = attention_block(t_x[...], t_ln1w, t_ln1b, t_wq, t_bq, t_wk, t_bk,
                        t_wv, t_bv, t_wo, t_bo)
    c = attention_block(c_x[...], c_ln1w, c_ln1b, c_wq, c_bq, c_wk, c_bk,
                        c_wv, c_bv, c_wo, c_bo)

    # ---- feed-forward blocks -------------------------------------------------
    copies[0].wait()
    copies[1].wait()
    t = ffn_block(t, t_ln2w, t_ln2b, t_w1_v, t_b1, t_w2_v, t_b2)
    copies[2].wait()
    copies[3].wait()
    c = ffn_block(c, c_ln2w, c_ln2b, c_w1_v, c_b1, c_w2_v, c_b2)

    # ---- MLP head: concat(title, content, axis=-1) fused via W1 row-split ---
    h = (jnp.dot(t, h_w1t[...], preferred_element_type=jnp.float32)
         + jnp.dot(c, h_w1c[...], preferred_element_type=jnp.float32)
         + h_b1[...])
    h = jnp.maximum(h, 0.0)
    o_ref[...] = (jnp.dot(h, h_w2[...], preferred_element_type=jnp.float32)
                  + h_b2[...])


# ----------------------------------------------------------------------------
# Wrapper
# ----------------------------------------------------------------------------
def textual_part_model(title_ids, content_ids, params):
    N = title_ids.shape[0]
    tp, cp, hp = params["title"], params["content"], params["head"]

    def enc_args(p):
        return [p["ln1w"], p["ln1b"], p["wq"], p["bq"], p["wk"], p["bk"],
                p["wv"], p["bv"], p["wo"], p["bo"], p["ln2w"], p["ln2b"],
                p["b1"], p["b2"], p["w1"], p["w2"]]

    args = ([title_ids.astype(jnp.float32), content_ids.astype(jnp.float32)]
            + enc_args(tp) + enc_args(cp)
            + [hp["w1t"], hp["w1c"], hp["b1"], hp["w2"], hp["b2"]])

    vmem = pl.BlockSpec(memory_space=pltpu.MemorySpace.VMEM)
    hbm = pl.BlockSpec(memory_space=pl.ANY)        # FFN weights: manual DMA overlap
    enc_specs = [vmem] * 14 + [hbm, hbm]
    in_specs = [vmem, vmem] + enc_specs + enc_specs + [vmem] * 5

    out = pl.pallas_call(
        fused_kernel,
        out_shape=jax.ShapeDtypeStruct((N, 128), jnp.float32),
        in_specs=in_specs,
        out_specs=vmem,
        scratch_shapes=[
            pltpu.VMEM(tp["w1"].shape, jnp.bfloat16),
            pltpu.VMEM(tp["w2"].shape, jnp.bfloat16),
            pltpu.VMEM(cp["w1"].shape, jnp.bfloat16),
            pltpu.VMEM(cp["w2"].shape, jnp.bfloat16),
            pltpu.SemaphoreType.DMA((4,)),
        ],
        compiler_params=pltpu.CompilerParams(vmem_limit_bytes=32 * 1024 * 1024),
    )(*args)
    # Lane-dense (N, 128) store inside the kernel; logits live in the first 5 cols.
    return out[:, :5]


# ----------------------------------------------------------------------------
# Parameter init (PyTorch-style layout, f32) and trace-time prep for the kernel
# (per-head QKV split, 1/sqrt(hd) folded into Wq/bq, bf16 matmul weights).
# ----------------------------------------------------------------------------
def init_encoder_params(key, d, dff=2048, scale=0.02):
    ks = jax.random.split(key, 8)
    f32 = jnp.float32
    return dict(
        wqkv=jax.random.normal(ks[0], (d, 3 * d), f32) * scale,   # in_proj_weight.T
        bqkv=jax.random.normal(ks[1], (1, 3 * d), f32) * scale,
        wout=jax.random.normal(ks[2], (d, d), f32) * scale,       # out_proj.weight.T
        bout=jax.random.normal(ks[3], (1, d), f32) * scale,
        w1=jax.random.normal(ks[4], (d, dff), f32) * scale,       # linear1.weight.T
        b1=jax.random.normal(ks[5], (1, dff), f32) * scale,
        w2=jax.random.normal(ks[6], (dff, d), f32) * scale,       # linear2.weight.T
        b2=jax.random.normal(ks[7], (1, d), f32) * scale,
        ln1w=jnp.ones((1, d), f32), ln1b=jnp.zeros((1, d), f32),
        ln2w=jnp.ones((1, d), f32), ln2b=jnp.zeros((1, d), f32),
    )


def init_head_params(key, scale=0.02):
    ks = jax.random.split(key, 4)
    f32 = jnp.float32
    return dict(
        w1=jax.random.normal(ks[0], (160, 86), f32) * scale,      # Linear(160,86).weight.T
        b1=jax.random.normal(ks[1], (1, 86), f32) * scale,
        w2=jax.random.normal(ks[2], (86, 5), f32) * scale,        # Linear(86,5).weight.T
        b2=jax.random.normal(ks[3], (1, 5), f32) * scale,
    )


def prep_encoder_params(p, nhead):
    d = p["wout"].shape[0]
    hd = d // nhead
    scale = 1.0 / (hd ** 0.5)
    bf16 = jnp.bfloat16

    wq = p["wqkv"][:, 0 * d:1 * d] * scale      # fold 1/sqrt(hd) into q projection
    wk = p["wqkv"][:, 1 * d:2 * d]
    wv = p["wqkv"][:, 2 * d:3 * d]
    bq = p["bqkv"][:, 0 * d:1 * d] * scale
    bk = p["bqkv"][:, 1 * d:2 * d]
    bv = p["bqkv"][:, 2 * d:3 * d]

    def cols(w):   # (d, d)  -> (nhead, d, hd)
        return jnp.stack([w[:, h * hd:(h + 1) * hd] for h in range(nhead)])

    def bcols(b):  # (1, d)  -> (nhead, 1, hd)
        return jnp.stack([b[:, h * hd:(h + 1) * hd] for h in range(nhead)])

    wo = jnp.stack([p["wout"][h * hd:(h + 1) * hd, :] for h in range(nhead)])

    return dict(
        ln1w=p["ln1w"], ln1b=p["ln1b"], ln2w=p["ln2w"], ln2b=p["ln2b"],
        wq=cols(wq).astype(bf16), bq=bcols(bq),
        wk=cols(wk).astype(bf16), bk=bcols(bk),
        wv=cols(wv).astype(bf16), bv=bcols(bv),
        wo=wo.astype(bf16), bo=p["bout"],
        w1=p["w1"].astype(bf16), b1=p["b1"],
        w2=p["w2"].astype(bf16), b2=p["b2"],
    )


def prep_head_params(p):
    # Head weights are tiny -> keep f32.  Pad W2/b2 to 128 output columns so the
    # kernel's final store is lane-dense; the wrapper slices back to 5.
    w2p = jnp.zeros((86, 128), jnp.float32).at[:, :5].set(p["w2"])
    b2p = jnp.zeros((1, 128), jnp.float32).at[:, :5].set(p["b2"])
    return dict(w1t=p["w1"][:32, :], w1c=p["w1"][32:, :], b1=p["b1"],
                w2=w2p, b2=b2p)


# ----------------------------------------------------------------------------
# Pure-JAX reference (PyTorch parametrization; matmul weights rounded through
# bf16 to match the kernel's weight storage).
# ----------------------------------------------------------------------------
def _round_bf16(w):
    return w.astype(jnp.bfloat16).astype(jnp.float32)


def _ref_encoder(x, p, nhead):
    d = x.shape[-1]
    hd = d // nhead
    scale = 1.0 / (hd ** 0.5)
    xn = _layernorm(x, p["ln1w"], p["ln1b"])
    q = xn @ _round_bf16(p["wqkv"][:, :d] * scale) + p["bqkv"][:, :d] * scale
    k = xn @ _round_bf16(p["wqkv"][:, d:2 * d]) + p["bqkv"][:, d:2 * d]
    v = xn @ _round_bf16(p["wqkv"][:, 2 * d:]) + p["bqkv"][:, 2 * d:]
    heads = []
    for h in range(nhead):
        sl = slice(h * hd, (h + 1) * hd)
        a = jax.nn.softmax(q[:, sl] @ k[:, sl].T, axis=-1)
        heads.append(a @ v[:, sl])
    x = x + jnp.concatenate(heads, axis=-1) @ _round_bf16(p["wout"]) + p["bout"]
    xn2 = _layernorm(x, p["ln2w"], p["ln2b"])
    hid = jnp.maximum(xn2 @ _round_bf16(p["w1"]) + p["b1"], 0.0)
    return x + hid @ _round_bf16(p["w2"]) + p["b2"]


def _ref_model(title, content, raw_params):
    t = _ref_encoder(title.astype(jnp.float32), raw_params["title"], 2)
    c = _ref_encoder(content.astype(jnp.float32), raw_params["content"], 4)
    cat = jnp.concatenate([t, c], axis=-1)
    ph = raw_params["head"]
    h = jnp.maximum(cat @ ph["w1"] + ph["b1"], 0.0)
    return h @ ph["w2"] + ph["b2"]


# ----------------------------------------------------------------------------
if __name__ == "__main__":
    key = jax.random.PRNGKey(0)
    k_t, k_c, k_pt, k_pc, k_ph = jax.random.split(key, 5)

    N = 8  # shared sequence length (torch.cat(dim=1) requires matching dim 0)
    # "input_ids" cast to float, as in the original forward.
    title_ids = jax.random.randint(k_t, (N, 32), 0, 100).astype(jnp.float32)
    content_ids = jax.random.randint(k_c, (N, 128), 0, 100).astype(jnp.float32)

    raw_params = dict(
        title=init_encoder_params(k_pt, d=32),
        content=init_encoder_params(k_pc, d=128),
        head=init_head_params(k_ph),
    )
    params = dict(
        title=prep_encoder_params(raw_params["title"], nhead=2),
        content=prep_encoder_params(raw_params["content"], nhead=4),
        head=prep_head_params(raw_params["head"]),
    )

    out = jax.block_until_ready(textual_part_model(title_ids, content_ids, params))
    assert out.shape == (N, 5) and out.dtype == jnp.float32

    ref = jax.block_until_ready(_ref_model(title_ids, content_ids, raw_params))
    assert jnp.allclose(out, ref, rtol=2e-2, atol=2e-2), (out, ref)

    print("KERNEL_OK")
</pallas_src>

<mosaic_0001>
module attributes {stable_mosaic.version = 11 : i64} {
  func.func @fused_kernel(%arg0: memref<8x32xf32, #tpu.memory_space<vmem>>, %arg1: memref<8x128xf32, #tpu.memory_space<vmem>>, %arg2: memref<1x32xf32, #tpu.memory_space<vmem>>, %arg3: memref<1x32xf32, #tpu.memory_space<vmem>>, %arg4: memref<2x32x16xbf16, #tpu.memory_space<vmem>>, %arg5: memref<2x1x16xf32, #tpu.memory_space<vmem>>, %arg6: memref<2x32x16xbf16, #tpu.memory_space<vmem>>, %arg7: memref<2x1x16xf32, #tpu.memory_space<vmem>>, %arg8: memref<2x32x16xbf16, #tpu.memory_space<vmem>>, %arg9: memref<2x1x16xf32, #tpu.memory_space<vmem>>, %arg10: memref<2x16x32xbf16, #tpu.memory_space<vmem>>, %arg11: memref<1x32xf32, #tpu.memory_space<vmem>>, %arg12: memref<1x32xf32, #tpu.memory_space<vmem>>, %arg13: memref<1x32xf32, #tpu.memory_space<vmem>>, %arg14: memref<1x2048xf32, #tpu.memory_space<vmem>>, %arg15: memref<1x32xf32, #tpu.memory_space<vmem>>, %arg16: memref<32x2048xbf16, #tpu.memory_space<any>>, %arg17: memref<2048x32xbf16, #tpu.memory_space<any>>, %arg18: memref<1x128xf32, #tpu.memory_space<vmem>>, %arg19: memref<1x128xf32, #tpu.memory_space<vmem>>, %arg20: memref<4x128x32xbf16, #tpu.memory_space<vmem>>, %arg21: memref<4x1x32xf32, #tpu.memory_space<vmem>>, %arg22: memref<4x128x32xbf16, #tpu.memory_space<vmem>>, %arg23: memref<4x1x32xf32, #tpu.memory_space<vmem>>, %arg24: memref<4x128x32xbf16, #tpu.memory_space<vmem>>, %arg25: memref<4x1x32xf32, #tpu.memory_space<vmem>>, %arg26: memref<4x32x128xbf16, #tpu.memory_space<vmem>>, %arg27: memref<1x128xf32, #tpu.memory_space<vmem>>, %arg28: memref<1x128xf32, #tpu.memory_space<vmem>>, %arg29: memref<1x128xf32, #tpu.memory_space<vmem>>, %arg30: memref<1x2048xf32, #tpu.memory_space<vmem>>, %arg31: memref<1x128xf32, #tpu.memory_space<vmem>>, %arg32: memref<128x2048xbf16, #tpu.memory_space<any>>, %arg33: memref<2048x128xbf16, #tpu.memory_space<any>>, %arg34: memref<32x86xf32, #tpu.memory_space<vmem>>, %arg35: memref<128x86xf32, #tpu.memory_space<vmem>>, %arg36: memref<1x86xf32, #tpu.memory_space<vmem>>, %arg37: memref<86x128xf32, #tpu.memory_space<vmem>>, %arg38: memref<1x128xf32, #tpu.memory_space<vmem>>, %arg39: memref<8x128xf32, #tpu.memory_space<vmem>>, %arg40: memref<32x2048xbf16, #tpu.memory_space<vmem>>, %arg41: memref<2048x32xbf16, #tpu.memory_space<vmem>>, %arg42: memref<128x2048xbf16, #tpu.memory_space<vmem>>, %arg43: memref<2048x128xbf16, #tpu.memory_space<vmem>>, %arg44: memref<4x!tpu.dma_semaphore, #tpu.memory_space<semaphore_mem>>) attributes {dimension_semantics = [], scalar_prefetch = 0 : i64, scratch_operands = 5 : i64, tpu.core_type = #tpu.core_type<tc>} {
    %c0_i32 = arith.constant 0 : i32
    %0 = tpu.memref_slice %arg44[%c0_i32] : memref<4x!tpu.dma_semaphore, #tpu.memory_space<semaphore_mem>> -> memref<1x!tpu.dma_semaphore, #tpu.memory_space<semaphore_mem>>
    %1 = tpu.memref_squeeze %0 : memref<1x!tpu.dma_semaphore, #tpu.memory_space<semaphore_mem>> -> memref<!tpu.dma_semaphore, #tpu.memory_space<semaphore_mem>>
    tpu.enqueue_dma source(%arg16 : memref<32x2048xbf16, #tpu.memory_space<any>>) target(%arg40 : memref<32x2048xbf16, #tpu.memory_space<vmem>>) target_semaphore(%1 : memref<!tpu.dma_semaphore, #tpu.memory_space<semaphore_mem>>)
    %c1_i32 = arith.constant 1 : i32
    %2 = tpu.memref_slice %arg44[%c1_i32] : memref<4x!tpu.dma_semaphore, #tpu.memory_space<semaphore_mem>> -> memref<1x!tpu.dma_semaphore, #tpu.memory_space<semaphore_mem>>
    %3 = tpu.memref_squeeze %2 : memref<1x!tpu.dma_semaphore, #tpu.memory_space<semaphore_mem>> -> memref<!tpu.dma_semaphore, #tpu.memory_space<semaphore_mem>>
    tpu.enqueue_dma source(%arg17 : memref<2048x32xbf16, #tpu.memory_space<any>>) target(%arg41 : memref<2048x32xbf16, #tpu.memory_space<vmem>>) target_semaphore(%3 : memref<!tpu.dma_semaphore, #tpu.memory_space<semaphore_mem>>)
    %c2_i32 = arith.constant 2 : i32
    %4 = tpu.memref_slice %arg44[%c2_i32] : memref<4x!tpu.dma_semaphore, #tpu.memory_space<semaphore_mem>> -> memref<1x!tpu.dma_semaphore, #tpu.memory_space<semaphore_mem>>
    %5 = tpu.memref_squeeze %4 : memref<1x!tpu.dma_semaphore, #tpu.memory_space<semaphore_mem>> -> memref<!tpu.dma_semaphore, #tpu.memory_space<semaphore_mem>>
    tpu.enqueue_dma source(%arg32 : memref<128x2048xbf16, #tpu.memory_space<any>>) target(%arg42 : memref<128x2048xbf16, #tpu.memory_space<vmem>>) target_semaphore(%5 : memref<!tpu.dma_semaphore, #tpu.memory_space<semaphore_mem>>)
    %c3_i32 = arith.constant 3 : i32
    %6 = tpu.memref_slice %arg44[%c3_i32] : memref<4x!tpu.dma_semaphore, #tpu.memory_space<semaphore_mem>> -> memref<1x!tpu.dma_semaphore, #tpu.memory_space<semaphore_mem>>
    %7 = tpu.memref_squeeze %6 : memref<1x!tpu.dma_semaphore, #tpu.memory_space<semaphore_mem>> -> memref<!tpu.dma_semaphore, #tpu.memory_space<semaphore_mem>>
    tpu.enqueue_dma source(%arg33 : memref<2048x128xbf16, #tpu.memory_space<any>>) target(%arg43 : memref<2048x128xbf16, #tpu.memory_space<vmem>>) target_semaphore(%7 : memref<!tpu.dma_semaphore, #tpu.memory_space<semaphore_mem>>)
    %c0 = arith.constant 0 : index
    %c0_0 = arith.constant 0 : index
    %8 = vector.load %arg0[%c0, %c0_0] : memref<8x32xf32, #tpu.memory_space<vmem>>, vector<8x32xf32>
    %c0_1 = arith.constant 0 : index
    %c0_2 = arith.constant 0 : index
    %9 = vector.load %arg2[%c0_1, %c0_2] : memref<1x32xf32, #tpu.memory_space<vmem>>, vector<1x32xf32>
    %c0_3 = arith.constant 0 : index
    %c0_4 = arith.constant 0 : index
    %10 = vector.load %arg3[%c0_3, %c0_4] : memref<1x32xf32, #tpu.memory_space<vmem>>, vector<1x32xf32>
    %cst = arith.constant dense<0.000000e+00> : vector<8xf32>
    %11 = vector.multi_reduction <add>, %8, %cst [1] : vector<8x32xf32> to vector<8xf32>
    %12 = vector.shape_cast %11 : vector<8xf32> to vector<8x1xf32>
    %cst_5 = arith.constant 3.200000e+01 : f32
    %13 = vector.broadcast %cst_5 : f32 to vector<8x1xf32>
    %14 = arith.divf %12, %13 : vector<8x1xf32>
    %15 = vector.broadcast %14 : vector<8x1xf32> to vector<8x32xf32>
    %16 = arith.subf %8, %15 : vector<8x32xf32>
    %17 = arith.mulf %16, %16 : vector<8x32xf32>
    %cst_6 = arith.constant dense<0.000000e+00> : vector<8xf32>
    %18 = vector.multi_reduction <add>, %17, %cst_6 [1] : vector<8x32xf32> to vector<8xf32>
    %19 = vector.shape_cast %18 : vector<8xf32> to vector<8x1xf32>
    %cst_7 = arith.constant 3.200000e+01 : f32
    %20 = vector.broadcast %cst_7 : f32 to vector<8x1xf32>
    %21 = arith.divf %19, %20 : vector<8x1xf32>
    %22 = vector.broadcast %14 : vector<8x1xf32> to vector<8x32xf32>
    %23 = arith.subf %8, %22 : vector<8x32xf32>
    %cst_8 = arith.constant 9.99999974E-6 : f32
    %24 = vector.broadcast %cst_8 : f32 to vector<8x1xf32>
    %25 = arith.addf %21, %24 : vector<8x1xf32>
    %26 = math.rsqrt %25 : vector<8x1xf32>
    %27 = vector.broadcast %26 : vector<8x1xf32> to vector<8x32xf32>
    %28 = arith.mulf %23, %27 : vector<8x32xf32>
    %29 = vector.broadcast %9 : vector<1x32xf32> to vector<8x32xf32>
    %30 = arith.mulf %28, %29 : vector<8x32xf32>
    %31 = vector.broadcast %10 : vector<1x32xf32> to vector<8x32xf32>
    %32 = arith.addf %30, %31 : vector<8x32xf32>
    %33 = arith.truncf %32 : vector<8x32xf32> to vector<8x32xbf16>
    %cst_9 = arith.constant 0.000000e+00 : f32
    %34 = vector.broadcast %cst_9 : f32 to vector<8x32xf32>
    %c0_10 = arith.constant 0 : index
    %c0_11 = arith.constant 0 : index
    %c0_12 = arith.constant 0 : index
    %35 = vector.load %arg4[%c0_10, %c0_11, %c0_12] : memref<2x32x16xbf16, #tpu.memory_space<vmem>>, vector<1x32x16xbf16>
    %36 = vector.shape_cast %35 : vector<1x32x16xbf16> to vector<32x16xbf16>
    %cst_13 = arith.constant dense<0.000000e+00> : vector<8x16xf32>
    %37 = tpu.matmul %33, %36, %cst_13 {dimension_numbers = #tpu.dot_dimension_numbers<[1], [0], [0], [1], [0, 0, 1, 1], [], []>} : vector<8x32xbf16>, vector<32x16xbf16>, vector<8x16xf32> -> vector<8x16xf32>
    %c0_14 = arith.constant 0 : index
    %c0_15 = arith.constant 0 : index
    %c0_16 = arith.constant 0 : index
    %38 = vector.load %arg5[%c0_14, %c0_15, %c0_16] : memref<2x1x16xf32, #tpu.memory_space<vmem>>, vector<1x1x16xf32>
    %39 = vector.shape_cast %38 : vector<1x1x16xf32> to vector<1x16xf32>
    %40 = vector.broadcast %39 : vector<1x16xf32> to vector<8x16xf32>
    %41 = arith.addf %37, %40 : vector<8x16xf32>
    %c0_17 = arith.constant 0 : index
    %c0_18 = arith.constant 0 : index
    %c0_19 = arith.constant 0 : index
    %42 = vector.load %arg6[%c0_17, %c0_18, %c0_19] : memref<2x32x16xbf16, #tpu.memory_space<vmem>>, vector<1x32x16xbf16>
    %43 = vector.shape_cast %42 : vector<1x32x16xbf16> to vector<32x16xbf16>
    %cst_20 = arith.constant dense<0.000000e+00> : vector<8x16xf32>
    %44 = tpu.matmul %33, %43, %cst_20 {dimension_numbers = #tpu.dot_dimension_numbers<[1], [0], [0], [1], [0, 0, 1, 1], [], []>} : vector<8x32xbf16>, vector<32x16xbf16>, vector<8x16xf32> -> vector<8x16xf32>
    %c0_21 = arith.constant 0 : index
    %c0_22 = arith.constant 0 : index
    %c0_23 = arith.constant 0 : index
    %45 = vector.load %arg7[%c0_21, %c0_22, %c0_23] : memref<2x1x16xf32, #tpu.memory_space<vmem>>, vector<1x1x16xf32>
    %46 = vector.shape_cast %45 : vector<1x1x16xf32> to vector<1x16xf32>
    %47 = vector.broadcast %46 : vector<1x16xf32> to vector<8x16xf32>
    %48 = arith.addf %44, %47 : vector<8x16xf32>
    %c0_24 = arith.constant 0 : index
    %c0_25 = arith.constant 0 : index
    %c0_26 = arith.constant 0 : index
    %49 = vector.load %arg8[%c0_24, %c0_25, %c0_26] : memref<2x32x16xbf16, #tpu.memory_space<vmem>>, vector<1x32x16xbf16>
    %50 = vector.shape_cast %49 : vector<1x32x16xbf16> to vector<32x16xbf16>
    %cst_27 = arith.constant dense<0.000000e+00> : vector<8x16xf32>
    %51 = tpu.matmul %33, %50, %cst_27 {dimension_numbers = #tpu.dot_dimension_numbers<[1], [0], [0], [1], [0, 0, 1, 1], [], []>} : vector<8x32xbf16>, vector<32x16xbf16>, vector<8x16xf32> -> vector<8x16xf32>
    %c0_28 = arith.constant 0 : index
    %c0_29 = arith.constant 0 : index
    %c0_30 = arith.constant 0 : index
    %52 = vector.load %arg9[%c0_28, %c0_29, %c0_30] : memref<2x1x16xf32, #tpu.memory_space<vmem>>, vector<1x1x16xf32>
    %53 = vector.shape_cast %52 : vector<1x1x16xf32> to vector<1x16xf32>
    %54 = vector.broadcast %53 : vector<1x16xf32> to vector<8x16xf32>
    %55 = arith.addf %51, %54 : vector<8x16xf32>
    %56 = tpu.transpose %48, [1, 0] : vector<8x16xf32> -> vector<16x8xf32>
    %cst_31 = arith.constant dense<0.000000e+00> : vector<8x8xf32>
    %57 = tpu.matmul %41, %56, %cst_31 {dimension_numbers = #tpu.dot_dimension_numbers<[1], [0], [0], [1], [0, 0, 1, 1], [], []>} : vector<8x16xf32>, vector<16x8xf32>, vector<8x8xf32> -> vector<8x8xf32>
    %cst_32 = arith.constant dense<0xFF800000> : vector<8xf32>
    %58 = vector.multi_reduction <maximumf>, %57, %cst_32 [1] : vector<8x8xf32> to vector<8xf32>
    %59 = vector.shape_cast %58 : vector<8xf32> to vector<8x1xf32>
    %60 = vector.broadcast %59 : vector<8x1xf32> to vector<8x8xf32>
    %61 = arith.subf %57, %60 : vector<8x8xf32>
    %62 = math.exp %61 : vector<8x8xf32>
    %cst_33 = arith.constant dense<0.000000e+00> : vector<8xf32>
    %63 = vector.multi_reduction <add>, %62, %cst_33 [1] : vector<8x8xf32> to vector<8xf32>
    %64 = vector.shape_cast %63 : vector<8xf32> to vector<8x1xf32>
    %65 = tpu.reciprocal %64 {approx = true} : vector<8x1xf32> -> vector<8x1xf32>
    %66 = vector.broadcast %65 : vector<8x1xf32> to vector<8x8xf32>
    %67 = arith.mulf %62, %66 : vector<8x8xf32>
    %cst_34 = arith.constant dense<0.000000e+00> : vector<8x16xf32>
    %68 = tpu.matmul %67, %55, %cst_34 {dimension_numbers = #tpu.dot_dimension_numbers<[1], [0], [0], [1], [0, 0, 1, 1], [], []>} : vector<8x8xf32>, vector<8x16xf32>, vector<8x16xf32> -> vector<8x16xf32>
    %69 = arith.truncf %68 : vector<8x16xf32> to vector<8x16xbf16>
    %c0_35 = arith.constant 0 : index
    %c0_36 = arith.constant 0 : index
    %c0_37 = arith.constant 0 : index
    %70 = vector.load %arg10[%c0_35, %c0_36, %c0_37] : memref<2x16x32xbf16, #tpu.memory_space<vmem>>, vector<1x16x32xbf16>
    %71 = vector.shape_cast %70 : vector<1x16x32xbf16> to vector<16x32xbf16>
    %cst_38 = arith.constant dense<0.000000e+00> : vector<8x32xf32>
    %72 = tpu.matmul %69, %71, %cst_38 {dimension_numbers = #tpu.dot_dimension_numbers<[1], [0], [0], [1], [0, 0, 1, 1], [], []>} : vector<8x16xbf16>, vector<16x32xbf16>, vector<8x32xf32> -> vector<8x32xf32>
    %73 = arith.addf %34, %72 : vector<8x32xf32>
    %c1 = arith.constant 1 : index
    %c0_39 = arith.constant 0 : index
    %c0_40 = arith.constant 0 : index
    %74 = vector.load %arg4[%c1, %c0_39, %c0_40] : memref<2x32x16xbf16, #tpu.memory_space<vmem>>, vector<1x32x16xbf16>
    %75 = vector.shape_cast %74 : vector<1x32x16xbf16> to vector<32x16xbf16>
    %cst_41 = arith.constant dense<0.000000e+00> : vector<8x16xf32>
    %76 = tpu.matmul %33, %75, %cst_41 {dimension_numbers = #tpu.dot_dimension_numbers<[1], [0], [0], [1], [0, 0, 1, 1], [], []>} : vector<8x32xbf16>, vector<32x16xbf16>, vector<8x16xf32> -> vector<8x16xf32>
    %c1_42 = arith.constant 1 : index
    %c0_43 = arith.constant 0 : index
    %c0_44 = arith.constant 0 : index
    %77 = vector.load %arg5[%c1_42, %c0_43, %c0_44] : memref<2x1x16xf32, #tpu.memory_space<vmem>>, vector<1x1x16xf32>
    %78 = vector.shape_cast %77 : vector<1x1x16xf32> to vector<1x16xf32>
    %79 = vector.broadcast %78 : vector<1x16xf32> to vector<8x16xf32>
    %80 = arith.addf %76, %79 : vector<8x16xf32>
    %c1_45 = arith.constant 1 : index
    %c0_46 = arith.constant 0 : index
    %c0_47 = arith.constant 0 : index
    %81 = vector.load %arg6[%c1_45, %c0_46, %c0_47] : memref<2x32x16xbf16, #tpu.memory_space<vmem>>, vector<1x32x16xbf16>
    %82 = vector.shape_cast %81 : vector<1x32x16xbf16> to vector<32x16xbf16>
    %cst_48 = arith.constant dense<0.000000e+00> : vector<8x16xf32>
    %83 = tpu.matmul %33, %82, %cst_48 {dimension_numbers = #tpu.dot_dimension_numbers<[1], [0], [0], [1], [0, 0, 1, 1], [], []>} : vector<8x32xbf16>, vector<32x16xbf16>, vector<8x16xf32> -> vector<8x16xf32>
    %c1_49 = arith.constant 1 : index
    %c0_50 = arith.constant 0 : index
    %c0_51 = arith.constant 0 : index
    %84 = vector.load %arg7[%c1_49, %c0_50, %c0_51] : memref<2x1x16xf32, #tpu.memory_space<vmem>>, vector<1x1x16xf32>
    %85 = vector.shape_cast %84 : vector<1x1x16xf32> to vector<1x16xf32>
    %86 = vector.broadcast %85 : vector<1x16xf32> to vector<8x16xf32>
    %87 = arith.addf %83, %86 : vector<8x16xf32>
    %c1_52 = arith.constant 1 : index
    %c0_53 = arith.constant 0 : index
    %c0_54 = arith.constant 0 : index
    %88 = vector.load %arg8[%c1_52, %c0_53, %c0_54] : memref<2x32x16xbf16, #tpu.memory_space<vmem>>, vector<1x32x16xbf16>
    %89 = vector.shape_cast %88 : vector<1x32x16xbf16> to vector<32x16xbf16>
    %cst_55 = arith.constant dense<0.000000e+00> : vector<8x16xf32>
    %90 = tpu.matmul %33, %89, %cst_55 {dimension_numbers = #tpu.dot_dimension_numbers<[1], [0], [0], [1], [0, 0, 1, 1], [], []>} : vector<8x32xbf16>, vector<32x16xbf16>, vector<8x16xf32> -> vector<8x16xf32>
    %c1_56 = arith.constant 1 : index
    %c0_57 = arith.constant 0 : index
    %c0_58 = arith.constant 0 : index
    %91 = vector.load %arg9[%c1_56, %c0_57, %c0_58] : memref<2x1x16xf32, #tpu.memory_space<vmem>>, vector<1x1x16xf32>
    %92 = vector.shape_cast %91 : vector<1x1x16xf32> to vector<1x16xf32>
    %93 = vector.broadcast %92 : vector<1x16xf32> to vector<8x16xf32>
    %94 = arith.addf %90, %93 : vector<8x16xf32>
    %95 = tpu.transpose %87, [1, 0] : vector<8x16xf32> -> vector<16x8xf32>
    %cst_59 = arith.constant dense<0.000000e+00> : vector<8x8xf32>
    %96 = tpu.matmul %80, %95, %cst_59 {dimension_numbers = #tpu.dot_dimension_numbers<[1], [0], [0], [1], [0, 0, 1, 1], [], []>} : vector<8x16xf32>, vector<16x8xf32>, vector<8x8xf32> -> vector<8x8xf32>
    %cst_60 = arith.constant dense<0xFF800000> : vector<8xf32>
    %97 = vector.multi_reduction <maximumf>, %96, %cst_60 [1] : vector<8x8xf32> to vector<8xf32>
    %98 = vector.shape_cast %97 : vector<8xf32> to vector<8x1xf32>
    %99 = vector.broadcast %98 : vector<8x1xf32> to vector<8x8xf32>
    %100 = arith.subf %96, %99 : vector<8x8xf32>
    %101 = math.exp %100 : vector<8x8xf32>
    %cst_61 = arith.constant dense<0.000000e+00> : vector<8xf32>
    %102 = vector.multi_reduction <add>, %101, %cst_61 [1] : vector<8x8xf32> to vector<8xf32>
    %103 = vector.shape_cast %102 : vector<8xf32> to vector<8x1xf32>
    %104 = tpu.reciprocal %103 {approx = true} : vector<8x1xf32> -> vector<8x1xf32>
    %105 = vector.broadcast %104 : vector<8x1xf32> to vector<8x8xf32>
    %106 = arith.mulf %101, %105 : vector<8x8xf32>
    %cst_62 = arith.constant dense<0.000000e+00> : vector<8x16xf32>
    %107 = tpu.matmul %106, %94, %cst_62 {dimension_numbers = #tpu.dot_dimension_numbers<[1], [0], [0], [1], [0, 0, 1, 1], [], []>} : vector<8x8xf32>, vector<8x16xf32>, vector<8x16xf32> -> vector<8x16xf32>
    %108 = arith.truncf %107 : vector<8x16xf32> to vector<8x16xbf16>
    %c1_63 = arith.constant 1 : index
    %c0_64 = arith.constant 0 : index
    %c0_65 = arith.constant 0 : index
    %109 = vector.load %arg10[%c1_63, %c0_64, %c0_65] : memref<2x16x32xbf16, #tpu.memory_space<vmem>>, vector<1x16x32xbf16>
    %110 = vector.shape_cast %109 : vector<1x16x32xbf16> to vector<16x32xbf16>
    %cst_66 = arith.constant dense<0.000000e+00> : vector<8x32xf32>
    %111 = tpu.matmul %108, %110, %cst_66 {dimension_numbers = #tpu.dot_dimension_numbers<[1], [0], [0], [1], [0, 0, 1, 1], [], []>} : vector<8x16xbf16>, vector<16x32xbf16>, vector<8x32xf32> -> vector<8x32xf32>
    %112 = arith.addf %73, %111 : vector<8x32xf32>
    %113 = arith.addf %8, %112 : vector<8x32xf32>
    %c0_67 = arith.constant 0 : index
    %c0_68 = arith.constant 0 : index
    %114 = vector.load %arg11[%c0_67, %c0_68] : memref<1x32xf32, #tpu.memory_space<vmem>>, vector<1x32xf32>
    %115 = vector.broadcast %114 : vector<1x32xf32> to vector<8x32xf32>
    %116 = arith.addf %113, %115 : vector<8x32xf32>
    %c0_69 = arith.constant 0 : index
    %c0_70 = arith.constant 0 : index
    %117 = vector.load %arg1[%c0_69, %c0_70] : memref<8x128xf32, #tpu.memory_space<vmem>>, vector<8x128xf32>
    %c0_71 = arith.constant 0 : index
    %c0_72 = arith.constant 0 : index
    %118 = vector.load %arg18[%c0_71, %c0_72] : memref<1x128xf32, #tpu.memory_space<vmem>>, vector<1x128xf32>
    %c0_73 = arith.constant 0 : index
    %c0_74 = arith.constant 0 : index
    %119 = vector.load %arg19[%c0_73, %c0_74] : memref<1x128xf32, #tpu.memory_space<vmem>>, vector<1x128xf32>
    %cst_75 = arith.constant dense<0.000000e+00> : vector<8xf32>
    %120 = vector.multi_reduction <add>, %117, %cst_75 [1] : vector<8x128xf32> to vector<8xf32>
    %121 = vector.shape_cast %120 : vector<8xf32> to vector<8x1xf32>
    %cst_76 = arith.constant 1.280000e+02 : f32
    %122 = vector.broadcast %cst_76 : f32 to vector<8x1xf32>
    %123 = arith.divf %121, %122 : vector<8x1xf32>
    %124 = vector.broadcast %123 : vector<8x1xf32> to vector<8x128xf32>
    %125 = arith.subf %117, %124 : vector<8x128xf32>
    %126 = arith.mulf %125, %125 : vector<8x128xf32>
    %cst_77 = arith.constant dense<0.000000e+00> : vector<8xf32>
    %127 = vector.multi_reduction <add>, %126, %cst_77 [1] : vector<8x128xf32> to vector<8xf32>
    %128 = vector.shape_cast %127 : vector<8xf32> to vector<8x1xf32>
    %cst_78 = arith.constant 1.280000e+02 : f32
    %129 = vector.broadcast %cst_78 : f32 to vector<8x1xf32>
    %130 = arith.divf %128, %129 : vector<8x1xf32>
    %131 = vector.broadcast %123 : vector<8x1xf32> to vector<8x128xf32>
    %132 = arith.subf %117, %131 : vector<8x128xf32>
    %cst_79 = arith.constant 9.99999974E-6 : f32
    %133 = vector.broadcast %cst_79 : f32 to vector<8x1xf32>
    %134 = arith.addf %130, %133 : vector<8x1xf32>
    %135 = math.rsqrt %134 : vector<8x1xf32>
    %136 = vector.broadcast %135 : vector<8x1xf32> to vector<8x128xf32>
    %137 = arith.mulf %132, %136 : vector<8x128xf32>
    %138 = vector.broadcast %118 : vector<1x128xf32> to vector<8x128xf32>
    %139 = arith.mulf %137, %138 : vector<8x128xf32>
    %140 = vector.broadcast %119 : vector<1x128xf32> to vector<8x128xf32>
    %141 = arith.addf %139, %140 : vector<8x128xf32>
    %142 = arith.truncf %141 : vector<8x128xf32> to vector<8x128xbf16>
    %cst_80 = arith.constant 0.000000e+00 : f32
    %143 = vector.broadcast %cst_80 : f32 to vector<8x128xf32>
    %c0_81 = arith.constant 0 : index
    %c0_82 = arith.constant 0 : index
    %c0_83 = arith.constant 0 : index
    %144 = vector.load %arg20[%c0_81, %c0_82, %c0_83] : memref<4x128x32xbf16, #tpu.memory_space<vmem>>, vector<1x128x32xbf16>
    %145 = vector.shape_cast %144 : vector<1x128x32xbf16> to vector<128x32xbf16>
    %cst_84 = arith.constant dense<0.000000e+00> : vector<8x32xf32>
    %146 = tpu.matmul %142, %145, %cst_84 {dimension_numbers = #tpu.dot_dimension_numbers<[1], [0], [0], [1], [0, 0, 1, 1], [], []>} : vector<8x128xbf16>, vector<128x32xbf16>, vector<8x32xf32> -> vector<8x32xf32>
    %c0_85 = arith.constant 0 : index
    %c0_86 = arith.constant 0 : index
    %c0_87 = arith.constant 0 : index
    %147 = vector.load %arg21[%c0_85, %c0_86, %c0_87] : memref<4x1x32xf32, #tpu.memory_space<vmem>>, vector<1x1x32xf32>
    %148 = vector.shape_cast %147 : vector<1x1x32xf32> to vector<1x32xf32>
    %149 = vector.broadcast %148 : vector<1x32xf32> to vector<8x32xf32>
    %150 = arith.addf %146, %149 : vector<8x32xf32>
    %c0_88 = arith.constant 0 : index
    %c0_89 = arith.constant 0 : index
    %c0_90 = arith.constant 0 : index
    %151 = vector.load %arg22[%c0_88, %c0_89, %c0_90] : memref<4x128x32xbf16, #tpu.memory_space<vmem>>, vector<1x128x32xbf16>
    %152 = vector.shape_cast %151 : vector<1x128x32xbf16> to vector<128x32xbf16>
    %cst_91 = arith.constant dense<0.000000e+00> : vector<8x32xf32>
    %153 = tpu.matmul %142, %152, %cst_91 {dimension_numbers = #tpu.dot_dimension_numbers<[1], [0], [0], [1], [0, 0, 1, 1], [], []>} : vector<8x128xbf16>, vector<128x32xbf16>, vector<8x32xf32> -> vector<8x32xf32>
    %c0_92 = arith.constant 0 : index
    %c0_93 = arith.constant 0 : index
    %c0_94 = arith.constant 0 : index
    %154 = vector.load %arg23[%c0_92, %c0_93, %c0_94] : memref<4x1x32xf32, #tpu.memory_space<vmem>>, vector<1x1x32xf32>
    %155 = vector.shape_cast %154 : vector<1x1x32xf32> to vector<1x32xf32>
    %156 = vector.broadcast %155 : vector<1x32xf32> to vector<8x32xf32>
    %157 = arith.addf %153, %156 : vector<8x32xf32>
    %c0_95 = arith.constant 0 : index
    %c0_96 = arith.constant 0 : index
    %c0_97 = arith.constant 0 : index
    %158 = vector.load %arg24[%c0_95, %c0_96, %c0_97] : memref<4x128x32xbf16, #tpu.memory_space<vmem>>, vector<1x128x32xbf16>
    %159 = vector.shape_cast %158 : vector<1x128x32xbf16> to vector<128x32xbf16>
    %cst_98 = arith.constant dense<0.000000e+00> : vector<8x32xf32>
    %160 = tpu.matmul %142, %159, %cst_98 {dimension_numbers = #tpu.dot_dimension_numbers<[1], [0], [0], [1], [0, 0, 1, 1], [], []>} : vector<8x128xbf16>, vector<128x32xbf16>, vector<8x32xf32> -> vector<8x32xf32>
    %c0_99 = arith.constant 0 : index
    %c0_100 = arith.constant 0 : index
    %c0_101 = arith.constant 0 : index
    %161 = vector.load %arg25[%c0_99, %c0_100, %c0_101] : memref<4x1x32xf32, #tpu.memory_space<vmem>>, vector<1x1x32xf32>
    %162 = vector.shape_cast %161 : vector<1x1x32xf32> to vector<1x32xf32>
    %163 = vector.broadcast %162 : vector<1x32xf32> to vector<8x32xf32>
    %164 = arith.addf %160, %163 : vector<8x32xf32>
    %165 = tpu.transpose %157, [1, 0] : vector<8x32xf32> -> vector<32x8xf32>
    %cst_102 = arith.constant dense<0.000000e+00> : vector<8x8xf32>
    %166 = tpu.matmul %150, %165, %cst_102 {dimension_numbers = #tpu.dot_dimension_numbers<[1], [0], [0], [1], [0, 0, 1, 1], [], []>} : vector<8x32xf32>, vector<32x8xf32>, vector<8x8xf32> -> vector<8x8xf32>
    %cst_103 = arith.constant dense<0xFF800000> : vector<8xf32>
    %167 = vector.multi_reduction <maximumf>, %166, %cst_103 [1] : vector<8x8xf32> to vector<8xf32>
    %168 = vector.shape_cast %167 : vector<8xf32> to vector<8x1xf32>
    %169 = vector.broadcast %168 : vector<8x1xf32> to vector<8x8xf32>
    %170 = arith.subf %166, %169 : vector<8x8xf32>
    %171 = math.exp %170 : vector<8x8xf32>
    %cst_104 = arith.constant dense<0.000000e+00> : vector<8xf32>
    %172 = vector.multi_reduction <add>, %171, %cst_104 [1] : vector<8x8xf32> to vector<8xf32>
    %173 = vector.shape_cast %172 : vector<8xf32> to vector<8x1xf32>
    %174 = tpu.reciprocal %173 {approx = true} : vector<8x1xf32> -> vector<8x1xf32>
    %175 = vector.broadcast %174 : vector<8x1xf32> to vector<8x8xf32>
    %176 = arith.mulf %171, %175 : vector<8x8xf32>
    %cst_105 = arith.constant dense<0.000000e+00> : vector<8x32xf32>
    %177 = tpu.matmul %176, %164, %cst_105 {dimension_numbers = #tpu.dot_dimension_numbers<[1], [0], [0], [1], [0, 0, 1, 1], [], []>} : vector<8x8xf32>, vector<8x32xf32>, vector<8x32xf32> -> vector<8x32xf32>
    %178 = arith.truncf %177 : vector<8x32xf32> to vector<8x32xbf16>
    %c0_106 = arith.constant 0 : index
    %c0_107 = arith.constant 0 : index
    %c0_108 = arith.constant 0 : index
    %179 = vector.load %arg26[%c0_106, %c0_107, %c0_108] : memref<4x32x128xbf16, #tpu.memory_space<vmem>>, vector<1x32x128xbf16>
    %180 = vector.shape_cast %179 : vector<1x32x128xbf16> to vector<32x128xbf16>
    %cst_109 = arith.constant dense<0.000000e+00> : vector<8x128xf32>
    %181 = tpu.matmul %178, %180, %cst_109 {dimension_numbers = #tpu.dot_dimension_numbers<[1], [0], [0], [1], [0, 0, 1, 1], [], []>} : vector<8x32xbf16>, vector<32x128xbf16>, vector<8x128xf32> -> vector<8x128xf32>
    %182 = arith.addf %143, %181 : vector<8x128xf32>
    %c1_110 = arith.constant 1 : index
    %c0_111 = arith.constant 0 : index
    %c0_112 = arith.constant 0 : index
    %183 = vector.load %arg20[%c1_110, %c0_111, %c0_112] : memref<4x128x32xbf16, #tpu.memory_space<vmem>>, vector<1x128x32xbf16>
    %184 = vector.shape_cast %183 : vector<1x128x32xbf16> to vector<128x32xbf16>
    %cst_113 = arith.constant dense<0.000000e+00> : vector<8x32xf32>
    %185 = tpu.matmul %142, %184, %cst_113 {dimension_numbers = #tpu.dot_dimension_numbers<[1], [0], [0], [1], [0, 0, 1, 1], [], []>} : vector<8x128xbf16>, vector<128x32xbf16>, vector<8x32xf32> -> vector<8x32xf32>
    %c1_114 = arith.constant 1 : index
    %c0_115 = arith.constant 0 : index
    %c0_116 = arith.constant 0 : index
    %186 = vector.load %arg21[%c1_114, %c0_115, %c0_116] : memref<4x1x32xf32, #tpu.memory_space<vmem>>, vector<1x1x32xf32>
    %187 = vector.shape_cast %186 : vector<1x1x32xf32> to vector<1x32xf32>
    %188 = vector.broadcast %187 : vector<1x32xf32> to vector<8x32xf32>
    %189 = arith.addf %185, %188 : vector<8x32xf32>
    %c1_117 = arith.constant 1 : index
    %c0_118 = arith.constant 0 : index
    %c0_119 = arith.constant 0 : index
    %190 = vector.load %arg22[%c1_117, %c0_118, %c0_119] : memref<4x128x32xbf16, #tpu.memory_space<vmem>>, vector<1x128x32xbf16>
    %191 = vector.shape_cast %190 : vector<1x128x32xbf16> to vector<128x32xbf16>
    %cst_120 = arith.constant dense<0.000000e+00> : vector<8x32xf32>
    %192 = tpu.matmul %142, %191, %cst_120 {dimension_numbers = #tpu.dot_dimension_numbers<[1], [0], [0], [1], [0, 0, 1, 1], [], []>} : vector<8x128xbf16>, vector<128x32xbf16>, vector<8x32xf32> -> vector<8x32xf32>
    %c1_121 = arith.constant 1 : index
    %c0_122 = arith.constant 0 : index
    %c0_123 = arith.constant 0 : index
    %193 = vector.load %arg23[%c1_121, %c0_122, %c0_123] : memref<4x1x32xf32, #tpu.memory_space<vmem>>, vector<1x1x32xf32>
    %194 = vector.shape_cast %193 : vector<1x1x32xf32> to vector<1x32xf32>
    %195 = vector.broadcast %194 : vector<1x32xf32> to vector<8x32xf32>
    %196 = arith.addf %192, %195 : vector<8x32xf32>
    %c1_124 = arith.constant 1 : index
    %c0_125 = arith.constant 0 : index
    %c0_126 = arith.constant 0 : index
    %197 = vector.load %arg24[%c1_124, %c0_125, %c0_126] : memref<4x128x32xbf16, #tpu.memory_space<vmem>>, vector<1x128x32xbf16>
    %198 = vector.shape_cast %197 : vector<1x128x32xbf16> to vector<128x32xbf16>
    %cst_127 = arith.constant dense<0.000000e+00> : vector<8x32xf32>
    %199 = tpu.matmul %142, %198, %cst_127 {dimension_numbers = #tpu.dot_dimension_numbers<[1], [0], [0], [1], [0, 0, 1, 1], [], []>} : vector<8x128xbf16>, vector<128x32xbf16>, vector<8x32xf32> -> vector<8x32xf32>
    %c1_128 = arith.constant 1 : index
    %c0_129 = arith.constant 0 : index
    %c0_130 = arith.constant 0 : index
    %200 = vector.load %arg25[%c1_128, %c0_129, %c0_130] : memref<4x1x32xf32, #tpu.memory_space<vmem>>, vector<1x1x32xf32>
    %201 = vector.shape_cast %200 : vector<1x1x32xf32> to vector<1x32xf32>
    %202 = vector.broadcast %201 : vector<1x32xf32> to vector<8x32xf32>
    %203 = arith.addf %199, %202 : vector<8x32xf32>
    %204 = tpu.transpose %196, [1, 0] : vector<8x32xf32> -> vector<32x8xf32>
    %cst_131 = arith.constant dense<0.000000e+00> : vector<8x8xf32>
    %205 = tpu.matmul %189, %204, %cst_131 {dimension_numbers = #tpu.dot_dimension_numbers<[1], [0], [0], [1], [0, 0, 1, 1], [], []>} : vector<8x32xf32>, vector<32x8xf32>, vector<8x8xf32> -> vector<8x8xf32>
    %cst_132 = arith.constant dense<0xFF800000> : vector<8xf32>
    %206 = vector.multi_reduction <maximumf>, %205, %cst_132 [1] : vector<8x8xf32> to vector<8xf32>
    %207 = vector.shape_cast %206 : vector<8xf32> to vector<8x1xf32>
    %208 = vector.broadcast %207 : vector<8x1xf32> to vector<8x8xf32>
    %209 = arith.subf %205, %208 : vector<8x8xf32>
    %210 = math.exp %209 : vector<8x8xf32>
    %cst_133 = arith.constant dense<0.000000e+00> : vector<8xf32>
    %211 = vector.multi_reduction <add>, %210, %cst_133 [1] : vector<8x8xf32> to vector<8xf32>
    %212 = vector.shape_cast %211 : vector<8xf32> to vector<8x1xf32>
    %213 = tpu.reciprocal %212 {approx = true} : vector<8x1xf32> -> vector<8x1xf32>
    %214 = vector.broadcast %213 : vector<8x1xf32> to vector<8x8xf32>
    %215 = arith.mulf %210, %214 : vector<8x8xf32>
    %cst_134 = arith.constant dense<0.000000e+00> : vector<8x32xf32>
    %216 = tpu.matmul %215, %203, %cst_134 {dimension_numbers = #tpu.dot_dimension_numbers<[1], [0], [0], [1], [0, 0, 1, 1], [], []>} : vector<8x8xf32>, vector<8x32xf32>, vector<8x32xf32> -> vector<8x32xf32>
    %217 = arith.truncf %216 : vector<8x32xf32> to vector<8x32xbf16>
    %c1_135 = arith.constant 1 : index
    %c0_136 = arith.constant 0 : index
    %c0_137 = arith.constant 0 : index
    %218 = vector.load %arg26[%c1_135, %c0_136, %c0_137] : memref<4x32x128xbf16, #tpu.memory_space<vmem>>, vector<1x32x128xbf16>
    %219 = vector.shape_cast %218 : vector<1x32x128xbf16> to vector<32x128xbf16>
    %cst_138 = arith.constant dense<0.000000e+00> : vector<8x128xf32>
    %220 = tpu.matmul %217, %219, %cst_138 {dimension_numbers = #tpu.dot_dimension_numbers<[1], [0], [0], [1], [0, 0, 1, 1], [], []>} : vector<8x32xbf16>, vector<32x128xbf16>, vector<8x128xf32> -> vector<8x128xf32>
    %221 = arith.addf %182, %220 : vector<8x128xf32>
    %c2 = arith.constant 2 : index
    %c0_139 = arith.constant 0 : index
    %c0_140 = arith.constant 0 : index
    %222 = vector.load %arg20[%c2, %c0_139, %c0_140] : memref<4x128x32xbf16, #tpu.memory_space<vmem>>, vector<1x128x32xbf16>
    %223 = vector.shape_cast %222 : vector<1x128x32xbf16> to vector<128x32xbf16>
    %cst_141 = arith.constant dense<0.000000e+00> : vector<8x32xf32>
    %224 = tpu.matmul %142, %223, %cst_141 {dimension_numbers = #tpu.dot_dimension_numbers<[1], [0], [0], [1], [0, 0, 1, 1], [], []>} : vector<8x128xbf16>, vector<128x32xbf16>, vector<8x32xf32> -> vector<8x32xf32>
    %c2_142 = arith.constant 2 : index
    %c0_143 = arith.constant 0 : index
    %c0_144 = arith.constant 0 : index
    %225 = vector.load %arg21[%c2_142, %c0_143, %c0_144] : memref<4x1x32xf32, #tpu.memory_space<vmem>>, vector<1x1x32xf32>
    %226 = vector.shape_cast %225 : vector<1x1x32xf32> to vector<1x32xf32>
    %227 = vector.broadcast %226 : vector<1x32xf32> to vector<8x32xf32>
    %228 = arith.addf %224, %227 : vector<8x32xf32>
    %c2_145 = arith.constant 2 : index
    %c0_146 = arith.constant 0 : index
    %c0_147 = arith.constant 0 : index
    %229 = vector.load %arg22[%c2_145, %c0_146, %c0_147] : memref<4x128x32xbf16, #tpu.memory_space<vmem>>, vector<1x128x32xbf16>
    %230 = vector.shape_cast %229 : vector<1x128x32xbf16> to vector<128x32xbf16>
    %cst_148 = arith.constant dense<0.000000e+00> : vector<8x32xf32>
    %231 = tpu.matmul %142, %230, %cst_148 {dimension_numbers = #tpu.dot_dimension_numbers<[1], [0], [0], [1], [0, 0, 1, 1], [], []>} : vector<8x128xbf16>, vector<128x32xbf16>, vector<8x32xf32> -> vector<8x32xf32>
    %c2_149 = arith.constant 2 : index
    %c0_150 = arith.constant 0 : index
    %c0_151 = arith.constant 0 : index
    %232 = vector.load %arg23[%c2_149, %c0_150, %c0_151] : memref<4x1x32xf32, #tpu.memory_space<vmem>>, vector<1x1x32xf32>
    %233 = vector.shape_cast %232 : vector<1x1x32xf32> to vector<1x32xf32>
    %234 = vector.broadcast %233 : vector<1x32xf32> to vector<8x32xf32>
    %235 = arith.addf %231, %234 : vector<8x32xf32>
    %c2_152 = arith.constant 2 : index
    %c0_153 = arith.constant 0 : index
    %c0_154 = arith.constant 0 : index
    %236 = vector.load %arg24[%c2_152, %c0_153, %c0_154] : memref<4x128x32xbf16, #tpu.memory_space<vmem>>, vector<1x128x32xbf16>
    %237 = vector.shape_cast %236 : vector<1x128x32xbf16> to vector<128x32xbf16>
    %cst_155 = arith.constant dense<0.000000e+00> : vector<8x32xf32>
    %238 = tpu.matmul %142, %237, %cst_155 {dimension_numbers = #tpu.dot_dimension_numbers<[1], [0], [0], [1], [0, 0, 1, 1], [], []>} : vector<8x128xbf16>, vector<128x32xbf16>, vector<8x32xf32> -> vector<8x32xf32>
    %c2_156 = arith.constant 2 : index
    %c0_157 = arith.constant 0 : index
    %c0_158 = arith.constant 0 : index
    %239 = vector.load %arg25[%c2_156, %c0_157, %c0_158] : memref<4x1x32xf32, #tpu.memory_space<vmem>>, vector<1x1x32xf32>
    %240 = vector.shape_cast %239 : vector<1x1x32xf32> to vector<1x32xf32>
    %241 = vector.broadcast %240 : vector<1x32xf32> to vector<8x32xf32>
    %242 = arith.addf %238, %241 : vector<8x32xf32>
    %243 = tpu.transpose %235, [1, 0] : vector<8x32xf32> -> vector<32x8xf32>
    %cst_159 = arith.constant dense<0.000000e+00> : vector<8x8xf32>
    %244 = tpu.matmul %228, %243, %cst_159 {dimension_numbers = #tpu.dot_dimension_numbers<[1], [0], [0], [1], [0, 0, 1, 1], [], []>} : vector<8x32xf32>, vector<32x8xf32>, vector<8x8xf32> -> vector<8x8xf32>
    %cst_160 = arith.constant dense<0xFF800000> : vector<8xf32>
    %245 = vector.multi_reduction <maximumf>, %244, %cst_160 [1] : vector<8x8xf32> to vector<8xf32>
    %246 = vector.shape_cast %245 : vector<8xf32> to vector<8x1xf32>
    %247 = vector.broadcast %246 : vector<8x1xf32> to vector<8x8xf32>
    %248 = arith.subf %244, %247 : vector<8x8xf32>
    %249 = math.exp %248 : vector<8x8xf32>
    %cst_161 = arith.constant dense<0.000000e+00> : vector<8xf32>
    %250 = vector.multi_reduction <add>, %249, %cst_161 [1] : vector<8x8xf32> to vector<8xf32>
    %251 = vector.shape_cast %250 : vector<8xf32> to vector<8x1xf32>
    %252 = tpu.reciprocal %251 {approx = true} : vector<8x1xf32> -> vector<8x1xf32>
    %253 = vector.broadcast %252 : vector<8x1xf32> to vector<8x8xf32>
    %254 = arith.mulf %249, %253 : vector<8x8xf32>
    %cst_162 = arith.constant dense<0.000000e+00> : vector<8x32xf32>
    %255 = tpu.matmul %254, %242, %cst_162 {dimension_numbers = #tpu.dot_dimension_numbers<[1], [0], [0], [1], [0, 0, 1, 1], [], []>} : vector<8x8xf32>, vector<8x32xf32>, vector<8x32xf32> -> vector<8x32xf32>
    %256 = arith.truncf %255 : vector<8x32xf32> to vector<8x32xbf16>
    %c2_163 = arith.constant 2 : index
    %c0_164 = arith.constant 0 : index
    %c0_165 = arith.constant 0 : index
    %257 = vector.load %arg26[%c2_163, %c0_164, %c0_165] : memref<4x32x128xbf16, #tpu.memory_space<vmem>>, vector<1x32x128xbf16>
    %258 = vector.shape_cast %257 : vector<1x32x128xbf16> to vector<32x128xbf16>
    %cst_166 = arith.constant dense<0.000000e+00> : vector<8x128xf32>
    %259 = tpu.matmul %256, %258, %cst_166 {dimension_numbers = #tpu.dot_dimension_numbers<[1], [0], [0], [1], [0, 0, 1, 1], [], []>} : vector<8x32xbf16>, vector<32x128xbf16>, vector<8x128xf32> -> vector<8x128xf32>
    %260 = arith.addf %221, %259 : vector<8x128xf32>
    %c3 = arith.constant 3 : index
    %c0_167 = arith.constant 0 : index
    %c0_168 = arith.constant 0 : index
    %261 = vector.load %arg20[%c3, %c0_167, %c0_168] : memref<4x128x32xbf16, #tpu.memory_space<vmem>>, vector<1x128x32xbf16>
    %262 = vector.shape_cast %261 : vector<1x128x32xbf16> to vector<128x32xbf16>
    %cst_169 = arith.constant dense<0.000000e+00> : vector<8x32xf32>
    %263 = tpu.matmul %142, %262, %cst_169 {dimension_numbers = #tpu.dot_dimension_numbers<[1], [0], [0], [1], [0, 0, 1, 1], [], []>} : vector<8x128xbf16>, vector<128x32xbf16>, vector<8x32xf32> -> vector<8x32xf32>
    %c3_170 = arith.constant 3 : index
    %c0_171 = arith.constant 0 : index
    %c0_172 = arith.constant 0 : index
    %264 = vector.load %arg21[%c3_170, %c0_171, %c0_172] : memref<4x1x32xf32, #tpu.memory_space<vmem>>, vector<1x1x32xf32>
    %265 = vector.shape_cast %264 : vector<1x1x32xf32> to vector<1x32xf32>
    %266 = vector.broadcast %265 : vector<1x32xf32> to vector<8x32xf32>
    %267 = arith.addf %263, %266 : vector<8x32xf32>
    %c3_173 = arith.constant 3 : index
    %c0_174 = arith.constant 0 : index
    %c0_175 = arith.constant 0 : index
    %268 = vector.load %arg22[%c3_173, %c0_174, %c0_175] : memref<4x128x32xbf16, #tpu.memory_space<vmem>>, vector<1x128x32xbf16>
    %269 = vector.shape_cast %268 : vector<1x128x32xbf16> to vector<128x32xbf16>
    %cst_176 = arith.constant dense<0.000000e+00> : vector<8x32xf32>
    %270 = tpu.matmul %142, %269, %cst_176 {dimension_numbers = #tpu.dot_dimension_numbers<[1], [0], [0], [1], [0, 0, 1, 1], [], []>} : vector<8x128xbf16>, vector<128x32xbf16>, vector<8x32xf32> -> vector<8x32xf32>
    %c3_177 = arith.constant 3 : index
    %c0_178 = arith.constant 0 : index
    %c0_179 = arith.constant 0 : index
    %271 = vector.load %arg23[%c3_177, %c0_178, %c0_179] : memref<4x1x32xf32, #tpu.memory_space<vmem>>, vector<1x1x32xf32>
    %272 = vector.shape_cast %271 : vector<1x1x32xf32> to vector<1x32xf32>
    %273 = vector.broadcast %272 : vector<1x32xf32> to vector<8x32xf32>
    %274 = arith.addf %270, %273 : vector<8x32xf32>
    %c3_180 = arith.constant 3 : index
    %c0_181 = arith.constant 0 : index
    %c0_182 = arith.constant 0 : index
    %275 = vector.load %arg24[%c3_180, %c0_181, %c0_182] : memref<4x128x32xbf16, #tpu.memory_space<vmem>>, vector<1x128x32xbf16>
    %276 = vector.shape_cast %275 : vector<1x128x32xbf16> to vector<128x32xbf16>
    %cst_183 = arith.constant dense<0.000000e+00> : vector<8x32xf32>
    %277 = tpu.matmul %142, %276, %cst_183 {dimension_numbers = #tpu.dot_dimension_numbers<[1], [0], [0], [1], [0, 0, 1, 1], [], []>} : vector<8x128xbf16>, vector<128x32xbf16>, vector<8x32xf32> -> vector<8x32xf32>
    %c3_184 = arith.constant 3 : index
    %c0_185 = arith.constant 0 : index
    %c0_186 = arith.constant 0 : index
    %278 = vector.load %arg25[%c3_184, %c0_185, %c0_186] : memref<4x1x32xf32, #tpu.memory_space<vmem>>, vector<1x1x32xf32>
    %279 = vector.shape_cast %278 : vector<1x1x32xf32> to vector<1x32xf32>
    %280 = vector.broadcast %279 : vector<1x32xf32> to vector<8x32xf32>
    %281 = arith.addf %277, %280 : vector<8x32xf32>
    %282 = tpu.transpose %274, [1, 0] : vector<8x32xf32> -> vector<32x8xf32>
    %cst_187 = arith.constant dense<0.000000e+00> : vector<8x8xf32>
    %283 = tpu.matmul %267, %282, %cst_187 {dimension_numbers = #tpu.dot_dimension_numbers<[1], [0], [0], [1], [0, 0, 1, 1], [], []>} : vector<8x32xf32>, vector<32x8xf32>, vector<8x8xf32> -> vector<8x8xf32>
    %cst_188 = arith.constant dense<0xFF800000> : vector<8xf32>
    %284 = vector.multi_reduction <maximumf>, %283, %cst_188 [1] : vector<8x8xf32> to vector<8xf32>
    %285 = vector.shape_cast %284 : vector<8xf32> to vector<8x1xf32>
    %286 = vector.broadcast %285 : vector<8x1xf32> to vector<8x8xf32>
    %287 = arith.subf %283, %286 : vector<8x8xf32>
    %288 = math.exp %287 : vector<8x8xf32>
    %cst_189 = arith.constant dense<0.000000e+00> : vector<8xf32>
    %289 = vector.multi_reduction <add>, %288, %cst_189 [1] : vector<8x8xf32> to vector<8xf32>
    %290 = vector.shape_cast %289 : vector<8xf32> to vector<8x1xf32>
    %291 = tpu.reciprocal %290 {approx = true} : vector<8x1xf32> -> vector<8x1xf32>
    %292 = vector.broadcast %291 : vector<8x1xf32> to vector<8x8xf32>
    %293 = arith.mulf %288, %292 : vector<8x8xf32>
    %cst_190 = arith.constant dense<0.000000e+00> : vector<8x32xf32>
    %294 = tpu.matmul %293, %281, %cst_190 {dimension_numbers = #tpu.dot_dimension_numbers<[1], [0], [0], [1], [0, 0, 1, 1], [], []>} : vector<8x8xf32>, vector<8x32xf32>, vector<8x32xf32> -> vector<8x32xf32>
    %295 = arith.truncf %294 : vector<8x32xf32> to vector<8x32xbf16>
    %c3_191 = arith.constant 3 : index
    %c0_192 = arith.constant 0 : index
    %c0_193 = arith.constant 0 : index
    %296 = vector.load %arg26[%c3_191, %c0_192, %c0_193] : memref<4x32x128xbf16, #tpu.memory_space<vmem>>, vector<1x32x128xbf16>
    %297 = vector.shape_cast %296 : vector<1x32x128xbf16> to vector<32x128xbf16>
    %cst_194 = arith.constant dense<0.000000e+00> : vector<8x128xf32>
    %298 = tpu.matmul %295, %297, %cst_194 {dimension_numbers = #tpu.dot_dimension_numbers<[1], [0], [0], [1], [0, 0, 1, 1], [], []>} : vector<8x32xbf16>, vector<32x128xbf16>, vector<8x128xf32> -> vector<8x128xf32>
    %299 = arith.addf %260, %298 : vector<8x128xf32>
    %300 = arith.addf %117, %299 : vector<8x128xf32>
    %c0_195 = arith.constant 0 : index
    %c0_196 = arith.constant 0 : index
    %301 = vector.load %arg27[%c0_195, %c0_196] : memref<1x128xf32, #tpu.memory_space<vmem>>, vector<1x128xf32>
    %302 = vector.broadcast %301 : vector<1x128xf32> to vector<8x128xf32>
    %303 = arith.addf %300, %302 : vector<8x128xf32>
    %c0_i32_197 = arith.constant 0 : i32
    %304 = tpu.memref_slice %arg44[%c0_i32_197] : memref<4x!tpu.dma_semaphore, #tpu.memory_space<semaphore_mem>> -> memref<1x!tpu.dma_semaphore, #tpu.memory_space<semaphore_mem>>
    %305 = tpu.memref_squeeze %304 : memref<1x!tpu.dma_semaphore, #tpu.memory_space<semaphore_mem>> -> memref<!tpu.dma_semaphore, #tpu.memory_space<semaphore_mem>>
    tpu.wait_dma2 semaphore(%305 : memref<!tpu.dma_semaphore, #tpu.memory_space<semaphore_mem>>) src(%arg16 : memref<32x2048xbf16, #tpu.memory_space<any>>) dst(%arg40 : memref<32x2048xbf16, #tpu.memory_space<vmem>>)
    %c1_i32_198 = arith.constant 1 : i32
    %306 = tpu.memref_slice %arg44[%c1_i32_198] : memref<4x!tpu.dma_semaphore, #tpu.memory_space<semaphore_mem>> -> memref<1x!tpu.dma_semaphore, #tpu.memory_space<semaphore_mem>>
    %307 = tpu.memref_squeeze %306 : memref<1x!tpu.dma_semaphore, #tpu.memory_space<semaphore_mem>> -> memref<!tpu.dma_semaphore, #tpu.memory_space<semaphore_mem>>
    tpu.wait_dma2 semaphore(%307 : memref<!tpu.dma_semaphore, #tpu.memory_space<semaphore_mem>>) src(%arg17 : memref<2048x32xbf16, #tpu.memory_space<any>>) dst(%arg41 : memref<2048x32xbf16, #tpu.memory_space<vmem>>)
    %c0_199 = arith.constant 0 : index
    %c0_200 = arith.constant 0 : index
    %308 = vector.load %arg12[%c0_199, %c0_200] : memref<1x32xf32, #tpu.memory_space<vmem>>, vector<1x32xf32>
    %c0_201 = arith.constant 0 : index
    %c0_202 = arith.constant 0 : index
    %309 = vector.load %arg13[%c0_201, %c0_202] : memref<1x32xf32, #tpu.memory_space<vmem>>, vector<1x32xf32>
    %cst_203 = arith.constant dense<0.000000e+00> : vector<8xf32>
    %310 = vector.multi_reduction <add>, %116, %cst_203 [1] : vector<8x32xf32> to vector<8xf32>
    %311 = vector.shape_cast %310 : vector<8xf32> to vector<8x1xf32>
    %cst_204 = arith.constant 3.200000e+01 : f32
    %312 = vector.broadcast %cst_204 : f32 to vector<8x1xf32>
    %313 = arith.divf %311, %312 : vector<8x1xf32>
    %314 = vector.broadcast %313 : vector<8x1xf32> to vector<8x32xf32>
    %315 = arith.subf %116, %314 : vector<8x32xf32>
    %316 = arith.mulf %315, %315 : vector<8x32xf32>
    %cst_205 = arith.constant dense<0.000000e+00> : vector<8xf32>
    %317 = vector.multi_reduction <add>, %316, %cst_205 [1] : vector<8x32xf32> to vector<8xf32>
    %318 = vector.shape_cast %317 : vector<8xf32> to vector<8x1xf32>
    %cst_206 = arith.constant 3.200000e+01 : f32
    %319 = vector.broadcast %cst_206 : f32 to vector<8x1xf32>
    %320 = arith.divf %318, %319 : vector<8x1xf32>
    %321 = vector.broadcast %313 : vector<8x1xf32> to vector<8x32xf32>
    %322 = arith.subf %116, %321 : vector<8x32xf32>
    %cst_207 = arith.constant 9.99999974E-6 : f32
    %323 = vector.broadcast %cst_207 : f32 to vector<8x1xf32>
    %324 = arith.addf %320, %323 : vector<8x1xf32>
    %325 = math.rsqrt %324 : vector<8x1xf32>
    %326 = vector.broadcast %325 : vector<8x1xf32> to vector<8x32xf32>
    %327 = arith.mulf %322, %326 : vector<8x32xf32>
    %328 = vector.broadcast %308 : vector<1x32xf32> to vector<8x32xf32>
    %329 = arith.mulf %327, %328 : vector<8x32xf32>
    %330 = vector.broadcast %309 : vector<1x32xf32> to vector<8x32xf32>
    %331 = arith.addf %329, %330 : vector<8x32xf32>
    %332 = arith.truncf %331 : vector<8x32xf32> to vector<8x32xbf16>
    %c0_208 = arith.constant 0 : index
    %c0_209 = arith.constant 0 : index
    %333 = vector.load %arg40[%c0_208, %c0_209] : memref<32x2048xbf16, #tpu.memory_space<vmem>>, vector<32x2048xbf16>
    %cst_210 = arith.constant dense<0.000000e+00> : vector<8x2048xf32>
    %334 = tpu.matmul %332, %333, %cst_210 {dimension_numbers = #tpu.dot_dimension_numbers<[1], [0], [0], [1], [0, 0, 1, 1], [], []>} : vector<8x32xbf16>, vector<32x2048xbf16>, vector<8x2048xf32> -> vector<8x2048xf32>
    %c0_211 = arith.constant 0 : index
    %c0_212 = arith.constant 0 : index
    %335 = vector.load %arg14[%c0_211, %c0_212] : memref<1x2048xf32, #tpu.memory_space<vmem>>, vector<1x2048xf32>
    %336 = vector.broadcast %335 : vector<1x2048xf32> to vector<8x2048xf32>
    %337 = arith.addf %334, %336 : vector<8x2048xf32>
    %cst_213 = arith.constant 0.000000e+00 : f32
    %338 = vector.broadcast %cst_213 : f32 to vector<8x2048xf32>
    %339 = arith.maximumf %337, %338 : vector<8x2048xf32>
    %340 = arith.truncf %339 : vector<8x2048xf32> to vector<8x2048xbf16>
    %c0_214 = arith.constant 0 : index
    %c0_215 = arith.constant 0 : index
    %341 = vector.load %arg41[%c0_214, %c0_215] : memref<2048x32xbf16, #tpu.memory_space<vmem>>, vector<2048x32xbf16>
    %cst_216 = arith.constant dense<0.000000e+00> : vector<8x32xf32>
    %342 = tpu.matmul %340, %341, %cst_216 {dimension_numbers = #tpu.dot_dimension_numbers<[1], [0], [0], [1], [0, 0, 1, 1], [], []>} : vector<8x2048xbf16>, vector<2048x32xbf16>, vector<8x32xf32> -> vector<8x32xf32>
    %c0_217 = arith.constant 0 : index
    %c0_218 = arith.constant 0 : index
    %343 = vector.load %arg15[%c0_217, %c0_218] : memref<1x32xf32, #tpu.memory_space<vmem>>, vector<1x32xf32>
    %344 = vector.broadcast %343 : vector<1x32xf32> to vector<8x32xf32>
    %345 = arith.addf %342, %344 : vector<8x32xf32>
    %346 = arith.addf %116, %345 : vector<8x32xf32>
    %c2_i32_219 = arith.constant 2 : i32
    %347 = tpu.memref_slice %arg44[%c2_i32_219] : memref<4x!tpu.dma_semaphore, #tpu.memory_space<semaphore_mem>> -> memref<1x!tpu.dma_semaphore, #tpu.memory_space<semaphore_mem>>
    %348 = tpu.memref_squeeze %347 : memref<1x!tpu.dma_semaphore, #tpu.memory_space<semaphore_mem>> -> memref<!tpu.dma_semaphore, #tpu.memory_space<semaphore_mem>>
    tpu.wait_dma2 semaphore(%348 : memref<!tpu.dma_semaphore, #tpu.memory_space<semaphore_mem>>) src(%arg32 : memref<128x2048xbf16, #tpu.memory_space<any>>) dst(%arg42 : memref<128x2048xbf16, #tpu.memory_space<vmem>>)
    %c3_i32_220 = arith.constant 3 : i32
    %349 = tpu.memref_slice %arg44[%c3_i32_220] : memref<4x!tpu.dma_semaphore, #tpu.memory_space<semaphore_mem>> -> memref<1x!tpu.dma_semaphore, #tpu.memory_space<semaphore_mem>>
    %350 = tpu.memref_squeeze %349 : memref<1x!tpu.dma_semaphore, #tpu.memory_space<semaphore_mem>> -> memref<!tpu.dma_semaphore, #tpu.memory_space<semaphore_mem>>
    tpu.wait_dma2 semaphore(%350 : memref<!tpu.dma_semaphore, #tpu.memory_space<semaphore_mem>>) src(%arg33 : memref<2048x128xbf16, #tpu.memory_space<any>>) dst(%arg43 : memref<2048x128xbf16, #tpu.memory_space<vmem>>)
    %c0_221 = arith.constant 0 : index
    %c0_222 = arith.constant 0 : index
    %351 = vector.load %arg28[%c0_221, %c0_222] : memref<1x128xf32, #tpu.memory_space<vmem>>, vector<1x128xf32>
    %c0_223 = arith.constant 0 : index
    %c0_224 = arith.constant 0 : index
    %352 = vector.load %arg29[%c0_223, %c0_224] : memref<1x128xf32, #tpu.memory_space<vmem>>, vector<1x128xf32>
    %cst_225 = arith.constant dense<0.000000e+00> : vector<8xf32>
    %353 = vector.multi_reduction <add>, %303, %cst_225 [1] : vector<8x128xf32> to vector<8xf32>
    %354 = vector.shape_cast %353 : vector<8xf32> to vector<8x1xf32>
    %cst_226 = arith.constant 1.280000e+02 : f32
    %355 = vector.broadcast %cst_226 : f32 to vector<8x1xf32>
    %356 = arith.divf %354, %355 : vector<8x1xf32>
    %357 = vector.broadcast %356 : vector<8x1xf32> to vector<8x128xf32>
    %358 = arith.subf %303, %357 : vector<8x128xf32>
    %359 = arith.mulf %358, %358 : vector<8x128xf32>
    %cst_227 = arith.constant dense<0.000000e+00> : vector<8xf32>
    %360 = vector.multi_reduction <add>, %359, %cst_227 [1] : vector<8x128xf32> to vector<8xf32>
    %361 = vector.shape_cast %360 : vector<8xf32> to vector<8x1xf32>
    %cst_228 = arith.constant 1.280000e+02 : f32
    %362 = vector.broadcast %cst_228 : f32 to vector<8x1xf32>
    %363 = arith.divf %361, %362 : vector<8x1xf32>
    %364 = vector.broadcast %356 : vector<8x1xf32> to vector<8x128xf32>
    %365 = arith.subf %303, %364 : vector<8x128xf32>
    %cst_229 = arith.constant 9.99999974E-6 : f32
    %366 = vector.broadcast %cst_229 : f32 to vector<8x1xf32>
    %367 = arith.addf %363, %366 : vector<8x1xf32>
    %368 = math.rsqrt %367 : vector<8x1xf32>
    %369 = vector.broadcast %368 : vector<8x1xf32> to vector<8x128xf32>
    %370 = arith.mulf %365, %369 : vector<8x128xf32>
    %371 = vector.broadcast %351 : vector<1x128xf32> to vector<8x128xf32>
    %372 = arith.mulf %370, %371 : vector<8x128xf32>
    %373 = vector.broadcast %352 : vector<1x128xf32> to vector<8x128xf32>
    %374 = arith.addf %372, %373 : vector<8x128xf32>
    %375 = arith.truncf %374 : vector<8x128xf32> to vector<8x128xbf16>
    %c0_230 = arith.constant 0 : index
    %c0_231 = arith.constant 0 : index
    %376 = vector.load %arg42[%c0_230, %c0_231] : memref<128x2048xbf16, #tpu.memory_space<vmem>>, vector<128x2048xbf16>
    %cst_232 = arith.constant dense<0.000000e+00> : vector<8x2048xf32>
    %377 = tpu.matmul %375, %376, %cst_232 {dimension_numbers = #tpu.dot_dimension_numbers<[1], [0], [0], [1], [0, 0, 1, 1], [], []>} : vector<8x128xbf16>, vector<128x2048xbf16>, vector<8x2048xf32> -> vector<8x2048xf32>
    %c0_233 = arith.constant 0 : index
    %c0_234 = arith.constant 0 : index
    %378 = vector.load %arg30[%c0_233, %c0_234] : memref<1x2048xf32, #tpu.memory_space<vmem>>, vector<1x2048xf32>
    %379 = vector.broadcast %378 : vector<1x2048xf32> to vector<8x2048xf32>
    %380 = arith.addf %377, %379 : vector<8x2048xf32>
    %cst_235 = arith.constant 0.000000e+00 : f32
    %381 = vector.broadcast %cst_235 : f32 to vector<8x2048xf32>
    %382 = arith.maximumf %380, %381 : vector<8x2048xf32>
    %383 = arith.truncf %382 : vector<8x2048xf32> to vector<8x2048xbf16>
    %c0_236 = arith.constant 0 : index
    %c0_237 = arith.constant 0 : index
    %384 = vector.load %arg43[%c0_236, %c0_237] : memref<2048x128xbf16, #tpu.memory_space<vmem>>, vector<2048x128xbf16>
    %cst_238 = arith.constant dense<0.000000e+00> : vector<8x128xf32>
    %385 = tpu.matmul %383, %384, %cst_238 {dimension_numbers = #tpu.dot_dimension_numbers<[1], [0], [0], [1], [0, 0, 1, 1], [], []>} : vector<8x2048xbf16>, vector<2048x128xbf16>, vector<8x128xf32> -> vector<8x128xf32>
    %c0_239 = arith.constant 0 : index
    %c0_240 = arith.constant 0 : index
    %386 = vector.load %arg31[%c0_239, %c0_240] : memref<1x128xf32, #tpu.memory_space<vmem>>, vector<1x128xf32>
    %387 = vector.broadcast %386 : vector<1x128xf32> to vector<8x128xf32>
    %388 = arith.addf %385, %387 : vector<8x128xf32>
    %389 = arith.addf %303, %388 : vector<8x128xf32>
    %c0_241 = arith.constant 0 : index
    %c0_242 = arith.constant 0 : index
    %390 = vector.load %arg34[%c0_241, %c0_242] : memref<32x86xf32, #tpu.memory_space<vmem>>, vector<32x86xf32>
    %cst_243 = arith.constant dense<0.000000e+00> : vector<8x86xf32>
    %391 = tpu.matmul %346, %390, %cst_243 {dimension_numbers = #tpu.dot_dimension_numbers<[1], [0], [0], [1], [0, 0, 1, 1], [], []>} : vector<8x32xf32>, vector<32x86xf32>, vector<8x86xf32> -> vector<8x86xf32>
    %c0_244 = arith.constant 0 : index
    %c0_245 = arith.constant 0 : index
    %392 = vector.load %arg35[%c0_244, %c0_245] : memref<128x86xf32, #tpu.memory_space<vmem>>, vector<128x86xf32>
    %cst_246 = arith.constant dense<0.000000e+00> : vector<8x86xf32>
    %393 = tpu.matmul %389, %392, %cst_246 {dimension_numbers = #tpu.dot_dimension_numbers<[1], [0], [0], [1], [0, 0, 1, 1], [], []>} : vector<8x128xf32>, vector<128x86xf32>, vector<8x86xf32> -> vector<8x86xf32>
    %394 = arith.addf %391, %393 : vector<8x86xf32>
    %c0_247 = arith.constant 0 : index
    %c0_248 = arith.constant 0 : index
    %395 = vector.load %arg36[%c0_247, %c0_248] : memref<1x86xf32, #tpu.memory_space<vmem>>, vector<1x86xf32>
    %396 = vector.broadcast %395 : vector<1x86xf32> to vector<8x86xf32>
    %397 = arith.addf %394, %396 : vector<8x86xf32>
    %cst_249 = arith.constant 0.000000e+00 : f32
    %398 = vector.broadcast %cst_249 : f32 to vector<8x86xf32>
    %399 = arith.maximumf %397, %398 : vector<8x86xf32>
    %c0_250 = arith.constant 0 : index
    %c0_251 = arith.constant 0 : index
    %400 = vector.load %arg37[%c0_250, %c0_251] : memref<86x128xf32, #tpu.memory_space<vmem>>, vector<86x128xf32>
    %cst_252 = arith.constant dense<0.000000e+00> : vector<8x128xf32>
    %401 = tpu.matmul %399, %400, %cst_252 {dimension_numbers = #tpu.dot_dimension_numbers<[1], [0], [0], [1], [0, 0, 1, 1], [], []>} : vector<8x86xf32>, vector<86x128xf32>, vector<8x128xf32> -> vector<8x128xf32>
    %c0_253 = arith.constant 0 : index
    %c0_254 = arith.constant 0 : index
    %402 = vector.load %arg38[%c0_253, %c0_254] : memref<1x128xf32, #tpu.memory_space<vmem>>, vector<1x128xf32>
    %403 = vector.broadcast %402 : vector<1x128xf32> to vector<8x128xf32>
    %404 = arith.addf %401, %403 : vector<8x128xf32>
    %c0_255 = arith.constant 0 : index
    %c0_256 = arith.constant 0 : index
    %405 = vector.load %arg39[%c0_255, %c0_256] : memref<8x128xf32, #tpu.memory_space<vmem>>, vector<8x128xf32>
    tpu.vector_store %arg39[%c0_255, %c0_256], %404 {strides = array<i32>} : memref<8x128xf32, #tpu.memory_space<vmem>>, vector<8x128xf32>,
    return
  }
}

</mosaic_0001>

<llo_original>
// kernel: tpu_custom_call.1
$region0: #{tpu_custom_call.1}
  #allocation0 [shape = 'u32[]', space=smem, size = 0x4, offset = 0x4, fixed_abs, tag = 'smem constant byte address 0x4 - core index']
  #allocation1 [shape = 'u32[144,128]{1,0:T(1,128)}', space=vmem, size = 0x12000, scoped, tag = 'internal scratch']
  #allocation2 [shape = 'bf16[32,2048]{1,0:T(16,128)(2,1)}', space=vmem, size = 0x20000, scoped, tag = 'scratch operand']
  #allocation3 [shape = 'bf16[2048,32]{1,0:T(16,128)(2,1)}', space=vmem, size = 0x80000, scoped, tag = 'scratch operand']
  #allocation4 [shape = 'bf16[128,2048]{1,0:T(16,128)(2,1)}', space=vmem, size = 0x80000, scoped, tag = 'scratch operand']
  #allocation5 [shape = 'bf16[2048,128]{1,0:T(16,128)(2,1)}', space=vmem, size = 0x80000, scoped, tag = 'scratch operand']
  #allocation6 [shape = 's32[4]{0}', space=sflag, size = 0x10, scoped, tag = 'scratch operand']
  #allocation41 [shape = 's32[]', space=sflag, size = 0x4, offset = 0, fixed_abs, tag = 'sflag constant byte address 0x0 - dummy sync flag']
  #allocation42 [shape = 's32[]', space=sflag, size = 0x4, offset = 0, fixed_abs, tag = 'sflag constant byte address 0x0 - dummy sync flag']
  #allocation43 [shape = 's32[]', space=sflag, size = 0x4, offset = 0, fixed_abs, tag = 'sflag constant byte address 0x0 - dummy sync flag']
  #allocation44 [shape = 's32[]', space=sflag, size = 0x4, offset = 0, fixed_abs, tag = 'sflag constant byte address 0x0 - dummy sync flag']
  %s0 = inlined_call_operand.smem [shape: u32[40], index: -1, kind: input, shape index: {}]
  %s1 = sld [smem:[%s0]]
  %s2 = scalar_lea.smem %s0, 1
  %s3 = sld [smem:[%s2]]
  %s4 = scalar_lea.smem %s0, 2
  %s5 = sld [smem:[%s4]]
  %s6 = scalar_lea.smem %s0, 3
  %s7 = sld [smem:[%s6]]
  %s8 = scalar_lea.smem %s0, 4
  %s9 = sld [smem:[%s8]]
  %s10 = scalar_lea.smem %s0, 5
  %s11 = sld [smem:[%s10]]
  %s12 = scalar_lea.smem %s0, 6
  %s13 = sld [smem:[%s12]]
  %s14 = scalar_lea.smem %s0, 7
  %s15 = sld [smem:[%s14]]
  %s16 = scalar_lea.smem %s0, 8
  %s17 = sld [smem:[%s16]]
  %s18 = scalar_lea.smem %s0, 9
  %s19 = sld [smem:[%s18]]
  %s20 = scalar_lea.smem %s0, 10
  %s21 = sld [smem:[%s20]]
  %s22 = scalar_lea.smem %s0, 11
  %s23 = sld [smem:[%s22]]
  %s24 = scalar_lea.smem %s0, 12
  %s25 = sld [smem:[%s24]]
  %s26 = scalar_lea.smem %s0, 13
  %s27 = sld [smem:[%s26]]
  %s28 = scalar_lea.smem %s0, 14
  %s29 = sld [smem:[%s28]]
  %s30 = scalar_lea.smem %s0, 15
  %s31 = sld [smem:[%s30]]
  %s32 = scalar_lea.smem %s0, 16
  %s33 = sld [smem:[%s32]]
  %s34 = scalar_lea.smem %s0, 17
  %s35 = sld [smem:[%s34]]
  %s36 = scalar_lea.smem %s0, 18
  %s37 = sld [smem:[%s36]]
  %s38 = scalar_lea.smem %s0, 19
  %s39 = sld [smem:[%s38]]
  %s40 = scalar_lea.smem %s0, 20
  %s41 = sld [smem:[%s40]]
  %s42 = scalar_lea.smem %s0, 21
  %s43 = sld [smem:[%s42]]
  %s44 = scalar_lea.smem %s0, 22
  %s45 = sld [smem:[%s44]]
  %s46 = scalar_lea.smem %s0, 23
  %s47 = sld [smem:[%s46]]
  %s48 = scalar_lea.smem %s0, 24
  %s49 = sld [smem:[%s48]]
  %s50 = scalar_lea.smem %s0, 25
  %s51 = sld [smem:[%s50]]
  %s52 = scalar_lea.smem %s0, 26
  %s53 = sld [smem:[%s52]]
  %s54 = scalar_lea.smem %s0, 27
  %s55 = sld [smem:[%s54]]
  %s56 = scalar_lea.smem %s0, 28
  %s57 = sld [smem:[%s56]]
  %s58 = scalar_lea.smem %s0, 29
  %s59 = sld [smem:[%s58]]
  %s60 = scalar_lea.smem %s0, 30
  %s61 = sld [smem:[%s60]]
  %s62 = scalar_lea.smem %s0, 31
  %s63 = sld [smem:[%s62]]
  %s64 = scalar_lea.smem %s0, 32
  %s65 = sld [smem:[%s64]]
  %s66 = scalar_lea.smem %s0, 33
  %s67 = sld [smem:[%s66]]
  %s68 = scalar_lea.smem %s0, 34
  %s69 = sld [smem:[%s68]]
  %s70 = scalar_lea.smem %s0, 35
  %s71 = sld [smem:[%s70]]
  %s72 = scalar_lea.smem %s0, 36
  %s73 = sld [smem:[%s72]]
  %s74 = scalar_lea.smem %s0, 37
  %s75 = sld [smem:[%s74]]
  %s76 = scalar_lea.smem %s0, 38
  %s77 = sld [smem:[%s76]]
  %s78 = scalar_lea.smem %s0, 39
  %s79 = sld [smem:[%s78]]
  %s80 = sld [smem:[#allocation0]]
  $region376: #{tpu_custom_call.1} parent=0
    _
  %s82 = ssub.s32 1, %s80
  %s83 = scalar_select 0, %s82, %s80
  $region1: #{tpu_custom_call.1} parent=0
    #allocation7 [shape = 'u8[4096]{0}', space=vmem, size = 0x1000, scoped, tag = 'input window, operand 0, single buffered']
    #allocation8 [shape = 's32[1]{0}', space=sflag, size = 0x4, scoped, tag = 'scoped memory for tpu_custom_call.1']
    #allocation9 [shape = 's32[1]{0}', space=sflag, size = 0x4, scoped, tag = 'scoped memory for tpu_custom_call.1']
    #allocation10 [shape = 'u8[4096]{0}', space=vmem, size = 0x1000, scoped, tag = 'input window, operand 1, single buffered']
    #allocation11 [shape = 's32[1]{0}', space=sflag, size = 0x4, scoped, tag = 'scoped memory for tpu_custom_call.1']
    #allocation12 [shape = 'u8[512]{0}', space=vmem, size = 0x400, scoped, tag = 'input window, operand 3, single buffered']
    #allocation13 [shape = 'u8[1024]{0}', space=vmem, size = 0x400, scoped, tag = 'input window, operand 5, single buffered']
    #allocation14 [shape = 's32[1]{0}', space=sflag, size = 0x4, scoped, tag = 'scoped memory for tpu_custom_call.1']
    #allocation15 [shape = 'u8[1024]{0}', space=vmem, size = 0x400, scoped, tag = 'input window, operand 7, single buffered']
    #allocation16 [shape = 'u8[1024]{0}', space=vmem, size = 0x400, scoped, tag = 'input window, operand 9, single buffered']
    #allocation17 [shape = 's32[1]{0}', space=sflag, size = 0x4, scoped, tag = 'scoped memory for tpu_custom_call.1']
    #allocation18 [shape = 'u8[8192]{0}', space=vmem, size = 0x2000, scoped, tag = 'input window, operand 10, single buffered']
    #allocation19 [shape = 'u8[512]{0}', space=vmem, size = 0x400, scoped, tag = 'input window, operand 11, single buffered']
    #allocation20 [shape = 's32[1]{0}', space=sflag, size = 0x4, scoped, tag = 'scoped memory for tpu_custom_call.1']
    #allocation21 [shape = 'u8[512]{0}', space=vmem, size = 0x400, scoped, tag = 'input window, operand 12, single buffered']
    #allocation22 [shape = 'u8[512]{0}', space=vmem, size = 0x400, scoped, tag = 'input window, operand 13, single buffered']
    #allocation23 [shape = 's32[1]{0}', space=sflag, size = 0x4, scoped, tag = 'scoped memory for tpu_custom_call.1']
    #allocation24 [shape = 'u8[8192]{0}', space=vmem, size = 0x2000, scoped, tag = 'input window, operand 14, single buffered']
    #allocation25 [shape = 'u8[512]{0}', space=vmem, size = 0x400, scoped, tag = 'input window, operand 15, single buffered']
    #allocation26 [shape = 's32[1]{0}', space=sflag, size = 0x4, scoped, tag = 'scoped memory for tpu_custom_call.1']
    #allocation27 [shape = 'u8[512]{0}', space=vmem, size = 0x400, scoped, tag = 'input window, operand 19, single buffered']
    #allocation28 [shape = 'u8[2048]{0}', space=vmem, size = 0x800, scoped, tag = 'input window, operand 25, single buffered']
    #allocation29 [shape = 's32[1]{0}', space=sflag, size = 0x4, scoped, tag = 'scoped memory for tpu_custom_call.1']
    #allocation30 [shape = 'u8[32768]{0}', space=vmem, size = 0x8000, scoped, tag = 'input window, operand 26, single buffered']
    #allocation31 [shape = 'u8[512]{0}', space=vmem, size = 0x400, scoped, tag = 'input window, operand 27, single buffered']
    #allocation32 [shape = 's32[1]{0}', space=sflag, size = 0x4, scoped, tag = 'scoped memory for tpu_custom_call.1']
    #allocation33 [shape = 'u8[512]{0}', space=vmem, size = 0x400, scoped, tag = 'input window, operand 28, single buffered']
    #allocation34 [shape = 'u8[512]{0}', space=vmem, size = 0x400, scoped, tag = 'input window, operand 29, single buffered']
    #allocation35 [shape = 's32[1]{0}', space=sflag, size = 0x4, scoped, tag = 'scoped memory for tpu_custom_call.1']
    #allocation36 [shape = 'u8[8192]{0}', space=vmem, size = 0x2000, scoped, tag = 'input window, operand 30, single buffered']
    #allocation37 [shape = 'u8[512]{0}', space=vmem, size = 0x400, scoped, tag = 'input window, operand 31, single buffered']
    #allocation38 [shape = 's32[1]{0}', space=sflag, size = 0x4, scoped, tag = 'scoped memory for tpu_custom_call.1']
    #allocation39 [shape = 'u8[45056]{0}', space=vmem, size = 0xb000, scoped, tag = 'input window, operand 37, single buffered']
    #allocation40 [shape = 'u8[4096]{0}', space=vmem, size = 0x1000, scoped, tag = 'output window, operand 0, single buffered']
    %84 = vsyncpa [#allocation8], 0
    %85 = vsyncpa [#allocation11], 0
    %86 = vsyncpa [#allocation14], 0
    %87 = vsyncpa [#allocation17], 0
    %88 = vsyncpa [#allocation20], 0
    %89 = vsyncpa [#allocation23], 0
    %90 = vsyncpa [#allocation26], 0
    %91 = vsyncpa [#allocation29], 0
    %92 = vsyncpa [#allocation32], 0
    %93 = vsyncpa [#allocation35], 0
    %94 = vsyncpa [#allocation38], 0
    %95 = vsyncpa [#allocation9], 0
    // Predicated region
    $region2: #{tpu_custom_call.1} parent=1 // pred_check
      _
    $region3: #{tpu_custom_call.1} parent=1 // pred_check_branch
      %97 = sbr.rel (0) target = $region5
    $region4: #{tpu_custom_call.1} parent=1 // pred_region
      %s99 = ssub.s32 128, 128
      %100 = vsyncadd [#allocation8], %s99
      %s102 = sshll.u32 [#allocation7], 4
      %s103 = int_to_ptr.vmem [resolvable:$true] %s102
      %105 = dma.hbm_to_vmem [thread:$0]  %s1, 128, %s103, [#allocation8]
    $region5: #{tpu_custom_call.1} parent=1 // pred_fallthru
      _
    // Predicated region
    $region6: #{tpu_custom_call.1} parent=1 // pred_check
      _
    $region7: #{tpu_custom_call.1} parent=1 // pred_check_branch
      %107 = sbr.rel (0) target = $region9
    $region8: #{tpu_custom_call.1} parent=1 // pred_region
      %s109 = ssub.s32 128, 128
      %110 = vsyncadd [#allocation11], %s109
      %s112 = sshll.u32 [#allocation10], 4
      %s113 = int_to_ptr.vmem [resolvable:$true] %s112
      %115 = dma.hbm_to_vmem [thread:$0]  %s3, 128, %s113, [#allocation11]
    $region9: #{tpu_custom_call.1} parent=1 // pred_fallthru
      _
    // Predicated region
    $region10: #{tpu_custom_call.1} parent=1 // pred_check
      _
    $region11: #{tpu_custom_call.1} parent=1 // pred_check_branch
      %117 = sbr.rel (0) target = $region13
    $region12: #{tpu_custom_call.1} parent=1 // pred_region
      _
    $region13: #{tpu_custom_call.1} parent=1 // pred_fallthru
      _
    // Predicated region
    $region14: #{tpu_custom_call.1} parent=1 // pred_check
      _
    $region15: #{tpu_custom_call.1} parent=1 // pred_check_branch
      %119 = sbr.rel (0) target = $region17
    $region16: #{tpu_custom_call.1} parent=1 // pred_region
      %s121 = ssub.s32 16, 16
      %122 = vsyncadd [#allocation11], %s121
      %s124 = sshll.u32 [#allocation12], 4
      %s125 = int_to_ptr.vmem [resolvable:$true] %s124
      %127 = dma.hbm_to_vmem [thread:$0]  %s7, 16, %s125, [#allocation11]
    $region17: #{tpu_custom_call.1} parent=1 // pred_fallthru
      _
    // Predicated region
    $region18: #{tpu_custom_call.1} parent=1 // pred_check
      _
    $region19: #{tpu_custom_call.1} parent=1 // pred_check_branch
      %129 = sbr.rel (0) target = $region21
    $region20: #{tpu_custom_call.1} parent=1 // pred_region
      _
    $region21: #{tpu_custom_call.1} parent=1 // pred_fallthru
      _
    // Predicated region
    $region22: #{tpu_custom_call.1} parent=1 // pred_check
      _
    $region23: #{tpu_custom_call.1} parent=1 // pred_check_branch
      %131 = sbr.rel (0) target = $region25
    $region24: #{tpu_custom_call.1} parent=1 // pred_region
      %s133 = ssub.s32 32, 32
      %134 = vsyncadd [#allocation14], %s133
      %s135 = sshll.u32 [#allocation13], 4
      %s136 = int_to_ptr.vmem [resolvable:$true] %s135
      %141 = dma.hbm_to_vmem [thread:$0]  %s11, 32, %s136, [#allocation14], 16, 16, 1
    $region25: #{tpu_custom_call.1} parent=1 // pred_fallthru
      _
    // Predicated region
    $region26: #{tpu_custom_call.1} parent=1 // pred_check
      _
    $region27: #{tpu_custom_call.1} parent=1 // pred_check_branch
      %143 = sbr.rel (0) target = $region29
    $region28: #{tpu_custom_call.1} parent=1 // pred_region
      _
    $region29: #{tpu_custom_call.1} parent=1 // pred_fallthru
      _
    // Predicated region
    $region30: #{tpu_custom_call.1} parent=1 // pred_check
      _
    $region31: #{tpu_custom_call.1} parent=1 // pred_check_branch
      %145 = sbr.rel (0) target = $region33
    $region32: #{tpu_custom_call.1} parent=1 // pred_region
      %s147 = ssub.s32 32, 32
      %148 = vsyncadd [#allocation14], %s147
      %s149 = sshll.u32 [#allocation15], 4
      %s150 = int_to_ptr.vmem [resolvable:$true] %s149
      %155 = dma.hbm_to_vmem [thread:$0]  %s15, 32, %s150, [#allocation14], 16, 16, 1
    $region33: #{tpu_custom_call.1} parent=1 // pred_fallthru
      _
    // Predicated region
    $region34: #{tpu_custom_call.1} parent=1 // pred_check
      _
    $region35: #{tpu_custom_call.1} parent=1 // pred_check_branch
      %157 = sbr.rel (0) target = $region37
    $region36: #{tpu_custom_call.1} parent=1 // pred_region
      _
    $region37: #{tpu_custom_call.1} parent=1 // pred_fallthru
      _
    // Predicated region
    $region38: #{tpu_custom_call.1} parent=1 // pred_check
      _
    $region39: #{tpu_custom_call.1} parent=1 // pred_check_branch
      %159 = sbr.rel (0) target = $region41
    $region40: #{tpu_custom_call.1} parent=1 // pred_region
      %s161 = ssub.s32 32, 32
      %162 = vsyncadd [#allocation17], %s161
      %s163 = sshll.u32 [#allocation16], 4
      %s164 = int_to_ptr.vmem [resolvable:$true] %s163
      %169 = dma.hbm_to_vmem [thread:$0]  %s19, 32, %s164, [#allocation17], 16, 16, 1
    $region41: #{tpu_custom_call.1} parent=1 // pred_fallthru
      _
    // Predicated region
    $region42: #{tpu_custom_call.1} parent=1 // pred_check
      _
    $region43: #{tpu_custom_call.1} parent=1 // pred_check_branch
      %171 = sbr.rel (0) target = $region45
    $region44: #{tpu_custom_call.1} parent=1 // pred_region
      %s173 = ssub.s32 256, 256
      %174 = vsyncadd [#allocation17], %s173
      %s175 = sshll.u32 [#allocation18], 4
      %s176 = int_to_ptr.vmem [resolvable:$true] %s175
      %181 = dma.hbm_to_vmem [thread:$0]  %s21, 256, %s176, [#allocation17], 64, 64, 4
    $region45: #{tpu_custom_call.1} parent=1 // pred_fallthru
      _
    // Predicated region
    $region46: #{tpu_custom_call.1} parent=1 // pred_check
      _
    $region47: #{tpu_custom_call.1} parent=1 // pred_check_branch
      %183 = sbr.rel (0) target = $region49
    $region48: #{tpu_custom_call.1} parent=1 // pred_region
      %s185 = ssub.s32 16, 16
      %186 = vsyncadd [#allocation20], %s185
      %s188 = sshll.u32 [#allocation19], 4
      %s189 = int_to_ptr.vmem [resolvable:$true] %s188
      %191 = dma.hbm_to_vmem [thread:$0]  %s23, 16, %s189, [#allocation20]
    $region49: #{tpu_custom_call.1} parent=1 // pred_fallthru
      _
    // Predicated region
    $region50: #{tpu_custom_call.1} parent=1 // pred_check
      _
    $region51: #{tpu_custom_call.1} parent=1 // pred_check_branch
      %193 = sbr.rel (0) target = $region53
    $region52: #{tpu_custom_call.1} parent=1 // pred_region
      %s195 = ssub.s32 16, 16
      %196 = vsyncadd [#allocation20], %s195
      %s198 = sshll.u32 [#allocation21], 4
      %s199 = int_to_ptr.vmem [resolvable:$true] %s198
      %201 = dma.hbm_to_vmem [thread:$0]  %s25, 16, %s199, [#allocation20]
    $region53: #{tpu_custom_call.1} parent=1 // pred_fallthru
      _
    // Predicated region
    $region54: #{tpu_custom_call.1} parent=1 // pred_check
      _
    $region55: #{tpu_custom_call.1} parent=1 // pred_check_branch
      %203 = sbr.rel (0) target = $region57
    $region56: #{tpu_custom_call.1} parent=1 // pred_region
      %s205 = ssub.s32 16, 16
      %206 = vsyncadd [#allocation23], %s205
      %s208 = sshll.u32 [#allocation22], 4
      %s209 = int_to_ptr.vmem [resolvable:$true] %s208
      %211 = dma.hbm_to_vmem [thread:$0]  %s27, 16, %s209, [#allocation23]
    $region57: #{tpu_custom_call.1} parent=1 // pred_fallthru
      _
    // Predicated region
    $region58: #{tpu_custom_call.1} parent=1 // pred_check
      _
    $region59: #{tpu_custom_call.1} parent=1 // pred_check_branch
      %213 = sbr.rel (0) target = $region61
    $region60: #{tpu_custom_call.1} parent=1 // pred_region
      %s215 = ssub.s32 256, 256
      %216 = vsyncadd [#allocation23], %s215
      %s218 = sshll.u32 [#allocation24], 4
      %s219 = int_to_ptr.vmem [resolvable:$true] %s218
      %221 = dma.hbm_to_vmem [thread:$0]  %s29, 256, %s219, [#allocation23]
    $region61: #{tpu_custom_call.1} parent=1 // pred_fallthru
      _
    // Predicated region
    $region62: #{tpu_custom_call.1} parent=1 // pred_check
      _
    $region63: #{tpu_custom_call.1} parent=1 // pred_check_branch
      %223 = sbr.rel (0) target = $region65
    $region64: #{tpu_custom_call.1} parent=1 // pred_region
      %s225 = ssub.s32 16, 16
      %226 = vsyncadd [#allocation26], %s225
      %s228 = sshll.u32 [#allocation25], 4
      %s229 = int_to_ptr.vmem [resolvable:$true] %s228
      %231 = dma.hbm_to_vmem [thread:$0]  %s31, 16, %s229, [#allocation26]
    $region65: #{tpu_custom_call.1} parent=1 // pred_fallthru
      _
    // Predicated region
    $region66: #{tpu_custom_call.1} parent=1 // pred_check
      _
    $region67: #{tpu_custom_call.1} parent=1 // pred_check_branch
      %233 = sbr.rel (0) target = $region69
    $region68: #{tpu_custom_call.1} parent=1 // pred_region
      _
    $region69: #{tpu_custom_call.1} parent=1 // pred_fallthru
      _
    // Predicated region
    $region70: #{tpu_custom_call.1} parent=1 // pred_check
      _
    $region71: #{tpu_custom_call.1} parent=1 // pred_check_branch
      %235 = sbr.rel (0) target = $region73
    $region72: #{tpu_custom_call.1} parent=1 // pred_region
      %s237 = ssub.s32 16, 16
      %238 = vsyncadd [#allocation26], %s237
      %s240 = sshll.u32 [#allocation27], 4
      %s241 = int_to_ptr.vmem [resolvable:$true] %s240
      %243 = dma.hbm_to_vmem [thread:$0]  %s39, 16, %s241, [#allocation26]
    $region73: #{tpu_custom_call.1} parent=1 // pred_fallthru
      _
    // Predicated region
    $region74: #{tpu_custom_call.1} parent=1 // pred_check
      _
    $region75: #{tpu_custom_call.1} parent=1 // pred_check_branch
      %245 = sbr.rel (0) target = $region77
    $region76: #{tpu_custom_call.1} parent=1 // pred_region
      _
    $region77: #{tpu_custom_call.1} parent=1 // pred_fallthru
      _
    // Predicated region
    $region78: #{tpu_custom_call.1} parent=1 // pred_check
      _
    $region79: #{tpu_custom_call.1} parent=1 // pred_check_branch
      %247 = sbr.rel (0) target = $region81
    $region80: #{tpu_custom_call.1} parent=1 // pred_region
      _
    $region81: #{tpu_custom_call.1} parent=1 // pred_fallthru
      _
    // Predicated region
    $region82: #{tpu_custom_call.1} parent=1 // pred_check
      _
    $region83: #{tpu_custom_call.1} parent=1 // pred_check_branch
      %249 = sbr.rel (0) target = $region85
    $region84: #{tpu_custom_call.1} parent=1 // pred_region
      _
    $region85: #{tpu_custom_call.1} parent=1 // pred_fallthru
      _
    // Predicated region
    $region86: #{tpu_custom_call.1} parent=1 // pred_check
      _
    $region87: #{tpu_custom_call.1} parent=1 // pred_check_branch
      %251 = sbr.rel (0) target = $region89
    $region88: #{tpu_custom_call.1} parent=1 // pred_region
      _
    $region89: #{tpu_custom_call.1} parent=1 // pred_fallthru
      _
    // Predicated region
    $region90: #{tpu_custom_call.1} parent=1 // pred_check
      _
    $region91: #{tpu_custom_call.1} parent=1 // pred_check_branch
      %253 = sbr.rel (0) target = $region93
    $region92: #{tpu_custom_call.1} parent=1 // pred_region
      _
    $region93: #{tpu_custom_call.1} parent=1 // pred_fallthru
      _
    // Predicated region
    $region94: #{tpu_custom_call.1} parent=1 // pred_check
      _
    $region95: #{tpu_custom_call.1} parent=1 // pred_check_branch
      %255 = sbr.rel (0) target = $region97
    $region96: #{tpu_custom_call.1} parent=1 // pred_region
      %s257 = ssub.s32 64, 64
      %258 = vsyncadd [#allocation29], %s257
      %s259 = sshll.u32 [#allocation28], 4
      %s260 = int_to_ptr.vmem [resolvable:$true] %s259
      %265 = dma.hbm_to_vmem [thread:$0]  %s51, 64, %s260, [#allocation29], 16, 16, 1
    $region97: #{tpu_custom_call.1} parent=1 // pred_fallthru
      _
    // Predicated region
    $region98: #{tpu_custom_call.1} parent=1 // pred_check
      _
    $region99: #{tpu_custom_call.1} parent=1 // pred_check_branch
      %267 = sbr.rel (0) target = $region101
    $region100: #{tpu_custom_call.1} parent=1 // pred_region
      %s269 = ssub.s32 1024, 1024
      %270 = vsyncadd [#allocation29], %s269
      %s271 = sshll.u32 [#allocation30], 4
      %s272 = int_to_ptr.vmem [resolvable:$true] %s271
      %277 = dma.hbm_to_vmem [thread:$0]  %s53, 1024, %s272, [#allocation29], 64, 64, 4
    $region101: #{tpu_custom_call.1} parent=1 // pred_fallthru
      _
    // Predicated region
    $region102: #{tpu_custom_call.1} parent=1 // pred_check
      _
    $region103: #{tpu_custom_call.1} parent=1 // pred_check_branch
      %279 = sbr.rel (0) target = $region105
    $region104: #{tpu_custom_call.1} parent=1 // pred_region
      %s281 = ssub.s32 16, 16
      %282 = vsyncadd [#allocation32], %s281
      %s284 = sshll.u32 [#allocation31], 4
      %s285 = int_to_ptr.vmem [resolvable:$true] %s284
      %287 = dma.hbm_to_vmem [thread:$0]  %s55, 16, %s285, [#allocation32]
    $region105: #{tpu_custom_call.1} parent=1 // pred_fallthru
      _
    // Predicated region
    $region106: #{tpu_custom_call.1} parent=1 // pred_check
      _
    $region107: #{tpu_custom_call.1} parent=1 // pred_check_branch
      %289 = sbr.rel (0) target = $region109
    $region108: #{tpu_custom_call.1} parent=1 // pred_region
      %s291 = ssub.s32 16, 16
      %292 = vsyncadd [#allocation32], %s291
      %s294 = sshll.u32 [#allocation33], 4
      %s295 = int_to_ptr.vmem [resolvable:$true] %s294
      %297 = dma.hbm_to_vmem [thread:$0]  %s57, 16, %s295, [#allocation32]
    $region109: #{tpu_custom_call.1} parent=1 // pred_fallthru
      _
    // Predicated region
    $region110: #{tpu_custom_call.1} parent=1 // pred_check
      _
    $region111: #{tpu_custom_call.1} parent=1 // pred_check_branch
      %299 = sbr.rel (0) target = $region113
    $region112: #{tpu_custom_call.1} parent=1 // pred_region
      %s301 = ssub.s32 16, 16
      %302 = vsyncadd [#allocation35], %s301
      %s304 = sshll.u32 [#allocation34], 4
      %s305 = int_to_ptr.vmem [resolvable:$true] %s304
      %307 = dma.hbm_to_vmem [thread:$0]  %s59, 16, %s305, [#allocation35]
    $region113: #{tpu_custom_call.1} parent=1 // pred_fallthru
      _
    // Predicated region
    $region114: #{tpu_custom_call.1} parent=1 // pred_check
      _
    $region115: #{tpu_custom_call.1} parent=1 // pred_check_branch
      %309 = sbr.rel (0) target = $region117
    $region116: #{tpu_custom_call.1} parent=1 // pred_region
      %s311 = ssub.s32 256, 256
      %312 = vsyncadd [#allocation35], %s311
      %s314 = sshll.u32 [#allocation36], 4
      %s315 = int_to_ptr.vmem [resolvable:$true] %s314
      %317 = dma.hbm_to_vmem [thread:$0]  %s61, 256, %s315, [#allocation35]
    $region117: #{tpu_custom_call.1} parent=1 // pred_fallthru
      _
    // Predicated region
    $region118: #{tpu_custom_call.1} parent=1 // pred_check
      _
    $region119: #{tpu_custom_call.1} parent=1 // pred_check_branch
      %319 = sbr.rel (0) target = $region121
    $region120: #{tpu_custom_call.1} parent=1 // pred_region
      %s321 = ssub.s32 16, 16
      %322 = vsyncadd [#allocation38], %s321
      %s324 = sshll.u32 [#allocation37], 4
      %s325 = int_to_ptr.vmem [resolvable:$true] %s324
      %327 = dma.hbm_to_vmem [thread:$0]  %s63, 16, %s325, [#allocation38]
    $region121: #{tpu_custom_call.1} parent=1 // pred_fallthru
      _
    // Predicated region
    $region122: #{tpu_custom_call.1} parent=1 // pred_check
      _
    $region123: #{tpu_custom_call.1} parent=1 // pred_check_branch
      %329 = sbr.rel (0) target = $region125
    $region124: #{tpu_custom_call.1} parent=1 // pred_region
      _
    $region125: #{tpu_custom_call.1} parent=1 // pred_fallthru
      _
    // Predicated region
    $region126: #{tpu_custom_call.1} parent=1 // pred_check
      _
    $region127: #{tpu_custom_call.1} parent=1 // pred_check_branch
      %331 = sbr.rel (0) target = $region129
    $region128: #{tpu_custom_call.1} parent=1 // pred_region
      _
    $region129: #{tpu_custom_call.1} parent=1 // pred_fallthru
      _
    // Predicated region
    $region130: #{tpu_custom_call.1} parent=1 // pred_check
      _
    $region131: #{tpu_custom_call.1} parent=1 // pred_check_branch
      %333 = sbr.rel (0) target = $region133
    $region132: #{tpu_custom_call.1} parent=1 // pred_region
      _
    $region133: #{tpu_custom_call.1} parent=1 // pred_fallthru
      _
    // Predicated region
    $region134: #{tpu_custom_call.1} parent=1 // pred_check
      _
    $region135: #{tpu_custom_call.1} parent=1 // pred_check_branch
      %335 = sbr.rel (0) target = $region137
    $region136: #{tpu_custom_call.1} parent=1 // pred_region
      %s337 = ssub.s32 1408, 1408
      %338 = vsyncadd [#allocation38], %s337
      %s339 = sshll.u32 [#allocation39], 4
      %s340 = int_to_ptr.vmem [resolvable:$true] %s339
      %345 = dma.hbm_to_vmem [thread:$0]  %s75, 1408, %s340, [#allocation38], 128, 128, 8
    $region137: #{tpu_custom_call.1} parent=1 // pred_fallthru
      _
    // Predicated region
    $region138: #{tpu_custom_call.1} parent=1 // pred_check
      _
    $region139: #{tpu_custom_call.1} parent=1 // pred_check_branch
      %347 = sbr.rel (0) target = $region141
    $region140: #{tpu_custom_call.1} parent=1 // pred_region
      _
    $region141: #{tpu_custom_call.1} parent=1 // pred_fallthru
      _
    // Predicated region
    $region142: #{tpu_custom_call.1} parent=1 // pred_check
      _
    $region143: #{tpu_custom_call.1} parent=1 // pred_check_branch
      %349 = sbr.rel (0) target = $region145
    $region144: #{tpu_custom_call.1} parent=1 // pred_region
      %350 = dma.done [#allocation8], 128
    $region145: #{tpu_custom_call.1} parent=1 // pred_fallthru
      _
    // Predicated region
    $region146: #{tpu_custom_call.1} parent=1 // pred_check
      _
    $region147: #{tpu_custom_call.1} parent=1 // pred_check_branch
      %352 = sbr.rel (0) target = $region149
    $region148: #{tpu_custom_call.1} parent=1 // pred_region
      %353 = dma.done [#allocation11], 128
    $region149: #{tpu_custom_call.1} parent=1 // pred_fallthru
      _
    // Predicated region
    $region150: #{tpu_custom_call.1} parent=1 // pred_check
      _
    $region151: #{tpu_custom_call.1} parent=1 // pred_check_branch
      %355 = sbr.rel (0) target = $region153
    $region152: #{tpu_custom_call.1} parent=1 // pred_region
      %356 = dma.done [#allocation11], 16
    $region153: #{tpu_custom_call.1} parent=1 // pred_fallthru
      _
    // Predicated region
    $region154: #{tpu_custom_call.1} parent=1 // pred_check
      _
    $region155: #{tpu_custom_call.1} parent=1 // pred_check_branch
      %358 = sbr.rel (0) target = $region157
    $region156: #{tpu_custom_call.1} parent=1 // pred_region
      %359 = dma.done [#allocation14], 32
    $region157: #{tpu_custom_call.1} parent=1 // pred_fallthru
      _
    // Predicated region
    $region158: #{tpu_custom_call.1} parent=1 // pred_check
      _
    $region159: #{tpu_custom_call.1} parent=1 // pred_check_branch
      %361 = sbr.rel (0) target = $region161
    $region160: #{tpu_custom_call.1} parent=1 // pred_region
      %362 = dma.done [#allocation14], 32
    $region161: #{tpu_custom_call.1} parent=1 // pred_fallthru
      _
    // Predicated region
    $region162: #{tpu_custom_call.1} parent=1 // pred_check
      _
    $region163: #{tpu_custom_call.1} parent=1 // pred_check_branch
      %364 = sbr.rel (0) target = $region165
    $region164: #{tpu_custom_call.1} parent=1 // pred_region
      %365 = dma.done [#allocation17], 32
    $region165: #{tpu_custom_call.1} parent=1 // pred_fallthru
      _
    // Predicated region
    $region166: #{tpu_custom_call.1} parent=1 // pred_check
      _
    $region167: #{tpu_custom_call.1} parent=1 // pred_check_branch
      %367 = sbr.rel (0) target = $region169
    $region168: #{tpu_custom_call.1} parent=1 // pred_region
      %368 = dma.done [#allocation17], 256
    $region169: #{tpu_custom_call.1} parent=1 // pred_fallthru
      _
    // Predicated region
    $region170: #{tpu_custom_call.1} parent=1 // pred_check
      _
    $region171: #{tpu_custom_call.1} parent=1 // pred_check_branch
      %370 = sbr.rel (0) target = $region173
    $region172: #{tpu_custom_call.1} parent=1 // pred_region
      %371 = dma.done [#allocation20], 16
    $region173: #{tpu_custom_call.1} parent=1 // pred_fallthru
      _
    // Predicated region
    $region174: #{tpu_custom_call.1} parent=1 // pred_check
      _
    $region175: #{tpu_custom_call.1} parent=1 // pred_check_branch
      %373 = sbr.rel (0) target = $region177
    $region176: #{tpu_custom_call.1} parent=1 // pred_region
      %374 = dma.done [#allocation20], 16
    $region177: #{tpu_custom_call.1} parent=1 // pred_fallthru
      _
    // Predicated region
    $region178: #{tpu_custom_call.1} parent=1 // pred_check
      _
    $region179: #{tpu_custom_call.1} parent=1 // pred_check_branch
      %376 = sbr.rel (0) target = $region181
    $region180: #{tpu_custom_call.1} parent=1 // pred_region
      %377 = dma.done [#allocation23], 16
    $region181: #{tpu_custom_call.1} parent=1 // pred_fallthru
      _
    // Predicated region
    $region182: #{tpu_custom_call.1} parent=1 // pred_check
      _
    $region183: #{tpu_custom_call.1} parent=1 // pred_check_branch
      %379 = sbr.rel (0) target = $region185
    $region184: #{tpu_custom_call.1} parent=1 // pred_region
      %380 = dma.done [#allocation23], 256
    $region185: #{tpu_custom_call.1} parent=1 // pred_fallthru
      _
    // Predicated region
    $region186: #{tpu_custom_call.1} parent=1 // pred_check
      _
    $region187: #{tpu_custom_call.1} parent=1 // pred_check_branch
      %382 = sbr.rel (0) target = $region189
    $region188: #{tpu_custom_call.1} parent=1 // pred_region
      %383 = dma.done [#allocation26], 16
    $region189: #{tpu_custom_call.1} parent=1 // pred_fallthru
      _
    // Predicated region
    $region190: #{tpu_custom_call.1} parent=1 // pred_check
      _
    $region191: #{tpu_custom_call.1} parent=1 // pred_check_branch
      %385 = sbr.rel (0) target = $region193
    $region192: #{tpu_custom_call.1} parent=1 // pred_region
      %386 = dma.done [#allocation26], 16
    $region193: #{tpu_custom_call.1} parent=1 // pred_fallthru
      _
    // Predicated region
    $region194: #{tpu_custom_call.1} parent=1 // pred_check
      _
    $region195: #{tpu_custom_call.1} parent=1 // pred_check_branch
      %388 = sbr.rel (0) target = $region197
    $region196: #{tpu_custom_call.1} parent=1 // pred_region
      %389 = dma.done [#allocation29], 64
    $region197: #{tpu_custom_call.1} parent=1 // pred_fallthru
      _
    // Predicated region
    $region198: #{tpu_custom_call.1} parent=1 // pred_check
      _
    $region199: #{tpu_custom_call.1} parent=1 // pred_check_branch
      %391 = sbr.rel (0) target = $region201
    $region200: #{tpu_custom_call.1} parent=1 // pred_region
      %392 = dma.done [#allocation29], 1024
    $region201: #{tpu_custom_call.1} parent=1 // pred_fallthru
      _
    // Predicated region
    $region202: #{tpu_custom_call.1} parent=1 // pred_check
      _
    $region203: #{tpu_custom_call.1} parent=1 // pred_check_branch
      %394 = sbr.rel (0) target = $region205
    $region204: #{tpu_custom_call.1} parent=1 // pred_region
      %395 = dma.done [#allocation32], 16
    $region205: #{tpu_custom_call.1} parent=1 // pred_fallthru
      _
    // Predicated region
    $region206: #{tpu_custom_call.1} parent=1 // pred_check
      _
    $region207: #{tpu_custom_call.1} parent=1 // pred_check_branch
      %397 = sbr.rel (0) target = $region209
    $region208: #{tpu_custom_call.1} parent=1 // pred_region
      %398 = dma.done [#allocation32], 16
    $region209: #{tpu_custom_call.1} parent=1 // pred_fallthru
      _
    // Predicated region
    $region210: #{tpu_custom_call.1} parent=1 // pred_check
      _
    $region211: #{tpu_custom_call.1} parent=1 // pred_check_branch
      %400 = sbr.rel (0) target = $region213
    $region212: #{tpu_custom_call.1} parent=1 // pred_region
      %401 = dma.done [#allocation35], 16
    $region213: #{tpu_custom_call.1} parent=1 // pred_fallthru
      _
    // Predicated region
    $region214: #{tpu_custom_call.1} parent=1 // pred_check
      _
    $region215: #{tpu_custom_call.1} parent=1 // pred_check_branch
      %403 = sbr.rel (0) target = $region217
    $region216: #{tpu_custom_call.1} parent=1 // pred_region
      %404 = dma.done [#allocation35], 256
    $region217: #{tpu_custom_call.1} parent=1 // pred_fallthru
      _
    // Predicated region
    $region218: #{tpu_custom_call.1} parent=1 // pred_check
      _
    $region219: #{tpu_custom_call.1} parent=1 // pred_check_branch
      %406 = sbr.rel (0) target = $region221
    $region220: #{tpu_custom_call.1} parent=1 // pred_region
      %407 = dma.done [#allocation38], 16
    $region221: #{tpu_custom_call.1} parent=1 // pred_fallthru
      _
    // Predicated region
    $region222: #{tpu_custom_call.1} parent=1 // pred_check
      _
    $region223: #{tpu_custom_call.1} parent=1 // pred_check_branch
      %409 = sbr.rel (0) target = $region225
    $region224: #{tpu_custom_call.1} parent=1 // pred_region
      %410 = dma.done [#allocation38], 1408
    $region225: #{tpu_custom_call.1} parent=1 // pred_fallthru
      _
    %p413 = scmp.lt.u32.totalorder 4, 8
    %p414 = pneg %p413
    // Predicated region
    $region226: #{tpu_custom_call.1} parent=1 // pred_check
      _
    $region227: #{tpu_custom_call.1} parent=1 // pred_check_branch
      %416 = sbr.rel (%p413) target = $region229
    $region228: #{tpu_custom_call.1} parent=1 // pred_region
      %s557 = sand.u32 4, 7
      %p558 = scmp.eq.s32.totalorder %s557, 0
      %p559 = pneg %p558
      // Predicated region
      $region241: #{tpu_custom_call.1} parent=228 // pred_check
        _
      $region242: #{tpu_custom_call.1} parent=228 // pred_check_branch
        %561 = sbr.rel (%p558) target = $region244
      $region243: #{tpu_custom_call.1} parent=228 // pred_region
        %s562 = sand.u32 4, 7
        %s563 = ssub.s32 4, %s562
        %s564 = scalar_lea.vmem %s33, %s563
        %s565 = ssub.s32 4, %s562
        %s566 = scalar_lea.vmem [#allocation2], %s565
        loop: start=0, step=1, limit=1
        $region245: #{tpu_custom_call.1} parent=243 // loop_pre_header
          _
        $region246: #{tpu_custom_call.1} parent=243 // loop_header
          %s568 = sphi 0, %s572
          %p569 = scmp.ge.s32.totalorder %s568, 1
          %s573 = sphi %s33, %s33
          %s574 = sphi [#allocation2], [#allocation2]
        $region247: #{tpu_custom_call.1} parent=243 // loop_header_branch
          %571 = sbr.rel (%p569) target = $region251
        $region248: #{tpu_custom_call.1} parent=243 // loop_body
          _
        $region249: #{tpu_custom_call.1} parent=243 // loop_footer
          %s572 = sadd.s32 1, %s568
        $region250: #{tpu_custom_call.1} parent=243 // loop_footer_branch
          %567 = sbr.rel target = $region246
        $region251: #{tpu_custom_call.1} parent=243 // loop_exit
          _
        %s575 = sshllo.u32 0, %s562
        loop: start=0, step=1, limit=1
        $region252: #{tpu_custom_call.1} parent=243 // loop_pre_header
          _
        $region253: #{tpu_custom_call.1} parent=243 // loop_header
          %s577 = sphi 0, %s581
          %p578 = scmp.ge.s32.totalorder %s577, 1
          %s582 = sphi %s564, %s564
          %s583 = sphi %s566, %s566
        $region254: #{tpu_custom_call.1} parent=243 // loop_header_branch
          %580 = sbr.rel (%p578) target = $region258
        $region255: #{tpu_custom_call.1} parent=243 // loop_body
          %v584 = vld [vmem:[%s582] sm:%s575]
          %585 = vst [vmem:[%s583] sm:%s575] %v584
          %v586 = vld [vmem:[%s582 + $0x40] sm:%s575]
          %587 = vst [vmem:[%s583 + $0x4] sm:%s575] %v586
          %v588 = vld [vmem:[%s582 + $0x4] sm:%s575]
          %589 = vst [vmem:[%s583 + $0x8] sm:%s575] %v588
          %v590 = vld [vmem:[%s582 + $0x44] sm:%s575]
          %591 = vst [vmem:[%s583 + $0xc] sm:%s575] %v590
          %v592 = vld [vmem:[%s582 + $0x8] sm:%s575]
          %593 = vst [vmem:[%s583 + $0x10] sm:%s575] %v592
          %v594 = vld [vmem:[%s582 + $0x48] sm:%s575]
          %595 = vst [vmem:[%s583 + $0x14] sm:%s575] %v594
          %v596 = vld [vmem:[%s582 + $0xc] sm:%s575]
          %597 = vst [vmem:[%s583 + $0x18] sm:%s575] %v596
          %v598 = vld [vmem:[%s582 + $0x4c] sm:%s575]
          %599 = vst [vmem:[%s583 + $0x1c] sm:%s575] %v598
          %v600 = vld [vmem:[%s582 + $0x10] sm:%s575]
          %601 = vst [vmem:[%s583 + $0x20] sm:%s575] %v600
          %v602 = vld [vmem:[%s582 + $0x50] sm:%s575]
          %603 = vst [vmem:[%s583 + $0x24] sm:%s575] %v602
          %v604 = vld [vmem:[%s582 + $0x14] sm:%s575]
          %605 = vst [vmem:[%s583 + $0x28] sm:%s575] %v604
          %v606 = vld [vmem:[%s582 + $0x54] sm:%s575]
          %607 = vst [vmem:[%s583 + $0x2c] sm:%s575] %v606
          %v608 = vld [vmem:[%s582 + $0x18] sm:%s575]
          %609 = vst [vmem:[%s583 + $0x30] sm:%s575] %v608
          %v610 = vld [vmem:[%s582 + $0x58] sm:%s575]
          %611 = vst [vmem:[%s583 + $0x34] sm:%s575] %v610
          %v612 = vld [vmem:[%s582 + $0x1c] sm:%s575]
          %613 = vst [vmem:[%s583 + $0x38] sm:%s575] %v612
          %v614 = vld [vmem:[%s582 + $0x5c] sm:%s575]
          %615 = vst [vmem:[%s583 + $0x3c] sm:%s575] %v614
          %v616 = vld [vmem:[%s582 + $0x20] sm:%s575]
          %617 = vst [vmem:[%s583 + $0x40] sm:%s575] %v616
          %v618 = vld [vmem:[%s582 + $0x60] sm:%s575]
          %619 = vst [vmem:[%s583 + $0x44] sm:%s575] %v618
          %v620 = vld [vmem:[%s582 + $0x24] sm:%s575]
          %621 = vst [vmem:[%s583 + $0x48] sm:%s575] %v620
          %v622 = vld [vmem:[%s582 + $0x64] sm:%s575]
          %623 = vst [vmem:[%s583 + $0x4c] sm:%s575] %v622
          %v624 = vld [vmem:[%s582 + $0x28] sm:%s575]
          %625 = vst [vmem:[%s583 + $0x50] sm:%s575] %v624
          %v626 = vld [vmem:[%s582 + $0x68] sm:%s575]
          %627 = vst [vmem:[%s583 + $0x54] sm:%s575] %v626
          %v628 = vld [vmem:[%s582 + $0x2c] sm:%s575]
          %629 = vst [vmem:[%s583 + $0x58] sm:%s575] %v628
          %v630 = vld [vmem:[%s582 + $0x6c] sm:%s575]
          %631 = vst [vmem:[%s583 + $0x5c] sm:%s575] %v630
          %v632 = vld [vmem:[%s582 + $0x30] sm:%s575]
          %633 = vst [vmem:[%s583 + $0x60] sm:%s575] %v632
          %v634 = vld [vmem:[%s582 + $0x70] sm:%s575]
          %635 = vst [vmem:[%s583 + $0x64] sm:%s575] %v634
          %v636 = vld [vmem:[%s582 + $0x34] sm:%s575]
          %637 = vst [vmem:[%s583 + $0x68] sm:%s575] %v636
          %v638 = vld [vmem:[%s582 + $0x74] sm:%s575]
          %639 = vst [vmem:[%s583 + $0x6c] sm:%s575] %v638
          %v640 = vld [vmem:[%s582 + $0x38] sm:%s575]
          %641 = vst [vmem:[%s583 + $0x70] sm:%s575] %v640
          %v642 = vld [vmem:[%s582 + $0x78] sm:%s575]
          %643 = vst [vmem:[%s583 + $0x74] sm:%s575] %v642
          %v644 = vld [vmem:[%s582 + $0x3c] sm:%s575]
          %645 = vst [vmem:[%s583 + $0x78] sm:%s575] %v644
          %v646 = vld [vmem:[%s582 + $0x7c] sm:%s575]
          %647 = vst [vmem:[%s583 + $0x7c] sm:%s575] %v646
          %v648 = vld [vmem:[%s582 + $0x80] sm:%s575]
          %649 = vst [vmem:[%s583 + $0x80] sm:%s575] %v648
          %v650 = vld [vmem:[%s582 + $0xc0] sm:%s575]
          %651 = vst [vmem:[%s583 + $0x84] sm:%s575] %v650
          %v652 = vld [vmem:[%s582 + $0x84] sm:%s575]
          %653 = vst [vmem:[%s583 + $0x88] sm:%s575] %v652
          %v654 = vld [vmem:[%s582 + $0xc4] sm:%s575]
          %655 = vst [vmem:[%s583 + $0x8c] sm:%s575] %v654
          %v656 = vld [vmem:[%s582 + $0x88] sm:%s575]
          %657 = vst [vmem:[%s583 + $0x90] sm:%s575] %v656
          %v658 = vld [vmem:[%s582 + $0xc8] sm:%s575]
          %659 = vst [vmem:[%s583 + $0x94] sm:%s575] %v658
          %v660 = vld [vmem:[%s582 + $0x8c] sm:%s575]
          %661 = vst [vmem:[%s583 + $0x98] sm:%s575] %v660
          %v662 = vld [vmem:[%s582 + $0xcc] sm:%s575]
          %663 = vst [vmem:[%s583 + $0x9c] sm:%s575] %v662
          %v664 = vld [vmem:[%s582 + $0x90] sm:%s575]
          %665 = vst [vmem:[%s583 + $0xa0] sm:%s575] %v664
          %v666 = vld [vmem:[%s582 + $0xd0] sm:%s575]
          %667 = vst [vmem:[%s583 + $0xa4] sm:%s575] %v666
          %v668 = vld [vmem:[%s582 + $0x94] sm:%s575]
          %669 = vst [vmem:[%s583 + $0xa8] sm:%s575] %v668
          %v670 = vld [vmem:[%s582 + $0xd4] sm:%s575]
          %671 = vst [vmem:[%s583 + $0xac] sm:%s575] %v670
          %v672 = vld [vmem:[%s582 + $0x98] sm:%s575]
          %673 = vst [vmem:[%s583 + $0xb0] sm:%s575] %v672
          %v674 = vld [vmem:[%s582 + $0xd8] sm:%s575]
          %675 = vst [vmem:[%s583 + $0xb4] sm:%s575] %v674
          %v676 = vld [vmem:[%s582 + $0x9c] sm:%s575]
          %677 = vst [vmem:[%s583 + $0xb8] sm:%s575] %v676
          %v678 = vld [vmem:[%s582 + $0xdc] sm:%s575]
          %679 = vst [vmem:[%s583 + $0xbc] sm:%s575] %v678
          %v680 = vld [vmem:[%s582 + $0xa0] sm:%s575]
          %681 = vst [vmem:[%s583 + $0xc0] sm:%s575] %v680
          %v682 = vld [vmem:[%s582 + $0xe0] sm:%s575]
          %683 = vst [vmem:[%s583 + $0xc4] sm:%s575] %v682
          %v684 = vld [vmem:[%s582 + $0xa4] sm:%s575]
          %685 = vst [vmem:[%s583 + $0xc8] sm:%s575] %v684
          %v686 = vld [vmem:[%s582 + $0xe4] sm:%s575]
          %687 = vst [vmem:[%s583 + $0xcc] sm:%s575] %v686
          %v688 = vld [vmem:[%s582 + $0xa8] sm:%s575]
          %689 = vst [vmem:[%s583 + $0xd0] sm:%s575] %v688
          %v690 = vld [vmem:[%s582 + $0xe8] sm:%s575]
          %691 = vst [vmem:[%s583 + $0xd4] sm:%s575] %v690
          %v692 = vld [vmem:[%s582 + $0xac] sm:%s575]
          %693 = vst [vmem:[%s583 + $0xd8] sm:%s575] %v692
          %v694 = vld [vmem:[%s582 + $0xec] sm:%s575]
          %695 = vst [vmem:[%s583 + $0xdc] sm:%s575] %v694
          %v696 = vld [vmem:[%s582 + $0xb0] sm:%s575]
          %697 = vst [vmem:[%s583 + $0xe0] sm:%s575] %v696
          %v698 = vld [vmem:[%s582 + $0xf0] sm:%s575]
          %699 = vst [vmem:[%s583 + $0xe4] sm:%s575] %v698
          %v700 = vld [vmem:[%s582 + $0xb4] sm:%s575]
          %701 = vst [vmem:[%s583 + $0xe8] sm:%s575] %v700
          %v702 = vld [vmem:[%s582 + $0xf4] sm:%s575]
          %703 = vst [vmem:[%s583 + $0xec] sm:%s575] %v702
          %v704 = vld [vmem:[%s582 + $0xb8] sm:%s575]
          %705 = vst [vmem:[%s583 + $0xf0] sm:%s575] %v704
          %v706 = vld [vmem:[%s582 + $0xf8] sm:%s575]
          %707 = vst [vmem:[%s583 + $0xf4] sm:%s575] %v706
          %v708 = vld [vmem:[%s582 + $0xbc] sm:%s575]
          %709 = vst [vmem:[%s583 + $0xf8] sm:%s575] %v708
          %v710 = vld [vmem:[%s582 + $0xfc] sm:%s575]
          %711 = vst [vmem:[%s583 + $0xfc] sm:%s575] %v710
        $region256: #{tpu_custom_call.1} parent=243 // loop_footer
          %s581 = sadd.s32 1, %s577
        $region257: #{tpu_custom_call.1} parent=243 // loop_footer_branch
          %576 = sbr.rel target = $region253
        $region258: #{tpu_custom_call.1} parent=243 // loop_exit
          _
      $region244: #{tpu_custom_call.1} parent=228 // pred_fallthru
        _
    $region229: #{tpu_custom_call.1} parent=1 // pred_fallthru
      _
    // Predicated region
    $region230: #{tpu_custom_call.1} parent=1 // pred_check
      %p417 = pneg %p413
    $region231: #{tpu_custom_call.1} parent=1 // pred_check_branch
      %419 = sbr.rel (%p417) target = $region233
    $region232: #{tpu_custom_call.1} parent=1 // pred_region
      %s420 = sshllo.u32 0, 4
      loop: start=0, step=1, limit=1
      $region234: #{tpu_custom_call.1} parent=232 // loop_pre_header
        _
      $region235: #{tpu_custom_call.1} parent=232 // loop_header
        %s422 = sphi 0, %s426
        %p423 = scmp.ge.s32.totalorder %s422, 1
        %s427 = sphi %s33, %s33
        %s428 = sphi [#allocation2], [#allocation2]
      $region236: #{tpu_custom_call.1} parent=232 // loop_header_branch
        %425 = sbr.rel (%p423) target = $region240
      $region237: #{tpu_custom_call.1} parent=232 // loop_body
        %v429 = vld [vmem:[%s427] sm:%s420]
        %430 = vst [vmem:[%s428] sm:%s420] %v429
        %v431 = vld [vmem:[%s427 + $0x40] sm:%s420]
        %432 = vst [vmem:[%s428 + $0x4] sm:%s420] %v431
        %v433 = vld [vmem:[%s427 + $0x4] sm:%s420]
        %434 = vst [vmem:[%s428 + $0x8] sm:%s420] %v433
        %v435 = vld [vmem:[%s427 + $0x44] sm:%s420]
        %436 = vst [vmem:[%s428 + $0xc] sm:%s420] %v435
        %v437 = vld [vmem:[%s427 + $0x8] sm:%s420]
        %438 = vst [vmem:[%s428 + $0x10] sm:%s420] %v437
        %v439 = vld [vmem:[%s427 + $0x48] sm:%s420]
        %440 = vst [vmem:[%s428 + $0x14] sm:%s420] %v439
        %v441 = vld [vmem:[%s427 + $0xc] sm:%s420]
        %442 = vst [vmem:[%s428 + $0x18] sm:%s420] %v441
        %v443 = vld [vmem:[%s427 + $0x4c] sm:%s420]
        %444 = vst [vmem:[%s428 + $0x1c] sm:%s420] %v443
        %v445 = vld [vmem:[%s427 + $0x10] sm:%s420]
        %446 = vst [vmem:[%s428 + $0x20] sm:%s420] %v445
        %v447 = vld [vmem:[%s427 + $0x50] sm:%s420]
        %448 = vst [vmem:[%s428 + $0x24] sm:%s420] %v447
        %v449 = vld [vmem:[%s427 + $0x14] sm:%s420]
        %450 = vst [vmem:[%s428 + $0x28] sm:%s420] %v449
        %v451 = vld [vmem:[%s427 + $0x54] sm:%s420]
        %452 = vst [vmem:[%s428 + $0x2c] sm:%s420] %v451
        %v453 = vld [vmem:[%s427 + $0x18] sm:%s420]
        %454 = vst [vmem:[%s428 + $0x30] sm:%s420] %v453
        %v455 = vld [vmem:[%s427 + $0x58] sm:%s420]
        %456 = vst [vmem:[%s428 + $0x34] sm:%s420] %v455
        %v457 = vld [vmem:[%s427 + $0x1c] sm:%s420]
        %458 = vst [vmem:[%s428 + $0x38] sm:%s420] %v457
        %v459 = vld [vmem:[%s427 + $0x5c] sm:%s420]
        %460 = vst [vmem:[%s428 + $0x3c] sm:%s420] %v459
        %v461 = vld [vmem:[%s427 + $0x20] sm:%s420]
        %462 = vst [vmem:[%s428 + $0x40] sm:%s420] %v461
        %v463 = vld [vmem:[%s427 + $0x60] sm:%s420]
        %464 = vst [vmem:[%s428 + $0x44] sm:%s420] %v463
        %v465 = vld [vmem:[%s427 + $0x24] sm:%s420]
        %466 = vst [vmem:[%s428 + $0x48] sm:%s420] %v465
        %v467 = vld [vmem:[%s427 + $0x64] sm:%s420]
        %468 = vst [vmem:[%s428 + $0x4c] sm:%s420] %v467
        %v469 = vld [vmem:[%s427 + $0x28] sm:%s420]
        %470 = vst [vmem:[%s428 + $0x50] sm:%s420] %v469
        %v471 = vld [vmem:[%s427 + $0x68] sm:%s420]
        %472 = vst [vmem:[%s428 + $0x54] sm:%s420] %v471
        %v473 = vld [vmem:[%s427 + $0x2c] sm:%s420]
        %474 = vst [vmem:[%s428 + $0x58] sm:%s420] %v473
        %v475 = vld [vmem:[%s427 + $0x6c] sm:%s420]
        %476 = vst [vmem:[%s428 + $0x5c] sm:%s420] %v475
        %v477 = vld [vmem:[%s427 + $0x30] sm:%s420]
        %478 = vst [vmem:[%s428 + $0x60] sm:%s420] %v477
        %v479 = vld [vmem:[%s427 + $0x70] sm:%s420]
        %480 = vst [vmem:[%s428 + $0x64] sm:%s420] %v479
        %v481 = vld [vmem:[%s427 + $0x34] sm:%s420]
        %482 = vst [vmem:[%s428 + $0x68] sm:%s420] %v481
        %v483 = vld [vmem:[%s427 + $0x74] sm:%s420]
        %484 = vst [vmem:[%s428 + $0x6c] sm:%s420] %v483
        %v485 = vld [vmem:[%s427 + $0x38] sm:%s420]
        %486 = vst [vmem:[%s428 + $0x70] sm:%s420] %v485
        %v487 = vld [vmem:[%s427 + $0x78] sm:%s420]
        %488 = vst [vmem:[%s428 + $0x74] sm:%s420] %v487
        %v489 = vld [vmem:[%s427 + $0x3c] sm:%s420]
        %490 = vst [vmem:[%s428 + $0x78] sm:%s420] %v489
        %v491 = vld [vmem:[%s427 + $0x7c] sm:%s420]
        %492 = vst [vmem:[%s428 + $0x7c] sm:%s420] %v491
        %v493 = vld [vmem:[%s427 + $0x80] sm:%s420]
        %494 = vst [vmem:[%s428 + $0x80] sm:%s420] %v493
        %v495 = vld [vmem:[%s427 + $0xc0] sm:%s420]
        %496 = vst [vmem:[%s428 + $0x84] sm:%s420] %v495
        %v497 = vld [vmem:[%s427 + $0x84] sm:%s420]
        %498 = vst [vmem:[%s428 + $0x88] sm:%s420] %v497
        %v499 = vld [vmem:[%s427 + $0xc4] sm:%s420]
        %500 = vst [vmem:[%s428 + $0x8c] sm:%s420] %v499
        %v501 = vld [vmem:[%s427 + $0x88] sm:%s420]
        %502 = vst [vmem:[%s428 + $0x90] sm:%s420] %v501
        %v503 = vld [vmem:[%s427 + $0xc8] sm:%s420]
        %504 = vst [vmem:[%s428 + $0x94] sm:%s420] %v503
        %v505 = vld [vmem:[%s427 + $0x8c] sm:%s420]
        %506 = vst [vmem:[%s428 + $0x98] sm:%s420] %v505
        %v507 = vld [vmem:[%s427 + $0xcc] sm:%s420]
        %508 = vst [vmem:[%s428 + $0x9c] sm:%s420] %v507
        %v509 = vld [vmem:[%s427 + $0x90] sm:%s420]
        %510 = vst [vmem:[%s428 + $0xa0] sm:%s420] %v509
        %v511 = vld [vmem:[%s427 + $0xd0] sm:%s420]
        %512 = vst [vmem:[%s428 + $0xa4] sm:%s420] %v511
        %v513 = vld [vmem:[%s427 + $0x94] sm:%s420]
        %514 = vst [vmem:[%s428 + $0xa8] sm:%s420] %v513
        %v515 = vld [vmem:[%s427 + $0xd4] sm:%s420]
        %516 = vst [vmem:[%s428 + $0xac] sm:%s420] %v515
        %v517 = vld [vmem:[%s427 + $0x98] sm:%s420]
        %518 = vst [vmem:[%s428 + $0xb0] sm:%s420] %v517
        %v519 = vld [vmem:[%s427 + $0xd8] sm:%s420]
        %520 = vst [vmem:[%s428 + $0xb4] sm:%s420] %v519
        %v521 = vld [vmem:[%s427 + $0x9c] sm:%s420]
        %522 = vst [vmem:[%s428 + $0xb8] sm:%s420] %v521
        %v523 = vld [vmem:[%s427 + $0xdc] sm:%s420]
        %524 = vst [vmem:[%s428 + $0xbc] sm:%s420] %v523
        %v525 = vld [vmem:[%s427 + $0xa0] sm:%s420]
        %526 = vst [vmem:[%s428 + $0xc0] sm:%s420] %v525
        %v527 = vld [vmem:[%s427 + $0xe0] sm:%s420]
        %528 = vst [vmem:[%s428 + $0xc4] sm:%s420] %v527
        %v529 = vld [vmem:[%s427 + $0xa4] sm:%s420]
        %530 = vst [vmem:[%s428 + $0xc8] sm:%s420] %v529
        %v531 = vld [vmem:[%s427 + $0xe4] sm:%s420]
        %532 = vst [vmem:[%s428 + $0xcc] sm:%s420] %v531
        %v533 = vld [vmem:[%s427 + $0xa8] sm:%s420]
        %534 = vst [vmem:[%s428 + $0xd0] sm:%s420] %v533
        %v535 = vld [vmem:[%s427 + $0xe8] sm:%s420]
        %536 = vst [vmem:[%s428 + $0xd4] sm:%s420] %v535
        %v537 = vld [vmem:[%s427 + $0xac] sm:%s420]
        %538 = vst [vmem:[%s428 + $0xd8] sm:%s420] %v537
        %v539 = vld [vmem:[%s427 + $0xec] sm:%s420]
        %540 = vst [vmem:[%s428 + $0xdc] sm:%s420] %v539
        %v541 = vld [vmem:[%s427 + $0xb0] sm:%s420]
        %542 = vst [vmem:[%s428 + $0xe0] sm:%s420] %v541
        %v543 = vld [vmem:[%s427 + $0xf0] sm:%s420]
        %544 = vst [vmem:[%s428 + $0xe4] sm:%s420] %v543
        %v545 = vld [vmem:[%s427 + $0xb4] sm:%s420]
        %546 = vst [vmem:[%s428 + $0xe8] sm:%s420] %v545
        %v547 = vld [vmem:[%s427 + $0xf4] sm:%s420]
        %548 = vst [vmem:[%s428 + $0xec] sm:%s420] %v547
        %v549 = vld [vmem:[%s427 + $0xb8] sm:%s420]
        %550 = vst [vmem:[%s428 + $0xf0] sm:%s420] %v549
        %v551 = vld [vmem:[%s427 + $0xf8] sm:%s420]
        %552 = vst [vmem:[%s428 + $0xf4] sm:%s420] %v551
        %v553 = vld [vmem:[%s427 + $0xbc] sm:%s420]
        %554 = vst [vmem:[%s428 + $0xf8] sm:%s420] %v553
        %v555 = vld [vmem:[%s427 + $0xfc] sm:%s420]
        %556 = vst [vmem:[%s428 + $0xfc] sm:%s420] %v555
      $region238: #{tpu_custom_call.1} parent=232 // loop_footer
        %s426 = sadd.s32 1, %s422
      $region239: #{tpu_custom_call.1} parent=232 // loop_footer_branch
        %421 = sbr.rel target = $region235
      $region240: #{tpu_custom_call.1} parent=232 // loop_exit
        _
    $region233: #{tpu_custom_call.1} parent=1 // pred_fallthru
      _
    // Predicated region
    $region259: #{tpu_custom_call.1} parent=1 // pred_check
      _
    $region260: #{tpu_custom_call.1} parent=1 // pred_check_branch
      %714 = sbr.rel (0) target = $region262
    $region261: #{tpu_custom_call.1} parent=1 // pred_region
      %715 = vsyncadd [#allocation6], 4096
    $region262: #{tpu_custom_call.1} parent=1 // pred_fallthru
      _
    %s716 = scalar_lea.sflag [#allocation6], 1
    %p718 = scmp.lt.u32.totalorder 1024, 8
    %p719 = pneg %p718
    // Predicated region
    $region263: #{tpu_custom_call.1} parent=1 // pred_check
      _
    $region264: #{tpu_custom_call.1} parent=1 // pred_check_branch
      %721 = sbr.rel (%p718) target = $region266
    $region265: #{tpu_custom_call.1} parent=1 // pred_region
      %s736 = sand.u32 1024, 7
      %p737 = scmp.eq.s32.totalorder %s736, 0
      // Predicated region
      $region278: #{tpu_custom_call.1} parent=265 // pred_check
        %p738 = pneg %p737
      $region279: #{tpu_custom_call.1} parent=265 // pred_check_branch
        %740 = sbr.rel (%p738) target = $region281
      $region280: #{tpu_custom_call.1} parent=265 // pred_region
        loop: start=0, step=1, limit=1
        $region282: #{tpu_custom_call.1} parent=280 // loop_pre_header
          _
        $region283: #{tpu_custom_call.1} parent=280 // loop_header
          %s742 = sphi 0, %s746
          %p743 = scmp.ge.s32.totalorder %s742, 1
          %s747 = sphi %s35, %s35
          %s748 = sphi [#allocation3], [#allocation3]
        $region284: #{tpu_custom_call.1} parent=280 // loop_header_branch
          %745 = sbr.rel (%p743) target = $region288
        $region285: #{tpu_custom_call.1} parent=280 // loop_body
          %v749 = vld [vmem:[%s747] sm:$0xff]
          %750 = vst [vmem:[%s748] sm:$0xff] %v749
          %v751 = vld [vmem:[%s747 + $0x8] sm:$0xff]
          %752 = vst [vmem:[%s748 + $0x8] sm:$0xff] %v751
          %v753 = vld [vmem:[%s747 + $0x10] sm:$0xff]
          %754 = vst [vmem:[%s748 + $0x10] sm:$0xff] %v753
          %v755 = vld [vmem:[%s747 + $0x18] sm:$0xff]
          %756 = vst [vmem:[%s748 + $0x18] sm:$0xff] %v755
          %v757 = vld [vmem:[%s747 + $0x20] sm:$0xff]
          %758 = vst [vmem:[%s748 + $0x20] sm:$0xff] %v757
          %v759 = vld [vmem:[%s747 + $0x28] sm:$0xff]
          %760 = vst [vmem:[%s748 + $0x28] sm:$0xff] %v759
          %v761 = vld [vmem:[%s747 + $0x30] sm:$0xff]
          %762 = vst [vmem:[%s748 + $0x30] sm:$0xff] %v761
          %v763 = vld [vmem:[%s747 + $0x38] sm:$0xff]
          %764 = vst [vmem:[%s748 + $0x38] sm:$0xff] %v763
          %v765 = vld [vmem:[%s747 + $0x40] sm:$0xff]
          %766 = vst [vmem:[%s748 + $0x40] sm:$0xff] %v765
          %v767 = vld [vmem:[%s747 + $0x48] sm:$0xff]
          %768 = vst [vmem:[%s748 + $0x48] sm:$0xff] %v767
          %v769 = vld [vmem:[%s747 + $0x50] sm:$0xff]
          %770 = vst [vmem:[%s748 + $0x50] sm:$0xff] %v769
          %v771 = vld [vmem:[%s747 + $0x58] sm:$0xff]
          %772 = vst [vmem:[%s748 + $0x58] sm:$0xff] %v771
          %v773 = vld [vmem:[%s747 + $0x60] sm:$0xff]
          %774 = vst [vmem:[%s748 + $0x60] sm:$0xff] %v773
          %v775 = vld [vmem:[%s747 + $0x68] sm:$0xff]
          %776 = vst [vmem:[%s748 + $0x68] sm:$0xff] %v775
          %v777 = vld [vmem:[%s747 + $0x70] sm:$0xff]
          %778 = vst [vmem:[%s748 + $0x70] sm:$0xff] %v777
          %v779 = vld [vmem:[%s747 + $0x78] sm:$0xff]
          %780 = vst [vmem:[%s748 + $0x78] sm:$0xff] %v779
          %v781 = vld [vmem:[%s747 + $0x80] sm:$0xff]
          %782 = vst [vmem:[%s748 + $0x80] sm:$0xff] %v781
          %v783 = vld [vmem:[%s747 + $0x88] sm:$0xff]
          %784 = vst [vmem:[%s748 + $0x88] sm:$0xff] %v783
          %v785 = vld [vmem:[%s747 + $0x90] sm:$0xff]
          %786 = vst [vmem:[%s748 + $0x90] sm:$0xff] %v785
          %v787 = vld [vmem:[%s747 + $0x98] sm:$0xff]
          %788 = vst [vmem:[%s748 + $0x98] sm:$0xff] %v787
          %v789 = vld [vmem:[%s747 + $0xa0] sm:$0xff]
          %790 = vst [vmem:[%s748 + $0xa0] sm:$0xff] %v789
          %v791 = vld [vmem:[%s747 + $0xa8] sm:$0xff]
          %792 = vst [vmem:[%s748 + $0xa8] sm:$0xff] %v791
          %v793 = vld [vmem:[%s747 + $0xb0] sm:$0xff]
          %794 = vst [vmem:[%s748 + $0xb0] sm:$0xff] %v793
          %v795 = vld [vmem:[%s747 + $0xb8] sm:$0xff]
          %796 = vst [vmem:[%s748 + $0xb8] sm:$0xff] %v795
          %v797 = vld [vmem:[%s747 + $0xc0] sm:$0xff]
          %798 = vst [vmem:[%s748 + $0xc0] sm:$0xff] %v797
          %v799 = vld [vmem:[%s747 + $0xc8] sm:$0xff]
          %800 = vst [vmem:[%s748 + $0xc8] sm:$0xff] %v799
          %v801 = vld [vmem:[%s747 + $0xd0] sm:$0xff]
          %802 = vst [vmem:[%s748 + $0xd0] sm:$0xff] %v801
          %v803 = vld [vmem:[%s747 + $0xd8] sm:$0xff]
          %804 = vst [vmem:[%s748 + $0xd8] sm:$0xff] %v803
          %v805 = vld [vmem:[%s747 + $0xe0] sm:$0xff]
          %806 = vst [vmem:[%s748 + $0xe0] sm:$0xff] %v805
          %v807 = vld [vmem:[%s747 + $0xe8] sm:$0xff]
          %808 = vst [vmem:[%s748 + $0xe8] sm:$0xff] %v807
          %v809 = vld [vmem:[%s747 + $0xf0] sm:$0xff]
          %810 = vst [vmem:[%s748 + $0xf0] sm:$0xff] %v809
          %v811 = vld [vmem:[%s747 + $0xf8] sm:$0xff]
          %812 = vst [vmem:[%s748 + $0xf8] sm:$0xff] %v811
          %v813 = vld [vmem:[%s747 + $0x100] sm:$0xff]
          %814 = vst [vmem:[%s748 + $0x100] sm:$0xff] %v813
          %v815 = vld [vmem:[%s747 + $0x108] sm:$0xff]
          %816 = vst [vmem:[%s748 + $0x108] sm:$0xff] %v815
          %v817 = vld [vmem:[%s747 + $0x110] sm:$0xff]
          %818 = vst [vmem:[%s748 + $0x110] sm:$0xff] %v817
          %v819 = vld [vmem:[%s747 + $0x118] sm:$0xff]
          %820 = vst [vmem:[%s748 + $0x118] sm:$0xff] %v819
          %v821 = vld [vmem:[%s747 + $0x120] sm:$0xff]
          %822 = vst [vmem:[%s748 + $0x120] sm:$0xff] %v821
          %v823 = vld [vmem:[%s747 + $0x128] sm:$0xff]
          %824 = vst [vmem:[%s748 + $0x128] sm:$0xff] %v823
          %v825 = vld [vmem:[%s747 + $0x130] sm:$0xff]
          %826 = vst [vmem:[%s748 + $0x130] sm:$0xff] %v825
          %v827 = vld [vmem:[%s747 + $0x138] sm:$0xff]
          %828 = vst [vmem:[%s748 + $0x138] sm:$0xff] %v827
          %v829 = vld [vmem:[%s747 + $0x140] sm:$0xff]
          %830 = vst [vmem:[%s748 + $0x140] sm:$0xff] %v829
          %v831 = vld [vmem:[%s747 + $0x148] sm:$0xff]
          %832 = vst [vmem:[%s748 + $0x148] sm:$0xff] %v831
          %v833 = vld [vmem:[%s747 + $0x150] sm:$0xff]
          %834 = vst [vmem:[%s748 + $0x150] sm:$0xff] %v833
          %v835 = vld [vmem:[%s747 + $0x158] sm:$0xff]
          %836 = vst [vmem:[%s748 + $0x158] sm:$0xff] %v835
          %v837 = vld [vmem:[%s747 + $0x160] sm:$0xff]
          %838 = vst [vmem:[%s748 + $0x160] sm:$0xff] %v837
          %v839 = vld [vmem:[%s747 + $0x168] sm:$0xff]
          %840 = vst [vmem:[%s748 + $0x168] sm:$0xff] %v839
          %v841 = vld [vmem:[%s747 + $0x170] sm:$0xff]
          %842 = vst [vmem:[%s748 + $0x170] sm:$0xff] %v841
          %v843 = vld [vmem:[%s747 + $0x178] sm:$0xff]
          %844 = vst [vmem:[%s748 + $0x178] sm:$0xff] %v843
          %v845 = vld [vmem:[%s747 + $0x180] sm:$0xff]
          %846 = vst [vmem:[%s748 + $0x180] sm:$0xff] %v845
          %v847 = vld [vmem:[%s747 + $0x188] sm:$0xff]
          %848 = vst [vmem:[%s748 + $0x188] sm:$0xff] %v847
          %v849 = vld [vmem:[%s747 + $0x190] sm:$0xff]
          %850 = vst [vmem:[%s748 + $0x190] sm:$0xff] %v849
          %v851 = vld [vmem:[%s747 + $0x198] sm:$0xff]
          %852 = vst [vmem:[%s748 + $0x198] sm:$0xff] %v851
          %v853 = vld [vmem:[%s747 + $0x1a0] sm:$0xff]
          %854 = vst [vmem:[%s748 + $0x1a0] sm:$0xff] %v853
          %v855 = vld [vmem:[%s747 + $0x1a8] sm:$0xff]
          %856 = vst [vmem:[%s748 + $0x1a8] sm:$0xff] %v855
          %v857 = vld [vmem:[%s747 + $0x1b0] sm:$0xff]
          %858 = vst [vmem:[%s748 + $0x1b0] sm:$0xff] %v857
          %v859 = vld [vmem:[%s747 + $0x1b8] sm:$0xff]
          %860 = vst [vmem:[%s748 + $0x1b8] sm:$0xff] %v859
          %v861 = vld [vmem:[%s747 + $0x1c0] sm:$0xff]
          %862 = vst [vmem:[%s748 + $0x1c0] sm:$0xff] %v861
          %v863 = vld [vmem:[%s747 + $0x1c8] sm:$0xff]
          %864 = vst [vmem:[%s748 + $0x1c8] sm:$0xff] %v863
          %v865 = vld [vmem:[%s747 + $0x1d0] sm:$0xff]
          %866 = vst [vmem:[%s748 + $0x1d0] sm:$0xff] %v865
          %v867 = vld [vmem:[%s747 + $0x1d8] sm:$0xff]
          %868 = vst [vmem:[%s748 + $0x1d8] sm:$0xff] %v867
          %v869 = vld [vmem:[%s747 + $0x1e0] sm:$0xff]
          %870 = vst [vmem:[%s748 + $0x1e0] sm:$0xff] %v869
          %v871 = vld [vmem:[%s747 + $0x1e8] sm:$0xff]
          %872 = vst [vmem:[%s748 + $0x1e8] sm:$0xff] %v871
          %v873 = vld [vmem:[%s747 + $0x1f0] sm:$0xff]
          %874 = vst [vmem:[%s748 + $0x1f0] sm:$0xff] %v873
          %v875 = vld [vmem:[%s747 + $0x1f8] sm:$0xff]
          %876 = vst [vmem:[%s748 + $0x1f8] sm:$0xff] %v875
          %v877 = vld [vmem:[%s747 + $0x200] sm:$0xff]
          %878 = vst [vmem:[%s748 + $0x200] sm:$0xff] %v877
          %v879 = vld [vmem:[%s747 + $0x208] sm:$0xff]
          %880 = vst [vmem:[%s748 + $0x208] sm:$0xff] %v879
          %v881 = vld [vmem:[%s747 + $0x210] sm:$0xff]
          %882 = vst [vmem:[%s748 + $0x210] sm:$0xff] %v881
          %v883 = vld [vmem:[%s747 + $0x218] sm:$0xff]
          %884 = vst [vmem:[%s748 + $0x218] sm:$0xff] %v883
          %v885 = vld [vmem:[%s747 + $0x220] sm:$0xff]
          %886 = vst [vmem:[%s748 + $0x220] sm:$0xff] %v885
          %v887 = vld [vmem:[%s747 + $0x228] sm:$0xff]
          %888 = vst [vmem:[%s748 + $0x228] sm:$0xff] %v887
          %v889 = vld [vmem:[%s747 + $0x230] sm:$0xff]
          %890 = vst [vmem:[%s748 + $0x230] sm:$0xff] %v889
          %v891 = vld [vmem:[%s747 + $0x238] sm:$0xff]
          %892 = vst [vmem:[%s748 + $0x238] sm:$0xff] %v891
          %v893 = vld [vmem:[%s747 + $0x240] sm:$0xff]
          %894 = vst [vmem:[%s748 + $0x240] sm:$0xff] %v893
          %v895 = vld [vmem:[%s747 + $0x248] sm:$0xff]
          %896 = vst [vmem:[%s748 + $0x248] sm:$0xff] %v895
          %v897 = vld [vmem:[%s747 + $0x250] sm:$0xff]
          %898 = vst [vmem:[%s748 + $0x250] sm:$0xff] %v897
          %v899 = vld [vmem:[%s747 + $0x258] sm:$0xff]
          %900 = vst [vmem:[%s748 + $0x258] sm:$0xff] %v899
          %v901 = vld [vmem:[%s747 + $0x260] sm:$0xff]
          %902 = vst [vmem:[%s748 + $0x260] sm:$0xff] %v901
          %v903 = vld [vmem:[%s747 + $0x268] sm:$0xff]
          %904 = vst [vmem:[%s748 + $0x268] sm:$0xff] %v903
          %v905 = vld [vmem:[%s747 + $0x270] sm:$0xff]
          %906 = vst [vmem:[%s748 + $0x270] sm:$0xff] %v905
          %v907 = vld [vmem:[%s747 + $0x278] sm:$0xff]
          %908 = vst [vmem:[%s748 + $0x278] sm:$0xff] %v907
          %v909 = vld [vmem:[%s747 + $0x280] sm:$0xff]
          %910 = vst [vmem:[%s748 + $0x280] sm:$0xff] %v909
          %v911 = vld [vmem:[%s747 + $0x288] sm:$0xff]
          %912 = vst [vmem:[%s748 + $0x288] sm:$0xff] %v911
          %v913 = vld [vmem:[%s747 + $0x290] sm:$0xff]
          %914 = vst [vmem:[%s748 + $0x290] sm:$0xff] %v913
          %v915 = vld [vmem:[%s747 + $0x298] sm:$0xff]
          %916 = vst [vmem:[%s748 + $0x298] sm:$0xff] %v915
          %v917 = vld [vmem:[%s747 + $0x2a0] sm:$0xff]
          %918 = vst [vmem:[%s748 + $0x2a0] sm:$0xff] %v917
          %v919 = vld [vmem:[%s747 + $0x2a8] sm:$0xff]
          %920 = vst [vmem:[%s748 + $0x2a8] sm:$0xff] %v919
          %v921 = vld [vmem:[%s747 + $0x2b0] sm:$0xff]
          %922 = vst [vmem:[%s748 + $0x2b0] sm:$0xff] %v921
          %v923 = vld [vmem:[%s747 + $0x2b8] sm:$0xff]
          %924 = vst [vmem:[%s748 + $0x2b8] sm:$0xff] %v923
          %v925 = vld [vmem:[%s747 + $0x2c0] sm:$0xff]
          %926 = vst [vmem:[%s748 + $0x2c0] sm:$0xff] %v925
          %v927 = vld [vmem:[%s747 + $0x2c8] sm:$0xff]
          %928 = vst [vmem:[%s748 + $0x2c8] sm:$0xff] %v927
          %v929 = vld [vmem:[%s747 + $0x2d0] sm:$0xff]
          %930 = vst [vmem:[%s748 + $0x2d0] sm:$0xff] %v929
          %v931 = vld [vmem:[%s747 + $0x2d8] sm:$0xff]
          %932 = vst [vmem:[%s748 + $0x2d8] sm:$0xff] %v931
          %v933 = vld [vmem:[%s747 + $0x2e0] sm:$0xff]
          %934 = vst [vmem:[%s748 + $0x2e0] sm:$0xff] %v933
          %v935 = vld [vmem:[%s747 + $0x2e8] sm:$0xff]
          %936 = vst [vmem:[%s748 + $0x2e8] sm:$0xff] %v935
          %v937 = vld [vmem:[%s747 + $0x2f0] sm:$0xff]
          %938 = vst [vmem:[%s748 + $0x2f0] sm:$0xff] %v937
          %v939 = vld [vmem:[%s747 + $0x2f8] sm:$0xff]
          %940 = vst [vmem:[%s748 + $0x2f8] sm:$0xff] %v939
          %v941 = vld [vmem:[%s747 + $0x300] sm:$0xff]
          %942 = vst [vmem:[%s748 + $0x300] sm:$0xff] %v941
          %v943 = vld [vmem:[%s747 + $0x308] sm:$0xff]
          %944 = vst [vmem:[%s748 + $0x308] sm:$0xff] %v943
          %v945 = vld [vmem:[%s747 + $0x310] sm:$0xff]
          %946 = vst [vmem:[%s748 + $0x310] sm:$0xff] %v945
          %v947 = vld [vmem:[%s747 + $0x318] sm:$0xff]
          %948 = vst [vmem:[%s748 + $0x318] sm:$0xff] %v947
          %v949 = vld [vmem:[%s747 + $0x320] sm:$0xff]
          %950 = vst [vmem:[%s748 + $0x320] sm:$0xff] %v949
          %v951 = vld [vmem:[%s747 + $0x328] sm:$0xff]
          %952 = vst [vmem:[%s748 + $0x328] sm:$0xff] %v951
          %v953 = vld [vmem:[%s747 + $0x330] sm:$0xff]
          %954 = vst [vmem:[%s748 + $0x330] sm:$0xff] %v953
          %v955 = vld [vmem:[%s747 + $0x338] sm:$0xff]
          %956 = vst [vmem:[%s748 + $0x338] sm:$0xff] %v955
          %v957 = vld [vmem:[%s747 + $0x340] sm:$0xff]
          %958 = vst [vmem:[%s748 + $0x340] sm:$0xff] %v957
          %v959 = vld [vmem:[%s747 + $0x348] sm:$0xff]
          %960 = vst [vmem:[%s748 + $0x348] sm:$0xff] %v959
          %v961 = vld [vmem:[%s747 + $0x350] sm:$0xff]
          %962 = vst [vmem:[%s748 + $0x350] sm:$0xff] %v961
          %v963 = vld [vmem:[%s747 + $0x358] sm:$0xff]
          %964 = vst [vmem:[%s748 + $0x358] sm:$0xff] %v963
          %v965 = vld [vmem:[%s747 + $0x360] sm:$0xff]
          %966 = vst [vmem:[%s748 + $0x360] sm:$0xff] %v965
          %v967 = vld [vmem:[%s747 + $0x368] sm:$0xff]
          %968 = vst [vmem:[%s748 + $0x368] sm:$0xff] %v967
          %v969 = vld [vmem:[%s747 + $0x370] sm:$0xff]
          %970 = vst [vmem:[%s748 + $0x370] sm:$0xff] %v969
          %v971 = vld [vmem:[%s747 + $0x378] sm:$0xff]
          %972 = vst [vmem:[%s748 + $0x378] sm:$0xff] %v971
          %v973 = vld [vmem:[%s747 + $0x380] sm:$0xff]
          %974 = vst [vmem:[%s748 + $0x380] sm:$0xff] %v973
          %v975 = vld [vmem:[%s747 + $0x388] sm:$0xff]
          %976 = vst [vmem:[%s748 + $0x388] sm:$0xff] %v975
          %v977 = vld [vmem:[%s747 + $0x390] sm:$0xff]
          %978 = vst [vmem:[%s748 + $0x390] sm:$0xff] %v977
          %v979 = vld [vmem:[%s747 + $0x398] sm:$0xff]
          %980 = vst [vmem:[%s748 + $0x398] sm:$0xff] %v979
          %v981 = vld [vmem:[%s747 + $0x3a0] sm:$0xff]
          %982 = vst [vmem:[%s748 + $0x3a0] sm:$0xff] %v981
          %v983 = vld [vmem:[%s747 + $0x3a8] sm:$0xff]
          %984 = vst [vmem:[%s748 + $0x3a8] sm:$0xff] %v983
          %v985 = vld [vmem:[%s747 + $0x3b0] sm:$0xff]
          %986 = vst [vmem:[%s748 + $0x3b0] sm:$0xff] %v985
          %v987 = vld [vmem:[%s747 + $0x3b8] sm:$0xff]
          %988 = vst [vmem:[%s748 + $0x3b8] sm:$0xff] %v987
          %v989 = vld [vmem:[%s747 + $0x3c0] sm:$0xff]
          %990 = vst [vmem:[%s748 + $0x3c0] sm:$0xff] %v989
          %v991 = vld [vmem:[%s747 + $0x3c8] sm:$0xff]
          %992 = vst [vmem:[%s748 + $0x3c8] sm:$0xff] %v991
          %v993 = vld [vmem:[%s747 + $0x3d0] sm:$0xff]
          %994 = vst [vmem:[%s748 + $0x3d0] sm:$0xff] %v993
          %v995 = vld [vmem:[%s747 + $0x3d8] sm:$0xff]
          %996 = vst [vmem:[%s748 + $0x3d8] sm:$0xff] %v995
          %v997 = vld [vmem:[%s747 + $0x3e0] sm:$0xff]
          %998 = vst [vmem:[%s748 + $0x3e0] sm:$0xff] %v997
          %v999 = vld [vmem:[%s747 + $0x3e8] sm:$0xff]
          %1000 = vst [vmem:[%s748 + $0x3e8] sm:$0xff] %v999
          %v1001 = vld [vmem:[%s747 + $0x3f0] sm:$0xff]
          %1002 = vst [vmem:[%s748 + $0x3f0] sm:$0xff] %v1001
          %v1003 = vld [vmem:[%s747 + $0x3f8] sm:$0xff]
          %1004 = vst [vmem:[%s748 + $0x3f8] sm:$0xff] %v1003
        $region286: #{tpu_custom_call.1} parent=280 // loop_footer
          %s746 = sadd.s32 1, %s742
        $region287: #{tpu_custom_call.1} parent=280 // loop_footer_branch
          %741 = sbr.rel target = $region283
        $region288: #{tpu_custom_call.1} parent=280 // loop_exit
          _
      $region281: #{tpu_custom_call.1} parent=265 // pred_fallthru
        _
      %p1005 = pneg %p737
      // Predicated region
      $region289: #{tpu_custom_call.1} parent=265 // pred_check
        _
      $region290: #{tpu_custom_call.1} parent=265 // pred_check_branch
        %1007 = sbr.rel (%p737) target = $region292
      $region291: #{tpu_custom_call.1} parent=265 // pred_region
        %s1008 = sand.u32 1024, 7
      $region292: #{tpu_custom_call.1} parent=265 // pred_fallthru
        _
    $region266: #{tpu_custom_call.1} parent=1 // pred_fallthru
      _
    // Predicated region
    $region267: #{tpu_custom_call.1} parent=1 // pred_check
      %p722 = pneg %p718
    $region268: #{tpu_custom_call.1} parent=1 // pred_check_branch
      %724 = sbr.rel (%p722) target = $region270
    $region269: #{tpu_custom_call.1} parent=1 // pred_region
      %s725 = sshllo.u32 0, 1024
      loop: start=0, step=1, limit=1
      $region271: #{tpu_custom_call.1} parent=269 // loop_pre_header
        _
      $region272: #{tpu_custom_call.1} parent=269 // loop_header
        %s727 = sphi 0, %s731
        %p728 = scmp.ge.s32.totalorder %s727, 1
        %s732 = sphi %s35, %s35
        %s733 = sphi [#allocation3], [#allocation3]
      $region273: #{tpu_custom_call.1} parent=269 // loop_header_branch
        %730 = sbr.rel (%p728) target = $region277
      $region274: #{tpu_custom_call.1} parent=269 // loop_body
        %v734 = vld [vmem:[%s732] sm:%s725]
        %735 = vst [vmem:[%s733] sm:%s725] %v734
      $region275: #{tpu_custom_call.1} parent=269 // loop_footer
        %s731 = sadd.s32 1, %s727
      $region276: #{tpu_custom_call.1} parent=269 // loop_footer_branch
        %726 = sbr.rel target = $region272
      $region277: #{tpu_custom_call.1} parent=269 // loop_exit
        _
    $region270: #{tpu_custom_call.1} parent=1 // pred_fallthru
      _
    // Predicated region
    $region293: #{tpu_custom_call.1} parent=1 // pred_check
      _
    $region294: #{tpu_custom_call.1} parent=1 // pred_check_branch
      %1011 = sbr.rel (0) target = $region296
    $region295: #{tpu_custom_call.1} parent=1 // pred_region
      %1012 = vsyncadd %s716, 16384
    $region296: #{tpu_custom_call.1} parent=1 // pred_fallthru
      _
    %s1013 = scalar_lea.sflag [#allocation6], 2
    %p1015 = scmp.lt.u32.totalorder 4, 8
    %p1016 = pneg %p1015
    // Predicated region
    $region297: #{tpu_custom_call.1} parent=1 // pred_check
      _
    $region298: #{tpu_custom_call.1} parent=1 // pred_check_branch
      %1018 = sbr.rel (%p1015) target = $region300
    $region299: #{tpu_custom_call.1} parent=1 // pred_region
      %s1543 = sand.u32 4, 7
      %p1544 = scmp.eq.s32.totalorder %s1543, 0
      %p1545 = pneg %p1544
      // Predicated region
      $region312: #{tpu_custom_call.1} parent=299 // pred_check
        _
      $region313: #{tpu_custom_call.1} parent=299 // pred_check_branch
        %1547 = sbr.rel (%p1544) target = $region315
      $region314: #{tpu_custom_call.1} parent=299 // pred_region
        %s1548 = sand.u32 4, 7
        %s1549 = ssub.s32 4, %s1548
        %s1550 = scalar_lea.vmem %s65, %s1549
        %s1551 = ssub.s32 4, %s1548
        %s1552 = scalar_lea.vmem [#allocation4], %s1551
        loop: start=0, step=1, limit=1
        $region316: #{tpu_custom_call.1} parent=314 // loop_pre_header
          _
        $region317: #{tpu_custom_call.1} parent=314 // loop_header
          %s1554 = sphi 0, %s1558
          %p1555 = scmp.ge.s32.totalorder %s1554, 1
          %s1559 = sphi %s65, %s65
          %s1560 = sphi [#allocation4], [#allocation4]
        $region318: #{tpu_custom_call.1} parent=314 // loop_header_branch
          %1557 = sbr.rel (%p1555) target = $region322
        $region319: #{tpu_custom_call.1} parent=314 // loop_body
          _
        $region320: #{tpu_custom_call.1} parent=314 // loop_footer
          %s1558 = sadd.s32 1, %s1554
        $region321: #{tpu_custom_call.1} parent=314 // loop_footer_branch
          %1553 = sbr.rel target = $region317
        $region322: #{tpu_custom_call.1} parent=314 // loop_exit
          _
        %s1561 = sshllo.u32 0, %s1548
        loop: start=0, step=1, limit=1
        $region323: #{tpu_custom_call.1} parent=314 // loop_pre_header
          _
        $region324: #{tpu_custom_call.1} parent=314 // loop_header
          %s1563 = sphi 0, %s1567
          %p1564 = scmp.ge.s32.totalorder %s1563, 1
          %s1568 = sphi %s1550, %s1550
          %s1569 = sphi %s1552, %s1552
        $region325: #{tpu_custom_call.1} parent=314 // loop_header_branch
          %1566 = sbr.rel (%p1564) target = $region329
        $region326: #{tpu_custom_call.1} parent=314 // loop_body
          %v1570 = vld [vmem:[%s1568] sm:%s1561]
          %1571 = vst [vmem:[%s1569] sm:%s1561] %v1570
          %v1572 = vld [vmem:[%s1568 + $0x40] sm:%s1561]
          %1573 = vst [vmem:[%s1569 + $0x4] sm:%s1561] %v1572
          %v1574 = vld [vmem:[%s1568 + $0x4] sm:%s1561]
          %1575 = vst [vmem:[%s1569 + $0x8] sm:%s1561] %v1574
          %v1576 = vld [vmem:[%s1568 + $0x44] sm:%s1561]
          %1577 = vst [vmem:[%s1569 + $0xc] sm:%s1561] %v1576
          %v1578 = vld [vmem:[%s1568 + $0x8] sm:%s1561]
          %1579 = vst [vmem:[%s1569 + $0x10] sm:%s1561] %v1578
          %v1580 = vld [vmem:[%s1568 + $0x48] sm:%s1561]
          %1581 = vst [vmem:[%s1569 + $0x14] sm:%s1561] %v1580
          %v1582 = vld [vmem:[%s1568 + $0xc] sm:%s1561]
          %1583 = vst [vmem:[%s1569 + $0x18] sm:%s1561] %v1582
          %v1584 = vld [vmem:[%s1568 + $0x4c] sm:%s1561]
          %1585 = vst [vmem:[%s1569 + $0x1c] sm:%s1561] %v1584
          %v1586 = vld [vmem:[%s1568 + $0x10] sm:%s1561]
          %1587 = vst [vmem:[%s1569 + $0x20] sm:%s1561] %v1586
          %v1588 = vld [vmem:[%s1568 + $0x50] sm:%s1561]
          %1589 = vst [vmem:[%s1569 + $0x24] sm:%s1561] %v1588
          %v1590 = vld [vmem:[%s1568 + $0x14] sm:%s1561]
          %1591 = vst [vmem:[%s1569 + $0x28] sm:%s1561] %v1590
          %v1592 = vld [vmem:[%s1568 + $0x54] sm:%s1561]
          %1593 = vst [vmem:[%s1569 + $0x2c] sm:%s1561] %v1592
          %v1594 = vld [vmem:[%s1568 + $0x18] sm:%s1561]
          %1595 = vst [vmem:[%s1569 + $0x30] sm:%s1561] %v1594
          %v1596 = vld [vmem:[%s1568 + $0x58] sm:%s1561]
          %1597 = vst [vmem:[%s1569 + $0x34] sm:%s1561] %v1596
          %v1598 = vld [vmem:[%s1568 + $0x1c] sm:%s1561]
          %1599 = vst [vmem:[%s1569 + $0x38] sm:%s1561] %v1598
          %v1600 = vld [vmem:[%s1568 + $0x5c] sm:%s1561]
          %1601 = vst [vmem:[%s1569 + $0x3c] sm:%s1561] %v1600
          %v1602 = vld [vmem:[%s1568 + $0x20] sm:%s1561]
          %1603 = vst [vmem:[%s1569 + $0x40] sm:%s1561] %v1602
          %v1604 = vld [vmem:[%s1568 + $0x60] sm:%s1561]
          %1605 = vst [vmem:[%s1569 + $0x44] sm:%s1561] %v1604
          %v1606 = vld [vmem:[%s1568 + $0x24] sm:%s1561]
          %1607 = vst [vmem:[%s1569 + $0x48] sm:%s1561] %v1606
          %v1608 = vld [vmem:[%s1568 + $0x64] sm:%s1561]
          %1609 = vst [vmem:[%s1569 + $0x4c] sm:%s1561] %v1608
          %v1610 = vld [vmem:[%s1568 + $0x28] sm:%s1561]
          %1611 = vst [vmem:[%s1569 + $0x50] sm:%s1561] %v1610
          %v1612 = vld [vmem:[%s1568 + $0x68] sm:%s1561]
          %1613 = vst [vmem:[%s1569 + $0x54] sm:%s1561] %v1612
          %v1614 = vld [vmem:[%s1568 + $0x2c] sm:%s1561]
          %1615 = vst [vmem:[%s1569 + $0x58] sm:%s1561] %v1614
          %v1616 = vld [vmem:[%s1568 + $0x6c] sm:%s1561]
          %1617 = vst [vmem:[%s1569 + $0x5c] sm:%s1561] %v1616
          %v1618 = vld [vmem:[%s1568 + $0x30] sm:%s1561]
          %1619 = vst [vmem:[%s1569 + $0x60] sm:%s1561] %v1618
          %v1620 = vld [vmem:[%s1568 + $0x70] sm:%s1561]
          %1621 = vst [vmem:[%s1569 + $0x64] sm:%s1561] %v1620
          %v1622 = vld [vmem:[%s1568 + $0x34] sm:%s1561]
          %1623 = vst [vmem:[%s1569 + $0x68] sm:%s1561] %v1622
          %v1624 = vld [vmem:[%s1568 + $0x74] sm:%s1561]
          %1625 = vst [vmem:[%s1569 + $0x6c] sm:%s1561] %v1624
          %v1626 = vld [vmem:[%s1568 + $0x38] sm:%s1561]
          %1627 = vst [vmem:[%s1569 + $0x70] sm:%s1561] %v1626
          %v1628 = vld [vmem:[%s1568 + $0x78] sm:%s1561]
          %1629 = vst [vmem:[%s1569 + $0x74] sm:%s1561] %v1628
          %v1630 = vld [vmem:[%s1568 + $0x3c] sm:%s1561]
          %1631 = vst [vmem:[%s1569 + $0x78] sm:%s1561] %v1630
          %v1632 = vld [vmem:[%s1568 + $0x7c] sm:%s1561]
          %1633 = vst [vmem:[%s1569 + $0x7c] sm:%s1561] %v1632
          %v1634 = vld [vmem:[%s1568 + $0x80] sm:%s1561]
          %1635 = vst [vmem:[%s1569 + $0x80] sm:%s1561] %v1634
          %v1636 = vld [vmem:[%s1568 + $0xc0] sm:%s1561]
          %1637 = vst [vmem:[%s1569 + $0x84] sm:%s1561] %v1636
          %v1638 = vld [vmem:[%s1568 + $0x84] sm:%s1561]
          %1639 = vst [vmem:[%s1569 + $0x88] sm:%s1561] %v1638
          %v1640 = vld [vmem:[%s1568 + $0xc4] sm:%s1561]
          %1641 = vst [vmem:[%s1569 + $0x8c] sm:%s1561] %v1640
          %v1642 = vld [vmem:[%s1568 + $0x88] sm:%s1561]
          %1643 = vst [vmem:[%s1569 + $0x90] sm:%s1561] %v1642
          %v1644 = vld [vmem:[%s1568 + $0xc8] sm:%s1561]
          %1645 = vst [vmem:[%s1569 + $0x94] sm:%s1561] %v1644
          %v1646 = vld [vmem:[%s1568 + $0x8c] sm:%s1561]
          %1647 = vst [vmem:[%s1569 + $0x98] sm:%s1561] %v1646
          %v1648 = vld [vmem:[%s1568 + $0xcc] sm:%s1561]
          %1649 = vst [vmem:[%s1569 + $0x9c] sm:%s1561] %v1648
          %v1650 = vld [vmem:[%s1568 + $0x90] sm:%s1561]
          %1651 = vst [vmem:[%s1569 + $0xa0] sm:%s1561] %v1650
          %v1652 = vld [vmem:[%s1568 + $0xd0] sm:%s1561]
          %1653 = vst [vmem:[%s1569 + $0xa4] sm:%s1561] %v1652
          %v1654 = vld [vmem:[%s1568 + $0x94] sm:%s1561]
          %1655 = vst [vmem:[%s1569 + $0xa8] sm:%s1561] %v1654
          %v1656 = vld [vmem:[%s1568 + $0xd4] sm:%s1561]
          %1657 = vst [vmem:[%s1569 + $0xac] sm:%s1561] %v1656
          %v1658 = vld [vmem:[%s1568 + $0x98] sm:%s1561]
          %1659 = vst [vmem:[%s1569 + $0xb0] sm:%s1561] %v1658
          %v1660 = vld [vmem:[%s1568 + $0xd8] sm:%s1561]
          %1661 = vst [vmem:[%s1569 + $0xb4] sm:%s1561] %v1660
          %v1662 = vld [vmem:[%s1568 + $0x9c] sm:%s1561]
          %1663 = vst [vmem:[%s1569 + $0xb8] sm:%s1561] %v1662
          %v1664 = vld [vmem:[%s1568 + $0xdc] sm:%s1561]
          %1665 = vst [vmem:[%s1569 + $0xbc] sm:%s1561] %v1664
          %v1666 = vld [vmem:[%s1568 + $0xa0] sm:%s1561]
          %1667 = vst [vmem:[%s1569 + $0xc0] sm:%s1561] %v1666
          %v1668 = vld [vmem:[%s1568 + $0xe0] sm:%s1561]
          %1669 = vst [vmem:[%s1569 + $0xc4] sm:%s1561] %v1668
          %v1670 = vld [vmem:[%s1568 + $0xa4] sm:%s1561]
          %1671 = vst [vmem:[%s1569 + $0xc8] sm:%s1561] %v1670
          %v1672 = vld [vmem:[%s1568 + $0xe4] sm:%s1561]
          %1673 = vst [vmem:[%s1569 + $0xcc] sm:%s1561] %v1672
          %v1674 = vld [vmem:[%s1568 + $0xa8] sm:%s1561]
          %1675 = vst [vmem:[%s1569 + $0xd0] sm:%s1561] %v1674
          %v1676 = vld [vmem:[%s1568 + $0xe8] sm:%s1561]
          %1677 = vst [vmem:[%s1569 + $0xd4] sm:%s1561] %v1676
          %v1678 = vld [vmem:[%s1568 + $0xac] sm:%s1561]
          %1679 = vst [vmem:[%s1569 + $0xd8] sm:%s1561] %v1678
          %v1680 = vld [vmem:[%s1568 + $0xec] sm:%s1561]
          %1681 = vst [vmem:[%s1569 + $0xdc] sm:%s1561] %v1680
          %v1682 = vld [vmem:[%s1568 + $0xb0] sm:%s1561]
          %1683 = vst [vmem:[%s1569 + $0xe0] sm:%s1561] %v1682
          %v1684 = vld [vmem:[%s1568 + $0xf0] sm:%s1561]
          %1685 = vst [vmem:[%s1569 + $0xe4] sm:%s1561] %v1684
          %v1686 = vld [vmem:[%s1568 + $0xb4] sm:%s1561]
          %1687 = vst [vmem:[%s1569 + $0xe8] sm:%s1561] %v1686
          %v1688 = vld [vmem:[%s1568 + $0xf4] sm:%s1561]
          %1689 = vst [vmem:[%s1569 + $0xec] sm:%s1561] %v1688
          %v1690 = vld [vmem:[%s1568 + $0xb8] sm:%s1561]
          %1691 = vst [vmem:[%s1569 + $0xf0] sm:%s1561] %v1690
          %v1692 = vld [vmem:[%s1568 + $0xf8] sm:%s1561]
          %1693 = vst [vmem:[%s1569 + $0xf4] sm:%s1561] %v1692
          %v1694 = vld [vmem:[%s1568 + $0xbc] sm:%s1561]
          %1695 = vst [vmem:[%s1569 + $0xf8] sm:%s1561] %v1694
          %v1696 = vld [vmem:[%s1568 + $0xfc] sm:%s1561]
          %1697 = vst [vmem:[%s1569 + $0xfc] sm:%s1561] %v1696
          %v1698 = vld [vmem:[%s1568 + $0x100] sm:%s1561]
          %1699 = vst [vmem:[%s1569 + $0x100] sm:%s1561] %v1698
          %v1700 = vld [vmem:[%s1568 + $0x140] sm:%s1561]
          %1701 = vst [vmem:[%s1569 + $0x104] sm:%s1561] %v1700
          %v1702 = vld [vmem:[%s1568 + $0x104] sm:%s1561]
          %1703 = vst [vmem:[%s1569 + $0x108] sm:%s1561] %v1702
          %v1704 = vld [vmem:[%s1568 + $0x144] sm:%s1561]
          %1705 = vst [vmem:[%s1569 + $0x10c] sm:%s1561] %v1704
          %v1706 = vld [vmem:[%s1568 + $0x108] sm:%s1561]
          %1707 = vst [vmem:[%s1569 + $0x110] sm:%s1561] %v1706
          %v1708 = vld [vmem:[%s1568 + $0x148] sm:%s1561]
          %1709 = vst [vmem:[%s1569 + $0x114] sm:%s1561] %v1708
          %v1710 = vld [vmem:[%s1568 + $0x10c] sm:%s1561]
          %1711 = vst [vmem:[%s1569 + $0x118] sm:%s1561] %v1710
          %v1712 = vld [vmem:[%s1568 + $0x14c] sm:%s1561]
          %1713 = vst [vmem:[%s1569 + $0x11c] sm:%s1561] %v1712
          %v1714 = vld [vmem:[%s1568 + $0x110] sm:%s1561]
          %1715 = vst [vmem:[%s1569 + $0x120] sm:%s1561] %v1714
          %v1716 = vld [vmem:[%s1568 + $0x150] sm:%s1561]
          %1717 = vst [vmem:[%s1569 + $0x124] sm:%s1561] %v1716
          %v1718 = vld [vmem:[%s1568 + $0x114] sm:%s1561]
          %1719 = vst [vmem:[%s1569 + $0x128] sm:%s1561] %v1718
          %v1720 = vld [vmem:[%s1568 + $0x154] sm:%s1561]
          %1721 = vst [vmem:[%s1569 + $0x12c] sm:%s1561] %v1720
          %v1722 = vld [vmem:[%s1568 + $0x118] sm:%s1561]
          %1723 = vst [vmem:[%s1569 + $0x130] sm:%s1561] %v1722
          %v1724 = vld [vmem:[%s1568 + $0x158] sm:%s1561]
          %1725 = vst [vmem:[%s1569 + $0x134] sm:%s1561] %v1724
          %v1726 = vld [vmem:[%s1568 + $0x11c] sm:%s1561]
          %1727 = vst [vmem:[%s1569 + $0x138] sm:%s1561] %v1726
          %v1728 = vld [vmem:[%s1568 + $0x15c] sm:%s1561]
          %1729 = vst [vmem:[%s1569 + $0x13c] sm:%s1561] %v1728
          %v1730 = vld [vmem:[%s1568 + $0x120] sm:%s1561]
          %1731 = vst [vmem:[%s1569 + $0x140] sm:%s1561] %v1730
          %v1732 = vld [vmem:[%s1568 + $0x160] sm:%s1561]
          %1733 = vst [vmem:[%s1569 + $0x144] sm:%s1561] %v1732
          %v1734 = vld [vmem:[%s1568 + $0x124] sm:%s1561]
          %1735 = vst [vmem:[%s1569 + $0x148] sm:%s1561] %v1734
          %v1736 = vld [vmem:[%s1568 + $0x164] sm:%s1561]
          %1737 = vst [vmem:[%s1569 + $0x14c] sm:%s1561] %v1736
          %v1738 = vld [vmem:[%s1568 + $0x128] sm:%s1561]
          %1739 = vst [vmem:[%s1569 + $0x150] sm:%s1561] %v1738
          %v1740 = vld [vmem:[%s1568 + $0x168] sm:%s1561]
          %1741 = vst [vmem:[%s1569 + $0x154] sm:%s1561] %v1740
          %v1742 = vld [vmem:[%s1568 + $0x12c] sm:%s1561]
          %1743 = vst [vmem:[%s1569 + $0x158] sm:%s1561] %v1742
          %v1744 = vld [vmem:[%s1568 + $0x16c] sm:%s1561]
          %1745 = vst [vmem:[%s1569 + $0x15c] sm:%s1561] %v1744
          %v1746 = vld [vmem:[%s1568 + $0x130] sm:%s1561]
          %1747 = vst [vmem:[%s1569 + $0x160] sm:%s1561] %v1746
          %v1748 = vld [vmem:[%s1568 + $0x170] sm:%s1561]
          %1749 = vst [vmem:[%s1569 + $0x164] sm:%s1561] %v1748
          %v1750 = vld [vmem:[%s1568 + $0x134] sm:%s1561]
          %1751 = vst [vmem:[%s1569 + $0x168] sm:%s1561] %v1750
          %v1752 = vld [vmem:[%s1568 + $0x174] sm:%s1561]
          %1753 = vst [vmem:[%s1569 + $0x16c] sm:%s1561] %v1752
          %v1754 = vld [vmem:[%s1568 + $0x138] sm:%s1561]
          %1755 = vst [vmem:[%s1569 + $0x170] sm:%s1561] %v1754
          %v1756 = vld [vmem:[%s1568 + $0x178] sm:%s1561]
          %1757 = vst [vmem:[%s1569 + $0x174] sm:%s1561] %v1756
          %v1758 = vld [vmem:[%s1568 + $0x13c] sm:%s1561]
          %1759 = vst [vmem:[%s1569 + $0x178] sm:%s1561] %v1758
          %v1760 = vld [vmem:[%s1568 + $0x17c] sm:%s1561]
          %1761 = vst [vmem:[%s1569 + $0x17c] sm:%s1561] %v1760
          %v1762 = vld [vmem:[%s1568 + $0x180] sm:%s1561]
          %1763 = vst [vmem:[%s1569 + $0x180] sm:%s1561] %v1762
          %v1764 = vld [vmem:[%s1568 + $0x1c0] sm:%s1561]
          %1765 = vst [vmem:[%s1569 + $0x184] sm:%s1561] %v1764
          %v1766 = vld [vmem:[%s1568 + $0x184] sm:%s1561]
          %1767 = vst [vmem:[%s1569 + $0x188] sm:%s1561] %v1766
          %v1768 = vld [vmem:[%s1568 + $0x1c4] sm:%s1561]
          %1769 = vst [vmem:[%s1569 + $0x18c] sm:%s1561] %v1768
          %v1770 = vld [vmem:[%s1568 + $0x188] sm:%s1561]
          %1771 = vst [vmem:[%s1569 + $0x190] sm:%s1561] %v1770
          %v1772 = vld [vmem:[%s1568 + $0x1c8] sm:%s1561]
          %1773 = vst [vmem:[%s1569 + $0x194] sm:%s1561] %v1772
          %v1774 = vld [vmem:[%s1568 + $0x18c] sm:%s1561]
          %1775 = vst [vmem:[%s1569 + $0x198] sm:%s1561] %v1774
          %v1776 = vld [vmem:[%s1568 + $0x1cc] sm:%s1561]
          %1777 = vst [vmem:[%s1569 + $0x19c] sm:%s1561] %v1776
          %v1778 = vld [vmem:[%s1568 + $0x190] sm:%s1561]
          %1779 = vst [vmem:[%s1569 + $0x1a0] sm:%s1561] %v1778
          %v1780 = vld [vmem:[%s1568 + $0x1d0] sm:%s1561]
          %1781 = vst [vmem:[%s1569 + $0x1a4] sm:%s1561] %v1780
          %v1782 = vld [vmem:[%s1568 + $0x194] sm:%s1561]
          %1783 = vst [vmem:[%s1569 + $0x1a8] sm:%s1561] %v1782
          %v1784 = vld [vmem:[%s1568 + $0x1d4] sm:%s1561]
          %1785 = vst [vmem:[%s1569 + $0x1ac] sm:%s1561] %v1784
          %v1786 = vld [vmem:[%s1568 + $0x198] sm:%s1561]
          %1787 = vst [vmem:[%s1569 + $0x1b0] sm:%s1561] %v1786
          %v1788 = vld [vmem:[%s1568 + $0x1d8] sm:%s1561]
          %1789 = vst [vmem:[%s1569 + $0x1b4] sm:%s1561] %v1788
          %v1790 = vld [vmem:[%s1568 + $0x19c] sm:%s1561]
          %1791 = vst [vmem:[%s1569 + $0x1b8] sm:%s1561] %v1790
          %v1792 = vld [vmem:[%s1568 + $0x1dc] sm:%s1561]
          %1793 = vst [vmem:[%s1569 + $0x1bc] sm:%s1561] %v1792
          %v1794 = vld [vmem:[%s1568 + $0x1a0] sm:%s1561]
          %1795 = vst [vmem:[%s1569 + $0x1c0] sm:%s1561] %v1794
          %v1796 = vld [vmem:[%s1568 + $0x1e0] sm:%s1561]
          %1797 = vst [vmem:[%s1569 + $0x1c4] sm:%s1561] %v1796
          %v1798 = vld [vmem:[%s1568 + $0x1a4] sm:%s1561]
          %1799 = vst [vmem:[%s1569 + $0x1c8] sm:%s1561] %v1798
          %v1800 = vld [vmem:[%s1568 + $0x1e4] sm:%s1561]
          %1801 = vst [vmem:[%s1569 + $0x1cc] sm:%s1561] %v1800
          %v1802 = vld [vmem:[%s1568 + $0x1a8] sm:%s1561]
          %1803 = vst [vmem:[%s1569 + $0x1d0] sm:%s1561] %v1802
          %v1804 = vld [vmem:[%s1568 + $0x1e8] sm:%s1561]
          %1805 = vst [vmem:[%s1569 + $0x1d4] sm:%s1561] %v1804
          %v1806 = vld [vmem:[%s1568 + $0x1ac] sm:%s1561]
          %1807 = vst [vmem:[%s1569 + $0x1d8] sm:%s1561] %v1806
          %v1808 = vld [vmem:[%s1568 + $0x1ec] sm:%s1561]
          %1809 = vst [vmem:[%s1569 + $0x1dc] sm:%s1561] %v1808
          %v1810 = vld [vmem:[%s1568 + $0x1b0] sm:%s1561]
          %1811 = vst [vmem:[%s1569 + $0x1e0] sm:%s1561] %v1810
          %v1812 = vld [vmem:[%s1568 + $0x1f0] sm:%s1561]
          %1813 = vst [vmem:[%s1569 + $0x1e4] sm:%s1561] %v1812
          %v1814 = vld [vmem:[%s1568 + $0x1b4] sm:%s1561]
          %1815 = vst [vmem:[%s1569 + $0x1e8] sm:%s1561] %v1814
          %v1816 = vld [vmem:[%s1568 + $0x1f4] sm:%s1561]
          %1817 = vst [vmem:[%s1569 + $0x1ec] sm:%s1561] %v1816
          %v1818 = vld [vmem:[%s1568 + $0x1b8] sm:%s1561]
          %1819 = vst [vmem:[%s1569 + $0x1f0] sm:%s1561] %v1818
          %v1820 = vld [vmem:[%s1568 + $0x1f8] sm:%s1561]
          %1821 = vst [vmem:[%s1569 + $0x1f4] sm:%s1561] %v1820
          %v1822 = vld [vmem:[%s1568 + $0x1bc] sm:%s1561]
          %1823 = vst [vmem:[%s1569 + $0x1f8] sm:%s1561] %v1822
          %v1824 = vld [vmem:[%s1568 + $0x1fc] sm:%s1561]
          %1825 = vst [vmem:[%s1569 + $0x1fc] sm:%s1561] %v1824
          %v1826 = vld [vmem:[%s1568 + $0x200] sm:%s1561]
          %1827 = vst [vmem:[%s1569 + $0x200] sm:%s1561] %v1826
          %v1828 = vld [vmem:[%s1568 + $0x240] sm:%s1561]
          %1829 = vst [vmem:[%s1569 + $0x204] sm:%s1561] %v1828
          %v1830 = vld [vmem:[%s1568 + $0x204] sm:%s1561]
          %1831 = vst [vmem:[%s1569 + $0x208] sm:%s1561] %v1830
          %v1832 = vld [vmem:[%s1568 + $0x244] sm:%s1561]
          %1833 = vst [vmem:[%s1569 + $0x20c] sm:%s1561] %v1832
          %v1834 = vld [vmem:[%s1568 + $0x208] sm:%s1561]
          %1835 = vst [vmem:[%s1569 + $0x210] sm:%s1561] %v1834
          %v1836 = vld [vmem:[%s1568 + $0x248] sm:%s1561]
          %1837 = vst [vmem:[%s1569 + $0x214] sm:%s1561] %v1836
          %v1838 = vld [vmem:[%s1568 + $0x20c] sm:%s1561]
          %1839 = vst [vmem:[%s1569 + $0x218] sm:%s1561] %v1838
          %v1840 = vld [vmem:[%s1568 + $0x24c] sm:%s1561]
          %1841 = vst [vmem:[%s1569 + $0x21c] sm:%s1561] %v1840
          %v1842 = vld [vmem:[%s1568 + $0x210] sm:%s1561]
          %1843 = vst [vmem:[%s1569 + $0x220] sm:%s1561] %v1842
          %v1844 = vld [vmem:[%s1568 + $0x250] sm:%s1561]
          %1845 = vst [vmem:[%s1569 + $0x224] sm:%s1561] %v1844
          %v1846 = vld [vmem:[%s1568 + $0x214] sm:%s1561]
          %1847 = vst [vmem:[%s1569 + $0x228] sm:%s1561] %v1846
          %v1848 = vld [vmem:[%s1568 + $0x254] sm:%s1561]
          %1849 = vst [vmem:[%s1569 + $0x22c] sm:%s1561] %v1848
          %v1850 = vld [vmem:[%s1568 + $0x218] sm:%s1561]
          %1851 = vst [vmem:[%s1569 + $0x230] sm:%s1561] %v1850
          %v1852 = vld [vmem:[%s1568 + $0x258] sm:%s1561]
          %1853 = vst [vmem:[%s1569 + $0x234] sm:%s1561] %v1852
          %v1854 = vld [vmem:[%s1568 + $0x21c] sm:%s1561]
          %1855 = vst [vmem:[%s1569 + $0x238] sm:%s1561] %v1854
          %v1856 = vld [vmem:[%s1568 + $0x25c] sm:%s1561]
          %1857 = vst [vmem:[%s1569 + $0x23c] sm:%s1561] %v1856
          %v1858 = vld [vmem:[%s1568 + $0x220] sm:%s1561]
          %1859 = vst [vmem:[%s1569 + $0x240] sm:%s1561] %v1858
          %v1860 = vld [vmem:[%s1568 + $0x260] sm:%s1561]
          %1861 = vst [vmem:[%s1569 + $0x244] sm:%s1561] %v1860
          %v1862 = vld [vmem:[%s1568 + $0x224] sm:%s1561]
          %1863 = vst [vmem:[%s1569 + $0x248] sm:%s1561] %v1862
          %v1864 = vld [vmem:[%s1568 + $0x264] sm:%s1561]
          %1865 = vst [vmem:[%s1569 + $0x24c] sm:%s1561] %v1864
          %v1866 = vld [vmem:[%s1568 + $0x228] sm:%s1561]
          %1867 = vst [vmem:[%s1569 + $0x250] sm:%s1561] %v1866
          %v1868 = vld [vmem:[%s1568 + $0x268] sm:%s1561]
          %1869 = vst [vmem:[%s1569 + $0x254] sm:%s1561] %v1868
          %v1870 = vld [vmem:[%s1568 + $0x22c] sm:%s1561]
          %1871 = vst [vmem:[%s1569 + $0x258] sm:%s1561] %v1870
          %v1872 = vld [vmem:[%s1568 + $0x26c] sm:%s1561]
          %1873 = vst [vmem:[%s1569 + $0x25c] sm:%s1561] %v1872
          %v1874 = vld [vmem:[%s1568 + $0x230] sm:%s1561]
          %1875 = vst [vmem:[%s1569 + $0x260] sm:%s1561] %v1874
          %v1876 = vld [vmem:[%s1568 + $0x270] sm:%s1561]
          %1877 = vst [vmem:[%s1569 + $0x264] sm:%s1561] %v1876
          %v1878 = vld [vmem:[%s1568 + $0x234] sm:%s1561]
          %1879 = vst [vmem:[%s1569 + $0x268] sm:%s1561] %v1878
          %v1880 = vld [vmem:[%s1568 + $0x274] sm:%s1561]
          %1881 = vst [vmem:[%s1569 + $0x26c] sm:%s1561] %v1880
          %v1882 = vld [vmem:[%s1568 + $0x238] sm:%s1561]
          %1883 = vst [vmem:[%s1569 + $0x270] sm:%s1561] %v1882
          %v1884 = vld [vmem:[%s1568 + $0x278] sm:%s1561]
          %1885 = vst [vmem:[%s1569 + $0x274] sm:%s1561] %v1884
          %v1886 = vld [vmem:[%s1568 + $0x23c] sm:%s1561]
          %1887 = vst [vmem:[%s1569 + $0x278] sm:%s1561] %v1886
          %v1888 = vld [vmem:[%s1568 + $0x27c] sm:%s1561]
          %1889 = vst [vmem:[%s1569 + $0x27c] sm:%s1561] %v1888
          %v1890 = vld [vmem:[%s1568 + $0x280] sm:%s1561]
          %1891 = vst [vmem:[%s1569 + $0x280] sm:%s1561] %v1890
          %v1892 = vld [vmem:[%s1568 + $0x2c0] sm:%s1561]
          %1893 = vst [vmem:[%s1569 + $0x284] sm:%s1561] %v1892
          %v1894 = vld [vmem:[%s1568 + $0x284] sm:%s1561]
          %1895 = vst [vmem:[%s1569 + $0x288] sm:%s1561] %v1894
          %v1896 = vld [vmem:[%s1568 + $0x2c4] sm:%s1561]
          %1897 = vst [vmem:[%s1569 + $0x28c] sm:%s1561] %v1896
          %v1898 = vld [vmem:[%s1568 + $0x288] sm:%s1561]
          %1899 = vst [vmem:[%s1569 + $0x290] sm:%s1561] %v1898
          %v1900 = vld [vmem:[%s1568 + $0x2c8] sm:%s1561]
          %1901 = vst [vmem:[%s1569 + $0x294] sm:%s1561] %v1900
          %v1902 = vld [vmem:[%s1568 + $0x28c] sm:%s1561]
          %1903 = vst [vmem:[%s1569 + $0x298] sm:%s1561] %v1902
          %v1904 = vld [vmem:[%s1568 + $0x2cc] sm:%s1561]
          %1905 = vst [vmem:[%s1569 + $0x29c] sm:%s1561] %v1904
          %v1906 = vld [vmem:[%s1568 + $0x290] sm:%s1561]
          %1907 = vst [vmem:[%s1569 + $0x2a0] sm:%s1561] %v1906
          %v1908 = vld [vmem:[%s1568 + $0x2d0] sm:%s1561]
          %1909 = vst [vmem:[%s1569 + $0x2a4] sm:%s1561] %v1908
          %v1910 = vld [vmem:[%s1568 + $0x294] sm:%s1561]
          %1911 = vst [vmem:[%s1569 + $0x2a8] sm:%s1561] %v1910
          %v1912 = vld [vmem:[%s1568 + $0x2d4] sm:%s1561]
          %1913 = vst [vmem:[%s1569 + $0x2ac] sm:%s1561] %v1912
          %v1914 = vld [vmem:[%s1568 + $0x298] sm:%s1561]
          %1915 = vst [vmem:[%s1569 + $0x2b0] sm:%s1561] %v1914
          %v1916 = vld [vmem:[%s1568 + $0x2d8] sm:%s1561]
          %1917 = vst [vmem:[%s1569 + $0x2b4] sm:%s1561] %v1916
          %v1918 = vld [vmem:[%s1568 + $0x29c] sm:%s1561]
          %1919 = vst [vmem:[%s1569 + $0x2b8] sm:%s1561] %v1918
          %v1920 = vld [vmem:[%s1568 + $0x2dc] sm:%s1561]
          %1921 = vst [vmem:[%s1569 + $0x2bc] sm:%s1561] %v1920
          %v1922 = vld [vmem:[%s1568 + $0x2a0] sm:%s1561]
          %1923 = vst [vmem:[%s1569 + $0x2c0] sm:%s1561] %v1922
          %v1924 = vld [vmem:[%s1568 + $0x2e0] sm:%s1561]
          %1925 = vst [vmem:[%s1569 + $0x2c4] sm:%s1561] %v1924
          %v1926 = vld [vmem:[%s1568 + $0x2a4] sm:%s1561]
          %1927 = vst [vmem:[%s1569 + $0x2c8] sm:%s1561] %v1926
          %v1928 = vld [vmem:[%s1568 + $0x2e4] sm:%s1561]
          %1929 = vst [vmem:[%s1569 + $0x2cc] sm:%s1561] %v1928
          %v1930 = vld [vmem:[%s1568 + $0x2a8] sm:%s1561]
          %1931 = vst [vmem:[%s1569 + $0x2d0] sm:%s1561] %v1930
          %v1932 = vld [vmem:[%s1568 + $0x2e8] sm:%s1561]
          %1933 = vst [vmem:[%s1569 + $0x2d4] sm:%s1561] %v1932
          %v1934 = vld [vmem:[%s1568 + $0x2ac] sm:%s1561]
          %1935 = vst [vmem:[%s1569 + $0x2d8] sm:%s1561] %v1934
          %v1936 = vld [vmem:[%s1568 + $0x2ec] sm:%s1561]
          %1937 = vst [vmem:[%s1569 + $0x2dc] sm:%s1561] %v1936
          %v1938 = vld [vmem:[%s1568 + $0x2b0] sm:%s1561]
          %1939 = vst [vmem:[%s1569 + $0x2e0] sm:%s1561] %v1938
          %v1940 = vld [vmem:[%s1568 + $0x2f0] sm:%s1561]
          %1941 = vst [vmem:[%s1569 + $0x2e4] sm:%s1561] %v1940
          %v1942 = vld [vmem:[%s1568 + $0x2b4] sm:%s1561]
          %1943 = vst [vmem:[%s1569 + $0x2e8] sm:%s1561] %v1942
          %v1944 = vld [vmem:[%s1568 + $0x2f4] sm:%s1561]
          %1945 = vst [vmem:[%s1569 + $0x2ec] sm:%s1561] %v1944
          %v1946 = vld [vmem:[%s1568 + $0x2b8] sm:%s1561]
          %1947 = vst [vmem:[%s1569 + $0x2f0] sm:%s1561] %v1946
          %v1948 = vld [vmem:[%s1568 + $0x2f8] sm:%s1561]
          %1949 = vst [vmem:[%s1569 + $0x2f4] sm:%s1561] %v1948
          %v1950 = vld [vmem:[%s1568 + $0x2bc] sm:%s1561]
          %1951 = vst [vmem:[%s1569 + $0x2f8] sm:%s1561] %v1950
          %v1952 = vld [vmem:[%s1568 + $0x2fc] sm:%s1561]
          %1953 = vst [vmem:[%s1569 + $0x2fc] sm:%s1561] %v1952
          %v1954 = vld [vmem:[%s1568 + $0x300] sm:%s1561]
          %1955 = vst [vmem:[%s1569 + $0x300] sm:%s1561] %v1954
          %v1956 = vld [vmem:[%s1568 + $0x340] sm:%s1561]
          %1957 = vst [vmem:[%s1569 + $0x304] sm:%s1561] %v1956
          %v1958 = vld [vmem:[%s1568 + $0x304] sm:%s1561]
          %1959 = vst [vmem:[%s1569 + $0x308] sm:%s1561] %v1958
          %v1960 = vld [vmem:[%s1568 + $0x344] sm:%s1561]
          %1961 = vst [vmem:[%s1569 + $0x30c] sm:%s1561] %v1960
          %v1962 = vld [vmem:[%s1568 + $0x308] sm:%s1561]
          %1963 = vst [vmem:[%s1569 + $0x310] sm:%s1561] %v1962
          %v1964 = vld [vmem:[%s1568 + $0x348] sm:%s1561]
          %1965 = vst [vmem:[%s1569 + $0x314] sm:%s1561] %v1964
          %v1966 = vld [vmem:[%s1568 + $0x30c] sm:%s1561]
          %1967 = vst [vmem:[%s1569 + $0x318] sm:%s1561] %v1966
          %v1968 = vld [vmem:[%s1568 + $0x34c] sm:%s1561]
          %1969 = vst [vmem:[%s1569 + $0x31c] sm:%s1561] %v1968
          %v1970 = vld [vmem:[%s1568 + $0x310] sm:%s1561]
          %1971 = vst [vmem:[%s1569 + $0x320] sm:%s1561] %v1970
          %v1972 = vld [vmem:[%s1568 + $0x350] sm:%s1561]
          %1973 = vst [vmem:[%s1569 + $0x324] sm:%s1561] %v1972
          %v1974 = vld [vmem:[%s1568 + $0x314] sm:%s1561]
          %1975 = vst [vmem:[%s1569 + $0x328] sm:%s1561] %v1974
          %v1976 = vld [vmem:[%s1568 + $0x354] sm:%s1561]
          %1977 = vst [vmem:[%s1569 + $0x32c] sm:%s1561] %v1976
          %v1978 = vld [vmem:[%s1568 + $0x318] sm:%s1561]
          %1979 = vst [vmem:[%s1569 + $0x330] sm:%s1561] %v1978
          %v1980 = vld [vmem:[%s1568 + $0x358] sm:%s1561]
          %1981 = vst [vmem:[%s1569 + $0x334] sm:%s1561] %v1980
          %v1982 = vld [vmem:[%s1568 + $0x31c] sm:%s1561]
          %1983 = vst [vmem:[%s1569 + $0x338] sm:%s1561] %v1982
          %v1984 = vld [vmem:[%s1568 + $0x35c] sm:%s1561]
          %1985 = vst [vmem:[%s1569 + $0x33c] sm:%s1561] %v1984
          %v1986 = vld [vmem:[%s1568 + $0x320] sm:%s1561]
          %1987 = vst [vmem:[%s1569 + $0x340] sm:%s1561] %v1986
          %v1988 = vld [vmem:[%s1568 + $0x360] sm:%s1561]
          %1989 = vst [vmem:[%s1569 + $0x344] sm:%s1561] %v1988
          %v1990 = vld [vmem:[%s1568 + $0x324] sm:%s1561]
          %1991 = vst [vmem:[%s1569 + $0x348] sm:%s1561] %v1990
          %v1992 = vld [vmem:[%s1568 + $0x364] sm:%s1561]
          %1993 = vst [vmem:[%s1569 + $0x34c] sm:%s1561] %v1992
          %v1994 = vld [vmem:[%s1568 + $0x328] sm:%s1561]
          %1995 = vst [vmem:[%s1569 + $0x350] sm:%s1561] %v1994
          %v1996 = vld [vmem:[%s1568 + $0x368] sm:%s1561]
          %1997 = vst [vmem:[%s1569 + $0x354] sm:%s1561] %v1996
          %v1998 = vld [vmem:[%s1568 + $0x32c] sm:%s1561]
          %1999 = vst [vmem:[%s1569 + $0x358] sm:%s1561] %v1998
          %v2000 = vld [vmem:[%s1568 + $0x36c] sm:%s1561]
          %2001 = vst [vmem:[%s1569 + $0x35c] sm:%s1561] %v2000
          %v2002 = vld [vmem:[%s1568 + $0x330] sm:%s1561]
          %2003 = vst [vmem:[%s1569 + $0x360] sm:%s1561] %v2002
          %v2004 = vld [vmem:[%s1568 + $0x370] sm:%s1561]
          %2005 = vst [vmem:[%s1569 + $0x364] sm:%s1561] %v2004
          %v2006 = vld [vmem:[%s1568 + $0x334] sm:%s1561]
          %2007 = vst [vmem:[%s1569 + $0x368] sm:%s1561] %v2006
          %v2008 = vld [vmem:[%s1568 + $0x374] sm:%s1561]
          %2009 = vst [vmem:[%s1569 + $0x36c] sm:%s1561] %v2008
          %v2010 = vld [vmem:[%s1568 + $0x338] sm:%s1561]
          %2011 = vst [vmem:[%s1569 + $0x370] sm:%s1561] %v2010
          %v2012 = vld [vmem:[%s1568 + $0x378] sm:%s1561]
          %2013 = vst [vmem:[%s1569 + $0x374] sm:%s1561] %v2012
          %v2014 = vld [vmem:[%s1568 + $0x33c] sm:%s1561]
          %2015 = vst [vmem:[%s1569 + $0x378] sm:%s1561] %v2014
          %v2016 = vld [vmem:[%s1568 + $0x37c] sm:%s1561]
          %2017 = vst [vmem:[%s1569 + $0x37c] sm:%s1561] %v2016
          %v2018 = vld [vmem:[%s1568 + $0x380] sm:%s1561]
          %2019 = vst [vmem:[%s1569 + $0x380] sm:%s1561] %v2018
          %v2020 = vld [vmem:[%s1568 + $0x3c0] sm:%s1561]
          %2021 = vst [vmem:[%s1569 + $0x384] sm:%s1561] %v2020
          %v2022 = vld [vmem:[%s1568 + $0x384] sm:%s1561]
          %2023 = vst [vmem:[%s1569 + $0x388] sm:%s1561] %v2022
          %v2024 = vld [vmem:[%s1568 + $0x3c4] sm:%s1561]
          %2025 = vst [vmem:[%s1569 + $0x38c] sm:%s1561] %v2024
          %v2026 = vld [vmem:[%s1568 + $0x388] sm:%s1561]
          %2027 = vst [vmem:[%s1569 + $0x390] sm:%s1561] %v2026
          %v2028 = vld [vmem:[%s1568 + $0x3c8] sm:%s1561]
          %2029 = vst [vmem:[%s1569 + $0x394] sm:%s1561] %v2028
          %v2030 = vld [vmem:[%s1568 + $0x38c] sm:%s1561]
          %2031 = vst [vmem:[%s1569 + $0x398] sm:%s1561] %v2030
          %v2032 = vld [vmem:[%s1568 + $0x3cc] sm:%s1561]
          %2033 = vst [vmem:[%s1569 + $0x39c] sm:%s1561] %v2032
          %v2034 = vld [vmem:[%s1568 + $0x390] sm:%s1561]
          %2035 = vst [vmem:[%s1569 + $0x3a0] sm:%s1561] %v2034
          %v2036 = vld [vmem:[%s1568 + $0x3d0] sm:%s1561]
          %2037 = vst [vmem:[%s1569 + $0x3a4] sm:%s1561] %v2036
          %v2038 = vld [vmem:[%s1568 + $0x394] sm:%s1561]
          %2039 = vst [vmem:[%s1569 + $0x3a8] sm:%s1561] %v2038
          %v2040 = vld [vmem:[%s1568 + $0x3d4] sm:%s1561]
          %2041 = vst [vmem:[%s1569 + $0x3ac] sm:%s1561] %v2040
          %v2042 = vld [vmem:[%s1568 + $0x398] sm:%s1561]
          %2043 = vst [vmem:[%s1569 + $0x3b0] sm:%s1561] %v2042
          %v2044 = vld [vmem:[%s1568 + $0x3d8] sm:%s1561]
          %2045 = vst [vmem:[%s1569 + $0x3b4] sm:%s1561] %v2044
          %v2046 = vld [vmem:[%s1568 + $0x39c] sm:%s1561]
          %2047 = vst [vmem:[%s1569 + $0x3b8] sm:%s1561] %v2046
          %v2048 = vld [vmem:[%s1568 + $0x3dc] sm:%s1561]
          %2049 = vst [vmem:[%s1569 + $0x3bc] sm:%s1561] %v2048
          %v2050 = vld [vmem:[%s1568 + $0x3a0] sm:%s1561]
          %2051 = vst [vmem:[%s1569 + $0x3c0] sm:%s1561] %v2050
          %v2052 = vld [vmem:[%s1568 + $0x3e0] sm:%s1561]
          %2053 = vst [vmem:[%s1569 + $0x3c4] sm:%s1561] %v2052
          %v2054 = vld [vmem:[%s1568 + $0x3a4] sm:%s1561]
          %2055 = vst [vmem:[%s1569 + $0x3c8] sm:%s1561] %v2054
          %v2056 = vld [vmem:[%s1568 + $0x3e4] sm:%s1561]
          %2057 = vst [vmem:[%s1569 + $0x3cc] sm:%s1561] %v2056
          %v2058 = vld [vmem:[%s1568 + $0x3a8] sm:%s1561]
          %2059 = vst [vmem:[%s1569 + $0x3d0] sm:%s1561] %v2058
          %v2060 = vld [vmem:[%s1568 + $0x3e8] sm:%s1561]
          %2061 = vst [vmem:[%s1569 + $0x3d4] sm:%s1561] %v2060
          %v2062 = vld [vmem:[%s1568 + $0x3ac] sm:%s1561]
          %2063 = vst [vmem:[%s1569 + $0x3d8] sm:%s1561] %v2062
          %v2064 = vld [vmem:[%s1568 + $0x3ec] sm:%s1561]
          %2065 = vst [vmem:[%s1569 + $0x3dc] sm:%s1561] %v2064
          %v2066 = vld [vmem:[%s1568 + $0x3b0] sm:%s1561]
          %2067 = vst [vmem:[%s1569 + $0x3e0] sm:%s1561] %v2066
          %v2068 = vld [vmem:[%s1568 + $0x3f0] sm:%s1561]
          %2069 = vst [vmem:[%s1569 + $0x3e4] sm:%s1561] %v2068
          %v2070 = vld [vmem:[%s1568 + $0x3b4] sm:%s1561]
          %2071 = vst [vmem:[%s1569 + $0x3e8] sm:%s1561] %v2070
          %v2072 = vld [vmem:[%s1568 + $0x3f4] sm:%s1561]
          %2073 = vst [vmem:[%s1569 + $0x3ec] sm:%s1561] %v2072
          %v2074 = vld [vmem:[%s1568 + $0x3b8] sm:%s1561]
          %2075 = vst [vmem:[%s1569 + $0x3f0] sm:%s1561] %v2074
          %v2076 = vld [vmem:[%s1568 + $0x3f8] sm:%s1561]
          %2077 = vst [vmem:[%s1569 + $0x3f4] sm:%s1561] %v2076
          %v2078 = vld [vmem:[%s1568 + $0x3bc] sm:%s1561]
          %2079 = vst [vmem:[%s1569 + $0x3f8] sm:%s1561] %v2078
          %v2080 = vld [vmem:[%s1568 + $0x3fc] sm:%s1561]
          %2081 = vst [vmem:[%s1569 + $0x3fc] sm:%s1561] %v2080
        $region327: #{tpu_custom_call.1} parent=314 // loop_footer
          %s1567 = sadd.s32 1, %s1563
        $region328: #{tpu_custom_call.1} parent=314 // loop_footer_branch
          %1562 = sbr.rel target = $region324
        $region329: #{tpu_custom_call.1} parent=314 // loop_exit
          _
      $region315: #{tpu_custom_call.1} parent=299 // pred_fallthru
        _
    $region300: #{tpu_custom_call.1} parent=1 // pred_fallthru
      _
    // Predicated region
    $region301: #{tpu_custom_call.1} parent=1 // pred_check
      %p1019 = pneg %p1015
    $region302: #{tpu_custom_call.1} parent=1 // pred_check_branch
      %1021 = sbr.rel (%p1019) target = $region304
    $region303: #{tpu_custom_call.1} parent=1 // pred_region
      %s1022 = sshllo.u32 0, 4
      loop: start=0, step=1, limit=1
      $region305: #{tpu_custom_call.1} parent=303 // loop_pre_header
        _
      $region306: #{tpu_custom_call.1} parent=303 // loop_header
        %s1024 = sphi 0, %s1028
        %p1025 = scmp.ge.s32.totalorder %s1024, 1
        %s1029 = sphi %s65, %s65
        %s1030 = sphi [#allocation4], [#allocation4]
      $region307: #{tpu_custom_call.1} parent=303 // loop_header_branch
        %1027 = sbr.rel (%p1025) target = $region311
      $region308: #{tpu_custom_call.1} parent=303 // loop_body
        %v1031 = vld [vmem:[%s1029] sm:%s1022]
        %1032 = vst [vmem:[%s1030] sm:%s1022] %v1031
        %v1033 = vld [vmem:[%s1029 + $0x40] sm:%s1022]
        %1034 = vst [vmem:[%s1030 + $0x4] sm:%s1022] %v1033
        %v1035 = vld [vmem:[%s1029 + $0x4] sm:%s1022]
        %1036 = vst [vmem:[%s1030 + $0x8] sm:%s1022] %v1035
        %v1037 = vld [vmem:[%s1029 + $0x44] sm:%s1022]
        %1038 = vst [vmem:[%s1030 + $0xc] sm:%s1022] %v1037
        %v1039 = vld [vmem:[%s1029 + $0x8] sm:%s1022]
        %1040 = vst [vmem:[%s1030 + $0x10] sm:%s1022] %v1039
        %v1041 = vld [vmem:[%s1029 + $0x48] sm:%s1022]
        %1042 = vst [vmem:[%s1030 + $0x14] sm:%s1022] %v1041
        %v1043 = vld [vmem:[%s1029 + $0xc] sm:%s1022]
        %1044 = vst [vmem:[%s1030 + $0x18] sm:%s1022] %v1043
        %v1045 = vld [vmem:[%s1029 + $0x4c] sm:%s1022]
        %1046 = vst [vmem:[%s1030 + $0x1c] sm:%s1022] %v1045
        %v1047 = vld [vmem:[%s1029 + $0x10] sm:%s1022]
        %1048 = vst [vmem:[%s1030 + $0x20] sm:%s1022] %v1047
        %v1049 = vld [vmem:[%s1029 + $0x50] sm:%s1022]
        %1050 = vst [vmem:[%s1030 + $0x24] sm:%s1022] %v1049
        %v1051 = vld [vmem:[%s1029 + $0x14] sm:%s1022]
        %1052 = vst [vmem:[%s1030 + $0x28] sm:%s1022] %v1051
        %v1053 = vld [vmem:[%s1029 + $0x54] sm:%s1022]
        %1054 = vst [vmem:[%s1030 + $0x2c] sm:%s1022] %v1053
        %v1055 = vld [vmem:[%s1029 + $0x18] sm:%s1022]
        %1056 = vst [vmem:[%s1030 + $0x30] sm:%s1022] %v1055
        %v1057 = vld [vmem:[%s1029 + $0x58] sm:%s1022]
        %1058 = vst [vmem:[%s1030 + $0x34] sm:%s1022] %v1057
        %v1059 = vld [vmem:[%s1029 + $0x1c] sm:%s1022]
        %1060 = vst [vmem:[%s1030 + $0x38] sm:%s1022] %v1059
        %v1061 = vld [vmem:[%s1029 + $0x5c] sm:%s1022]
        %1062 = vst [vmem:[%s1030 + $0x3c] sm:%s1022] %v1061
        %v1063 = vld [vmem:[%s1029 + $0x20] sm:%s1022]
        %1064 = vst [vmem:[%s1030 + $0x40] sm:%s1022] %v1063
        %v1065 = vld [vmem:[%s1029 + $0x60] sm:%s1022]
        %1066 = vst [vmem:[%s1030 + $0x44] sm:%s1022] %v1065
        %v1067 = vld [vmem:[%s1029 + $0x24] sm:%s1022]
        %1068 = vst [vmem:[%s1030 + $0x48] sm:%s1022] %v1067
        %v1069 = vld [vmem:[%s1029 + $0x64] sm:%s1022]
        %1070 = vst [vmem:[%s1030 + $0x4c] sm:%s1022] %v1069
        %v1071 = vld [vmem:[%s1029 + $0x28] sm:%s1022]
        %1072 = vst [vmem:[%s1030 + $0x50] sm:%s1022] %v1071
        %v1073 = vld [vmem:[%s1029 + $0x68] sm:%s1022]
        %1074 = vst [vmem:[%s1030 + $0x54] sm:%s1022] %v1073
        %v1075 = vld [vmem:[%s1029 + $0x2c] sm:%s1022]
        %1076 = vst [vmem:[%s1030 + $0x58] sm:%s1022] %v1075
        %v1077 = vld [vmem:[%s1029 + $0x6c] sm:%s1022]
        %1078 = vst [vmem:[%s1030 + $0x5c] sm:%s1022] %v1077
        %v1079 = vld [vmem:[%s1029 + $0x30] sm:%s1022]
        %1080 = vst [vmem:[%s1030 + $0x60] sm:%s1022] %v1079
        %v1081 = vld [vmem:[%s1029 + $0x70] sm:%s1022]
        %1082 = vst [vmem:[%s1030 + $0x64] sm:%s1022] %v1081
        %v1083 = vld [vmem:[%s1029 + $0x34] sm:%s1022]
        %1084 = vst [vmem:[%s1030 + $0x68] sm:%s1022] %v1083
        %v1085 = vld [vmem:[%s1029 + $0x74] sm:%s1022]
        %1086 = vst [vmem:[%s1030 + $0x6c] sm:%s1022] %v1085
        %v1087 = vld [vmem:[%s1029 + $0x38] sm:%s1022]
        %1088 = vst [vmem:[%s1030 + $0x70] sm:%s1022] %v1087
        %v1089 = vld [vmem:[%s1029 + $0x78] sm:%s1022]
        %1090 = vst [vmem:[%s1030 + $0x74] sm:%s1022] %v1089
        %v1091 = vld [vmem:[%s1029 + $0x3c] sm:%s1022]
        %1092 = vst [vmem:[%s1030 + $0x78] sm:%s1022] %v1091
        %v1093 = vld [vmem:[%s1029 + $0x7c] sm:%s1022]
        %1094 = vst [vmem:[%s1030 + $0x7c] sm:%s1022] %v1093
        %v1095 = vld [vmem:[%s1029 + $0x80] sm:%s1022]
        %1096 = vst [vmem:[%s1030 + $0x80] sm:%s1022] %v1095
        %v1097 = vld [vmem:[%s1029 + $0xc0] sm:%s1022]
        %1098 = vst [vmem:[%s1030 + $0x84] sm:%s1022] %v1097
        %v1099 = vld [vmem:[%s1029 + $0x84] sm:%s1022]
        %1100 = vst [vmem:[%s1030 + $0x88] sm:%s1022] %v1099
        %v1101 = vld [vmem:[%s1029 + $0xc4] sm:%s1022]
        %1102 = vst [vmem:[%s1030 + $0x8c] sm:%s1022] %v1101
        %v1103 = vld [vmem:[%s1029 + $0x88] sm:%s1022]
        %1104 = vst [vmem:[%s1030 + $0x90] sm:%s1022] %v1103
        %v1105 = vld [vmem:[%s1029 + $0xc8] sm:%s1022]
        %1106 = vst [vmem:[%s1030 + $0x94] sm:%s1022] %v1105
        %v1107 = vld [vmem:[%s1029 + $0x8c] sm:%s1022]
        %1108 = vst [vmem:[%s1030 + $0x98] sm:%s1022] %v1107
        %v1109 = vld [vmem:[%s1029 + $0xcc] sm:%s1022]
        %1110 = vst [vmem:[%s1030 + $0x9c] sm:%s1022] %v1109
        %v1111 = vld [vmem:[%s1029 + $0x90] sm:%s1022]
        %1112 = vst [vmem:[%s1030 + $0xa0] sm:%s1022] %v1111
        %v1113 = vld [vmem:[%s1029 + $0xd0] sm:%s1022]
        %1114 = vst [vmem:[%s1030 + $0xa4] sm:%s1022] %v1113
        %v1115 = vld [vmem:[%s1029 + $0x94] sm:%s1022]
        %1116 = vst [vmem:[%s1030 + $0xa8] sm:%s1022] %v1115
        %v1117 = vld [vmem:[%s1029 + $0xd4] sm:%s1022]
        %1118 = vst [vmem:[%s1030 + $0xac] sm:%s1022] %v1117
        %v1119 = vld [vmem:[%s1029 + $0x98] sm:%s1022]
        %1120 = vst [vmem:[%s1030 + $0xb0] sm:%s1022] %v1119
        %v1121 = vld [vmem:[%s1029 + $0xd8] sm:%s1022]
        %1122 = vst [vmem:[%s1030 + $0xb4] sm:%s1022] %v1121
        %v1123 = vld [vmem:[%s1029 + $0x9c] sm:%s1022]
        %1124 = vst [vmem:[%s1030 + $0xb8] sm:%s1022] %v1123
        %v1125 = vld [vmem:[%s1029 + $0xdc] sm:%s1022]
        %1126 = vst [vmem:[%s1030 + $0xbc] sm:%s1022] %v1125
        %v1127 = vld [vmem:[%s1029 + $0xa0] sm:%s1022]
        %1128 = vst [vmem:[%s1030 + $0xc0] sm:%s1022] %v1127
        %v1129 = vld [vmem:[%s1029 + $0xe0] sm:%s1022]
        %1130 = vst [vmem:[%s1030 + $0xc4] sm:%s1022] %v1129
        %v1131 = vld [vmem:[%s1029 + $0xa4] sm:%s1022]
        %1132 = vst [vmem:[%s1030 + $0xc8] sm:%s1022] %v1131
        %v1133 = vld [vmem:[%s1029 + $0xe4] sm:%s1022]
        %1134 = vst [vmem:[%s1030 + $0xcc] sm:%s1022] %v1133
        %v1135 = vld [vmem:[%s1029 + $0xa8] sm:%s1022]
        %1136 = vst [vmem:[%s1030 + $0xd0] sm:%s1022] %v1135
        %v1137 = vld [vmem:[%s1029 + $0xe8] sm:%s1022]
        %1138 = vst [vmem:[%s1030 + $0xd4] sm:%s1022] %v1137
        %v1139 = vld [vmem:[%s1029 + $0xac] sm:%s1022]
        %1140 = vst [vmem:[%s1030 + $0xd8] sm:%s1022] %v1139
        %v1141 = vld [vmem:[%s1029 + $0xec] sm:%s1022]
        %1142 = vst [vmem:[%s1030 + $0xdc] sm:%s1022] %v1141
        %v1143 = vld [vmem:[%s1029 + $0xb0] sm:%s1022]
        %1144 = vst [vmem:[%s1030 + $0xe0] sm:%s1022] %v1143
        %v1145 = vld [vmem:[%s1029 + $0xf0] sm:%s1022]
        %1146 = vst [vmem:[%s1030 + $0xe4] sm:%s1022] %v1145
        %v1147 = vld [vmem:[%s1029 + $0xb4] sm:%s1022]
        %1148 = vst [vmem:[%s1030 + $0xe8] sm:%s1022] %v1147
        %v1149 = vld [vmem:[%s1029 + $0xf4] sm:%s1022]
        %1150 = vst [vmem:[%s1030 + $0xec] sm:%s1022] %v1149
        %v1151 = vld [vmem:[%s1029 + $0xb8] sm:%s1022]
        %1152 = vst [vmem:[%s1030 + $0xf0] sm:%s1022] %v1151
        %v1153 = vld [vmem:[%s1029 + $0xf8] sm:%s1022]
        %1154 = vst [vmem:[%s1030 + $0xf4] sm:%s1022] %v1153
        %v1155 = vld [vmem:[%s1029 + $0xbc] sm:%s1022]
        %1156 = vst [vmem:[%s1030 + $0xf8] sm:%s1022] %v1155
        %v1157 = vld [vmem:[%s1029 + $0xfc] sm:%s1022]
        %1158 = vst [vmem:[%s1030 + $0xfc] sm:%s1022] %v1157
        %v1159 = vld [vmem:[%s1029 + $0x100] sm:%s1022]
        %1160 = vst [vmem:[%s1030 + $0x100] sm:%s1022] %v1159
        %v1161 = vld [vmem:[%s1029 + $0x140] sm:%s1022]
        %1162 = vst [vmem:[%s1030 + $0x104] sm:%s1022] %v1161
        %v1163 = vld [vmem:[%s1029 + $0x104] sm:%s1022]
        %1164 = vst [vmem:[%s1030 + $0x108] sm:%s1022] %v1163
        %v1165 = vld [vmem:[%s1029 + $0x144] sm:%s1022]
        %1166 = vst [vmem:[%s1030 + $0x10c] sm:%s1022] %v1165
        %v1167 = vld [vmem:[%s1029 + $0x108] sm:%s1022]
        %1168 = vst [vmem:[%s1030 + $0x110] sm:%s1022] %v1167
        %v1169 = vld [vmem:[%s1029 + $0x148] sm:%s1022]
        %1170 = vst [vmem:[%s1030 + $0x114] sm:%s1022] %v1169
        %v1171 = vld [vmem:[%s1029 + $0x10c] sm:%s1022]
        %1172 = vst [vmem:[%s1030 + $0x118] sm:%s1022] %v1171
        %v1173 = vld [vmem:[%s1029 + $0x14c] sm:%s1022]
        %1174 = vst [vmem:[%s1030 + $0x11c] sm:%s1022] %v1173
        %v1175 = vld [vmem:[%s1029 + $0x110] sm:%s1022]
        %1176 = vst [vmem:[%s1030 + $0x120] sm:%s1022] %v1175
        %v1177 = vld [vmem:[%s1029 + $0x150] sm:%s1022]
        %1178 = vst [vmem:[%s1030 + $0x124] sm:%s1022] %v1177
        %v1179 = vld [vmem:[%s1029 + $0x114] sm:%s1022]
        %1180 = vst [vmem:[%s1030 + $0x128] sm:%s1022] %v1179
        %v1181 = vld [vmem:[%s1029 + $0x154] sm:%s1022]
        %1182 = vst [vmem:[%s1030 + $0x12c] sm:%s1022] %v1181
        %v1183 = vld [vmem:[%s1029 + $0x118] sm:%s1022]
        %1184 = vst [vmem:[%s1030 + $0x130] sm:%s1022] %v1183
        %v1185 = vld [vmem:[%s1029 + $0x158] sm:%s1022]
        %1186 = vst [vmem:[%s1030 + $0x134] sm:%s1022] %v1185
        %v1187 = vld [vmem:[%s1029 + $0x11c] sm:%s1022]
        %1188 = vst [vmem:[%s1030 + $0x138] sm:%s1022] %v1187
        %v1189 = vld [vmem:[%s1029 + $0x15c] sm:%s1022]
        %1190 = vst [vmem:[%s1030 + $0x13c] sm:%s1022] %v1189
        %v1191 = vld [vmem:[%s1029 + $0x120] sm:%s1022]
        %1192 = vst [vmem:[%s1030 + $0x140] sm:%s1022] %v1191
        %v1193 = vld [vmem:[%s1029 + $0x160] sm:%s1022]
        %1194 = vst [vmem:[%s1030 + $0x144] sm:%s1022] %v1193
        %v1195 = vld [vmem:[%s1029 + $0x124] sm:%s1022]
        %1196 = vst [vmem:[%s1030 + $0x148] sm:%s1022] %v1195
        %v1197 = vld [vmem:[%s1029 + $0x164] sm:%s1022]
        %1198 = vst [vmem:[%s1030 + $0x14c] sm:%s1022] %v1197
        %v1199 = vld [vmem:[%s1029 + $0x128] sm:%s1022]
        %1200 = vst [vmem:[%s1030 + $0x150] sm:%s1022] %v1199
        %v1201 = vld [vmem:[%s1029 + $0x168] sm:%s1022]
        %1202 = vst [vmem:[%s1030 + $0x154] sm:%s1022] %v1201
        %v1203 = vld [vmem:[%s1029 + $0x12c] sm:%s1022]
        %1204 = vst [vmem:[%s1030 + $0x158] sm:%s1022] %v1203
        %v1205 = vld [vmem:[%s1029 + $0x16c] sm:%s1022]
        %1206 = vst [vmem:[%s1030 + $0x15c] sm:%s1022] %v1205
        %v1207 = vld [vmem:[%s1029 + $0x130] sm:%s1022]
        %1208 = vst [vmem:[%s1030 + $0x160] sm:%s1022] %v1207
        %v1209 = vld [vmem:[%s1029 + $0x170] sm:%s1022]
        %1210 = vst [vmem:[%s1030 + $0x164] sm:%s1022] %v1209
        %v1211 = vld [vmem:[%s1029 + $0x134] sm:%s1022]
        %1212 = vst [vmem:[%s1030 + $0x168] sm:%s1022] %v1211
        %v1213 = vld [vmem:[%s1029 + $0x174] sm:%s1022]
        %1214 = vst [vmem:[%s1030 + $0x16c] sm:%s1022] %v1213
        %v1215 = vld [vmem:[%s1029 + $0x138] sm:%s1022]
        %1216 = vst [vmem:[%s1030 + $0x170] sm:%s1022] %v1215
        %v1217 = vld [vmem:[%s1029 + $0x178] sm:%s1022]
        %1218 = vst [vmem:[%s1030 + $0x174] sm:%s1022] %v1217
        %v1219 = vld [vmem:[%s1029 + $0x13c] sm:%s1022]
        %1220 = vst [vmem:[%s1030 + $0x178] sm:%s1022] %v1219
        %v1221 = vld [vmem:[%s1029 + $0x17c] sm:%s1022]
        %1222 = vst [vmem:[%s1030 + $0x17c] sm:%s1022] %v1221
        %v1223 = vld [vmem:[%s1029 + $0x180] sm:%s1022]
        %1224 = vst [vmem:[%s1030 + $0x180] sm:%s1022] %v1223
        %v1225 = vld [vmem:[%s1029 + $0x1c0] sm:%s1022]
        %1226 = vst [vmem:[%s1030 + $0x184] sm:%s1022] %v1225
        %v1227 = vld [vmem:[%s1029 + $0x184] sm:%s1022]
        %1228 = vst [vmem:[%s1030 + $0x188] sm:%s1022] %v1227
        %v1229 = vld [vmem:[%s1029 + $0x1c4] sm:%s1022]
        %1230 = vst [vmem:[%s1030 + $0x18c] sm:%s1022] %v1229
        %v1231 = vld [vmem:[%s1029 + $0x188] sm:%s1022]
        %1232 = vst [vmem:[%s1030 + $0x190] sm:%s1022] %v1231
        %v1233 = vld [vmem:[%s1029 + $0x1c8] sm:%s1022]
        %1234 = vst [vmem:[%s1030 + $0x194] sm:%s1022] %v1233
        %v1235 = vld [vmem:[%s1029 + $0x18c] sm:%s1022]
        %1236 = vst [vmem:[%s1030 + $0x198] sm:%s1022] %v1235
        %v1237 = vld [vmem:[%s1029 + $0x1cc] sm:%s1022]
        %1238 = vst [vmem:[%s1030 + $0x19c] sm:%s1022] %v1237
        %v1239 = vld [vmem:[%s1029 + $0x190] sm:%s1022]
        %1240 = vst [vmem:[%s1030 + $0x1a0] sm:%s1022] %v1239
        %v1241 = vld [vmem:[%s1029 + $0x1d0] sm:%s1022]
        %1242 = vst [vmem:[%s1030 + $0x1a4] sm:%s1022] %v1241
        %v1243 = vld [vmem:[%s1029 + $0x194] sm:%s1022]
        %1244 = vst [vmem:[%s1030 + $0x1a8] sm:%s1022] %v1243
        %v1245 = vld [vmem:[%s1029 + $0x1d4] sm:%s1022]
        %1246 = vst [vmem:[%s1030 + $0x1ac] sm:%s1022] %v1245
        %v1247 = vld [vmem:[%s1029 + $0x198] sm:%s1022]
        %1248 = vst [vmem:[%s1030 + $0x1b0] sm:%s1022] %v1247
        %v1249 = vld [vmem:[%s1029 + $0x1d8] sm:%s1022]
        %1250 = vst [vmem:[%s1030 + $0x1b4] sm:%s1022] %v1249
        %v1251 = vld [vmem:[%s1029 + $0x19c] sm:%s1022]
        %1252 = vst [vmem:[%s1030 + $0x1b8] sm:%s1022] %v1251
        %v1253 = vld [vmem:[%s1029 + $0x1dc] sm:%s1022]
        %1254 = vst [vmem:[%s1030 + $0x1bc] sm:%s1022] %v1253
        %v1255 = vld [vmem:[%s1029 + $0x1a0] sm:%s1022]
        %1256 = vst [vmem:[%s1030 + $0x1c0] sm:%s1022] %v1255
        %v1257 = vld [vmem:[%s1029 + $0x1e0] sm:%s1022]
        %1258 = vst [vmem:[%s1030 + $0x1c4] sm:%s1022] %v1257
        %v1259 = vld [vmem:[%s1029 + $0x1a4] sm:%s1022]
        %1260 = vst [vmem:[%s1030 + $0x1c8] sm:%s1022] %v1259
        %v1261 = vld [vmem:[%s1029 + $0x1e4] sm:%s1022]
        %1262 = vst [vmem:[%s1030 + $0x1cc] sm:%s1022] %v1261
        %v1263 = vld [vmem:[%s1029 + $0x1a8] sm:%s1022]
        %1264 = vst [vmem:[%s1030 + $0x1d0] sm:%s1022] %v1263
        %v1265 = vld [vmem:[%s1029 + $0x1e8] sm:%s1022]
        %1266 = vst [vmem:[%s1030 + $0x1d4] sm:%s1022] %v1265
        %v1267 = vld [vmem:[%s1029 + $0x1ac] sm:%s1022]
        %1268 = vst [vmem:[%s1030 + $0x1d8] sm:%s1022] %v1267
        %v1269 = vld [vmem:[%s1029 + $0x1ec] sm:%s1022]
        %1270 = vst [vmem:[%s1030 + $0x1dc] sm:%s1022] %v1269
        %v1271 = vld [vmem:[%s1029 + $0x1b0] sm:%s1022]
        %1272 = vst [vmem:[%s1030 + $0x1e0] sm:%s1022] %v1271
        %v1273 = vld [vmem:[%s1029 + $0x1f0] sm:%s1022]
        %1274 = vst [vmem:[%s1030 + $0x1e4] sm:%s1022] %v1273
        %v1275 = vld [vmem:[%s1029 + $0x1b4] sm:%s1022]
        %1276 = vst [vmem:[%s1030 + $0x1e8] sm:%s1022] %v1275
        %v1277 = vld [vmem:[%s1029 + $0x1f4] sm:%s1022]
        %1278 = vst [vmem:[%s1030 + $0x1ec] sm:%s1022] %v1277
        %v1279 = vld [vmem:[%s1029 + $0x1b8] sm:%s1022]
        %1280 = vst [vmem:[%s1030 + $0x1f0] sm:%s1022] %v1279
        %v1281 = vld [vmem:[%s1029 + $0x1f8] sm:%s1022]
        %1282 = vst [vmem:[%s1030 + $0x1f4] sm:%s1022] %v1281
        %v1283 = vld [vmem:[%s1029 + $0x1bc] sm:%s1022]
        %1284 = vst [vmem:[%s1030 + $0x1f8] sm:%s1022] %v1283
        %v1285 = vld [vmem:[%s1029 + $0x1fc] sm:%s1022]
        %1286 = vst [vmem:[%s1030 + $0x1fc] sm:%s1022] %v1285
        %v1287 = vld [vmem:[%s1029 + $0x200] sm:%s1022]
        %1288 = vst [vmem:[%s1030 + $0x200] sm:%s1022] %v1287
        %v1289 = vld [vmem:[%s1029 + $0x240] sm:%s1022]
        %1290 = vst [vmem:[%s1030 + $0x204] sm:%s1022] %v1289
        %v1291 = vld [vmem:[%s1029 + $0x204] sm:%s1022]
        %1292 = vst [vmem:[%s1030 + $0x208] sm:%s1022] %v1291
        %v1293 = vld [vmem:[%s1029 + $0x244] sm:%s1022]
        %1294 = vst [vmem:[%s1030 + $0x20c] sm:%s1022] %v1293
        %v1295 = vld [vmem:[%s1029 + $0x208] sm:%s1022]
        %1296 = vst [vmem:[%s1030 + $0x210] sm:%s1022] %v1295
        %v1297 = vld [vmem:[%s1029 + $0x248] sm:%s1022]
        %1298 = vst [vmem:[%s1030 + $0x214] sm:%s1022] %v1297
        %v1299 = vld [vmem:[%s1029 + $0x20c] sm:%s1022]
        %1300 = vst [vmem:[%s1030 + $0x218] sm:%s1022] %v1299
        %v1301 = vld [vmem:[%s1029 + $0x24c] sm:%s1022]
        %1302 = vst [vmem:[%s1030 + $0x21c] sm:%s1022] %v1301
        %v1303 = vld [vmem:[%s1029 + $0x210] sm:%s1022]
        %1304 = vst [vmem:[%s1030 + $0x220] sm:%s1022] %v1303
        %v1305 = vld [vmem:[%s1029 + $0x250] sm:%s1022]
        %1306 = vst [vmem:[%s1030 + $0x224] sm:%s1022] %v1305
        %v1307 = vld [vmem:[%s1029 + $0x214] sm:%s1022]
        %1308 = vst [vmem:[%s1030 + $0x228] sm:%s1022] %v1307
        %v1309 = vld [vmem:[%s1029 + $0x254] sm:%s1022]
        %1310 = vst [vmem:[%s1030 + $0x22c] sm:%s1022] %v1309
        %v1311 = vld [vmem:[%s1029 + $0x218] sm:%s1022]
        %1312 = vst [vmem:[%s1030 + $0x230] sm:%s1022] %v1311
        %v1313 = vld [vmem:[%s1029 + $0x258] sm:%s1022]
        %1314 = vst [vmem:[%s1030 + $0x234] sm:%s1022] %v1313
        %v1315 = vld [vmem:[%s1029 + $0x21c] sm:%s1022]
        %1316 = vst [vmem:[%s1030 + $0x238] sm:%s1022] %v1315
        %v1317 = vld [vmem:[%s1029 + $0x25c] sm:%s1022]
        %1318 = vst [vmem:[%s1030 + $0x23c] sm:%s1022] %v1317
        %v1319 = vld [vmem:[%s1029 + $0x220] sm:%s1022]
        %1320 = vst [vmem:[%s1030 + $0x240] sm:%s1022] %v1319
        %v1321 = vld [vmem:[%s1029 + $0x260] sm:%s1022]
        %1322 = vst [vmem:[%s1030 + $0x244] sm:%s1022] %v1321
        %v1323 = vld [vmem:[%s1029 + $0x224] sm:%s1022]
        %1324 = vst [vmem:[%s1030 + $0x248] sm:%s1022] %v1323
        %v1325 = vld [vmem:[%s1029 + $0x264] sm:%s1022]
        %1326 = vst [vmem:[%s1030 + $0x24c] sm:%s1022] %v1325
        %v1327 = vld [vmem:[%s1029 + $0x228] sm:%s1022]
        %1328 = vst [vmem:[%s1030 + $0x250] sm:%s1022] %v1327
        %v1329 = vld [vmem:[%s1029 + $0x268] sm:%s1022]
        %1330 = vst [vmem:[%s1030 + $0x254] sm:%s1022] %v1329
        %v1331 = vld [vmem:[%s1029 + $0x22c] sm:%s1022]
        %1332 = vst [vmem:[%s1030 + $0x258] sm:%s1022] %v1331
        %v1333 = vld [vmem:[%s1029 + $0x26c] sm:%s1022]
        %1334 = vst [vmem:[%s1030 + $0x25c] sm:%s1022] %v1333
        %v1335 = vld [vmem:[%s1029 + $0x230] sm:%s1022]
        %1336 = vst [vmem:[%s1030 + $0x260] sm:%s1022] %v1335
        %v1337 = vld [vmem:[%s1029 + $0x270] sm:%s1022]
        %1338 = vst [vmem:[%s1030 + $0x264] sm:%s1022] %v1337
        %v1339 = vld [vmem:[%s1029 + $0x234] sm:%s1022]
        %1340 = vst [vmem:[%s1030 + $0x268] sm:%s1022] %v1339
        %v1341 = vld [vmem:[%s1029 + $0x274] sm:%s1022]
        %1342 = vst [vmem:[%s1030 + $0x26c] sm:%s1022] %v1341
        %v1343 = vld [vmem:[%s1029 + $0x238] sm:%s1022]
        %1344 = vst [vmem:[%s1030 + $0x270] sm:%s1022] %v1343
        %v1345 = vld [vmem:[%s1029 + $0x278] sm:%s1022]
        %1346 = vst [vmem:[%s1030 + $0x274] sm:%s1022] %v1345
        %v1347 = vld [vmem:[%s1029 + $0x23c] sm:%s1022]
        %1348 = vst [vmem:[%s1030 + $0x278] sm:%s1022] %v1347
        %v1349 = vld [vmem:[%s1029 + $0x27c] sm:%s1022]
        %1350 = vst [vmem:[%s1030 + $0x27c] sm:%s1022] %v1349
        %v1351 = vld [vmem:[%s1029 + $0x280] sm:%s1022]
        %1352 = vst [vmem:[%s1030 + $0x280] sm:%s1022] %v1351
        %v1353 = vld [vmem:[%s1029 + $0x2c0] sm:%s1022]
        %1354 = vst [vmem:[%s1030 + $0x284] sm:%s1022] %v1353
        %v1355 = vld [vmem:[%s1029 + $0x284] sm:%s1022]
        %1356 = vst [vmem:[%s1030 + $0x288] sm:%s1022] %v1355
        %v1357 = vld [vmem:[%s1029 + $0x2c4] sm:%s1022]
        %1358 = vst [vmem:[%s1030 + $0x28c] sm:%s1022] %v1357
        %v1359 = vld [vmem:[%s1029 + $0x288] sm:%s1022]
        %1360 = vst [vmem:[%s1030 + $0x290] sm:%s1022] %v1359
        %v1361 = vld [vmem:[%s1029 + $0x2c8] sm:%s1022]
        %1362 = vst [vmem:[%s1030 + $0x294] sm:%s1022] %v1361
        %v1363 = vld [vmem:[%s1029 + $0x28c] sm:%s1022]
        %1364 = vst [vmem:[%s1030 + $0x298] sm:%s1022] %v1363
        %v1365 = vld [vmem:[%s1029 + $0x2cc] sm:%s1022]
        %1366 = vst [vmem:[%s1030 + $0x29c] sm:%s1022] %v1365
        %v1367 = vld [vmem:[%s1029 + $0x290] sm:%s1022]
        %1368 = vst [vmem:[%s1030 + $0x2a0] sm:%s1022] %v1367
        %v1369 = vld [vmem:[%s1029 + $0x2d0] sm:%s1022]
        %1370 = vst [vmem:[%s1030 + $0x2a4] sm:%s1022] %v1369
        %v1371 = vld [vmem:[%s1029 + $0x294] sm:%s1022]
        %1372 = vst [vmem:[%s1030 + $0x2a8] sm:%s1022] %v1371
        %v1373 = vld [vmem:[%s1029 + $0x2d4] sm:%s1022]
        %1374 = vst [vmem:[%s1030 + $0x2ac] sm:%s1022] %v1373
        %v1375 = vld [vmem:[%s1029 + $0x298] sm:%s1022]
        %1376 = vst [vmem:[%s1030 + $0x2b0] sm:%s1022] %v1375
        %v1377 = vld [vmem:[%s1029 + $0x2d8] sm:%s1022]
        %1378 = vst [vmem:[%s1030 + $0x2b4] sm:%s1022] %v1377
        %v1379 = vld [vmem:[%s1029 + $0x29c] sm:%s1022]
        %1380 = vst [vmem:[%s1030 + $0x2b8] sm:%s1022] %v1379
        %v1381 = vld [vmem:[%s1029 + $0x2dc] sm:%s1022]
        %1382 = vst [vmem:[%s1030 + $0x2bc] sm:%s1022] %v1381
        %v1383 = vld [vmem:[%s1029 + $0x2a0] sm:%s1022]
        %1384 = vst [vmem:[%s1030 + $0x2c0] sm:%s1022] %v1383
        %v1385 = vld [vmem:[%s1029 + $0x2e0] sm:%s1022]
        %1386 = vst [vmem:[%s1030 + $0x2c4] sm:%s1022] %v1385
        %v1387 = vld [vmem:[%s1029 + $0x2a4] sm:%s1022]
        %1388 = vst [vmem:[%s1030 + $0x2c8] sm:%s1022] %v1387
        %v1389 = vld [vmem:[%s1029 + $0x2e4] sm:%s1022]
        %1390 = vst [vmem:[%s1030 + $0x2cc] sm:%s1022] %v1389
        %v1391 = vld [vmem:[%s1029 + $0x2a8] sm:%s1022]
        %1392 = vst [vmem:[%s1030 + $0x2d0] sm:%s1022] %v1391
        %v1393 = vld [vmem:[%s1029 + $0x2e8] sm:%s1022]
        %1394 = vst [vmem:[%s1030 + $0x2d4] sm:%s1022] %v1393
        %v1395 = vld [vmem:[%s1029 + $0x2ac] sm:%s1022]
        %1396 = vst [vmem:[%s1030 + $0x2d8] sm:%s1022] %v1395
        %v1397 = vld [vmem:[%s1029 + $0x2ec] sm:%s1022]
        %1398 = vst [vmem:[%s1030 + $0x2dc] sm:%s1022] %v1397
        %v1399 = vld [vmem:[%s1029 + $0x2b0] sm:%s1022]
        %1400 = vst [vmem:[%s1030 + $0x2e0] sm:%s1022] %v1399
        %v1401 = vld [vmem:[%s1029 + $0x2f0] sm:%s1022]
        %1402 = vst [vmem:[%s1030 + $0x2e4] sm:%s1022] %v1401
        %v1403 = vld [vmem:[%s1029 + $0x2b4] sm:%s1022]
        %1404 = vst [vmem:[%s1030 + $0x2e8] sm:%s1022] %v1403
        %v1405 = vld [vmem:[%s1029 + $0x2f4] sm:%s1022]
        %1406 = vst [vmem:[%s1030 + $0x2ec] sm:%s1022] %v1405
        %v1407 = vld [vmem:[%s1029 + $0x2b8] sm:%s1022]
        %1408 = vst [vmem:[%s1030 + $0x2f0] sm:%s1022] %v1407
        %v1409 = vld [vmem:[%s1029 + $0x2f8] sm:%s1022]
        %1410 = vst [vmem:[%s1030 + $0x2f4] sm:%s1022] %v1409
        %v1411 = vld [vmem:[%s1029 + $0x2bc] sm:%s1022]
        %1412 = vst [vmem:[%s1030 + $0x2f8] sm:%s1022] %v1411
        %v1413 = vld [vmem:[%s1029 + $0x2fc] sm:%s1022]
        %1414 = vst [vmem:[%s1030 + $0x2fc] sm:%s1022] %v1413
        %v1415 = vld [vmem:[%s1029 + $0x300] sm:%s1022]
        %1416 = vst [vmem:[%s1030 + $0x300] sm:%s1022] %v1415
        %v1417 = vld [vmem:[%s1029 + $0x340] sm:%s1022]
        %1418 = vst [vmem:[%s1030 + $0x304] sm:%s1022] %v1417
        %v1419 = vld [vmem:[%s1029 + $0x304] sm:%s1022]
        %1420 = vst [vmem:[%s1030 + $0x308] sm:%s1022] %v1419
        %v1421 = vld [vmem:[%s1029 + $0x344] sm:%s1022]
        %1422 = vst [vmem:[%s1030 + $0x30c] sm:%s1022] %v1421
        %v1423 = vld [vmem:[%s1029 + $0x308] sm:%s1022]
        %1424 = vst [vmem:[%s1030 + $0x310] sm:%s1022] %v1423
        %v1425 = vld [vmem:[%s1029 + $0x348] sm:%s1022]
        %1426 = vst [vmem:[%s1030 + $0x314] sm:%s1022] %v1425
        %v1427 = vld [vmem:[%s1029 + $0x30c] sm:%s1022]
        %1428 = vst [vmem:[%s1030 + $0x318] sm:%s1022] %v1427
        %v1429 = vld [vmem:[%s1029 + $0x34c] sm:%s1022]
        %1430 = vst [vmem:[%s1030 + $0x31c] sm:%s1022] %v1429
        %v1431 = vld [vmem:[%s1029 + $0x310] sm:%s1022]
        %1432 = vst [vmem:[%s1030 + $0x320] sm:%s1022] %v1431
        %v1433 = vld [vmem:[%s1029 + $0x350] sm:%s1022]
        %1434 = vst [vmem:[%s1030 + $0x324] sm:%s1022] %v1433
        %v1435 = vld [vmem:[%s1029 + $0x314] sm:%s1022]
        %1436 = vst [vmem:[%s1030 + $0x328] sm:%s1022] %v1435
        %v1437 = vld [vmem:[%s1029 + $0x354] sm:%s1022]
        %1438 = vst [vmem:[%s1030 + $0x32c] sm:%s1022] %v1437
        %v1439 = vld [vmem:[%s1029 + $0x318] sm:%s1022]
        %1440 = vst [vmem:[%s1030 + $0x330] sm:%s1022] %v1439
        %v1441 = vld [vmem:[%s1029 + $0x358] sm:%s1022]
        %1442 = vst [vmem:[%s1030 + $0x334] sm:%s1022] %v1441
        %v1443 = vld [vmem:[%s1029 + $0x31c] sm:%s1022]
        %1444 = vst [vmem:[%s1030 + $0x338] sm:%s1022] %v1443
        %v1445 = vld [vmem:[%s1029 + $0x35c] sm:%s1022]
        %1446 = vst [vmem:[%s1030 + $0x33c] sm:%s1022] %v1445
        %v1447 = vld [vmem:[%s1029 + $0x320] sm:%s1022]
        %1448 = vst [vmem:[%s1030 + $0x340] sm:%s1022] %v1447
        %v1449 = vld [vmem:[%s1029 + $0x360] sm:%s1022]
        %1450 = vst [vmem:[%s1030 + $0x344] sm:%s1022] %v1449
        %v1451 = vld [vmem:[%s1029 + $0x324] sm:%s1022]
        %1452 = vst [vmem:[%s1030 + $0x348] sm:%s1022] %v1451
        %v1453 = vld [vmem:[%s1029 + $0x364] sm:%s1022]
        %1454 = vst [vmem:[%s1030 + $0x34c] sm:%s1022] %v1453
        %v1455 = vld [vmem:[%s1029 + $0x328] sm:%s1022]
        %1456 = vst [vmem:[%s1030 + $0x350] sm:%s1022] %v1455
        %v1457 = vld [vmem:[%s1029 + $0x368] sm:%s1022]
        %1458 = vst [vmem:[%s1030 + $0x354] sm:%s1022] %v1457
        %v1459 = vld [vmem:[%s1029 + $0x32c] sm:%s1022]
        %1460 = vst [vmem:[%s1030 + $0x358] sm:%s1022] %v1459
        %v1461 = vld [vmem:[%s1029 + $0x36c] sm:%s1022]
        %1462 = vst [vmem:[%s1030 + $0x35c] sm:%s1022] %v1461
        %v1463 = vld [vmem:[%s1029 + $0x330] sm:%s1022]
        %1464 = vst [vmem:[%s1030 + $0x360] sm:%s1022] %v1463
        %v1465 = vld [vmem:[%s1029 + $0x370] sm:%s1022]
        %1466 = vst [vmem:[%s1030 + $0x364] sm:%s1022] %v1465
        %v1467 = vld [vmem:[%s1029 + $0x334] sm:%s1022]
        %1468 = vst [vmem:[%s1030 + $0x368] sm:%s1022] %v1467
        %v1469 = vld [vmem:[%s1029 + $0x374] sm:%s1022]
        %1470 = vst [vmem:[%s1030 + $0x36c] sm:%s1022] %v1469
        %v1471 = vld [vmem:[%s1029 + $0x338] sm:%s1022]
        %1472 = vst [vmem:[%s1030 + $0x370] sm:%s1022] %v1471
        %v1473 = vld [vmem:[%s1029 + $0x378] sm:%s1022]
        %1474 = vst [vmem:[%s1030 + $0x374] sm:%s1022] %v1473
        %v1475 = vld [vmem:[%s1029 + $0x33c] sm:%s1022]
        %1476 = vst [vmem:[%s1030 + $0x378] sm:%s1022] %v1475
        %v1477 = vld [vmem:[%s1029 + $0x37c] sm:%s1022]
        %1478 = vst [vmem:[%s1030 + $0x37c] sm:%s1022] %v1477
        %v1479 = vld [vmem:[%s1029 + $0x380] sm:%s1022]
        %1480 = vst [vmem:[%s1030 + $0x380] sm:%s1022] %v1479
        %v1481 = vld [vmem:[%s1029 + $0x3c0] sm:%s1022]
        %1482 = vst [vmem:[%s1030 + $0x384] sm:%s1022] %v1481
        %v1483 = vld [vmem:[%s1029 + $0x384] sm:%s1022]
        %1484 = vst [vmem:[%s1030 + $0x388] sm:%s1022] %v1483
        %v1485 = vld [vmem:[%s1029 + $0x3c4] sm:%s1022]
        %1486 = vst [vmem:[%s1030 + $0x38c] sm:%s1022] %v1485
        %v1487 = vld [vmem:[%s1029 + $0x388] sm:%s1022]
        %1488 = vst [vmem:[%s1030 + $0x390] sm:%s1022] %v1487
        %v1489 = vld [vmem:[%s1029 + $0x3c8] sm:%s1022]
        %1490 = vst [vmem:[%s1030 + $0x394] sm:%s1022] %v1489
        %v1491 = vld [vmem:[%s1029 + $0x38c] sm:%s1022]
        %1492 = vst [vmem:[%s1030 + $0x398] sm:%s1022] %v1491
        %v1493 = vld [vmem:[%s1029 + $0x3cc] sm:%s1022]
        %1494 = vst [vmem:[%s1030 + $0x39c] sm:%s1022] %v1493
        %v1495 = vld [vmem:[%s1029 + $0x390] sm:%s1022]
        %1496 = vst [vmem:[%s1030 + $0x3a0] sm:%s1022] %v1495
        %v1497 = vld [vmem:[%s1029 + $0x3d0] sm:%s1022]
        %1498 = vst [vmem:[%s1030 + $0x3a4] sm:%s1022] %v1497
        %v1499 = vld [vmem:[%s1029 + $0x394] sm:%s1022]
        %1500 = vst [vmem:[%s1030 + $0x3a8] sm:%s1022] %v1499
        %v1501 = vld [vmem:[%s1029 + $0x3d4] sm:%s1022]
        %1502 = vst [vmem:[%s1030 + $0x3ac] sm:%s1022] %v1501
        %v1503 = vld [vmem:[%s1029 + $0x398] sm:%s1022]
        %1504 = vst [vmem:[%s1030 + $0x3b0] sm:%s1022] %v1503
        %v1505 = vld [vmem:[%s1029 + $0x3d8] sm:%s1022]
        %1506 = vst [vmem:[%s1030 + $0x3b4] sm:%s1022] %v1505
        %v1507 = vld [vmem:[%s1029 + $0x39c] sm:%s1022]
        %1508 = vst [vmem:[%s1030 + $0x3b8] sm:%s1022] %v1507
        %v1509 = vld [vmem:[%s1029 + $0x3dc] sm:%s1022]
        %1510 = vst [vmem:[%s1030 + $0x3bc] sm:%s1022] %v1509
        %v1511 = vld [vmem:[%s1029 + $0x3a0] sm:%s1022]
        %1512 = vst [vmem:[%s1030 + $0x3c0] sm:%s1022] %v1511
        %v1513 = vld [vmem:[%s1029 + $0x3e0] sm:%s1022]
        %1514 = vst [vmem:[%s1030 + $0x3c4] sm:%s1022] %v1513
        %v1515 = vld [vmem:[%s1029 + $0x3a4] sm:%s1022]
        %1516 = vst [vmem:[%s1030 + $0x3c8] sm:%s1022] %v1515
        %v1517 = vld [vmem:[%s1029 + $0x3e4] sm:%s1022]
        %1518 = vst [vmem:[%s1030 + $0x3cc] sm:%s1022] %v1517
        %v1519 = vld [vmem:[%s1029 + $0x3a8] sm:%s1022]
        %1520 = vst [vmem:[%s1030 + $0x3d0] sm:%s1022] %v1519
        %v1521 = vld [vmem:[%s1029 + $0x3e8] sm:%s1022]
        %1522 = vst [vmem:[%s1030 + $0x3d4] sm:%s1022] %v1521
        %v1523 = vld [vmem:[%s1029 + $0x3ac] sm:%s1022]
        %1524 = vst [vmem:[%s1030 + $0x3d8] sm:%s1022] %v1523
        %v1525 = vld [vmem:[%s1029 + $0x3ec] sm:%s1022]
        %1526 = vst [vmem:[%s1030 + $0x3dc] sm:%s1022] %v1525
        %v1527 = vld [vmem:[%s1029 + $0x3b0] sm:%s1022]
        %1528 = vst [vmem:[%s1030 + $0x3e0] sm:%s1022] %v1527
        %v1529 = vld [vmem:[%s1029 + $0x3f0] sm:%s1022]
        %1530 = vst [vmem:[%s1030 + $0x3e4] sm:%s1022] %v1529
        %v1531 = vld [vmem:[%s1029 + $0x3b4] sm:%s1022]
        %1532 = vst [vmem:[%s1030 + $0x3e8] sm:%s1022] %v1531
        %v1533 = vld [vmem:[%s1029 + $0x3f4] sm:%s1022]
        %1534 = vst [vmem:[%s1030 + $0x3ec] sm:%s1022] %v1533
        %v1535 = vld [vmem:[%s1029 + $0x3b8] sm:%s1022]
        %1536 = vst [vmem:[%s1030 + $0x3f0] sm:%s1022] %v1535
        %v1537 = vld [vmem:[%s1029 + $0x3f8] sm:%s1022]
        %1538 = vst [vmem:[%s1030 + $0x3f4] sm:%s1022] %v1537
        %v1539 = vld [vmem:[%s1029 + $0x3bc] sm:%s1022]
        %1540 = vst [vmem:[%s1030 + $0x3f8] sm:%s1022] %v1539
        %v1541 = vld [vmem:[%s1029 + $0x3fc] sm:%s1022]
        %1542 = vst [vmem:[%s1030 + $0x3fc] sm:%s1022] %v1541
      $region309: #{tpu_custom_call.1} parent=303 // loop_footer
        %s1028 = sadd.s32 1, %s1024
      $region310: #{tpu_custom_call.1} parent=303 // loop_footer_branch
        %1023 = sbr.rel target = $region306
      $region311: #{tpu_custom_call.1} parent=303 // loop_exit
        _
    $region304: #{tpu_custom_call.1} parent=1 // pred_fallthru
      _
    // Predicated region
    $region330: #{tpu_custom_call.1} parent=1 // pred_check
      _
    $region331: #{tpu_custom_call.1} parent=1 // pred_check_branch
      %2084 = sbr.rel (0) target = $region333
    $region332: #{tpu_custom_call.1} parent=1 // pred_region
      %2085 = vsyncadd %s1013, 16384
    $region333: #{tpu_custom_call.1} parent=1 // pred_fallthru
      _
    %s2086 = scalar_lea.sflag [#allocation6], 3
    %p2088 = scmp.lt.u32.totalorder 1024, 8
    %p2089 = pneg %p2088
    // Predicated region
    $region334: #{tpu_custom_call.1} parent=1 // pred_check
      _
    $region335: #{tpu_custom_call.1} parent=1 // pred_check_branch
      %2091 = sbr.rel (%p2088) target = $region337
    $region336: #{tpu_custom_call.1} parent=1 // pred_region
      %s2106 = sand.u32 1024, 7
      %p2107 = scmp.eq.s32.totalorder %s2106, 0
      // Predicated region
      $region349: #{tpu_custom_call.1} parent=336 // pred_check
        %p2108 = pneg %p2107
      $region350: #{tpu_custom_call.1} parent=336 // pred_check_branch
        %2110 = sbr.rel (%p2108) target = $region352
      $region351: #{tpu_custom_call.1} parent=336 // pred_region
        loop: start=0, step=1, limit=1
        $region353: #{tpu_custom_call.1} parent=351 // loop_pre_header
          _
        $region354: #{tpu_custom_call.1} parent=351 // loop_header
          %s2112 = sphi 0, %s2116
          %p2113 = scmp.ge.s32.totalorder %s2112, 1
          %s2117 = sphi %s67, %s67
          %s2118 = sphi [#allocation5], [#allocation5]
        $region355: #{tpu_custom_call.1} parent=351 // loop_header_branch
          %2115 = sbr.rel (%p2113) target = $region359
        $region356: #{tpu_custom_call.1} parent=351 // loop_body
          %v2119 = vld [vmem:[%s2117] sm:$0xff]
          %2120 = vst [vmem:[%s2118] sm:$0xff] %v2119
          %v2121 = vld [vmem:[%s2117 + $0x8] sm:$0xff]
          %2122 = vst [vmem:[%s2118 + $0x8] sm:$0xff] %v2121
          %v2123 = vld [vmem:[%s2117 + $0x10] sm:$0xff]
          %2124 = vst [vmem:[%s2118 + $0x10] sm:$0xff] %v2123
          %v2125 = vld [vmem:[%s2117 + $0x18] sm:$0xff]
          %2126 = vst [vmem:[%s2118 + $0x18] sm:$0xff] %v2125
          %v2127 = vld [vmem:[%s2117 + $0x20] sm:$0xff]
          %2128 = vst [vmem:[%s2118 + $0x20] sm:$0xff] %v2127
          %v2129 = vld [vmem:[%s2117 + $0x28] sm:$0xff]
          %2130 = vst [vmem:[%s2118 + $0x28] sm:$0xff] %v2129
          %v2131 = vld [vmem:[%s2117 + $0x30] sm:$0xff]
          %2132 = vst [vmem:[%s2118 + $0x30] sm:$0xff] %v2131
          %v2133 = vld [vmem:[%s2117 + $0x38] sm:$0xff]
          %2134 = vst [vmem:[%s2118 + $0x38] sm:$0xff] %v2133
          %v2135 = vld [vmem:[%s2117 + $0x40] sm:$0xff]
          %2136 = vst [vmem:[%s2118 + $0x40] sm:$0xff] %v2135
          %v2137 = vld [vmem:[%s2117 + $0x48] sm:$0xff]
          %2138 = vst [vmem:[%s2118 + $0x48] sm:$0xff] %v2137
          %v2139 = vld [vmem:[%s2117 + $0x50] sm:$0xff]
          %2140 = vst [vmem:[%s2118 + $0x50] sm:$0xff] %v2139
          %v2141 = vld [vmem:[%s2117 + $0x58] sm:$0xff]
          %2142 = vst [vmem:[%s2118 + $0x58] sm:$0xff] %v2141
          %v2143 = vld [vmem:[%s2117 + $0x60] sm:$0xff]
          %2144 = vst [vmem:[%s2118 + $0x60] sm:$0xff] %v2143
          %v2145 = vld [vmem:[%s2117 + $0x68] sm:$0xff]
          %2146 = vst [vmem:[%s2118 + $0x68] sm:$0xff] %v2145
          %v2147 = vld [vmem:[%s2117 + $0x70] sm:$0xff]
          %2148 = vst [vmem:[%s2118 + $0x70] sm:$0xff] %v2147
          %v2149 = vld [vmem:[%s2117 + $0x78] sm:$0xff]
          %2150 = vst [vmem:[%s2118 + $0x78] sm:$0xff] %v2149
          %v2151 = vld [vmem:[%s2117 + $0x80] sm:$0xff]
          %2152 = vst [vmem:[%s2118 + $0x80] sm:$0xff] %v2151
          %v2153 = vld [vmem:[%s2117 + $0x88] sm:$0xff]
          %2154 = vst [vmem:[%s2118 + $0x88] sm:$0xff] %v2153
          %v2155 = vld [vmem:[%s2117 + $0x90] sm:$0xff]
          %2156 = vst [vmem:[%s2118 + $0x90] sm:$0xff] %v2155
          %v2157 = vld [vmem:[%s2117 + $0x98] sm:$0xff]
          %2158 = vst [vmem:[%s2118 + $0x98] sm:$0xff] %v2157
          %v2159 = vld [vmem:[%s2117 + $0xa0] sm:$0xff]
          %2160 = vst [vmem:[%s2118 + $0xa0] sm:$0xff] %v2159
          %v2161 = vld [vmem:[%s2117 + $0xa8] sm:$0xff]
          %2162 = vst [vmem:[%s2118 + $0xa8] sm:$0xff] %v2161
          %v2163 = vld [vmem:[%s2117 + $0xb0] sm:$0xff]
          %2164 = vst [vmem:[%s2118 + $0xb0] sm:$0xff] %v2163
          %v2165 = vld [vmem:[%s2117 + $0xb8] sm:$0xff]
          %2166 = vst [vmem:[%s2118 + $0xb8] sm:$0xff] %v2165
          %v2167 = vld [vmem:[%s2117 + $0xc0] sm:$0xff]
          %2168 = vst [vmem:[%s2118 + $0xc0] sm:$0xff] %v2167
          %v2169 = vld [vmem:[%s2117 + $0xc8] sm:$0xff]
          %2170 = vst [vmem:[%s2118 + $0xc8] sm:$0xff] %v2169
          %v2171 = vld [vmem:[%s2117 + $0xd0] sm:$0xff]
          %2172 = vst [vmem:[%s2118 + $0xd0] sm:$0xff] %v2171
          %v2173 = vld [vmem:[%s2117 + $0xd8] sm:$0xff]
          %2174 = vst [vmem:[%s2118 + $0xd8] sm:$0xff] %v2173
          %v2175 = vld [vmem:[%s2117 + $0xe0] sm:$0xff]
          %2176 = vst [vmem:[%s2118 + $0xe0] sm:$0xff] %v2175
          %v2177 = vld [vmem:[%s2117 + $0xe8] sm:$0xff]
          %2178 = vst [vmem:[%s2118 + $0xe8] sm:$0xff] %v2177
          %v2179 = vld [vmem:[%s2117 + $0xf0] sm:$0xff]
          %2180 = vst [vmem:[%s2118 + $0xf0] sm:$0xff] %v2179
          %v2181 = vld [vmem:[%s2117 + $0xf8] sm:$0xff]
          %2182 = vst [vmem:[%s2118 + $0xf8] sm:$0xff] %v2181
          %v2183 = vld [vmem:[%s2117 + $0x100] sm:$0xff]
          %2184 = vst [vmem:[%s2118 + $0x100] sm:$0xff] %v2183
          %v2185 = vld [vmem:[%s2117 + $0x108] sm:$0xff]
          %2186 = vst [vmem:[%s2118 + $0x108] sm:$0xff] %v2185
          %v2187 = vld [vmem:[%s2117 + $0x110] sm:$0xff]
          %2188 = vst [vmem:[%s2118 + $0x110] sm:$0xff] %v2187
          %v2189 = vld [vmem:[%s2117 + $0x118] sm:$0xff]
          %2190 = vst [vmem:[%s2118 + $0x118] sm:$0xff] %v2189
          %v2191 = vld [vmem:[%s2117 + $0x120] sm:$0xff]
          %2192 = vst [vmem:[%s2118 + $0x120] sm:$0xff] %v2191
          %v2193 = vld [vmem:[%s2117 + $0x128] sm:$0xff]
          %2194 = vst [vmem:[%s2118 + $0x128] sm:$0xff] %v2193
          %v2195 = vld [vmem:[%s2117 + $0x130] sm:$0xff]
          %2196 = vst [vmem:[%s2118 + $0x130] sm:$0xff] %v2195
          %v2197 = vld [vmem:[%s2117 + $0x138] sm:$0xff]
          %2198 = vst [vmem:[%s2118 + $0x138] sm:$0xff] %v2197
          %v2199 = vld [vmem:[%s2117 + $0x140] sm:$0xff]
          %2200 = vst [vmem:[%s2118 + $0x140] sm:$0xff] %v2199
          %v2201 = vld [vmem:[%s2117 + $0x148] sm:$0xff]
          %2202 = vst [vmem:[%s2118 + $0x148] sm:$0xff] %v2201
          %v2203 = vld [vmem:[%s2117 + $0x150] sm:$0xff]
          %2204 = vst [vmem:[%s2118 + $0x150] sm:$0xff] %v2203
          %v2205 = vld [vmem:[%s2117 + $0x158] sm:$0xff]
          %2206 = vst [vmem:[%s2118 + $0x158] sm:$0xff] %v2205
          %v2207 = vld [vmem:[%s2117 + $0x160] sm:$0xff]
          %2208 = vst [vmem:[%s2118 + $0x160] sm:$0xff] %v2207
          %v2209 = vld [vmem:[%s2117 + $0x168] sm:$0xff]
          %2210 = vst [vmem:[%s2118 + $0x168] sm:$0xff] %v2209
          %v2211 = vld [vmem:[%s2117 + $0x170] sm:$0xff]
          %2212 = vst [vmem:[%s2118 + $0x170] sm:$0xff] %v2211
          %v2213 = vld [vmem:[%s2117 + $0x178] sm:$0xff]
          %2214 = vst [vmem:[%s2118 + $0x178] sm:$0xff] %v2213
          %v2215 = vld [vmem:[%s2117 + $0x180] sm:$0xff]
          %2216 = vst [vmem:[%s2118 + $0x180] sm:$0xff] %v2215
          %v2217 = vld [vmem:[%s2117 + $0x188] sm:$0xff]
          %2218 = vst [vmem:[%s2118 + $0x188] sm:$0xff] %v2217
          %v2219 = vld [vmem:[%s2117 + $0x190] sm:$0xff]
          %2220 = vst [vmem:[%s2118 + $0x190] sm:$0xff] %v2219
          %v2221 = vld [vmem:[%s2117 + $0x198] sm:$0xff]
          %2222 = vst [vmem:[%s2118 + $0x198] sm:$0xff] %v2221
          %v2223 = vld [vmem:[%s2117 + $0x1a0] sm:$0xff]
          %2224 = vst [vmem:[%s2118 + $0x1a0] sm:$0xff] %v2223
          %v2225 = vld [vmem:[%s2117 + $0x1a8] sm:$0xff]
          %2226 = vst [vmem:[%s2118 + $0x1a8] sm:$0xff] %v2225
          %v2227 = vld [vmem:[%s2117 + $0x1b0] sm:$0xff]
          %2228 = vst [vmem:[%s2118 + $0x1b0] sm:$0xff] %v2227
          %v2229 = vld [vmem:[%s2117 + $0x1b8] sm:$0xff]
          %2230 = vst [vmem:[%s2118 + $0x1b8] sm:$0xff] %v2229
          %v2231 = vld [vmem:[%s2117 + $0x1c0] sm:$0xff]
          %2232 = vst [vmem:[%s2118 + $0x1c0] sm:$0xff] %v2231
          %v2233 = vld [vmem:[%s2117 + $0x1c8] sm:$0xff]
          %2234 = vst [vmem:[%s2118 + $0x1c8] sm:$0xff] %v2233
          %v2235 = vld [vmem:[%s2117 + $0x1d0] sm:$0xff]
          %2236 = vst [vmem:[%s2118 + $0x1d0] sm:$0xff] %v2235
          %v2237 = vld [vmem:[%s2117 + $0x1d8] sm:$0xff]
          %2238 = vst [vmem:[%s2118 + $0x1d8] sm:$0xff] %v2237
          %v2239 = vld [vmem:[%s2117 + $0x1e0] sm:$0xff]
          %2240 = vst [vmem:[%s2118 + $0x1e0] sm:$0xff] %v2239
          %v2241 = vld [vmem:[%s2117 + $0x1e8] sm:$0xff]
          %2242 = vst [vmem:[%s2118 + $0x1e8] sm:$0xff] %v2241
          %v2243 = vld [vmem:[%s2117 + $0x1f0] sm:$0xff]
          %2244 = vst [vmem:[%s2118 + $0x1f0] sm:$0xff] %v2243
          %v2245 = vld [vmem:[%s2117 + $0x1f8] sm:$0xff]
          %2246 = vst [vmem:[%s2118 + $0x1f8] sm:$0xff] %v2245
          %v2247 = vld [vmem:[%s2117 + $0x200] sm:$0xff]
          %2248 = vst [vmem:[%s2118 + $0x200] sm:$0xff] %v2247
          %v2249 = vld [vmem:[%s2117 + $0x208] sm:$0xff]
          %2250 = vst [vmem:[%s2118 + $0x208] sm:$0xff] %v2249
          %v2251 = vld [vmem:[%s2117 + $0x210] sm:$0xff]
          %2252 = vst [vmem:[%s2118 + $0x210] sm:$0xff] %v2251
          %v2253 = vld [vmem:[%s2117 + $0x218] sm:$0xff]
          %2254 = vst [vmem:[%s2118 + $0x218] sm:$0xff] %v2253
          %v2255 = vld [vmem:[%s2117 + $0x220] sm:$0xff]
          %2256 = vst [vmem:[%s2118 + $0x220] sm:$0xff] %v2255
          %v2257 = vld [vmem:[%s2117 + $0x228] sm:$0xff]
          %2258 = vst [vmem:[%s2118 + $0x228] sm:$0xff] %v2257
          %v2259 = vld [vmem:[%s2117 + $0x230] sm:$0xff]
          %2260 = vst [vmem:[%s2118 + $0x230] sm:$0xff] %v2259
          %v2261 = vld [vmem:[%s2117 + $0x238] sm:$0xff]
          %2262 = vst [vmem:[%s2118 + $0x238] sm:$0xff] %v2261
          %v2263 = vld [vmem:[%s2117 + $0x240] sm:$0xff]
          %2264 = vst [vmem:[%s2118 + $0x240] sm:$0xff] %v2263
          %v2265 = vld [vmem:[%s2117 + $0x248] sm:$0xff]
          %2266 = vst [vmem:[%s2118 + $0x248] sm:$0xff] %v2265
          %v2267 = vld [vmem:[%s2117 + $0x250] sm:$0xff]
          %2268 = vst [vmem:[%s2118 + $0x250] sm:$0xff] %v2267
          %v2269 = vld [vmem:[%s2117 + $0x258] sm:$0xff]
          %2270 = vst [vmem:[%s2118 + $0x258] sm:$0xff] %v2269
          %v2271 = vld [vmem:[%s2117 + $0x260] sm:$0xff]
          %2272 = vst [vmem:[%s2118 + $0x260] sm:$0xff] %v2271
          %v2273 = vld [vmem:[%s2117 + $0x268] sm:$0xff]
          %2274 = vst [vmem:[%s2118 + $0x268] sm:$0xff] %v2273
          %v2275 = vld [vmem:[%s2117 + $0x270] sm:$0xff]
          %2276 = vst [vmem:[%s2118 + $0x270] sm:$0xff] %v2275
          %v2277 = vld [vmem:[%s2117 + $0x278] sm:$0xff]
          %2278 = vst [vmem:[%s2118 + $0x278] sm:$0xff] %v2277
          %v2279 = vld [vmem:[%s2117 + $0x280] sm:$0xff]
          %2280 = vst [vmem:[%s2118 + $0x280] sm:$0xff] %v2279
          %v2281 = vld [vmem:[%s2117 + $0x288] sm:$0xff]
          %2282 = vst [vmem:[%s2118 + $0x288] sm:$0xff] %v2281
          %v2283 = vld [vmem:[%s2117 + $0x290] sm:$0xff]
          %2284 = vst [vmem:[%s2118 + $0x290] sm:$0xff] %v2283
          %v2285 = vld [vmem:[%s2117 + $0x298] sm:$0xff]
          %2286 = vst [vmem:[%s2118 + $0x298] sm:$0xff] %v2285
          %v2287 = vld [vmem:[%s2117 + $0x2a0] sm:$0xff]
          %2288 = vst [vmem:[%s2118 + $0x2a0] sm:$0xff] %v2287
          %v2289 = vld [vmem:[%s2117 + $0x2a8] sm:$0xff]
          %2290 = vst [vmem:[%s2118 + $0x2a8] sm:$0xff] %v2289
          %v2291 = vld [vmem:[%s2117 + $0x2b0] sm:$0xff]
          %2292 = vst [vmem:[%s2118 + $0x2b0] sm:$0xff] %v2291
          %v2293 = vld [vmem:[%s2117 + $0x2b8] sm:$0xff]
          %2294 = vst [vmem:[%s2118 + $0x2b8] sm:$0xff] %v2293
          %v2295 = vld [vmem:[%s2117 + $0x2c0] sm:$0xff]
          %2296 = vst [vmem:[%s2118 + $0x2c0] sm:$0xff] %v2295
          %v2297 = vld [vmem:[%s2117 + $0x2c8] sm:$0xff]
          %2298 = vst [vmem:[%s2118 + $0x2c8] sm:$0xff] %v2297
          %v2299 = vld [vmem:[%s2117 + $0x2d0] sm:$0xff]
          %2300 = vst [vmem:[%s2118 + $0x2d0] sm:$0xff] %v2299
          %v2301 = vld [vmem:[%s2117 + $0x2d8] sm:$0xff]
          %2302 = vst [vmem:[%s2118 + $0x2d8] sm:$0xff] %v2301
          %v2303 = vld [vmem:[%s2117 + $0x2e0] sm:$0xff]
          %2304 = vst [vmem:[%s2118 + $0x2e0] sm:$0xff] %v2303
          %v2305 = vld [vmem:[%s2117 + $0x2e8] sm:$0xff]
          %2306 = vst [vmem:[%s2118 + $0x2e8] sm:$0xff] %v2305
          %v2307 = vld [vmem:[%s2117 + $0x2f0] sm:$0xff]
          %2308 = vst [vmem:[%s2118 + $0x2f0] sm:$0xff] %v2307
          %v2309 = vld [vmem:[%s2117 + $0x2f8] sm:$0xff]
          %2310 = vst [vmem:[%s2118 + $0x2f8] sm:$0xff] %v2309
          %v2311 = vld [vmem:[%s2117 + $0x300] sm:$0xff]
          %2312 = vst [vmem:[%s2118 + $0x300] sm:$0xff] %v2311
          %v2313 = vld [vmem:[%s2117 + $0x308] sm:$0xff]
          %2314 = vst [vmem:[%s2118 + $0x308] sm:$0xff] %v2313
          %v2315 = vld [vmem:[%s2117 + $0x310] sm:$0xff]
          %2316 = vst [vmem:[%s2118 + $0x310] sm:$0xff] %v2315
          %v2317 = vld [vmem:[%s2117 + $0x318] sm:$0xff]
          %2318 = vst [vmem:[%s2118 + $0x318] sm:$0xff] %v2317
          %v2319 = vld [vmem:[%s2117 + $0x320] sm:$0xff]
          %2320 = vst [vmem:[%s2118 + $0x320] sm:$0xff] %v2319
          %v2321 = vld [vmem:[%s2117 + $0x328] sm:$0xff]
          %2322 = vst [vmem:[%s2118 + $0x328] sm:$0xff] %v2321
          %v2323 = vld [vmem:[%s2117 + $0x330] sm:$0xff]
          %2324 = vst [vmem:[%s2118 + $0x330] sm:$0xff] %v2323
          %v2325 = vld [vmem:[%s2117 + $0x338] sm:$0xff]
          %2326 = vst [vmem:[%s2118 + $0x338] sm:$0xff] %v2325
          %v2327 = vld [vmem:[%s2117 + $0x340] sm:$0xff]
          %2328 = vst [vmem:[%s2118 + $0x340] sm:$0xff] %v2327
          %v2329 = vld [vmem:[%s2117 + $0x348] sm:$0xff]
          %2330 = vst [vmem:[%s2118 + $0x348] sm:$0xff] %v2329
          %v2331 = vld [vmem:[%s2117 + $0x350] sm:$0xff]
          %2332 = vst [vmem:[%s2118 + $0x350] sm:$0xff] %v2331
          %v2333 = vld [vmem:[%s2117 + $0x358] sm:$0xff]
          %2334 = vst [vmem:[%s2118 + $0x358] sm:$0xff] %v2333
          %v2335 = vld [vmem:[%s2117 + $0x360] sm:$0xff]
          %2336 = vst [vmem:[%s2118 + $0x360] sm:$0xff] %v2335
          %v2337 = vld [vmem:[%s2117 + $0x368] sm:$0xff]
          %2338 = vst [vmem:[%s2118 + $0x368] sm:$0xff] %v2337
          %v2339 = vld [vmem:[%s2117 + $0x370] sm:$0xff]
          %2340 = vst [vmem:[%s2118 + $0x370] sm:$0xff] %v2339
          %v2341 = vld [vmem:[%s2117 + $0x378] sm:$0xff]
          %2342 = vst [vmem:[%s2118 + $0x378] sm:$0xff] %v2341
          %v2343 = vld [vmem:[%s2117 + $0x380] sm:$0xff]
          %2344 = vst [vmem:[%s2118 + $0x380] sm:$0xff] %v2343
          %v2345 = vld [vmem:[%s2117 + $0x388] sm:$0xff]
          %2346 = vst [vmem:[%s2118 + $0x388] sm:$0xff] %v2345
          %v2347 = vld [vmem:[%s2117 + $0x390] sm:$0xff]
          %2348 = vst [vmem:[%s2118 + $0x390] sm:$0xff] %v2347
          %v2349 = vld [vmem:[%s2117 + $0x398] sm:$0xff]
          %2350 = vst [vmem:[%s2118 + $0x398] sm:$0xff] %v2349
          %v2351 = vld [vmem:[%s2117 + $0x3a0] sm:$0xff]
          %2352 = vst [vmem:[%s2118 + $0x3a0] sm:$0xff] %v2351
          %v2353 = vld [vmem:[%s2117 + $0x3a8] sm:$0xff]
          %2354 = vst [vmem:[%s2118 + $0x3a8] sm:$0xff] %v2353
          %v2355 = vld [vmem:[%s2117 + $0x3b0] sm:$0xff]
          %2356 = vst [vmem:[%s2118 + $0x3b0] sm:$0xff] %v2355
          %v2357 = vld [vmem:[%s2117 + $0x3b8] sm:$0xff]
          %2358 = vst [vmem:[%s2118 + $0x3b8] sm:$0xff] %v2357
          %v2359 = vld [vmem:[%s2117 + $0x3c0] sm:$0xff]
          %2360 = vst [vmem:[%s2118 + $0x3c0] sm:$0xff] %v2359
          %v2361 = vld [vmem:[%s2117 + $0x3c8] sm:$0xff]
          %2362 = vst [vmem:[%s2118 + $0x3c8] sm:$0xff] %v2361
          %v2363 = vld [vmem:[%s2117 + $0x3d0] sm:$0xff]
          %2364 = vst [vmem:[%s2118 + $0x3d0] sm:$0xff] %v2363
          %v2365 = vld [vmem:[%s2117 + $0x3d8] sm:$0xff]
          %2366 = vst [vmem:[%s2118 + $0x3d8] sm:$0xff] %v2365
          %v2367 = vld [vmem:[%s2117 + $0x3e0] sm:$0xff]
          %2368 = vst [vmem:[%s2118 + $0x3e0] sm:$0xff] %v2367
          %v2369 = vld [vmem:[%s2117 + $0x3e8] sm:$0xff]
          %2370 = vst [vmem:[%s2118 + $0x3e8] sm:$0xff] %v2369
          %v2371 = vld [vmem:[%s2117 + $0x3f0] sm:$0xff]
          %2372 = vst [vmem:[%s2118 + $0x3f0] sm:$0xff] %v2371
          %v2373 = vld [vmem:[%s2117 + $0x3f8] sm:$0xff]
          %2374 = vst [vmem:[%s2118 + $0x3f8] sm:$0xff] %v2373
        $region357: #{tpu_custom_call.1} parent=351 // loop_footer
          %s2116 = sadd.s32 1, %s2112
        $region358: #{tpu_custom_call.1} parent=351 // loop_footer_branch
          %2111 = sbr.rel target = $region354
        $region359: #{tpu_custom_call.1} parent=351 // loop_exit
          _
      $region352: #{tpu_custom_call.1} parent=336 // pred_fallthru
        _
      %p2375 = pneg %p2107
      // Predicated region
      $region360: #{tpu_custom_call.1} parent=336 // pred_check
        _
      $region361: #{tpu_custom_call.1} parent=336 // pred_check_branch
        %2377 = sbr.rel (%p2107) target = $region363
      $region362: #{tpu_custom_call.1} parent=336 // pred_region
        %s2378 = sand.u32 1024, 7
      $region363: #{tpu_custom_call.1} parent=336 // pred_fallthru
        _
    $region337: #{tpu_custom_call.1} parent=1 // pred_fallthru
      _
    // Predicated region
    $region338: #{tpu_custom_call.1} parent=1 // pred_check
      %p2092 = pneg %p2088
    $region339: #{tpu_custom_call.1} parent=1 // pred_check_branch
      %2094 = sbr.rel (%p2092) target = $region341
    $region340: #{tpu_custom_call.1} parent=1 // pred_region
      %s2095 = sshllo.u32 0, 1024
      loop: start=0, step=1, limit=1
      $region342: #{tpu_custom_call.1} parent=340 // loop_pre_header
        _
      $region343: #{tpu_custom_call.1} parent=340 // loop_header
        %s2097 = sphi 0, %s2101
        %p2098 = scmp.ge.s32.totalorder %s2097, 1
        %s2102 = sphi %s67, %s67
        %s2103 = sphi [#allocation5], [#allocation5]
      $region344: #{tpu_custom_call.1} parent=340 // loop_header_branch
        %2100 = sbr.rel (%p2098) target = $region348
      $region345: #{tpu_custom_call.1} parent=340 // loop_body
        %v2104 = vld [vmem:[%s2102] sm:%s2095]
        %2105 = vst [vmem:[%s2103] sm:%s2095] %v2104
      $region346: #{tpu_custom_call.1} parent=340 // loop_footer
        %s2101 = sadd.s32 1, %s2097
      $region347: #{tpu_custom_call.1} parent=340 // loop_footer_branch
        %2096 = sbr.rel target = $region343
      $region348: #{tpu_custom_call.1} parent=340 // loop_exit
        _
    $region341: #{tpu_custom_call.1} parent=1 // pred_fallthru
      _
    // Predicated region
    $region364: #{tpu_custom_call.1} parent=1 // pred_check
      _
    $region365: #{tpu_custom_call.1} parent=1 // pred_check_branch
      %2381 = sbr.rel (0) target = $region367
    $region366: #{tpu_custom_call.1} parent=1 // pred_region
      %2382 = vsyncadd %s2086, 16384
    $region367: #{tpu_custom_call.1} parent=1 // pred_fallthru
      _
    %v2383 = vld [vmem:[#allocation7] sm:$0xff]
    %v2384 = vld [vmem:[%s5] sm:$0x1]
    %v2385 = vld [vmem:[#allocation12] sm:$0x1]
    %vm2386 = vcmask 261120
    %v2387 = vsel %vm2386, %v2383, 0.0
    %2388 = vadd.xlane.f32.xlu0 %v2387
    %v2389 = vpop.xlane.xlu0 %2388
    %v2390 = vrcp.pop 32.0
    %v2391 = vmul.f32 %v2389, %v2390
    %v2392 = vsub.f32 %v2383, %v2391
    %v2393 = vmul.f32 %v2392, %v2392
    %v2394 = vsel %vm2386, %v2393, 0.0
    %2395 = vadd.xlane.f32.xlu0 %v2394
    %v2396 = vpop.xlane.xlu0 %2395
    %v2397 = vmul.f32 %v2396, %v2390
    %v2398 = vadd.f32 %v2397, 1e-05
    %v2399 = vrsqrt.pop %v2398
    %v2400 = vmul.f32 %v2392, %v2399
    %v2402 = vlaneseq
    %v2403 = vshrl.u32 %v2402, 7
    %v2404 = vsub.s32 0, %v2403
    %v2405 = vrot.slane %v2384, %v2404
    %v2407 = vmul.f32 %v2400, %v2405
    %v2409 = vlaneseq
    %v2410 = vshrl.u32 %v2409, 7
    %v2411 = vsub.s32 0, %v2410
    %v2412 = vrot.slane %v2385, %v2411
    %v2414 = vadd.f32 %v2407, %v2412
    %v2415 = vpack.c.bf16 %v2414, %v2414
    %v2416 = vld [vmem:[%s9] sm:$0xf]
    %v2417 = vld [vmem:[%s9 + $0x4] sm:$0xf]
    %v2418 = vld [vmem:[%s9 + $0x8] sm:$0xf]
    %v2419 = vld [vmem:[%s9 + $0xc] sm:$0xf]
    %v2420 = vld [vmem:[#allocation13] sm:$0x1]
    %v2422 = vlaneseq
    %v2423 = vshrl.u32 %v2422, 7
    %v2424 = vsub.s32 0, %v2423
    %v2425 = vrot.slane %v2420, %v2424
    %v2431 = vunpack.c.l.b16 %v2416
    %v2432 = vunpack.c.l.b16 %v2417
    %v2433 = vunpack.c.l.b16 %v2418
    %v2434 = vunpack.c.l.b16 %v2419
    %v2435 = vpack.c.b16 %v2432, %v2431
    %v2436 = vpack.c.b16 %v2434, %v2433
    %v2440 = vsel %vm2386, %v2415, 0
    %2442 = vmatprep.subr.bf16.mxu0 0
    %2443 = vmatpush1.bf16.msra.mxu0 %v2435
    %2444 = vmatprep.subr.bf16.mxu0 0
    %2445 = vmatpush1.bf16.msra.mxu0 %v2436
    %2446 = vmatprep.subr.bf16.mxu0 0
    %2447 = vmatpush1.bf16.msra.mxu0 0
    %2448 = vmatprep.subr.bf16.mxu0 0
    %2449 = vmatpush1.bf16.msra.mxu0 0
    %2450 = vmatprep.subr.bf16.mxu0 0
    %2451 = vmatpush1.bf16.msra.mxu0 0
    %2452 = vmatprep.subr.bf16.mxu0 0
    %2453 = vmatpush1.bf16.msra.mxu0 0
    %2454 = vmatprep.subr.bf16.mxu0 0
    %2455 = vmatpush1.bf16.msra.mxu0 0
    %2456 = vmatprep.subr.bf16.mxu0 0
    %2457 = vmatpush1.bf16.msra.mxu0 0
    %2458 = vmatprep.subr.bf16.mxu0 0
    %2459 = vmatpush1.bf16.msra.mxu0 0
    %2460 = vmatprep.subr.bf16.mxu0 0
    %2461 = vmatpush1.bf16.msra.mxu0 0
    %2462 = vmatprep.subr.bf16.mxu0 0
    %2463 = vmatpush1.bf16.msra.mxu0 0
    %2464 = vmatprep.subr.bf16.mxu0 0
    %2465 = vmatpush1.bf16.msra.mxu0 0
    %2466 = vmatprep.subr.bf16.mxu0 0
    %2467 = vmatpush1.bf16.msra.mxu0 0
    %2468 = vmatprep.subr.bf16.mxu0 0
    %2469 = vmatpush1.bf16.msra.mxu0 0
    %2470 = vmatprep.subr.bf16.mxu0 0
    %2471 = vmatpush1.bf16.msra.mxu0 0
    %2472 = vmatprep.subr.bf16.mxu0 0
    %2473 = vmatpush1.bf16.msra.mxu0 0
    %2474 = vmatprep.mubr.bf16.mxu0 0
    %2475 = vmatmul.mubr.bf16.gmra.mrb[0].mxu0 %v2440
    %v2476 = vpop.f32.mrb[0].mxu0
    %v2477 = vadd.f32 %v2425, %v2476
    %v2478 = vpop.f32.mrb[0].mxu0
    %v2479 = vpop.f32.mrb[0].mxu0
    %v2480 = vpop.f32.mrb[0].mxu0
    %2481 = vdwg.mxu0
    %v2482 = vld [vmem:[%s13] sm:$0xf]
    %v2483 = vld [vmem:[%s13 + $0x4] sm:$0xf]
    %v2484 = vld [vmem:[%s13 + $0x8] sm:$0xf]
    %v2485 = vld [vmem:[%s13 + $0xc] sm:$0xf]
    %v2486 = vld [vmem:[#allocation15] sm:$0x1]
    %v2488 = vlaneseq
    %v2489 = vshrl.u32 %v2488, 7
    %v2490 = vsub.s32 0, %v2489
    %v2491 = vrot.slane %v2486, %v2490
    %v2497 = vunpack.c.l.b16 %v2482
    %v2498 = vunpack.c.l.b16 %v2483
    %v2499 = vunpack.c.l.b16 %v2484
    %v2500 = vunpack.c.l.b16 %v2485
    %v2501 = vpack.c.b16 %v2498, %v2497
    %v2502 = vpack.c.b16 %v2500, %v2499
    %2505 = vmatprep.subr.bf16.mxu0 0
    %2506 = vmatpush1.bf16.msra.mxu0 %v2501
    %2507 = vmatprep.subr.bf16.mxu0 0
    %2508 = vmatpush1.bf16.msra.mxu0 %v2502
    %2509 = vmatprep.subr.bf16.mxu0 0
    %2510 = vmatpush1.bf16.msra.mxu0 0
    %2511 = vmatprep.subr.bf16.mxu0 0
    %2512 = vmatpush1.bf16.msra.mxu0 0
    %2513 = vmatprep.subr.bf16.mxu0 0
    %2514 = vmatpush1.bf16.msra.mxu0 0
    %2515 = vmatprep.subr.bf16.mxu0 0
    %2516 = vmatpush1.bf16.msra.mxu0 0
    %2517 = vmatprep.subr.bf16.mxu0 0
    %2518 = vmatpush1.bf16.msra.mxu0 0
    %2519 = vmatprep.subr.bf16.mxu0 0
    %2520 = vmatpush1.bf16.msra.mxu0 0
    %2521 = vmatprep.subr.bf16.mxu0 0
    %2522 = vmatpush1.bf16.msra.mxu0 0
    %2523 = vmatprep.subr.bf16.mxu0 0
    %2524 = vmatpush1.bf16.msra.mxu0 0
    %2525 = vmatprep.subr.bf16.mxu0 0
    %2526 = vmatpush1.bf16.msra.mxu0 0
    %2527 = vmatprep.subr.bf16.mxu0 0
    %2528 = vmatpush1.bf16.msra.mxu0 0
    %2529 = vmatprep.subr.bf16.mxu0 0
    %2530 = vmatpush1.bf16.msra.mxu0 0
    %2531 = vmatprep.subr.bf16.mxu0 0
    %2532 = vmatpush1.bf16.msra.mxu0 0
    %2533 = vmatprep.subr.bf16.mxu0 0
    %2534 = vmatpush1.bf16.msra.mxu0 0
    %2535 = vmatprep.subr.bf16.mxu0 0
    %2536 = vmatpush1.bf16.msra.mxu0 0
    %2537 = vmatprep.mubr.bf16.mxu0 0
    %2538 = vmatmul.mubr.bf16.gmra.mrb[0].mxu0 %v2440
    %v2539 = vpop.f32.mrb[0].mxu0
    %v2540 = vadd.f32 %v2491, %v2539
    %v2541 = vpop.f32.mrb[0].mxu0
    %v2542 = vpop.f32.mrb[0].mxu0
    %v2543 = vpop.f32.mrb[0].mxu0
    %2544 = vdwg.mxu0
    %v2545 = vld [vmem:[%s17] sm:$0xf]
    %v2546 = vld [vmem:[%s17 + $0x4] sm:$0xf]
    %v2547 = vld [vmem:[%s17 + $0x8] sm:$0xf]
    %v2548 = vld [vmem:[%s17 + $0xc] sm:$0xf]
    %v2549 = vld [vmem:[#allocation16] sm:$0x1]
    %v2551 = vlaneseq
    %v2552 = vshrl.u32 %v2551, 7
    %v2553 = vsub.s32 0, %v2552
    %v2554 = vrot.slane %v2549, %v2553
    %v2560 = vunpack.c.l.b16 %v2545
    %v2561 = vunpack.c.l.b16 %v2546
    %v2562 = vunpack.c.l.b16 %v2547
    %v2563 = vunpack.c.l.b16 %v2548
    %v2564 = vpack.c.b16 %v2561, %v2560
    %v2565 = vpack.c.b16 %v2563, %v2562
    %2568 = vmatprep.subr.bf16.mxu0 0
    %2569 = vmatpush1.bf16.msra.mxu0 %v2564
    %2570 = vmatprep.subr.bf16.mxu0 0
    %2571 = vmatpush1.bf16.msra.mxu0 %v2565
    %2572 = vmatprep.subr.bf16.mxu0 0
    %2573 = vmatpush1.bf16.msra.mxu0 0
    %2574 = vmatprep.subr.bf16.mxu0 0
    %2575 = vmatpush1.bf16.msra.mxu0 0
    %2576 = vmatprep.subr.bf16.mxu0 0
    %2577 = vmatpush1.bf16.msra.mxu0 0
    %2578 = vmatprep.subr.bf16.mxu0 0
    %2579 = vmatpush1.bf16.msra.mxu0 0
    %2580 = vmatprep.subr.bf16.mxu0 0
    %2581 = vmatpush1.bf16.msra.mxu0 0
    %2582 = vmatprep.subr.bf16.mxu0 0
    %2583 = vmatpush1.bf16.msra.mxu0 0
    %2584 = vmatprep.subr.bf16.mxu0 0
    %2585 = vmatpush1.bf16.msra.mxu0 0
    %2586 = vmatprep.subr.bf16.mxu0 0
    %2587 = vmatpush1.bf16.msra.mxu0 0
    %2588 = vmatprep.subr.bf16.mxu0 0
    %2589 = vmatpush1.bf16.msra.mxu0 0
    %2590 = vmatprep.subr.bf16.mxu0 0
    %2591 = vmatpush1.bf16.msra.mxu0 0
    %2592 = vmatprep.subr.bf16.mxu0 0
    %2593 = vmatpush1.bf16.msra.mxu0 0
    %2594 = vmatprep.subr.bf16.mxu0 0
    %2595 = vmatpush1.bf16.msra.mxu0 0
    %2596 = vmatprep.subr.bf16.mxu0 0
    %2597 = vmatpush1.bf16.msra.mxu0 0
    %2598 = vmatprep.subr.bf16.mxu0 0
    %2599 = vmatpush1.bf16.msra.mxu0 0
    %2600 = vmatprep.mubr.bf16.mxu0 0
    %2601 = vmatmul.mubr.bf16.gmra.mrb[0].mxu0 %v2440
    %v2602 = vpop.f32.mrb[0].mxu0
    %v2603 = vadd.f32 %v2554, %v2602
    %v2604 = vpop.f32.mrb[0].mxu0
    %v2605 = vpop.f32.mrb[0].mxu0
    %v2606 = vpop.f32.mrb[0].mxu0
    %2607 = vdwg.mxu0
    %vm2608 = vcmask 130048
    %v2610 = vsel %vm2608, %v2477, 0
    %v2613 = vsel %vm2608, %v2540, 0
    %2615 = vmatprep.subr.mxu0 0.0
    %2616 = vmatpush1.xpose.msra.mxu0 %v2613
    %2617 = vmatprep.subr.mxu0 0.0
    %2618 = vmatpush1.xpose.msra.mxu0 0.0
    %2619 = vmatprep.subr.mxu0 0.0
    %2620 = vmatpush1.xpose.msra.mxu0 0.0
    %2621 = vmatprep.subr.mxu0 0.0
    %2622 = vmatpush1.xpose.msra.mxu0 0.0
    %2623 = vmatprep.subr.mxu0 0.0
    %2624 = vmatpush1.xpose.msra.mxu0 0.0
    %2625 = vmatprep.subr.mxu0 0.0
    %2626 = vmatpush1.xpose.msra.mxu0 0.0
    %2627 = vmatprep.subr.mxu0 0.0
    %2628 = vmatpush1.xpose.msra.mxu0 0.0
    %2629 = vmatprep.subr.mxu0 0.0
    %2630 = vmatpush1.xpose.msra.mxu0 0.0
    %2631 = vmatprep.subr.mxu0 0.0
    %2632 = vmatpush1.xpose.msra.mxu0 0.0
    %2633 = vmatprep.subr.mxu0 0.0
    %2634 = vmatpush1.xpose.msra.mxu0 0.0
    %2635 = vmatprep.subr.mxu0 0.0
    %2636 = vmatpush1.xpose.msra.mxu0 0.0
    %2637 = vmatprep.subr.mxu0 0.0
    %2638 = vmatpush1.xpose.msra.mxu0 0.0
    %2639 = vmatprep.subr.mxu0 0.0
    %2640 = vmatpush1.xpose.msra.mxu0 0.0
    %2641 = vmatprep.subr.mxu0 0.0
    %2642 = vmatpush1.xpose.msra.mxu0 0.0
    %2643 = vmatprep.subr.mxu0 0.0
    %2644 = vmatpush1.xpose.msra.mxu0 0.0
    %2645 = vmatprep.subr.mxu0 0.0
    %2646 = vmatpush1.xpose.msra.mxu0 0.0
    %2647 = vmatprep.subr.mxu0 0.0
    %2648 = vmatpush1.xpose.msra.mxu0 0.0
    %2649 = vmatprep.subr.mxu0 0.0
    %2650 = vmatpush1.xpose.msra.mxu0 0.0
    %2651 = vmatprep.subr.mxu0 0.0
    %2652 = vmatpush1.xpose.msra.mxu0 0.0
    %2653 = vmatprep.subr.mxu0 0.0
    %2654 = vmatpush1.xpose.msra.mxu0 0.0
    %2655 = vmatprep.subr.mxu0 0.0
    %2656 = vmatpush1.xpose.msra.mxu0 0.0
    %2657 = vmatprep.subr.mxu0 0.0
    %2658 = vmatpush1.xpose.msra.mxu0 0.0
    %2659 = vmatprep.subr.mxu0 0.0
    %2660 = vmatpush1.xpose.msra.mxu0 0.0
    %2661 = vmatprep.subr.mxu0 0.0
    %2662 = vmatpush1.xpose.msra.mxu0 0.0
    %2663 = vmatprep.subr.mxu0 0.0
    %2664 = vmatpush1.xpose.msra.mxu0 0.0
    %2665 = vmatprep.subr.mxu0 0.0
    %2666 = vmatpush1.xpose.msra.mxu0 0.0
    %2667 = vmatprep.subr.mxu0 0.0
    %2668 = vmatpush1.xpose.msra.mxu0 0.0
    %2669 = vmatprep.subr.mxu0 0.0
    %2670 = vmatpush1.xpose.msra.mxu0 0.0
    %2671 = vmatprep.subr.mxu0 0.0
    %2672 = vmatpush1.xpose.msra.mxu0 0.0
    %2673 = vmatprep.subr.mxu0 0.0
    %2674 = vmatpush1.xpose.msra.mxu0 0.0
    %2675 = vmatprep.subr.mxu0 0.0
    %2676 = vmatpush1.xpose.msra.mxu0 0.0
    %2677 = vmatprep.subr.mxu0 0.0
    %2678 = vmatpush1.xpose.msra.mxu0 0.0
    %2679 = vmatprep.mubr.f32.mxu0 0.0
    %2680 = vmatmul.mubr.f32.gmra.mrb[0].mxu0 %v2610
    %v2681 = vpop.f32.mrb[0].mxu0
    %v2682 = vadd.f32 0.0, %v2681
    %v2683 = vpop.f32.mrb[0].mxu0
    %2684 = vdwg.mxu0
    %vm2685 = vcmask 64512
    %v2686 = vsel %vm2685, %v2682, -inf
    %2687 = vmax.xlane.f32.xlu0 %v2686
    %v2688 = vpop.xlane.xlu0 %2687
    %v2689 = vsub.f32 %v2682, %v2688
    %v2690 = vmul.f32 %v2689, 1.442695
    %v2691 = vpow.pop %v2690
    %v2692 = vsel %vm2685, %v2691, 0.0
    %2693 = vadd.xlane.f32.xlu0 %v2692
    %v2694 = vpop.xlane.xlu0 %2693
    %v2695 = vrcp.pop %v2694
    %v2696 = vmul.f32 %v2691, %v2695
    %v2698 = vsel %vm2685, %v2696, 0
    %2700 = vmatprep.subr.mxu0 0.0
    %2701 = vmatpush1.msra.mxu0 %v2603
    %2702 = vmatprep.subr.mxu0 0.0
    %2703 = vmatpush1.msra.mxu0 0.0
    %2704 = vmatprep.subr.mxu0 0.0
    %2705 = vmatpush1.msra.mxu0 0.0
    %2706 = vmatprep.subr.mxu0 0.0
    %2707 = vmatpush1.msra.mxu0 0.0
    %2708 = vmatprep.subr.mxu0 0.0
    %2709 = vmatpush1.msra.mxu0 0.0
    %2710 = vmatprep.subr.mxu0 0.0
    %2711 = vmatpush1.msra.mxu0 0.0
    %2712 = vmatprep.subr.mxu0 0.0
    %2713 = vmatpush1.msra.mxu0 0.0
    %2714 = vmatprep.subr.mxu0 0.0
    %2715 = vmatpush1.msra.mxu0 0.0
    %2716 = vmatprep.subr.mxu0 0.0
    %2717 = vmatpush1.msra.mxu0 0.0
    %2718 = vmatprep.subr.mxu0 0.0
    %2719 = vmatpush1.msra.mxu0 0.0
    %2720 = vmatprep.subr.mxu0 0.0
    %2721 = vmatpush1.msra.mxu0 0.0
    %2722 = vmatprep.subr.mxu0 0.0
    %2723 = vmatpush1.msra.mxu0 0.0
    %2724 = vmatprep.subr.mxu0 0.0
    %2725 = vmatpush1.msra.mxu0 0.0
    %2726 = vmatprep.subr.mxu0 0.0
    %2727 = vmatpush1.msra.mxu0 0.0
    %2728 = vmatprep.subr.mxu0 0.0
    %2729 = vmatpush1.msra.mxu0 0.0
    %2730 = vmatprep.subr.mxu0 0.0
    %2731 = vmatpush1.msra.mxu0 0.0
    %2732 = vmatprep.subr.mxu0 0.0
    %2733 = vmatpush1.msra.mxu0 0.0
    %2734 = vmatprep.subr.mxu0 0.0
    %2735 = vmatpush1.msra.mxu0 0.0
    %2736 = vmatprep.subr.mxu0 0.0
    %2737 = vmatpush1.msra.mxu0 0.0
    %2738 = vmatprep.subr.mxu0 0.0
    %2739 = vmatpush1.msra.mxu0 0.0
    %2740 = vmatprep.subr.mxu0 0.0
    %2741 = vmatpush1.msra.mxu0 0.0
    %2742 = vmatprep.subr.mxu0 0.0
    %2743 = vmatpush1.msra.mxu0 0.0
    %2744 = vmatprep.subr.mxu0 0.0
    %2745 = vmatpush1.msra.mxu0 0.0
    %2746 = vmatprep.subr.mxu0 0.0
    %2747 = vmatpush1.msra.mxu0 0.0
    %2748 = vmatprep.subr.mxu0 0.0
    %2749 = vmatpush1.msra.mxu0 0.0
    %2750 = vmatprep.subr.mxu0 0.0
    %2751 = vmatpush1.msra.mxu0 0.0
    %2752 = vmatprep.subr.mxu0 0.0
    %2753 = vmatpush1.msra.mxu0 0.0
    %2754 = vmatprep.subr.mxu0 0.0
    %2755 = vmatpush1.msra.mxu0 0.0
    %2756 = vmatprep.subr.mxu0 0.0
    %2757 = vmatpush1.msra.mxu0 0.0
    %2758 = vmatprep.subr.mxu0 0.0
    %2759 = vmatpush1.msra.mxu0 0.0
    %2760 = vmatprep.subr.mxu0 0.0
    %2761 = vmatpush1.msra.mxu0 0.0
    %2762 = vmatprep.subr.mxu0 0.0
    %2763 = vmatpush1.msra.mxu0 0.0
    %2764 = vmatprep.mubr.f32.mxu0 0.0
    %2765 = vmatmul.mubr.f32.gmra.mrb[0].mxu0 %v2698
    %v2766 = vpop.f32.mrb[0].mxu0
    %v2767 = vadd.f32 0.0, %v2766
    %v2768 = vpop.f32.mrb[0].mxu0
    %2769 = vdwg.mxu0
    %v2770 = vpack.c.bf16 %v2767, %v2767
    %v2771 = vld [vmem:[#allocation18] sm:$0xf]
    %v2772 = vld [vmem:[#allocation18 + $0x4] sm:$0xf]
    %s2773 = scalar_lea.vmem %s9, 16
    %v2774 = vld [vmem:[%s2773] sm:$0xf]
    %v2775 = vld [vmem:[%s2773 + $0x4] sm:$0xf]
    %v2776 = vld [vmem:[%s2773 + $0x8] sm:$0xf]
    %v2777 = vld [vmem:[%s2773 + $0xc] sm:$0xf]
    %s2778 = scalar_lea.vmem [#allocation13], 1
    %v2779 = vld [vmem:[%s2778] sm:$0x1]
    %v2781 = vlaneseq
    %v2782 = vshrl.u32 %v2781, 7
    %v2783 = vsub.s32 0, %v2782
    %v2784 = vrot.slane %v2779, %v2783
    %v2790 = vunpack.c.l.b16 %v2774
    %v2791 = vunpack.c.l.b16 %v2775
    %v2792 = vunpack.c.l.b16 %v2776
    %v2793 = vunpack.c.l.b16 %v2777
    %v2794 = vpack.c.b16 %v2791, %v2790
    %v2795 = vpack.c.b16 %v2793, %v2792
    %2798 = vmatprep.subr.bf16.mxu0 0
    %2799 = vmatpush1.bf16.msra.mxu0 %v2794
    %2800 = vmatprep.subr.bf16.mxu0 0
    %2801 = vmatpush1.bf16.msra.mxu0 %v2795
    %2802 = vmatprep.subr.bf16.mxu0 0
    %2803 = vmatpush1.bf16.msra.mxu0 0
    %2804 = vmatprep.subr.bf16.mxu0 0
    %2805 = vmatpush1.bf16.msra.mxu0 0
    %2806 = vmatprep.subr.bf16.mxu0 0
    %2807 = vmatpush1.bf16.msra.mxu0 0
    %2808 = vmatprep.subr.bf16.mxu0 0
    %2809 = vmatpush1.bf16.msra.mxu0 0
    %2810 = vmatprep.subr.bf16.mxu0 0
    %2811 = vmatpush1.bf16.msra.mxu0 0
    %2812 = vmatprep.subr.bf16.mxu0 0
    %2813 = vmatpush1.bf16.msra.mxu0 0
    %2814 = vmatprep.subr.bf16.mxu0 0
    %2815 = vmatpush1.bf16.msra.mxu0 0
    %2816 = vmatprep.subr.bf16.mxu0 0
    %2817 = vmatpush1.bf16.msra.mxu0 0
    %2818 = vmatprep.subr.bf16.mxu0 0
    %2819 = vmatpush1.bf16.msra.mxu0 0
    %2820 = vmatprep.subr.bf16.mxu0 0
    %2821 = vmatpush1.bf16.msra.mxu0 0
    %2822 = vmatprep.subr.bf16.mxu0 0
    %2823 = vmatpush1.bf16.msra.mxu0 0
    %2824 = vmatprep.subr.bf16.mxu0 0
    %2825 = vmatpush1.bf16.msra.mxu0 0
    %2826 = vmatprep.subr.bf16.mxu0 0
    %2827 = vmatpush1.bf16.msra.mxu0 0
    %2828 = vmatprep.subr.bf16.mxu0 0
    %2829 = vmatpush1.bf16.msra.mxu0 0
    %2830 = vmatprep.mubr.bf16.mxu0 0
    %2831 = vmatmul.mubr.bf16.gmra.mrb[0].mxu0 %v2440
    %v2832 = vpop.f32.mrb[0].mxu0
    %v2833 = vadd.f32 %v2784, %v2832
    %v2834 = vpop.f32.mrb[0].mxu0
    %v2835 = vpop.f32.mrb[0].mxu0
    %v2836 = vpop.f32.mrb[0].mxu0
    %2837 = vdwg.mxu0
    %s2838 = scalar_lea.vmem %s13, 16
    %v2839 = vld [vmem:[%s2838] sm:$0xf]
    %v2840 = vld [vmem:[%s2838 + $0x4] sm:$0xf]
    %v2841 = vld [vmem:[%s2838 + $0x8] sm:$0xf]
    %v2842 = vld [vmem:[%s2838 + $0xc] sm:$0xf]
    %s2843 = scalar_lea.vmem [#allocation15], 1
    %v2844 = vld [vmem:[%s2843] sm:$0x1]
    %v2846 = vlaneseq
    %v2847 = vshrl.u32 %v2846, 7
    %v2848 = vsub.s32 0, %v2847
    %v2849 = vrot.slane %v2844, %v2848
    %v2855 = vunpack.c.l.b16 %v2839
    %v2856 = vunpack.c.l.b16 %v2840
    %v2857 = vunpack.c.l.b16 %v2841
    %v2858 = vunpack.c.l.b16 %v2842
    %v2859 = vpack.c.b16 %v2856, %v2855
    %v2860 = vpack.c.b16 %v2858, %v2857
    %2863 = vmatprep.subr.bf16.mxu0 0
    %2864 = vmatpush1.bf16.msra.mxu0 %v2859
    %2865 = vmatprep.subr.bf16.mxu0 0
    %2866 = vmatpush1.bf16.msra.mxu0 %v2860
    %2867 = vmatprep.subr.bf16.mxu0 0
    %2868 = vmatpush1.bf16.msra.mxu0 0
    %2869 = vmatprep.subr.bf16.mxu0 0
    %2870 = vmatpush1.bf16.msra.mxu0 0
    %2871 = vmatprep.subr.bf16.mxu0 0
    %2872 = vmatpush1.bf16.msra.mxu0 0
    %2873 = vmatprep.subr.bf16.mxu0 0
    %2874 = vmatpush1.bf16.msra.mxu0 0
    %2875 = vmatprep.subr.bf16.mxu0 0
    %2876 = vmatpush1.bf16.msra.mxu0 0
    %2877 = vmatprep.subr.bf16.mxu0 0
    %2878 = vmatpush1.bf16.msra.mxu0 0
    %2879 = vmatprep.subr.bf16.mxu0 0
    %2880 = vmatpush1.bf16.msra.mxu0 0
    %2881 = vmatprep.subr.bf16.mxu0 0
    %2882 = vmatpush1.bf16.msra.mxu0 0
    %2883 = vmatprep.subr.bf16.mxu0 0
    %2884 = vmatpush1.bf16.msra.mxu0 0
    %2885 = vmatprep.subr.bf16.mxu0 0
    %2886 = vmatpush1.bf16.msra.mxu0 0
    %2887 = vmatprep.subr.bf16.mxu0 0
    %2888 = vmatpush1.bf16.msra.mxu0 0
    %2889 = vmatprep.subr.bf16.mxu0 0
    %2890 = vmatpush1.bf16.msra.mxu0 0
    %2891 = vmatprep.subr.bf16.mxu0 0
    %2892 = vmatpush1.bf16.msra.mxu0 0
    %2893 = vmatprep.subr.bf16.mxu0 0
    %2894 = vmatpush1.bf16.msra.mxu0 0
    %2895 = vmatprep.mubr.bf16.mxu0 0
    %2896 = vmatmul.mubr.bf16.gmra.mrb[0].mxu0 %v2440
    %v2897 = vpop.f32.mrb[0].mxu0
    %v2898 = vadd.f32 %v2849, %v2897
    %v2899 = vpop.f32.mrb[0].mxu0
    %v2900 = vpop.f32.mrb[0].mxu0
    %v2901 = vpop.f32.mrb[0].mxu0
    %2902 = vdwg.mxu0
    %s2903 = scalar_lea.vmem %s17, 16
    %v2904 = vld [vmem:[%s2903] sm:$0xf]
    %v2905 = vld [vmem:[%s2903 + $0x4] sm:$0xf]
    %v2906 = vld [vmem:[%s2903 + $0x8] sm:$0xf]
    %v2907 = vld [vmem:[%s2903 + $0xc] sm:$0xf]
    %s2908 = scalar_lea.vmem [#allocation16], 1
    %v2909 = vld [vmem:[%s2908] sm:$0x1]
    %v2911 = vlaneseq
    %v2912 = vshrl.u32 %v2911, 7
    %v2913 = vsub.s32 0, %v2912
    %v2914 = vrot.slane %v2909, %v2913
    %v2920 = vunpack.c.l.b16 %v2904
    %v2921 = vunpack.c.l.b16 %v2905
    %v2922 = vunpack.c.l.b16 %v2906
    %v2923 = vunpack.c.l.b16 %v2907
    %v2924 = vpack.c.b16 %v2921, %v2920
    %v2925 = vpack.c.b16 %v2923, %v2922
    %2928 = vmatprep.subr.bf16.mxu0 0
    %2929 = vmatpush1.bf16.msra.mxu0 %v2924
    %2930 = vmatprep.subr.bf16.mxu0 0
    %2931 = vmatpush1.bf16.msra.mxu0 %v2925
    %2932 = vmatprep.subr.bf16.mxu0 0
    %2933 = vmatpush1.bf16.msra.mxu0 0
    %2934 = vmatprep.subr.bf16.mxu0 0
    %2935 = vmatpush1.bf16.msra.mxu0 0
    %2936 = vmatprep.subr.bf16.mxu0 0
    %2937 = vmatpush1.bf16.msra.mxu0 0
    %2938 = vmatprep.subr.bf16.mxu0 0
    %2939 = vmatpush1.bf16.msra.mxu0 0
    %2940 = vmatprep.subr.bf16.mxu0 0
    %2941 = vmatpush1.bf16.msra.mxu0 0
    %2942 = vmatprep.subr.bf16.mxu0 0
    %2943 = vmatpush1.bf16.msra.mxu0 0
    %2944 = vmatprep.subr.bf16.mxu0 0
    %2945 = vmatpush1.bf16.msra.mxu0 0
    %2946 = vmatprep.subr.bf16.mxu0 0
    %2947 = vmatpush1.bf16.msra.mxu0 0
    %2948 = vmatprep.subr.bf16.mxu0 0
    %2949 = vmatpush1.bf16.msra.mxu0 0
    %2950 = vmatprep.subr.bf16.mxu0 0
    %2951 = vmatpush1.bf16.msra.mxu0 0
    %2952 = vmatprep.subr.bf16.mxu0 0
    %2953 = vmatpush1.bf16.msra.mxu0 0
    %2954 = vmatprep.subr.bf16.mxu0 0
    %2955 = vmatpush1.bf16.msra.mxu0 0
    %2956 = vmatprep.subr.bf16.mxu0 0
    %2957 = vmatpush1.bf16.msra.mxu0 0
    %2958 = vmatprep.subr.bf16.mxu0 0
    %2959 = vmatpush1.bf16.msra.mxu0 0
    %2960 = vmatprep.mubr.bf16.mxu0 0
    %2961 = vmatmul.mubr.bf16.gmra.mrb[0].mxu0 %v2440
    %v2962 = vpop.f32.mrb[0].mxu0
    %v2963 = vadd.f32 %v2914, %v2962
    %v2964 = vpop.f32.mrb[0].mxu0
    %v2965 = vpop.f32.mrb[0].mxu0
    %v2966 = vpop.f32.mrb[0].mxu0
    %2967 = vdwg.mxu0
    %v2969 = vsel %vm2608, %v2833, 0
    %v2972 = vsel %vm2608, %v2898, 0
    %2974 = vmatprep.subr.mxu0 0.0
    %2975 = vmatpush1.xpose.msra.mxu0 %v2972
    %2976 = vmatprep.subr.mxu0 0.0
    %2977 = vmatpush1.xpose.msra.mxu0 0.0
    %2978 = vmatprep.subr.mxu0 0.0
    %2979 = vmatpush1.xpose.msra.mxu0 0.0
    %2980 = vmatprep.subr.mxu0 0.0
    %2981 = vmatpush1.xpose.msra.mxu0 0.0
    %2982 = vmatprep.subr.mxu0 0.0
    %2983 = vmatpush1.xpose.msra.mxu0 0.0
    %2984 = vmatprep.subr.mxu0 0.0
    %2985 = vmatpush1.xpose.msra.mxu0 0.0
    %2986 = vmatprep.subr.mxu0 0.0
    %2987 = vmatpush1.xpose.msra.mxu0 0.0
    %2988 = vmatprep.subr.mxu0 0.0
    %2989 = vmatpush1.xpose.msra.mxu0 0.0
    %2990 = vmatprep.subr.mxu0 0.0
    %2991 = vmatpush1.xpose.msra.mxu0 0.0
    %2992 = vmatprep.subr.mxu0 0.0
    %2993 = vmatpush1.xpose.msra.mxu0 0.0
    %2994 = vmatprep.subr.mxu0 0.0
    %2995 = vmatpush1.xpose.msra.mxu0 0.0
    %2996 = vmatprep.subr.mxu0 0.0
    %2997 = vmatpush1.xpose.msra.mxu0 0.0
    %2998 = vmatprep.subr.mxu0 0.0
    %2999 = vmatpush1.xpose.msra.mxu0 0.0
    %3000 = vmatprep.subr.mxu0 0.0
    %3001 = vmatpush1.xpose.msra.mxu0 0.0
    %3002 = vmatprep.subr.mxu0 0.0
    %3003 = vmatpush1.xpose.msra.mxu0 0.0
    %3004 = vmatprep.subr.mxu0 0.0
    %3005 = vmatpush1.xpose.msra.mxu0 0.0
    %3006 = vmatprep.subr.mxu0 0.0
    %3007 = vmatpush1.xpose.msra.mxu0 0.0
    %3008 = vmatprep.subr.mxu0 0.0
    %3009 = vmatpush1.xpose.msra.mxu0 0.0
    %3010 = vmatprep.subr.mxu0 0.0
    %3011 = vmatpush1.xpose.msra.mxu0 0.0
    %3012 = vmatprep.subr.mxu0 0.0
    %3013 = vmatpush1.xpose.msra.mxu0 0.0
    %3014 = vmatprep.subr.mxu0 0.0
    %3015 = vmatpush1.xpose.msra.mxu0 0.0
    %3016 = vmatprep.subr.mxu0 0.0
    %3017 = vmatpush1.xpose.msra.mxu0 0.0
    %3018 = vmatprep.subr.mxu0 0.0
    %3019 = vmatpush1.xpose.msra.mxu0 0.0
    %3020 = vmatprep.subr.mxu0 0.0
    %3021 = vmatpush1.xpose.msra.mxu0 0.0
    %3022 = vmatprep.subr.mxu0 0.0
    %3023 = vmatpush1.xpose.msra.mxu0 0.0
    %3024 = vmatprep.subr.mxu0 0.0
    %3025 = vmatpush1.xpose.msra.mxu0 0.0
    %3026 = vmatprep.subr.mxu0 0.0
    %3027 = vmatpush1.xpose.msra.mxu0 0.0
    %3028 = vmatprep.subr.mxu0 0.0
    %3029 = vmatpush1.xpose.msra.mxu0 0.0
    %3030 = vmatprep.subr.mxu0 0.0
    %3031 = vmatpush1.xpose.msra.mxu0 0.0
    %3032 = vmatprep.subr.mxu0 0.0
    %3033 = vmatpush1.xpose.msra.mxu0 0.0
    %3034 = vmatprep.subr.mxu0 0.0
    %3035 = vmatpush1.xpose.msra.mxu0 0.0
    %3036 = vmatprep.subr.mxu0 0.0
    %3037 = vmatpush1.xpose.msra.mxu0 0.0
    %3038 = vmatprep.mubr.f32.mxu0 0.0
    %3039 = vmatmul.mubr.f32.gmra.mrb[0].mxu0 %v2969
    %v3040 = vpop.f32.mrb[0].mxu0
    %v3041 = vadd.f32 0.0, %v3040
    %v3042 = vpop.f32.mrb[0].mxu0
    %3043 = vdwg.mxu0
    %v3044 = vsel %vm2685, %v3041, -inf
    %3045 = vmax.xlane.f32.xlu0 %v3044
    %v3046 = vpop.xlane.xlu0 %3045
    %v3047 = vsub.f32 %v3041, %v3046
    %v3048 = vmul.f32 %v3047, 1.442695
    %v3049 = vpow.pop %v3048
    %v3050 = vsel %vm2685, %v3049, 0.0
    %3051 = vadd.xlane.f32.xlu0 %v3050
    %v3052 = vpop.xlane.xlu0 %3051
    %v3053 = vrcp.pop %v3052
    %v3054 = vmul.f32 %v3049, %v3053
    %v3056 = vsel %vm2685, %v3054, 0
    %3058 = vmatprep.subr.mxu0 0.0
    %3059 = vmatpush1.msra.mxu0 %v2963
    %3060 = vmatprep.subr.mxu0 0.0
    %3061 = vmatpush1.msra.mxu0 0.0
    %3062 = vmatprep.subr.mxu0 0.0
    %3063 = vmatpush1.msra.mxu0 0.0
    %3064 = vmatprep.subr.mxu0 0.0
    %3065 = vmatpush1.msra.mxu0 0.0
    %3066 = vmatprep.subr.mxu0 0.0
    %3067 = vmatpush1.msra.mxu0 0.0
    %3068 = vmatprep.subr.mxu0 0.0
    %3069 = vmatpush1.msra.mxu0 0.0
    %3070 = vmatprep.subr.mxu0 0.0
    %3071 = vmatpush1.msra.mxu0 0.0
    %3072 = vmatprep.subr.mxu0 0.0
    %3073 = vmatpush1.msra.mxu0 0.0
    %3074 = vmatprep.subr.mxu0 0.0
    %3075 = vmatpush1.msra.mxu0 0.0
    %3076 = vmatprep.subr.mxu0 0.0
    %3077 = vmatpush1.msra.mxu0 0.0
    %3078 = vmatprep.subr.mxu0 0.0
    %3079 = vmatpush1.msra.mxu0 0.0
    %3080 = vmatprep.subr.mxu0 0.0
    %3081 = vmatpush1.msra.mxu0 0.0
    %3082 = vmatprep.subr.mxu0 0.0
    %3083 = vmatpush1.msra.mxu0 0.0
    %3084 = vmatprep.subr.mxu0 0.0
    %3085 = vmatpush1.msra.mxu0 0.0
    %3086 = vmatprep.subr.mxu0 0.0
    %3087 = vmatpush1.msra.mxu0 0.0
    %3088 = vmatprep.subr.mxu0 0.0
    %3089 = vmatpush1.msra.mxu0 0.0
    %3090 = vmatprep.subr.mxu0 0.0
    %3091 = vmatpush1.msra.mxu0 0.0
    %3092 = vmatprep.subr.mxu0 0.0
    %3093 = vmatpush1.msra.mxu0 0.0
    %3094 = vmatprep.subr.mxu0 0.0
    %3095 = vmatpush1.msra.mxu0 0.0
    %3096 = vmatprep.subr.mxu0 0.0
    %3097 = vmatpush1.msra.mxu0 0.0
    %3098 = vmatprep.subr.mxu0 0.0
    %3099 = vmatpush1.msra.mxu0 0.0
    %3100 = vmatprep.subr.mxu0 0.0
    %3101 = vmatpush1.msra.mxu0 0.0
    %3102 = vmatprep.subr.mxu0 0.0
    %3103 = vmatpush1.msra.mxu0 0.0
    %3104 = vmatprep.subr.mxu0 0.0
    %3105 = vmatpush1.msra.mxu0 0.0
    %3106 = vmatprep.subr.mxu0 0.0
    %3107 = vmatpush1.msra.mxu0 0.0
    %3108 = vmatprep.subr.mxu0 0.0
    %3109 = vmatpush1.msra.mxu0 0.0
    %3110 = vmatprep.subr.mxu0 0.0
    %3111 = vmatpush1.msra.mxu0 0.0
    %3112 = vmatprep.subr.mxu0 0.0
    %3113 = vmatpush1.msra.mxu0 0.0
    %3114 = vmatprep.subr.mxu0 0.0
    %3115 = vmatpush1.msra.mxu0 0.0
    %3116 = vmatprep.subr.mxu0 0.0
    %3117 = vmatpush1.msra.mxu0 0.0
    %3118 = vmatprep.subr.mxu0 0.0
    %3119 = vmatpush1.msra.mxu0 0.0
    %3120 = vmatprep.subr.mxu0 0.0
    %3121 = vmatpush1.msra.mxu0 0.0
    %3122 = vmatprep.mubr.f32.mxu0 0.0
    %3123 = vmatmul.mubr.f32.gmra.mrb[0].mxu0 %v3056
    %v3124 = vpop.f32.mrb[0].mxu0
    %v3125 = vadd.f32 0.0, %v3124
    %v3126 = vpop.f32.mrb[0].mxu0
    %3127 = vdwg.mxu0
    %v3128 = vpack.c.bf16 %v3125, %v3125
    %s3129 = scalar_lea.vmem [#allocation18], 8
    %v3130 = vld [vmem:[%s3129] sm:$0xf]
    %v3131 = vld [vmem:[%s3129 + $0x4] sm:$0xf]
    %v3134 = vunpack.c.l.b16 %v3130
    %v3135 = vunpack.c.l.b16 %v3131
    %v3136 = vpack.c.b16 %v3135, %v3134
    %v3139 = vsel %vm2608, %v3128, 0
    %3141 = vmatprep.subr.bf16.mxu0 0
    %3142 = vmatpush1.bf16.msra.mxu0 %v3136
    %3143 = vmatprep.subr.bf16.mxu0 0
    %3144 = vmatpush1.bf16.msra.mxu0 0
    %3145 = vmatprep.subr.bf16.mxu0 0
    %3146 = vmatpush1.bf16.msra.mxu0 0
    %3147 = vmatprep.subr.bf16.mxu0 0
    %3148 = vmatpush1.bf16.msra.mxu0 0
    %3149 = vmatprep.subr.bf16.mxu0 0
    %3150 = vmatpush1.bf16.msra.mxu0 0
    %3151 = vmatprep.subr.bf16.mxu0 0
    %3152 = vmatpush1.bf16.msra.mxu0 0
    %3153 = vmatprep.subr.bf16.mxu0 0
    %3154 = vmatpush1.bf16.msra.mxu0 0
    %3155 = vmatprep.subr.bf16.mxu0 0
    %3156 = vmatpush1.bf16.msra.mxu0 0
    %3157 = vmatprep.subr.bf16.mxu0 0
    %3158 = vmatpush1.bf16.msra.mxu0 0
    %3159 = vmatprep.subr.bf16.mxu0 0
    %3160 = vmatpush1.bf16.msra.mxu0 0
    %3161 = vmatprep.subr.bf16.mxu0 0
    %3162 = vmatpush1.bf16.msra.mxu0 0
    %3163 = vmatprep.subr.bf16.mxu0 0
    %3164 = vmatpush1.bf16.msra.mxu0 0
    %3165 = vmatprep.subr.bf16.mxu0 0
    %3166 = vmatpush1.bf16.msra.mxu0 0
    %3167 = vmatprep.subr.bf16.mxu0 0
    %3168 = vmatpush1.bf16.msra.mxu0 0
    %3169 = vmatprep.subr.bf16.mxu0 0
    %3170 = vmatpush1.bf16.msra.mxu0 0
    %3171 = vmatprep.subr.bf16.mxu0 0
    %3172 = vmatpush1.bf16.msra.mxu0 0
    %3173 = vmatprep.mubr.bf16.mxu0 0
    %3174 = vmatmul.mubr.bf16.gmra.mrb[0].mxu0 %v3139
    %v3175 = vpop.f32.mrb[0].mxu0
    %v3176 = vadd.f32 0.0, %v3175
    %v3177 = vpop.f32.mrb[0].mxu0
    %v3178 = vpop.f32.mrb[0].mxu0
    %v3179 = vpop.f32.mrb[0].mxu0
    %3180 = vdwg.mxu0
    %v3183 = vunpack.c.l.b16 %v2771
    %v3184 = vunpack.c.l.b16 %v2772
    %v3185 = vpack.c.b16 %v3184, %v3183
    %v3188 = vsel %vm2608, %v2770, 0
    %3190 = vmatprep.subr.bf16.mxu0 0
    %3191 = vmatpush1.bf16.msra.mxu0 %v3185
    %3192 = vmatprep.subr.bf16.mxu0 0
    %3193 = vmatpush1.bf16.msra.mxu0 0
    %3194 = vmatprep.subr.bf16.mxu0 0
    %3195 = vmatpush1.bf16.msra.mxu0 0
    %3196 = vmatprep.subr.bf16.mxu0 0
    %3197 = vmatpush1.bf16.msra.mxu0 0
    %3198 = vmatprep.subr.bf16.mxu0 0
    %3199 = vmatpush1.bf16.msra.mxu0 0
    %3200 = vmatprep.subr.bf16.mxu0 0
    %3201 = vmatpush1.bf16.msra.mxu0 0
    %3202 = vmatprep.subr.bf16.mxu0 0
    %3203 = vmatpush1.bf16.msra.mxu0 0
    %3204 = vmatprep.subr.bf16.mxu0 0
    %3205 = vmatpush1.bf16.msra.mxu0 0
    %3206 = vmatprep.subr.bf16.mxu0 0
    %3207 = vmatpush1.bf16.msra.mxu0 0
    %3208 = vmatprep.subr.bf16.mxu0 0
    %3209 = vmatpush1.bf16.msra.mxu0 0
    %3210 = vmatprep.subr.bf16.mxu0 0
    %3211 = vmatpush1.bf16.msra.mxu0 0
    %3212 = vmatprep.subr.bf16.mxu0 0
    %3213 = vmatpush1.bf16.msra.mxu0 0
    %3214 = vmatprep.subr.bf16.mxu0 0
    %3215 = vmatpush1.bf16.msra.mxu0 0
    %3216 = vmatprep.subr.bf16.mxu0 0
    %3217 = vmatpush1.bf16.msra.mxu0 0
    %3218 = vmatprep.subr.bf16.mxu0 0
    %3219 = vmatpush1.bf16.msra.mxu0 0
    %3220 = vmatprep.subr.bf16.mxu0 0
    %3221 = vmatpush1.bf16.msra.mxu0 0
    %3222 = vmatprep.mubr.bf16.mxu0 0
    %3223 = vmatmul.mubr.bf16.gmra.mrb[0].mxu0 %v3188
    %v3224 = vpop.f32.mrb[0].mxu0
    %v3225 = vadd.f32 %v3176, %v3224
    %v3226 = vpop.f32.mrb[0].mxu0
    %v3227 = vpop.f32.mrb[0].mxu0
    %v3228 = vpop.f32.mrb[0].mxu0
    %3229 = vdwg.mxu0
    %v3230 = vadd.f32 %v2383, %v3225
    %v3231 = vld [vmem:[#allocation19] sm:$0x1]
    %v3233 = vlaneseq
    %v3234 = vshrl.u32 %v3233, 7
    %v3235 = vsub.s32 0, %v3234
    %v3236 = vrot.slane %v3231, %v3235
    %v3238 = vadd.f32 %v3230, %v3236
    %v3239 = vld [vmem:[#allocation10] sm:$0xff]
    %v3240 = vld [vmem:[%s37] sm:$0x1]
    %v3241 = vld [vmem:[#allocation27] sm:$0x1]
    %3242 = vadd.xlane.f32.xlu0 %v3239
    %v3243 = vpop.xlane.xlu0 %3242
    %v3244 = vrcp.pop 128.0
    %v3245 = vmul.f32 %v3243, %v3244
    %v3246 = vsub.f32 %v3239, %v3245
    %v3247 = vmul.f32 %v3246, %v3246
    %3248 = vadd.xlane.f32.xlu0 %v3247
    %v3249 = vpop.xlane.xlu0 %3248
    %v3250 = vmul.f32 %v3249, %v3244
    %v3251 = vadd.f32 %v3250, 1e-05
    %v3252 = vrsqrt.pop %v3251
    %v3253 = vmul.f32 %v3246, %v3252
    %v3255 = vlaneseq
    %v3256 = vshrl.u32 %v3255, 7
    %v3257 = vsub.s32 0, %v3256
    %v3258 = vrot.slane %v3240, %v3257
    %v3260 = vmul.f32 %v3253, %v3258
    %v3262 = vlaneseq
    %v3263 = vshrl.u32 %v3262, 7
    %v3264 = vsub.s32 0, %v3263
    %v3265 = vrot.slane %v3241, %v3264
    %v3267 = vadd.f32 %v3260, %v3265
    %v3268 = vpack.c.bf16 %v3267, %v3267
    %v3269 = vld [vmem:[%s41] sm:$0xf]
    %v3270 = vld [vmem:[%s41 + $0x4] sm:$0xf]
    %v3271 = vld [vmem:[%s41 + $0x8] sm:$0xf]
    %v3272 = vld [vmem:[%s41 + $0xc] sm:$0xf]
    %v3273 = vld [vmem:[%s41 + $0x10] sm:$0xf]
    %v3274 = vld [vmem:[%s41 + $0x14] sm:$0xf]
    %v3275 = vld [vmem:[%s41 + $0x18] sm:$0xf]
    %v3276 = vld [vmem:[%s41 + $0x1c] sm:$0xf]
    %v3277 = vld [vmem:[%s41 + $0x20] sm:$0xf]
    %v3278 = vld [vmem:[%s41 + $0x24] sm:$0xf]
    %v3279 = vld [vmem:[%s41 + $0x28] sm:$0xf]
    %v3280 = vld [vmem:[%s41 + $0x2c] sm:$0xf]
    %v3281 = vld [vmem:[%s41 + $0x30] sm:$0xf]
    %v3282 = vld [vmem:[%s41 + $0x34] sm:$0xf]
    %v3283 = vld [vmem:[%s41 + $0x38] sm:$0xf]
    %v3284 = vld [vmem:[%s41 + $0x3c] sm:$0xf]
    %v3285 = vld [vmem:[%s43] sm:$0x1]
    %v3287 = vlaneseq
    %v3288 = vshrl.u32 %v3287, 7
    %v3289 = vsub.s32 0, %v3288
    %v3290 = vrot.slane %v3285, %v3289
    %v3308 = vunpack.c.l.b16 %v3269
    %v3309 = vunpack.c.l.b16 %v3270
    %v3310 = vunpack.c.l.b16 %v3271
    %v3311 = vunpack.c.l.b16 %v3272
    %v3312 = vunpack.c.l.b16 %v3273
    %v3313 = vunpack.c.l.b16 %v3274
    %v3314 = vunpack.c.l.b16 %v3275
    %v3315 = vunpack.c.l.b16 %v3276
    %v3316 = vunpack.c.l.b16 %v3277
    %v3317 = vunpack.c.l.b16 %v3278
    %v3318 = vunpack.c.l.b16 %v3279
    %v3319 = vunpack.c.l.b16 %v3280
    %v3320 = vunpack.c.l.b16 %v3281
    %v3321 = vunpack.c.l.b16 %v3282
    %v3322 = vunpack.c.l.b16 %v3283
    %v3323 = vunpack.c.l.b16 %v3284
    %v3324 = vpack.c.b16 %v3309, %v3308
    %v3325 = vpack.c.b16 %v3311, %v3310
    %v3326 = vpack.c.b16 %v3313, %v3312
    %v3327 = vpack.c.b16 %v3315, %v3314
    %v3328 = vpack.c.b16 %v3317, %v3316
    %v3329 = vpack.c.b16 %v3319, %v3318
    %v3330 = vpack.c.b16 %v3321, %v3320
    %v3331 = vpack.c.b16 %v3323, %v3322
    %3340 = vmatprep.subr.bf16.mxu0 0
    %3341 = vmatpush1.bf16.msra.mxu0 %v3324
    %3342 = vmatprep.subr.bf16.mxu0 0
    %3343 = vmatpush1.bf16.msra.mxu0 %v3325
    %3344 = vmatprep.subr.bf16.mxu0 0
    %3345 = vmatpush1.bf16.msra.mxu0 %v3326
    %3346 = vmatprep.subr.bf16.mxu0 0
    %3347 = vmatpush1.bf16.msra.mxu0 %v3327
    %3348 = vmatprep.subr.bf16.mxu0 0
    %3349 = vmatpush1.bf16.msra.mxu0 %v3328
    %3350 = vmatprep.subr.bf16.mxu0 0
    %3351 = vmatpush1.bf16.msra.mxu0 %v3329
    %3352 = vmatprep.subr.bf16.mxu0 0
    %3353 = vmatpush1.bf16.msra.mxu0 %v3330
    %3354 = vmatprep.subr.bf16.mxu0 0
    %3355 = vmatpush1.bf16.msra.mxu0 %v3331
    %3356 = vmatprep.subr.bf16.mxu0 0
    %3357 = vmatpush1.bf16.msra.mxu0 0
    %3358 = vmatprep.subr.bf16.mxu0 0
    %3359 = vmatpush1.bf16.msra.mxu0 0
    %3360 = vmatprep.subr.bf16.mxu0 0
    %3361 = vmatpush1.bf16.msra.mxu0 0
    %3362 = vmatprep.subr.bf16.mxu0 0
    %3363 = vmatpush1.bf16.msra.mxu0 0
    %3364 = vmatprep.subr.bf16.mxu0 0
    %3365 = vmatpush1.bf16.msra.mxu0 0
    %3366 = vmatprep.subr.bf16.mxu0 0
    %3367 = vmatpush1.bf16.msra.mxu0 0
    %3368 = vmatprep.subr.bf16.mxu0 0
    %3369 = vmatpush1.bf16.msra.mxu0 0
    %3370 = vmatprep.subr.bf16.mxu0 0
    %3371 = vmatpush1.bf16.msra.mxu0 0
    %3372 = vmatprep.mubr.bf16.mxu0 0
    %3373 = vmatmul.mubr.bf16.gmra.mrb[0].mxu0 %v3268
    %v3374 = vpop.f32.mrb[0].mxu0
    %v3375 = vadd.f32 %v3290, %v3374
    %v3376 = vpop.f32.mrb[0].mxu0
    %v3377 = vpop.f32.mrb[0].mxu0
    %v3378 = vpop.f32.mrb[0].mxu0
    %3379 = vdwg.mxu0
    %v3380 = vld [vmem:[%s45] sm:$0xf]
    %v3381 = vld [vmem:[%s45 + $0x4] sm:$0xf]
    %v3382 = vld [vmem:[%s45 + $0x8] sm:$0xf]
    %v3383 = vld [vmem:[%s45 + $0xc] sm:$0xf]
    %v3384 = vld [vmem:[%s45 + $0x10] sm:$0xf]
    %v3385 = vld [vmem:[%s45 + $0x14] sm:$0xf]
    %v3386 = vld [vmem:[%s45 + $0x18] sm:$0xf]
    %v3387 = vld [vmem:[%s45 + $0x1c] sm:$0xf]
    %v3388 = vld [vmem:[%s45 + $0x20] sm:$0xf]
    %v3389 = vld [vmem:[%s45 + $0x24] sm:$0xf]
    %v3390 = vld [vmem:[%s45 + $0x28] sm:$0xf]
    %v3391 = vld [vmem:[%s45 + $0x2c] sm:$0xf]
    %v3392 = vld [vmem:[%s45 + $0x30] sm:$0xf]
    %v3393 = vld [vmem:[%s45 + $0x34] sm:$0xf]
    %v3394 = vld [vmem:[%s45 + $0x38] sm:$0xf]
    %v3395 = vld [vmem:[%s45 + $0x3c] sm:$0xf]
    %v3396 = vld [vmem:[%s47] sm:$0x1]
    %v3398 = vlaneseq
    %v3399 = vshrl.u32 %v3398, 7
    %v3400 = vsub.s32 0, %v3399
    %v3401 = vrot.slane %v3396, %v3400
    %v3419 = vunpack.c.l.b16 %v3380
    %v3420 = vunpack.c.l.b16 %v3381
    %v3421 = vunpack.c.l.b16 %v3382
    %v3422 = vunpack.c.l.b16 %v3383
    %v3423 = vunpack.c.l.b16 %v3384
    %v3424 = vunpack.c.l.b16 %v3385
    %v3425 = vunpack.c.l.b16 %v3386
    %v3426 = vunpack.c.l.b16 %v3387
    %v3427 = vunpack.c.l.b16 %v3388
    %v3428 = vunpack.c.l.b16 %v3389
    %v3429 = vunpack.c.l.b16 %v3390
    %v3430 = vunpack.c.l.b16 %v3391
    %v3431 = vunpack.c.l.b16 %v3392
    %v3432 = vunpack.c.l.b16 %v3393
    %v3433 = vunpack.c.l.b16 %v3394
    %v3434 = vunpack.c.l.b16 %v3395
    %v3435 = vpack.c.b16 %v3420, %v3419
    %v3436 = vpack.c.b16 %v3422, %v3421
    %v3437 = vpack.c.b16 %v3424, %v3423
    %v3438 = vpack.c.b16 %v3426, %v3425
    %v3439 = vpack.c.b16 %v3428, %v3427
    %v3440 = vpack.c.b16 %v3430, %v3429
    %v3441 = vpack.c.b16 %v3432, %v3431
    %v3442 = vpack.c.b16 %v3434, %v3433
    %3451 = vmatprep.subr.bf16.mxu0 0
    %3452 = vmatpush1.bf16.msra.mxu0 %v3435
    %3453 = vmatprep.subr.bf16.mxu0 0
    %3454 = vmatpush1.bf16.msra.mxu0 %v3436
    %3455 = vmatprep.subr.bf16.mxu0 0
    %3456 = vmatpush1.bf16.msra.mxu0 %v3437
    %3457 = vmatprep.subr.bf16.mxu0 0
    %3458 = vmatpush1.bf16.msra.mxu0 %v3438
    %3459 = vmatprep.subr.bf16.mxu0 0
    %3460 = vmatpush1.bf16.msra.mxu0 %v3439
    %3461 = vmatprep.subr.bf16.mxu0 0
    %3462 = vmatpush1.bf16.msra.mxu0 %v3440
    %3463 = vmatprep.subr.bf16.mxu0 0
    %3464 = vmatpush1.bf16.msra.mxu0 %v3441
    %3465 = vmatprep.subr.bf16.mxu0 0
    %3466 = vmatpush1.bf16.msra.mxu0 %v3442
    %3467 = vmatprep.subr.bf16.mxu0 0
    %3468 = vmatpush1.bf16.msra.mxu0 0
    %3469 = vmatprep.subr.bf16.mxu0 0
    %3470 = vmatpush1.bf16.msra.mxu0 0
    %3471 = vmatprep.subr.bf16.mxu0 0
    %3472 = vmatpush1.bf16.msra.mxu0 0
    %3473 = vmatprep.subr.bf16.mxu0 0
    %3474 = vmatpush1.bf16.msra.mxu0 0
    %3475 = vmatprep.subr.bf16.mxu0 0
    %3476 = vmatpush1.bf16.msra.mxu0 0
    %3477 = vmatprep.subr.bf16.mxu0 0
    %3478 = vmatpush1.bf16.msra.mxu0 0
    %3479 = vmatprep.subr.bf16.mxu0 0
    %3480 = vmatpush1.bf16.msra.mxu0 0
    %3481 = vmatprep.subr.bf16.mxu0 0
    %3482 = vmatpush1.bf16.msra.mxu0 0
    %3483 = vmatprep.mubr.bf16.mxu0 0
    %3484 = vmatmul.mubr.bf16.gmra.mrb[0].mxu0 %v3268
    %v3485 = vpop.f32.mrb[0].mxu0
    %v3486 = vadd.f32 %v3401, %v3485
    %v3487 = vpop.f32.mrb[0].mxu0
    %v3488 = vpop.f32.mrb[0].mxu0
    %v3489 = vpop.f32.mrb[0].mxu0
    %3490 = vdwg.mxu0
    %v3491 = vld [vmem:[%s49] sm:$0xf]
    %v3492 = vld [vmem:[%s49 + $0x4] sm:$0xf]
    %v3493 = vld [vmem:[%s49 + $0x8] sm:$0xf]
    %v3494 = vld [vmem:[%s49 + $0xc] sm:$0xf]
    %v3495 = vld [vmem:[%s49 + $0x10] sm:$0xf]
    %v3496 = vld [vmem:[%s49 + $0x14] sm:$0xf]
    %v3497 = vld [vmem:[%s49 + $0x18] sm:$0xf]
    %v3498 = vld [vmem:[%s49 + $0x1c] sm:$0xf]
    %v3499 = vld [vmem:[%s49 + $0x20] sm:$0xf]
    %v3500 = vld [vmem:[%s49 + $0x24] sm:$0xf]
    %v3501 = vld [vmem:[%s49 + $0x28] sm:$0xf]
    %v3502 = vld [vmem:[%s49 + $0x2c] sm:$0xf]
    %v3503 = vld [vmem:[%s49 + $0x30] sm:$0xf]
    %v3504 = vld [vmem:[%s49 + $0x34] sm:$0xf]
    %v3505 = vld [vmem:[%s49 + $0x38] sm:$0xf]
    %v3506 = vld [vmem:[%s49 + $0x3c] sm:$0xf]
    %v3507 = vld [vmem:[#allocation28] sm:$0x1]
    %v3509 = vlaneseq
    %v3510 = vshrl.u32 %v3509, 7
    %v3511 = vsub.s32 0, %v3510
    %v3512 = vrot.slane %v3507, %v3511
    %v3530 = vunpack.c.l.b16 %v3491
    %v3531 = vunpack.c.l.b16 %v3492
    %v3532 = vunpack.c.l.b16 %v3493
    %v3533 = vunpack.c.l.b16 %v3494
    %v3534 = vunpack.c.l.b16 %v3495
    %v3535 = vunpack.c.l.b16 %v3496
    %v3536 = vunpack.c.l.b16 %v3497
    %v3537 = vunpack.c.l.b16 %v3498
    %v3538 = vunpack.c.l.b16 %v3499
    %v3539 = vunpack.c.l.b16 %v3500
    %v3540 = vunpack.c.l.b16 %v3501
    %v3541 = vunpack.c.l.b16 %v3502
    %v3542 = vunpack.c.l.b16 %v3503
    %v3543 = vunpack.c.l.b16 %v3504
    %v3544 = vunpack.c.l.b16 %v3505
    %v3545 = vunpack.c.l.b16 %v3506
    %v3546 = vpack.c.b16 %v3531, %v3530
    %v3547 = vpack.c.b16 %v3533, %v3532
    %v3548 = vpack.c.b16 %v3535, %v3534
    %v3549 = vpack.c.b16 %v3537, %v3536
    %v3550 = vpack.c.b16 %v3539, %v3538
    %v3551 = vpack.c.b16 %v3541, %v3540
    %v3552 = vpack.c.b16 %v3543, %v3542
    %v3553 = vpack.c.b16 %v3545, %v3544
    %3562 = vmatprep.subr.bf16.mxu0 0
    %3563 = vmatpush1.bf16.msra.mxu0 %v3546
    %3564 = vmatprep.subr.bf16.mxu0 0
    %3565 = vmatpush1.bf16.msra.mxu0 %v3547
    %3566 = vmatprep.subr.bf16.mxu0 0
    %3567 = vmatpush1.bf16.msra.mxu0 %v3548
    %3568 = vmatprep.subr.bf16.mxu0 0
    %3569 = vmatpush1.bf16.msra.mxu0 %v3549
    %3570 = vmatprep.subr.bf16.mxu0 0
    %3571 = vmatpush1.bf16.msra.mxu0 %v3550
    %3572 = vmatprep.subr.bf16.mxu0 0
    %3573 = vmatpush1.bf16.msra.mxu0 %v3551
    %3574 = vmatprep.subr.bf16.mxu0 0
    %3575 = vmatpush1.bf16.msra.mxu0 %v3552
    %3576 = vmatprep.subr.bf16.mxu0 0
    %3577 = vmatpush1.bf16.msra.mxu0 %v3553
    %3578 = vmatprep.subr.bf16.mxu0 0
    %3579 = vmatpush1.bf16.msra.mxu0 0
    %3580 = vmatprep.subr.bf16.mxu0 0
    %3581 = vmatpush1.bf16.msra.mxu0 0
    %3582 = vmatprep.subr.bf16.mxu0 0
    %3583 = vmatpush1.bf16.msra.mxu0 0
    %3584 = vmatprep.subr.bf16.mxu0 0
    %3585 = vmatpush1.bf16.msra.mxu0 0
    %3586 = vmatprep.subr.bf16.mxu0 0
    %3587 = vmatpush1.bf16.msra.mxu0 0
    %3588 = vmatprep.subr.bf16.mxu0 0
    %3589 = vmatpush1.bf16.msra.mxu0 0
    %3590 = vmatprep.subr.bf16.mxu0 0
    %3591 = vmatpush1.bf16.msra.mxu0 0
    %3592 = vmatprep.subr.bf16.mxu0 0
    %3593 = vmatpush1.bf16.msra.mxu0 0
    %3594 = vmatprep.mubr.bf16.mxu0 0
    %3595 = vmatmul.mubr.bf16.gmra.mrb[0].mxu0 %v3268
    %v3596 = vpop.f32.mrb[0].mxu0
    %v3597 = vadd.f32 %v3512, %v3596
    %v3598 = vpop.f32.mrb[0].mxu0
    %v3599 = vpop.f32.mrb[0].mxu0
    %v3600 = vpop.f32.mrb[0].mxu0
    %3601 = vdwg.mxu0
    %v3603 = vsel %vm2386, %v3375, 0
    %v3606 = vsel %vm2386, %v3486, 0
    %3608 = vmatprep.subr.mxu0 0.0
    %3609 = vmatpush1.xpose.msra.mxu0 %v3606
    %3610 = vmatprep.subr.mxu0 0.0
    %3611 = vmatpush1.xpose.msra.mxu0 0.0
    %3612 = vmatprep.subr.mxu0 0.0
    %3613 = vmatpush1.xpose.msra.mxu0 0.0
    %3614 = vmatprep.subr.mxu0 0.0
    %3615 = vmatpush1.xpose.msra.mxu0 0.0
    %3616 = vmatprep.subr.mxu0 0.0
    %3617 = vmatpush1.xpose.msra.mxu0 0.0
    %3618 = vmatprep.subr.mxu0 0.0
    %3619 = vmatpush1.xpose.msra.mxu0 0.0
    %3620 = vmatprep.subr.mxu0 0.0
    %3621 = vmatpush1.xpose.msra.mxu0 0.0
    %3622 = vmatprep.subr.mxu0 0.0
    %3623 = vmatpush1.xpose.msra.mxu0 0.0
    %3624 = vmatprep.subr.mxu0 0.0
    %3625 = vmatpush1.xpose.msra.mxu0 0.0
    %3626 = vmatprep.subr.mxu0 0.0
    %3627 = vmatpush1.xpose.msra.mxu0 0.0
    %3628 = vmatprep.subr.mxu0 0.0
    %3629 = vmatpush1.xpose.msra.mxu0 0.0
    %3630 = vmatprep.subr.mxu0 0.0
    %3631 = vmatpush1.xpose.msra.mxu0 0.0
    %3632 = vmatprep.subr.mxu0 0.0
    %3633 = vmatpush1.xpose.msra.mxu0 0.0
    %3634 = vmatprep.subr.mxu0 0.0
    %3635 = vmatpush1.xpose.msra.mxu0 0.0
    %3636 = vmatprep.subr.mxu0 0.0
    %3637 = vmatpush1.xpose.msra.mxu0 0.0
    %3638 = vmatprep.subr.mxu0 0.0
    %3639 = vmatpush1.xpose.msra.mxu0 0.0
    %3640 = vmatprep.subr.mxu0 0.0
    %3641 = vmatpush1.xpose.msra.mxu0 0.0
    %3642 = vmatprep.subr.mxu0 0.0
    %3643 = vmatpush1.xpose.msra.mxu0 0.0
    %3644 = vmatprep.subr.mxu0 0.0
    %3645 = vmatpush1.xpose.msra.mxu0 0.0
    %3646 = vmatprep.subr.mxu0 0.0
    %3647 = vmatpush1.xpose.msra.mxu0 0.0
    %3648 = vmatprep.subr.mxu0 0.0
    %3649 = vmatpush1.xpose.msra.mxu0 0.0
    %3650 = vmatprep.subr.mxu0 0.0
    %3651 = vmatpush1.xpose.msra.mxu0 0.0
    %3652 = vmatprep.subr.mxu0 0.0
    %3653 = vmatpush1.xpose.msra.mxu0 0.0
    %3654 = vmatprep.subr.mxu0 0.0
    %3655 = vmatpush1.xpose.msra.mxu0 0.0
    %3656 = vmatprep.subr.mxu0 0.0
    %3657 = vmatpush1.xpose.msra.mxu0 0.0
    %3658 = vmatprep.subr.mxu0 0.0
    %3659 = vmatpush1.xpose.msra.mxu0 0.0
    %3660 = vmatprep.subr.mxu0 0.0
    %3661 = vmatpush1.xpose.msra.mxu0 0.0
    %3662 = vmatprep.subr.mxu0 0.0
    %3663 = vmatpush1.xpose.msra.mxu0 0.0
    %3664 = vmatprep.subr.mxu0 0.0
    %3665 = vmatpush1.xpose.msra.mxu0 0.0
    %3666 = vmatprep.subr.mxu0 0.0
    %3667 = vmatpush1.xpose.msra.mxu0 0.0
    %3668 = vmatprep.subr.mxu0 0.0
    %3669 = vmatpush1.xpose.msra.mxu0 0.0
    %3670 = vmatprep.subr.mxu0 0.0
    %3671 = vmatpush1.xpose.msra.mxu0 0.0
    %3672 = vmatprep.mubr.f32.mxu0 0.0
    %3673 = vmatmul.mubr.f32.gmra.mrb[0].mxu0 %v3603
    %v3674 = vpop.f32.mrb[0].mxu0
    %v3675 = vadd.f32 0.0, %v3674
    %v3676 = vpop.f32.mrb[0].mxu0
    %3677 = vdwg.mxu0
    %v3678 = vsel %vm2685, %v3675, -inf
    %3679 = vmax.xlane.f32.xlu0 %v3678
    %v3680 = vpop.xlane.xlu0 %3679
    %v3681 = vsub.f32 %v3675, %v3680
    %v3682 = vmul.f32 %v3681, 1.442695
    %v3683 = vpow.pop %v3682
    %v3684 = vsel %vm2685, %v3683, 0.0
    %3685 = vadd.xlane.f32.xlu0 %v3684
    %v3686 = vpop.xlane.xlu0 %3685
    %v3687 = vrcp.pop %v3686
    %v3688 = vmul.f32 %v3683, %v3687
    %v3690 = vsel %vm2685, %v3688, 0
    %3692 = vmatprep.subr.mxu0 0.0
    %3693 = vmatpush1.msra.mxu0 %v3597
    %3694 = vmatprep.subr.mxu0 0.0
    %3695 = vmatpush1.msra.mxu0 0.0
    %3696 = vmatprep.subr.mxu0 0.0
    %3697 = vmatpush1.msra.mxu0 0.0
    %3698 = vmatprep.subr.mxu0 0.0
    %3699 = vmatpush1.msra.mxu0 0.0
    %3700 = vmatprep.subr.mxu0 0.0
    %3701 = vmatpush1.msra.mxu0 0.0
    %3702 = vmatprep.subr.mxu0 0.0
    %3703 = vmatpush1.msra.mxu0 0.0
    %3704 = vmatprep.subr.mxu0 0.0
    %3705 = vmatpush1.msra.mxu0 0.0
    %3706 = vmatprep.subr.mxu0 0.0
    %3707 = vmatpush1.msra.mxu0 0.0
    %3708 = vmatprep.subr.mxu0 0.0
    %3709 = vmatpush1.msra.mxu0 0.0
    %3710 = vmatprep.subr.mxu0 0.0
    %3711 = vmatpush1.msra.mxu0 0.0
    %3712 = vmatprep.subr.mxu0 0.0
    %3713 = vmatpush1.msra.mxu0 0.0
    %3714 = vmatprep.subr.mxu0 0.0
    %3715 = vmatpush1.msra.mxu0 0.0
    %3716 = vmatprep.subr.mxu0 0.0
    %3717 = vmatpush1.msra.mxu0 0.0
    %3718 = vmatprep.subr.mxu0 0.0
    %3719 = vmatpush1.msra.mxu0 0.0
    %3720 = vmatprep.subr.mxu0 0.0
    %3721 = vmatpush1.msra.mxu0 0.0
    %3722 = vmatprep.subr.mxu0 0.0
    %3723 = vmatpush1.msra.mxu0 0.0
    %3724 = vmatprep.subr.mxu0 0.0
    %3725 = vmatpush1.msra.mxu0 0.0
    %3726 = vmatprep.subr.mxu0 0.0
    %3727 = vmatpush1.msra.mxu0 0.0
    %3728 = vmatprep.subr.mxu0 0.0
    %3729 = vmatpush1.msra.mxu0 0.0
    %3730 = vmatprep.subr.mxu0 0.0
    %3731 = vmatpush1.msra.mxu0 0.0
    %3732 = vmatprep.subr.mxu0 0.0
    %3733 = vmatpush1.msra.mxu0 0.0
    %3734 = vmatprep.subr.mxu0 0.0
    %3735 = vmatpush1.msra.mxu0 0.0
    %3736 = vmatprep.subr.mxu0 0.0
    %3737 = vmatpush1.msra.mxu0 0.0
    %3738 = vmatprep.subr.mxu0 0.0
    %3739 = vmatpush1.msra.mxu0 0.0
    %3740 = vmatprep.subr.mxu0 0.0
    %3741 = vmatpush1.msra.mxu0 0.0
    %3742 = vmatprep.subr.mxu0 0.0
    %3743 = vmatpush1.msra.mxu0 0.0
    %3744 = vmatprep.subr.mxu0 0.0
    %3745 = vmatpush1.msra.mxu0 0.0
    %3746 = vmatprep.subr.mxu0 0.0
    %3747 = vmatpush1.msra.mxu0 0.0
    %3748 = vmatprep.subr.mxu0 0.0
    %3749 = vmatpush1.msra.mxu0 0.0
    %3750 = vmatprep.subr.mxu0 0.0
    %3751 = vmatpush1.msra.mxu0 0.0
    %3752 = vmatprep.subr.mxu0 0.0
    %3753 = vmatpush1.msra.mxu0 0.0
    %3754 = vmatprep.subr.mxu0 0.0
    %3755 = vmatpush1.msra.mxu0 0.0
    %3756 = vmatprep.mubr.f32.mxu0 0.0
    %3757 = vmatmul.mubr.f32.gmra.mrb[0].mxu0 %v3690
    %v3758 = vpop.f32.mrb[0].mxu0
    %v3759 = vadd.f32 0.0, %v3758
    %v3760 = vpop.f32.mrb[0].mxu0
    %3761 = vdwg.mxu0
    %v3762 = vpack.c.bf16 %v3759, %v3759
    %v3763 = vld [vmem:[#allocation30] sm:$0xf]
    %v3764 = vld [vmem:[#allocation30 + $0x4] sm:$0xf]
    %v3765 = vld [vmem:[#allocation30 + $0x8] sm:$0xf]
    %v3766 = vld [vmem:[#allocation30 + $0xc] sm:$0xf]
    %s3767 = scalar_lea.vmem %s41, 64
    %v3768 = vld [vmem:[%s3767] sm:$0xf]
    %v3769 = vld [vmem:[%s3767 + $0x4] sm:$0xf]
    %v3770 = vld [vmem:[%s3767 + $0x8] sm:$0xf]
    %v3771 = vld [vmem:[%s3767 + $0xc] sm:$0xf]
    %v3772 = vld [vmem:[%s3767 + $0x10] sm:$0xf]
    %v3773 = vld [vmem:[%s3767 + $0x14] sm:$0xf]
    %v3774 = vld [vmem:[%s3767 + $0x18] sm:$0xf]
    %v3775 = vld [vmem:[%s3767 + $0x1c] sm:$0xf]
    %v3776 = vld [vmem:[%s3767 + $0x20] sm:$0xf]
    %v3777 = vld [vmem:[%s3767 + $0x24] sm:$0xf]
    %v3778 = vld [vmem:[%s3767 + $0x28] sm:$0xf]
    %v3779 = vld [vmem:[%s3767 + $0x2c] sm:$0xf]
    %v3780 = vld [vmem:[%s3767 + $0x30] sm:$0xf]
    %v3781 = vld [vmem:[%s3767 + $0x34] sm:$0xf]
    %v3782 = vld [vmem:[%s3767 + $0x38] sm:$0xf]
    %v3783 = vld [vmem:[%s3767 + $0x3c] sm:$0xf]
    %s3784 = scalar_lea.vmem %s43, 1
    %v3785 = vld [vmem:[%s3784] sm:$0x1]
    %v3787 = vlaneseq
    %v3788 = vshrl.u32 %v3787, 7
    %v3789 = vsub.s32 0, %v3788
    %v3790 = vrot.slane %v3785, %v3789
    %v3808 = vunpack.c.l.b16 %v3768
    %v3809 = vunpack.c.l.b16 %v3769
    %v3810 = vunpack.c.l.b16 %v3770
    %v3811 = vunpack.c.l.b16 %v3771
    %v3812 = vunpack.c.l.b16 %v3772
    %v3813 = vunpack.c.l.b16 %v3773
    %v3814 = vunpack.c.l.b16 %v3774
    %v3815 = vunpack.c.l.b16 %v3775
    %v3816 = vunpack.c.l.b16 %v3776
    %v3817 = vunpack.c.l.b16 %v3777
    %v3818 = vunpack.c.l.b16 %v3778
    %v3819 = vunpack.c.l.b16 %v3779
    %v3820 = vunpack.c.l.b16 %v3780
    %v3821 = vunpack.c.l.b16 %v3781
    %v3822 = vunpack.c.l.b16 %v3782
    %v3823 = vunpack.c.l.b16 %v3783
    %v3824 = vpack.c.b16 %v3809, %v3808
    %v3825 = vpack.c.b16 %v3811, %v3810
    %v3826 = vpack.c.b16 %v3813, %v3812
    %v3827 = vpack.c.b16 %v3815, %v3814
    %v3828 = vpack.c.b16 %v3817, %v3816
    %v3829 = vpack.c.b16 %v3819, %v3818
    %v3830 = vpack.c.b16 %v3821, %v3820
    %v3831 = vpack.c.b16 %v3823, %v3822
    %3840 = vmatprep.subr.bf16.mxu0 0
    %3841 = vmatpush1.bf16.msra.mxu0 %v3824
    %3842 = vmatprep.subr.bf16.mxu0 0
    %3843 = vmatpush1.bf16.msra.mxu0 %v3825
    %3844 = vmatprep.subr.bf16.mxu0 0
    %3845 = vmatpush1.bf16.msra.mxu0 %v3826
    %3846 = vmatprep.subr.bf16.mxu0 0
    %3847 = vmatpush1.bf16.msra.mxu0 %v3827
    %3848 = vmatprep.subr.bf16.mxu0 0
    %3849 = vmatpush1.bf16.msra.mxu0 %v3828
    %3850 = vmatprep.subr.bf16.mxu0 0
    %3851 = vmatpush1.bf16.msra.mxu0 %v3829
    %3852 = vmatprep.subr.bf16.mxu0 0
    %3853 = vmatpush1.bf16.msra.mxu0 %v3830
    %3854 = vmatprep.subr.bf16.mxu0 0
    %3855 = vmatpush1.bf16.msra.mxu0 %v3831
    %3856 = vmatprep.subr.bf16.mxu0 0
    %3857 = vmatpush1.bf16.msra.mxu0 0
    %3858 = vmatprep.subr.bf16.mxu0 0
    %3859 = vmatpush1.bf16.msra.mxu0 0
    %3860 = vmatprep.subr.bf16.mxu0 0
    %3861 = vmatpush1.bf16.msra.mxu0 0
    %3862 = vmatprep.subr.bf16.mxu0 0
    %3863 = vmatpush1.bf16.msra.mxu0 0
    %3864 = vmatprep.subr.bf16.mxu0 0
    %3865 = vmatpush1.bf16.msra.mxu0 0
    %3866 = vmatprep.subr.bf16.mxu0 0
    %3867 = vmatpush1.bf16.msra.mxu0 0
    %3868 = vmatprep.subr.bf16.mxu0 0
    %3869 = vmatpush1.bf16.msra.mxu0 0
    %3870 = vmatprep.subr.bf16.mxu0 0
    %3871 = vmatpush1.bf16.msra.mxu0 0
    %3872 = vmatprep.mubr.bf16.mxu0 0
    %3873 = vmatmul.mubr.bf16.gmra.mrb[0].mxu0 %v3268
    %v3874 = vpop.f32.mrb[0].mxu0
    %v3875 = vadd.f32 %v3790, %v3874
    %v3876 = vpop.f32.mrb[0].mxu0
    %v3877 = vpop.f32.mrb[0].mxu0
    %v3878 = vpop.f32.mrb[0].mxu0
    %3879 = vdwg.mxu0
    %s3880 = scalar_lea.vmem %s45, 64
    %v3881 = vld [vmem:[%s3880] sm:$0xf]
    %v3882 = vld [vmem:[%s3880 + $0x4] sm:$0xf]
    %v3883 = vld [vmem:[%s3880 + $0x8] sm:$0xf]
    %v3884 = vld [vmem:[%s3880 + $0xc] sm:$0xf]
    %v3885 = vld [vmem:[%s3880 + $0x10] sm:$0xf]
    %v3886 = vld [vmem:[%s3880 + $0x14] sm:$0xf]
    %v3887 = vld [vmem:[%s3880 + $0x18] sm:$0xf]
    %v3888 = vld [vmem:[%s3880 + $0x1c] sm:$0xf]
    %v3889 = vld [vmem:[%s3880 + $0x20] sm:$0xf]
    %v3890 = vld [vmem:[%s3880 + $0x24] sm:$0xf]
    %v3891 = vld [vmem:[%s3880 + $0x28] sm:$0xf]
    %v3892 = vld [vmem:[%s3880 + $0x2c] sm:$0xf]
    %v3893 = vld [vmem:[%s3880 + $0x30] sm:$0xf]
    %v3894 = vld [vmem:[%s3880 + $0x34] sm:$0xf]
    %v3895 = vld [vmem:[%s3880 + $0x38] sm:$0xf]
    %v3896 = vld [vmem:[%s3880 + $0x3c] sm:$0xf]
    %s3897 = scalar_lea.vmem %s47, 1
    %v3898 = vld [vmem:[%s3897] sm:$0x1]
    %v3900 = vlaneseq
    %v3901 = vshrl.u32 %v3900, 7
    %v3902 = vsub.s32 0, %v3901
    %v3903 = vrot.slane %v3898, %v3902
    %v3921 = vunpack.c.l.b16 %v3881
    %v3922 = vunpack.c.l.b16 %v3882
    %v3923 = vunpack.c.l.b16 %v3883
    %v3924 = vunpack.c.l.b16 %v3884
    %v3925 = vunpack.c.l.b16 %v3885
    %v3926 = vunpack.c.l.b16 %v3886
    %v3927 = vunpack.c.l.b16 %v3887
    %v3928 = vunpack.c.l.b16 %v3888
    %v3929 = vunpack.c.l.b16 %v3889
    %v3930 = vunpack.c.l.b16 %v3890
    %v3931 = vunpack.c.l.b16 %v3891
    %v3932 = vunpack.c.l.b16 %v3892
    %v3933 = vunpack.c.l.b16 %v3893
    %v3934 = vunpack.c.l.b16 %v3894
    %v3935 = vunpack.c.l.b16 %v3895
    %v3936 = vunpack.c.l.b16 %v3896
    %v3937 = vpack.c.b16 %v3922, %v3921
    %v3938 = vpack.c.b16 %v3924, %v3923
    %v3939 = vpack.c.b16 %v3926, %v3925
    %v3940 = vpack.c.b16 %v3928, %v3927
    %v3941 = vpack.c.b16 %v3930, %v3929
    %v3942 = vpack.c.b16 %v3932, %v3931
    %v3943 = vpack.c.b16 %v3934, %v3933
    %v3944 = vpack.c.b16 %v3936, %v3935
    %3953 = vmatprep.subr.bf16.mxu0 0
    %3954 = vmatpush1.bf16.msra.mxu0 %v3937
    %3955 = vmatprep.subr.bf16.mxu0 0
    %3956 = vmatpush1.bf16.msra.mxu0 %v3938
    %3957 = vmatprep.subr.bf16.mxu0 0
    %3958 = vmatpush1.bf16.msra.mxu0 %v3939
    %3959 = vmatprep.subr.bf16.mxu0 0
    %3960 = vmatpush1.bf16.msra.mxu0 %v3940
    %3961 = vmatprep.subr.bf16.mxu0 0
    %3962 = vmatpush1.bf16.msra.mxu0 %v3941
    %3963 = vmatprep.subr.bf16.mxu0 0
    %3964 = vmatpush1.bf16.msra.mxu0 %v3942
    %3965 = vmatprep.subr.bf16.mxu0 0
    %3966 = vmatpush1.bf16.msra.mxu0 %v3943
    %3967 = vmatprep.subr.bf16.mxu0 0
    %3968 = vmatpush1.bf16.msra.mxu0 %v3944
    %3969 = vmatprep.subr.bf16.mxu0 0
    %3970 = vmatpush1.bf16.msra.mxu0 0
    %3971 = vmatprep.subr.bf16.mxu0 0
    %3972 = vmatpush1.bf16.msra.mxu0 0
    %3973 = vmatprep.subr.bf16.mxu0 0
    %3974 = vmatpush1.bf16.msra.mxu0 0
    %3975 = vmatprep.subr.bf16.mxu0 0
    %3976 = vmatpush1.bf16.msra.mxu0 0
    %3977 = vmatprep.subr.bf16.mxu0 0
    %3978 = vmatpush1.bf16.msra.mxu0 0
    %3979 = vmatprep.subr.bf16.mxu0 0
    %3980 = vmatpush1.bf16.msra.mxu0 0
    %3981 = vmatprep.subr.bf16.mxu0 0
    %3982 = vmatpush1.bf16.msra.mxu0 0
    %3983 = vmatprep.subr.bf16.mxu0 0
    %3984 = vmatpush1.bf16.msra.mxu0 0
    %3985 = vmatprep.mubr.bf16.mxu0 0
    %3986 = vmatmul.mubr.bf16.gmra.mrb[0].mxu0 %v3268
    %v3987 = vpop.f32.mrb[0].mxu0
    %v3988 = vadd.f32 %v3903, %v3987
    %v3989 = vpop.f32.mrb[0].mxu0
    %v3990 = vpop.f32.mrb[0].mxu0
    %v3991 = vpop.f32.mrb[0].mxu0
    %3992 = vdwg.mxu0
    %s3993 = scalar_lea.vmem %s49, 64
    %v3994 = vld [vmem:[%s3993] sm:$0xf]
    %v3995 = vld [vmem:[%s3993 + $0x4] sm:$0xf]
    %v3996 = vld [vmem:[%s3993 + $0x8] sm:$0xf]
    %v3997 = vld [vmem:[%s3993 + $0xc] sm:$0xf]
    %v3998 = vld [vmem:[%s3993 + $0x10] sm:$0xf]
    %v3999 = vld [vmem:[%s3993 + $0x14] sm:$0xf]
    %v4000 = vld [vmem:[%s3993 + $0x18] sm:$0xf]
    %v4001 = vld [vmem:[%s3993 + $0x1c] sm:$0xf]
    %v4002 = vld [vmem:[%s3993 + $0x20] sm:$0xf]
    %v4003 = vld [vmem:[%s3993 + $0x24] sm:$0xf]
    %v4004 = vld [vmem:[%s3993 + $0x28] sm:$0xf]
    %v4005 = vld [vmem:[%s3993 + $0x2c] sm:$0xf]
    %v4006 = vld [vmem:[%s3993 + $0x30] sm:$0xf]
    %v4007 = vld [vmem:[%s3993 + $0x34] sm:$0xf]
    %v4008 = vld [vmem:[%s3993 + $0x38] sm:$0xf]
    %v4009 = vld [vmem:[%s3993 + $0x3c] sm:$0xf]
    %s4010 = scalar_lea.vmem [#allocation28], 1
    %v4011 = vld [vmem:[%s4010] sm:$0x1]
    %v4013 = vlaneseq
    %v4014 = vshrl.u32 %v4013, 7
    %v4015 = vsub.s32 0, %v4014
    %v4016 = vrot.slane %v4011, %v4015
    %v4034 = vunpack.c.l.b16 %v3994
    %v4035 = vunpack.c.l.b16 %v3995
    %v4036 = vunpack.c.l.b16 %v3996
    %v4037 = vunpack.c.l.b16 %v3997
    %v4038 = vunpack.c.l.b16 %v3998
    %v4039 = vunpack.c.l.b16 %v3999
    %v4040 = vunpack.c.l.b16 %v4000
    %v4041 = vunpack.c.l.b16 %v4001
    %v4042 = vunpack.c.l.b16 %v4002
    %v4043 = vunpack.c.l.b16 %v4003
    %v4044 = vunpack.c.l.b16 %v4004
    %v4045 = vunpack.c.l.b16 %v4005
    %v4046 = vunpack.c.l.b16 %v4006
    %v4047 = vunpack.c.l.b16 %v4007
    %v4048 = vunpack.c.l.b16 %v4008
    %v4049 = vunpack.c.l.b16 %v4009
    %v4050 = vpack.c.b16 %v4035, %v4034
    %v4051 = vpack.c.b16 %v4037, %v4036
    %v4052 = vpack.c.b16 %v4039, %v4038
    %v4053 = vpack.c.b16 %v4041, %v4040
    %v4054 = vpack.c.b16 %v4043, %v4042
    %v4055 = vpack.c.b16 %v4045, %v4044
    %v4056 = vpack.c.b16 %v4047, %v4046
    %v4057 = vpack.c.b16 %v4049, %v4048
    %4066 = vmatprep.subr.bf16.mxu0 0
    %4067 = vmatpush1.bf16.msra.mxu0 %v4050
    %4068 = vmatprep.subr.bf16.mxu0 0
    %4069 = vmatpush1.bf16.msra.mxu0 %v4051
    %4070 = vmatprep.subr.bf16.mxu0 0
    %4071 = vmatpush1.bf16.msra.mxu0 %v4052
    %4072 = vmatprep.subr.bf16.mxu0 0
    %4073 = vmatpush1.bf16.msra.mxu0 %v4053
    %4074 = vmatprep.subr.bf16.mxu0 0
    %4075 = vmatpush1.bf16.msra.mxu0 %v4054
    %4076 = vmatprep.subr.bf16.mxu0 0
    %4077 = vmatpush1.bf16.msra.mxu0 %v4055
    %4078 = vmatprep.subr.bf16.mxu0 0
    %4079 = vmatpush1.bf16.msra.mxu0 %v4056
    %4080 = vmatprep.subr.bf16.mxu0 0
    %4081 = vmatpush1.bf16.msra.mxu0 %v4057
    %4082 = vmatprep.subr.bf16.mxu0 0
    %4083 = vmatpush1.bf16.msra.mxu0 0
    %4084 = vmatprep.subr.bf16.mxu0 0
    %4085 = vmatpush1.bf16.msra.mxu0 0
    %4086 = vmatprep.subr.bf16.mxu0 0
    %4087 = vmatpush1.bf16.msra.mxu0 0
    %4088 = vmatprep.subr.bf16.mxu0 0
    %4089 = vmatpush1.bf16.msra.mxu0 0
    %4090 = vmatprep.subr.bf16.mxu0 0
    %4091 = vmatpush1.bf16.msra.mxu0 0
    %4092 = vmatprep.subr.bf16.mxu0 0
    %4093 = vmatpush1.bf16.msra.mxu0 0
    %4094 = vmatprep.subr.bf16.mxu0 0
    %4095 = vmatpush1.bf16.msra.mxu0 0
    %4096 = vmatprep.subr.bf16.mxu0 0
    %4097 = vmatpush1.bf16.msra.mxu0 0
    %4098 = vmatprep.mubr.bf16.mxu0 0
    %4099 = vmatmul.mubr.bf16.gmra.mrb[0].mxu0 %v3268
    %v4100 = vpop.f32.mrb[0].mxu0
    %v4101 = vadd.f32 %v4016, %v4100
    %v4102 = vpop.f32.mrb[0].mxu0
    %v4103 = vpop.f32.mrb[0].mxu0
    %v4104 = vpop.f32.mrb[0].mxu0
    %4105 = vdwg.mxu0
    %v4107 = vsel %vm2386, %v3875, 0
    %v4110 = vsel %vm2386, %v3988, 0
    %4112 = vmatprep.subr.mxu0 0.0
    %4113 = vmatpush1.xpose.msra.mxu0 %v4110
    %4114 = vmatprep.subr.mxu0 0.0
    %4115 = vmatpush1.xpose.msra.mxu0 0.0
    %4116 = vmatprep.subr.mxu0 0.0
    %4117 = vmatpush1.xpose.msra.mxu0 0.0
    %4118 = vmatprep.subr.mxu0 0.0
    %4119 = vmatpush1.xpose.msra.mxu0 0.0
    %4120 = vmatprep.subr.mxu0 0.0
    %4121 = vmatpush1.xpose.msra.mxu0 0.0
    %4122 = vmatprep.subr.mxu0 0.0
    %4123 = vmatpush1.xpose.msra.mxu0 0.0
    %4124 = vmatprep.subr.mxu0 0.0
    %4125 = vmatpush1.xpose.msra.mxu0 0.0
    %4126 = vmatprep.subr.mxu0 0.0
    %4127 = vmatpush1.xpose.msra.mxu0 0.0
    %4128 = vmatprep.subr.mxu0 0.0
    %4129 = vmatpush1.xpose.msra.mxu0 0.0
    %4130 = vmatprep.subr.mxu0 0.0
    %4131 = vmatpush1.xpose.msra.mxu0 0.0
    %4132 = vmatprep.subr.mxu0 0.0
    %4133 = vmatpush1.xpose.msra.mxu0 0.0
    %4134 = vmatprep.subr.mxu0 0.0
    %4135 = vmatpush1.xpose.msra.mxu0 0.0
    %4136 = vmatprep.subr.mxu0 0.0
    %4137 = vmatpush1.xpose.msra.mxu0 0.0
    %4138 = vmatprep.subr.mxu0 0.0
    %4139 = vmatpush1.xpose.msra.mxu0 0.0
    %4140 = vmatprep.subr.mxu0 0.0
    %4141 = vmatpush1.xpose.msra.mxu0 0.0
    %4142 = vmatprep.subr.mxu0 0.0
    %4143 = vmatpush1.xpose.msra.mxu0 0.0
    %4144 = vmatprep.subr.mxu0 0.0
    %4145 = vmatpush1.xpose.msra.mxu0 0.0
    %4146 = vmatprep.subr.mxu0 0.0
    %4147 = vmatpush1.xpose.msra.mxu0 0.0
    %4148 = vmatprep.subr.mxu0 0.0
    %4149 = vmatpush1.xpose.msra.mxu0 0.0
    %4150 = vmatprep.subr.mxu0 0.0
    %4151 = vmatpush1.xpose.msra.mxu0 0.0
    %4152 = vmatprep.subr.mxu0 0.0
    %4153 = vmatpush1.xpose.msra.mxu0 0.0
    %4154 = vmatprep.subr.mxu0 0.0
    %4155 = vmatpush1.xpose.msra.mxu0 0.0
    %4156 = vmatprep.subr.mxu0 0.0
    %4157 = vmatpush1.xpose.msra.mxu0 0.0
    %4158 = vmatprep.subr.mxu0 0.0
    %4159 = vmatpush1.xpose.msra.mxu0 0.0
    %4160 = vmatprep.subr.mxu0 0.0
    %4161 = vmatpush1.xpose.msra.mxu0 0.0
    %4162 = vmatprep.subr.mxu0 0.0
    %4163 = vmatpush1.xpose.msra.mxu0 0.0
    %4164 = vmatprep.subr.mxu0 0.0
    %4165 = vmatpush1.xpose.msra.mxu0 0.0
    %4166 = vmatprep.subr.mxu0 0.0
    %4167 = vmatpush1.xpose.msra.mxu0 0.0
    %4168 = vmatprep.subr.mxu0 0.0
    %4169 = vmatpush1.xpose.msra.mxu0 0.0
    %4170 = vmatprep.subr.mxu0 0.0
    %4171 = vmatpush1.xpose.msra.mxu0 0.0
    %4172 = vmatprep.subr.mxu0 0.0
    %4173 = vmatpush1.xpose.msra.mxu0 0.0
    %4174 = vmatprep.subr.mxu0 0.0
    %4175 = vmatpush1.xpose.msra.mxu0 0.0
    %4176 = vmatprep.mubr.f32.mxu0 0.0
    %4177 = vmatmul.mubr.f32.gmra.mrb[0].mxu0 %v4107
    %v4178 = vpop.f32.mrb[0].mxu0
    %v4179 = vadd.f32 0.0, %v4178
    %v4180 = vpop.f32.mrb[0].mxu0
    %4181 = vdwg.mxu0
    %v4182 = vsel %vm2685, %v4179, -inf
    %4183 = vmax.xlane.f32.xlu0 %v4182
    %v4184 = vpop.xlane.xlu0 %4183
    %v4185 = vsub.f32 %v4179, %v4184
    %v4186 = vmul.f32 %v4185, 1.442695
    %v4187 = vpow.pop %v4186
    %v4188 = vsel %vm2685, %v4187, 0.0
    %4189 = vadd.xlane.f32.xlu0 %v4188
    %v4190 = vpop.xlane.xlu0 %4189
    %v4191 = vrcp.pop %v4190
    %v4192 = vmul.f32 %v4187, %v4191
    %v4194 = vsel %vm2685, %v4192, 0
    %4196 = vmatprep.subr.mxu0 0.0
    %4197 = vmatpush1.msra.mxu0 %v4101
    %4198 = vmatprep.subr.mxu0 0.0
    %4199 = vmatpush1.msra.mxu0 0.0
    %4200 = vmatprep.subr.mxu0 0.0
    %4201 = vmatpush1.msra.mxu0 0.0
    %4202 = vmatprep.subr.mxu0 0.0
    %4203 = vmatpush1.msra.mxu0 0.0
    %4204 = vmatprep.subr.mxu0 0.0
    %4205 = vmatpush1.msra.mxu0 0.0
    %4206 = vmatprep.subr.mxu0 0.0
    %4207 = vmatpush1.msra.mxu0 0.0
    %4208 = vmatprep.subr.mxu0 0.0
    %4209 = vmatpush1.msra.mxu0 0.0
    %4210 = vmatprep.subr.mxu0 0.0
    %4211 = vmatpush1.msra.mxu0 0.0
    %4212 = vmatprep.subr.mxu0 0.0
    %4213 = vmatpush1.msra.mxu0 0.0
    %4214 = vmatprep.subr.mxu0 0.0
    %4215 = vmatpush1.msra.mxu0 0.0
    %4216 = vmatprep.subr.mxu0 0.0
    %4217 = vmatpush1.msra.mxu0 0.0
    %4218 = vmatprep.subr.mxu0 0.0
    %4219 = vmatpush1.msra.mxu0 0.0
    %4220 = vmatprep.subr.mxu0 0.0
    %4221 = vmatpush1.msra.mxu0 0.0
    %4222 = vmatprep.subr.mxu0 0.0
    %4223 = vmatpush1.msra.mxu0 0.0
    %4224 = vmatprep.subr.mxu0 0.0
    %4225 = vmatpush1.msra.mxu0 0.0
    %4226 = vmatprep.subr.mxu0 0.0
    %4227 = vmatpush1.msra.mxu0 0.0
    %4228 = vmatprep.subr.mxu0 0.0
    %4229 = vmatpush1.msra.mxu0 0.0
    %4230 = vmatprep.subr.mxu0 0.0
    %4231 = vmatpush1.msra.mxu0 0.0
    %4232 = vmatprep.subr.mxu0 0.0
    %4233 = vmatpush1.msra.mxu0 0.0
    %4234 = vmatprep.subr.mxu0 0.0
    %4235 = vmatpush1.msra.mxu0 0.0
    %4236 = vmatprep.subr.mxu0 0.0
    %4237 = vmatpush1.msra.mxu0 0.0
    %4238 = vmatprep.subr.mxu0 0.0
    %4239 = vmatpush1.msra.mxu0 0.0
    %4240 = vmatprep.subr.mxu0 0.0
    %4241 = vmatpush1.msra.mxu0 0.0
    %4242 = vmatprep.subr.mxu0 0.0
    %4243 = vmatpush1.msra.mxu0 0.0
    %4244 = vmatprep.subr.mxu0 0.0
    %4245 = vmatpush1.msra.mxu0 0.0
    %4246 = vmatprep.subr.mxu0 0.0
    %4247 = vmatpush1.msra.mxu0 0.0
    %4248 = vmatprep.subr.mxu0 0.0
    %4249 = vmatpush1.msra.mxu0 0.0
    %4250 = vmatprep.subr.mxu0 0.0
    %4251 = vmatpush1.msra.mxu0 0.0
    %4252 = vmatprep.subr.mxu0 0.0
    %4253 = vmatpush1.msra.mxu0 0.0
    %4254 = vmatprep.subr.mxu0 0.0
    %4255 = vmatpush1.msra.mxu0 0.0
    %4256 = vmatprep.subr.mxu0 0.0
    %4257 = vmatpush1.msra.mxu0 0.0
    %4258 = vmatprep.subr.mxu0 0.0
    %4259 = vmatpush1.msra.mxu0 0.0
    %4260 = vmatprep.mubr.f32.mxu0 0.0
    %4261 = vmatmul.mubr.f32.gmra.mrb[0].mxu0 %v4194
    %v4262 = vpop.f32.mrb[0].mxu0
    %v4263 = vadd.f32 0.0, %v4262
    %v4264 = vpop.f32.mrb[0].mxu0
    %4265 = vdwg.mxu0
    %v4266 = vpack.c.bf16 %v4263, %v4263
    %s4267 = scalar_lea.vmem [#allocation30], 16
    %v4268 = vld [vmem:[%s4267] sm:$0xf]
    %v4269 = vld [vmem:[%s4267 + $0x4] sm:$0xf]
    %v4270 = vld [vmem:[%s4267 + $0x8] sm:$0xf]
    %v4271 = vld [vmem:[%s4267 + $0xc] sm:$0xf]
    %v4276 = vunpack.c.l.b16 %v4268
    %v4277 = vunpack.c.l.b16 %v4269
    %v4278 = vunpack.c.l.b16 %v4270
    %v4279 = vunpack.c.l.b16 %v4271
    %v4280 = vpack.c.b16 %v4277, %v4276
    %v4281 = vpack.c.b16 %v4279, %v4278
    %v4285 = vsel %vm2386, %v4266, 0
    %4287 = vmatprep.subr.bf16.mxu0 0
    %4288 = vmatpush1.bf16.msra.mxu0 %v4280
    %4289 = vmatprep.subr.bf16.mxu0 0
    %4290 = vmatpush1.bf16.msra.mxu0 %v4281
    %4291 = vmatprep.subr.bf16.mxu0 0
    %4292 = vmatpush1.bf16.msra.mxu0 0
    %4293 = vmatprep.subr.bf16.mxu0 0
    %4294 = vmatpush1.bf16.msra.mxu0 0
    %4295 = vmatprep.subr.bf16.mxu0 0
    %4296 = vmatpush1.bf16.msra.mxu0 0
    %4297 = vmatprep.subr.bf16.mxu0 0
    %4298 = vmatpush1.bf16.msra.mxu0 0
    %4299 = vmatprep.subr.bf16.mxu0 0
    %4300 = vmatpush1.bf16.msra.mxu0 0
    %4301 = vmatprep.subr.bf16.mxu0 0
    %4302 = vmatpush1.bf16.msra.mxu0 0
    %4303 = vmatprep.subr.bf16.mxu0 0
    %4304 = vmatpush1.bf16.msra.mxu0 0
    %4305 = vmatprep.subr.bf16.mxu0 0
    %4306 = vmatpush1.bf16.msra.mxu0 0
    %4307 = vmatprep.subr.bf16.mxu0 0
    %4308 = vmatpush1.bf16.msra.mxu0 0
    %4309 = vmatprep.subr.bf16.mxu0 0
    %4310 = vmatpush1.bf16.msra.mxu0 0
    %4311 = vmatprep.subr.bf16.mxu0 0
    %4312 = vmatpush1.bf16.msra.mxu0 0
    %4313 = vmatprep.subr.bf16.mxu0 0
    %4314 = vmatpush1.bf16.msra.mxu0 0
    %4315 = vmatprep.subr.bf16.mxu0 0
    %4316 = vmatpush1.bf16.msra.mxu0 0
    %4317 = vmatprep.subr.bf16.mxu0 0
    %4318 = vmatpush1.bf16.msra.mxu0 0
    %4319 = vmatprep.mubr.bf16.mxu0 0
    %4320 = vmatmul.mubr.bf16.gmra.mrb[0].mxu0 %v4285
    %v4321 = vpop.f32.mrb[0].mxu0
    %v4322 = vadd.f32 0.0, %v4321
    %v4323 = vpop.f32.mrb[0].mxu0
    %v4324 = vpop.f32.mrb[0].mxu0
    %v4325 = vpop.f32.mrb[0].mxu0
    %4326 = vdwg.mxu0
    %v4331 = vunpack.c.l.b16 %v3763
    %v4332 = vunpack.c.l.b16 %v3764
    %v4333 = vunpack.c.l.b16 %v3765
    %v4334 = vunpack.c.l.b16 %v3766
    %v4335 = vpack.c.b16 %v4332, %v4331
    %v4336 = vpack.c.b16 %v4334, %v4333
    %v4340 = vsel %vm2386, %v3762, 0
    %4342 = vmatprep.subr.bf16.mxu0 0
    %4343 = vmatpush1.bf16.msra.mxu0 %v4335
    %4344 = vmatprep.subr.bf16.mxu0 0
    %4345 = vmatpush1.bf16.msra.mxu0 %v4336
    %4346 = vmatprep.subr.bf16.mxu0 0
    %4347 = vmatpush1.bf16.msra.mxu0 0
    %4348 = vmatprep.subr.bf16.mxu0 0
    %4349 = vmatpush1.bf16.msra.mxu0 0
    %4350 = vmatprep.subr.bf16.mxu0 0
    %4351 = vmatpush1.bf16.msra.mxu0 0
    %4352 = vmatprep.subr.bf16.mxu0 0
    %4353 = vmatpush1.bf16.msra.mxu0 0
    %4354 = vmatprep.subr.bf16.mxu0 0
    %4355 = vmatpush1.bf16.msra.mxu0 0
    %4356 = vmatprep.subr.bf16.mxu0 0
    %4357 = vmatpush1.bf16.msra.mxu0 0
    %4358 = vmatprep.subr.bf16.mxu0 0
    %4359 = vmatpush1.bf16.msra.mxu0 0
    %4360 = vmatprep.subr.bf16.mxu0 0
    %4361 = vmatpush1.bf16.msra.mxu0 0
    %4362 = vmatprep.subr.bf16.mxu0 0
    %4363 = vmatpush1.bf16.msra.mxu0 0
    %4364 = vmatprep.subr.bf16.mxu0 0
    %4365 = vmatpush1.bf16.msra.mxu0 0
    %4366 = vmatprep.subr.bf16.mxu0 0
    %4367 = vmatpush1.bf16.msra.mxu0 0
    %4368 = vmatprep.subr.bf16.mxu0 0
    %4369 = vmatpush1.bf16.msra.mxu0 0
    %4370 = vmatprep.subr.bf16.mxu0 0
    %4371 = vmatpush1.bf16.msra.mxu0 0
    %4372 = vmatprep.subr.bf16.mxu0 0
    %4373 = vmatpush1.bf16.msra.mxu0 0
    %4374 = vmatprep.mubr.bf16.mxu0 0
    %4375 = vmatmul.mubr.bf16.gmra.mrb[0].mxu0 %v4340
    %v4376 = vpop.f32.mrb[0].mxu0
    %v4377 = vadd.f32 %v4322, %v4376
    %v4378 = vpop.f32.mrb[0].mxu0
    %v4379 = vpop.f32.mrb[0].mxu0
    %v4380 = vpop.f32.mrb[0].mxu0
    %4381 = vdwg.mxu0
    %s4382 = scalar_lea.vmem %s41, 128
    %v4383 = vld [vmem:[%s4382] sm:$0xf]
    %v4384 = vld [vmem:[%s4382 + $0x4] sm:$0xf]
    %v4385 = vld [vmem:[%s4382 + $0x8] sm:$0xf]
    %v4386 = vld [vmem:[%s4382 + $0xc] sm:$0xf]
    %v4387 = vld [vmem:[%s4382 + $0x10] sm:$0xf]
    %v4388 = vld [vmem:[%s4382 + $0x14] sm:$0xf]
    %v4389 = vld [vmem:[%s4382 + $0x18] sm:$0xf]
    %v4390 = vld [vmem:[%s4382 + $0x1c] sm:$0xf]
    %v4391 = vld [vmem:[%s4382 + $0x20] sm:$0xf]
    %v4392 = vld [vmem:[%s4382 + $0x24] sm:$0xf]
    %v4393 = vld [vmem:[%s4382 + $0x28] sm:$0xf]
    %v4394 = vld [vmem:[%s4382 + $0x2c] sm:$0xf]
    %v4395 = vld [vmem:[%s4382 + $0x30] sm:$0xf]
    %v4396 = vld [vmem:[%s4382 + $0x34] sm:$0xf]
    %v4397 = vld [vmem:[%s4382 + $0x38] sm:$0xf]
    %v4398 = vld [vmem:[%s4382 + $0x3c] sm:$0xf]
    %s4399 = scalar_lea.vmem %s43, 2
    %v4400 = vld [vmem:[%s4399] sm:$0x1]
    %v4402 = vlaneseq
    %v4403 = vshrl.u32 %v4402, 7
    %v4404 = vsub.s32 0, %v4403
    %v4405 = vrot.slane %v4400, %v4404
    %v4423 = vunpack.c.l.b16 %v4383
    %v4424 = vunpack.c.l.b16 %v4384
    %v4425 = vunpack.c.l.b16 %v4385
    %v4426 = vunpack.c.l.b16 %v4386
    %v4427 = vunpack.c.l.b16 %v4387
    %v4428 = vunpack.c.l.b16 %v4388
    %v4429 = vunpack.c.l.b16 %v4389
    %v4430 = vunpack.c.l.b16 %v4390
    %v4431 = vunpack.c.l.b16 %v4391
    %v4432 = vunpack.c.l.b16 %v4392
    %v4433 = vunpack.c.l.b16 %v4393
    %v4434 = vunpack.c.l.b16 %v4394
    %v4435 = vunpack.c.l.b16 %v4395
    %v4436 = vunpack.c.l.b16 %v4396
    %v4437 = vunpack.c.l.b16 %v4397
    %v4438 = vunpack.c.l.b16 %v4398
    %v4439 = vpack.c.b16 %v4424, %v4423
    %v4440 = vpack.c.b16 %v4426, %v4425
    %v4441 = vpack.c.b16 %v4428, %v4427
    %v4442 = vpack.c.b16 %v4430, %v4429
    %v4443 = vpack.c.b16 %v4432, %v4431
    %v4444 = vpack.c.b16 %v4434, %v4433
    %v4445 = vpack.c.b16 %v4436, %v4435
    %v4446 = vpack.c.b16 %v4438, %v4437
    %4455 = vmatprep.subr.bf16.mxu0 0
    %4456 = vmatpush1.bf16.msra.mxu0 %v4439
    %4457 = vmatprep.subr.bf16.mxu0 0
    %4458 = vmatpush1.bf16.msra.mxu0 %v4440
    %4459 = vmatprep.subr.bf16.mxu0 0
    %4460 = vmatpush1.bf16.msra.mxu0 %v4441
    %4461 = vmatprep.subr.bf16.mxu0 0
    %4462 = vmatpush1.bf16.msra.mxu0 %v4442
    %4463 = vmatprep.subr.bf16.mxu0 0
    %4464 = vmatpush1.bf16.msra.mxu0 %v4443
    %4465 = vmatprep.subr.bf16.mxu0 0
    %4466 = vmatpush1.bf16.msra.mxu0 %v4444
    %4467 = vmatprep.subr.bf16.mxu0 0
    %4468 = vmatpush1.bf16.msra.mxu0 %v4445
    %4469 = vmatprep.subr.bf16.mxu0 0
    %4470 = vmatpush1.bf16.msra.mxu0 %v4446
    %4471 = vmatprep.subr.bf16.mxu0 0
    %4472 = vmatpush1.bf16.msra.mxu0 0
    %4473 = vmatprep.subr.bf16.mxu0 0
    %4474 = vmatpush1.bf16.msra.mxu0 0
    %4475 = vmatprep.subr.bf16.mxu0 0
    %4476 = vmatpush1.bf16.msra.mxu0 0
    %4477 = vmatprep.subr.bf16.mxu0 0
    %4478 = vmatpush1.bf16.msra.mxu0 0
    %4479 = vmatprep.subr.bf16.mxu0 0
    %4480 = vmatpush1.bf16.msra.mxu0 0
    %4481 = vmatprep.subr.bf16.mxu0 0
    %4482 = vmatpush1.bf16.msra.mxu0 0
    %4483 = vmatprep.subr.bf16.mxu0 0
    %4484 = vmatpush1.bf16.msra.mxu0 0
    %4485 = vmatprep.subr.bf16.mxu0 0
    %4486 = vmatpush1.bf16.msra.mxu0 0
    %4487 = vmatprep.mubr.bf16.mxu0 0
    %4488 = vmatmul.mubr.bf16.gmra.mrb[0].mxu0 %v3268
    %v4489 = vpop.f32.mrb[0].mxu0
    %v4490 = vadd.f32 %v4405, %v4489
    %v4491 = vpop.f32.mrb[0].mxu0
    %v4492 = vpop.f32.mrb[0].mxu0
    %v4493 = vpop.f32.mrb[0].mxu0
    %4494 = vdwg.mxu0
    %s4495 = scalar_lea.vmem %s45, 128
    %v4496 = vld [vmem:[%s4495] sm:$0xf]
    %v4497 = vld [vmem:[%s4495 + $0x4] sm:$0xf]
    %v4498 = vld [vmem:[%s4495 + $0x8] sm:$0xf]
    %v4499 = vld [vmem:[%s4495 + $0xc] sm:$0xf]
    %v4500 = vld [vmem:[%s4495 + $0x10] sm:$0xf]
    %v4501 = vld [vmem:[%s4495 + $0x14] sm:$0xf]
    %v4502 = vld [vmem:[%s4495 + $0x18] sm:$0xf]
    %v4503 = vld [vmem:[%s4495 + $0x1c] sm:$0xf]
    %v4504 = vld [vmem:[%s4495 + $0x20] sm:$0xf]
    %v4505 = vld [vmem:[%s4495 + $0x24] sm:$0xf]
    %v4506 = vld [vmem:[%s4495 + $0x28] sm:$0xf]
    %v4507 = vld [vmem:[%s4495 + $0x2c] sm:$0xf]
    %v4508 = vld [vmem:[%s4495 + $0x30] sm:$0xf]
    %v4509 = vld [vmem:[%s4495 + $0x34] sm:$0xf]
    %v4510 = vld [vmem:[%s4495 + $0x38] sm:$0xf]
    %v4511 = vld [vmem:[%s4495 + $0x3c] sm:$0xf]
    %s4512 = scalar_lea.vmem %s47, 2
    %v4513 = vld [vmem:[%s4512] sm:$0x1]
    %v4515 = vlaneseq
    %v4516 = vshrl.u32 %v4515, 7
    %v4517 = vsub.s32 0, %v4516
    %v4518 = vrot.slane %v4513, %v4517
    %v4536 = vunpack.c.l.b16 %v4496
    %v4537 = vunpack.c.l.b16 %v4497
    %v4538 = vunpack.c.l.b16 %v4498
    %v4539 = vunpack.c.l.b16 %v4499
    %v4540 = vunpack.c.l.b16 %v4500
    %v4541 = vunpack.c.l.b16 %v4501
    %v4542 = vunpack.c.l.b16 %v4502
    %v4543 = vunpack.c.l.b16 %v4503
    %v4544 = vunpack.c.l.b16 %v4504
    %v4545 = vunpack.c.l.b16 %v4505
    %v4546 = vunpack.c.l.b16 %v4506
    %v4547 = vunpack.c.l.b16 %v4507
    %v4548 = vunpack.c.l.b16 %v4508
    %v4549 = vunpack.c.l.b16 %v4509
    %v4550 = vunpack.c.l.b16 %v4510
    %v4551 = vunpack.c.l.b16 %v4511
    %v4552 = vpack.c.b16 %v4537, %v4536
    %v4553 = vpack.c.b16 %v4539, %v4538
    %v4554 = vpack.c.b16 %v4541, %v4540
    %v4555 = vpack.c.b16 %v4543, %v4542
    %v4556 = vpack.c.b16 %v4545, %v4544
    %v4557 = vpack.c.b16 %v4547, %v4546
    %v4558 = vpack.c.b16 %v4549, %v4548
    %v4559 = vpack.c.b16 %v4551, %v4550
    %4568 = vmatprep.subr.bf16.mxu0 0
    %4569 = vmatpush1.bf16.msra.mxu0 %v4552
    %4570 = vmatprep.subr.bf16.mxu0 0
    %4571 = vmatpush1.bf16.msra.mxu0 %v4553
    %4572 = vmatprep.subr.bf16.mxu0 0
    %4573 = vmatpush1.bf16.msra.mxu0 %v4554
    %4574 = vmatprep.subr.bf16.mxu0 0
    %4575 = vmatpush1.bf16.msra.mxu0 %v4555
    %4576 = vmatprep.subr.bf16.mxu0 0
    %4577 = vmatpush1.bf16.msra.mxu0 %v4556
    %4578 = vmatprep.subr.bf16.mxu0 0
    %4579 = vmatpush1.bf16.msra.mxu0 %v4557
    %4580 = vmatprep.subr.bf16.mxu0 0
    %4581 = vmatpush1.bf16.msra.mxu0 %v4558
    %4582 = vmatprep.subr.bf16.mxu0 0
    %4583 = vmatpush1.bf16.msra.mxu0 %v4559
    %4584 = vmatprep.subr.bf16.mxu0 0
    %4585 = vmatpush1.bf16.msra.mxu0 0
    %4586 = vmatprep.subr.bf16.mxu0 0
    %4587 = vmatpush1.bf16.msra.mxu0 0
    %4588 = vmatprep.subr.bf16.mxu0 0
    %4589 = vmatpush1.bf16.msra.mxu0 0
    %4590 = vmatprep.subr.bf16.mxu0 0
    %4591 = vmatpush1.bf16.msra.mxu0 0
    %4592 = vmatprep.subr.bf16.mxu0 0
    %4593 = vmatpush1.bf16.msra.mxu0 0
    %4594 = vmatprep.subr.bf16.mxu0 0
    %4595 = vmatpush1.bf16.msra.mxu0 0
    %4596 = vmatprep.subr.bf16.mxu0 0
    %4597 = vmatpush1.bf16.msra.mxu0 0
    %4598 = vmatprep.subr.bf16.mxu0 0
    %4599 = vmatpush1.bf16.msra.mxu0 0
    %4600 = vmatprep.mubr.bf16.mxu0 0
    %4601 = vmatmul.mubr.bf16.gmra.mrb[0].mxu0 %v3268
    %v4602 = vpop.f32.mrb[0].mxu0
    %v4603 = vadd.f32 %v4518, %v4602
    %v4604 = vpop.f32.mrb[0].mxu0
    %v4605 = vpop.f32.mrb[0].mxu0
    %v4606 = vpop.f32.mrb[0].mxu0
    %4607 = vdwg.mxu0
    %s4608 = scalar_lea.vmem %s49, 128
    %v4609 = vld [vmem:[%s4608] sm:$0xf]
    %v4610 = vld [vmem:[%s4608 + $0x4] sm:$0xf]
    %v4611 = vld [vmem:[%s4608 + $0x8] sm:$0xf]
    %v4612 = vld [vmem:[%s4608 + $0xc] sm:$0xf]
    %v4613 = vld [vmem:[%s4608 + $0x10] sm:$0xf]
    %v4614 = vld [vmem:[%s4608 + $0x14] sm:$0xf]
    %v4615 = vld [vmem:[%s4608 + $0x18] sm:$0xf]
    %v4616 = vld [vmem:[%s4608 + $0x1c] sm:$0xf]
    %v4617 = vld [vmem:[%s4608 + $0x20] sm:$0xf]
    %v4618 = vld [vmem:[%s4608 + $0x24] sm:$0xf]
    %v4619 = vld [vmem:[%s4608 + $0x28] sm:$0xf]
    %v4620 = vld [vmem:[%s4608 + $0x2c] sm:$0xf]
    %v4621 = vld [vmem:[%s4608 + $0x30] sm:$0xf]
    %v4622 = vld [vmem:[%s4608 + $0x34] sm:$0xf]
    %v4623 = vld [vmem:[%s4608 + $0x38] sm:$0xf]
    %v4624 = vld [vmem:[%s4608 + $0x3c] sm:$0xf]
    %s4625 = scalar_lea.vmem [#allocation28], 2
    %v4626 = vld [vmem:[%s4625] sm:$0x1]
    %v4628 = vlaneseq
    %v4629 = vshrl.u32 %v4628, 7
    %v4630 = vsub.s32 0, %v4629
    %v4631 = vrot.slane %v4626, %v4630
    %v4649 = vunpack.c.l.b16 %v4609
    %v4650 = vunpack.c.l.b16 %v4610
    %v4651 = vunpack.c.l.b16 %v4611
    %v4652 = vunpack.c.l.b16 %v4612
    %v4653 = vunpack.c.l.b16 %v4613
    %v4654 = vunpack.c.l.b16 %v4614
    %v4655 = vunpack.c.l.b16 %v4615
    %v4656 = vunpack.c.l.b16 %v4616
    %v4657 = vunpack.c.l.b16 %v4617
    %v4658 = vunpack.c.l.b16 %v4618
    %v4659 = vunpack.c.l.b16 %v4619
    %v4660 = vunpack.c.l.b16 %v4620
    %v4661 = vunpack.c.l.b16 %v4621
    %v4662 = vunpack.c.l.b16 %v4622
    %v4663 = vunpack.c.l.b16 %v4623
    %v4664 = vunpack.c.l.b16 %v4624
    %v4665 = vpack.c.b16 %v4650, %v4649
    %v4666 = vpack.c.b16 %v4652, %v4651
    %v4667 = vpack.c.b16 %v4654, %v4653
    %v4668 = vpack.c.b16 %v4656, %v4655
    %v4669 = vpack.c.b16 %v4658, %v4657
    %v4670 = vpack.c.b16 %v4660, %v4659
    %v4671 = vpack.c.b16 %v4662, %v4661
    %v4672 = vpack.c.b16 %v4664, %v4663
    %4681 = vmatprep.subr.bf16.mxu0 0
    %4682 = vmatpush1.bf16.msra.mxu0 %v4665
    %4683 = vmatprep.subr.bf16.mxu0 0
    %4684 = vmatpush1.bf16.msra.mxu0 %v4666
    %4685 = vmatprep.subr.bf16.mxu0 0
    %4686 = vmatpush1.bf16.msra.mxu0 %v4667
    %4687 = vmatprep.subr.bf16.mxu0 0
    %4688 = vmatpush1.bf16.msra.mxu0 %v4668
    %4689 = vmatprep.subr.bf16.mxu0 0
    %4690 = vmatpush1.bf16.msra.mxu0 %v4669
    %4691 = vmatprep.subr.bf16.mxu0 0
    %4692 = vmatpush1.bf16.msra.mxu0 %v4670
    %4693 = vmatprep.subr.bf16.mxu0 0
    %4694 = vmatpush1.bf16.msra.mxu0 %v4671
    %4695 = vmatprep.subr.bf16.mxu0 0
    %4696 = vmatpush1.bf16.msra.mxu0 %v4672
    %4697 = vmatprep.subr.bf16.mxu0 0
    %4698 = vmatpush1.bf16.msra.mxu0 0
    %4699 = vmatprep.subr.bf16.mxu0 0
    %4700 = vmatpush1.bf16.msra.mxu0 0
    %4701 = vmatprep.subr.bf16.mxu0 0
    %4702 = vmatpush1.bf16.msra.mxu0 0
    %4703 = vmatprep.subr.bf16.mxu0 0
    %4704 = vmatpush1.bf16.msra.mxu0 0
    %4705 = vmatprep.subr.bf16.mxu0 0
    %4706 = vmatpush1.bf16.msra.mxu0 0
    %4707 = vmatprep.subr.bf16.mxu0 0
    %4708 = vmatpush1.bf16.msra.mxu0 0
    %4709 = vmatprep.subr.bf16.mxu0 0
    %4710 = vmatpush1.bf16.msra.mxu0 0
    %4711 = vmatprep.subr.bf16.mxu0 0
    %4712 = vmatpush1.bf16.msra.mxu0 0
    %4713 = vmatprep.mubr.bf16.mxu0 0
    %4714 = vmatmul.mubr.bf16.gmra.mrb[0].mxu0 %v3268
    %v4715 = vpop.f32.mrb[0].mxu0
    %v4716 = vadd.f32 %v4631, %v4715
    %v4717 = vpop.f32.mrb[0].mxu0
    %v4718 = vpop.f32.mrb[0].mxu0
    %v4719 = vpop.f32.mrb[0].mxu0
    %4720 = vdwg.mxu0
    %v4722 = vsel %vm2386, %v4490, 0
    %v4725 = vsel %vm2386, %v4603, 0
    %4727 = vmatprep.subr.mxu0 0.0
    %4728 = vmatpush1.xpose.msra.mxu0 %v4725
    %4729 = vmatprep.subr.mxu0 0.0
    %4730 = vmatpush1.xpose.msra.mxu0 0.0
    %4731 = vmatprep.subr.mxu0 0.0
    %4732 = vmatpush1.xpose.msra.mxu0 0.0
    %4733 = vmatprep.subr.mxu0 0.0
    %4734 = vmatpush1.xpose.msra.mxu0 0.0
    %4735 = vmatprep.subr.mxu0 0.0
    %4736 = vmatpush1.xpose.msra.mxu0 0.0
    %4737 = vmatprep.subr.mxu0 0.0
    %4738 = vmatpush1.xpose.msra.mxu0 0.0
    %4739 = vmatprep.subr.mxu0 0.0
    %4740 = vmatpush1.xpose.msra.mxu0 0.0
    %4741 = vmatprep.subr.mxu0 0.0
    %4742 = vmatpush1.xpose.msra.mxu0 0.0
    %4743 = vmatprep.subr.mxu0 0.0
    %4744 = vmatpush1.xpose.msra.mxu0 0.0
    %4745 = vmatprep.subr.mxu0 0.0
    %4746 = vmatpush1.xpose.msra.mxu0 0.0
    %4747 = vmatprep.subr.mxu0 0.0
    %4748 = vmatpush1.xpose.msra.mxu0 0.0
    %4749 = vmatprep.subr.mxu0 0.0
    %4750 = vmatpush1.xpose.msra.mxu0 0.0
    %4751 = vmatprep.subr.mxu0 0.0
    %4752 = vmatpush1.xpose.msra.mxu0 0.0
    %4753 = vmatprep.subr.mxu0 0.0
    %4754 = vmatpush1.xpose.msra.mxu0 0.0
    %4755 = vmatprep.subr.mxu0 0.0
    %4756 = vmatpush1.xpose.msra.mxu0 0.0
    %4757 = vmatprep.subr.mxu0 0.0
    %4758 = vmatpush1.xpose.msra.mxu0 0.0
    %4759 = vmatprep.subr.mxu0 0.0
    %4760 = vmatpush1.xpose.msra.mxu0 0.0
    %4761 = vmatprep.subr.mxu0 0.0
    %4762 = vmatpush1.xpose.msra.mxu0 0.0
    %4763 = vmatprep.subr.mxu0 0.0
    %4764 = vmatpush1.xpose.msra.mxu0 0.0
    %4765 = vmatprep.subr.mxu0 0.0
    %4766 = vmatpush1.xpose.msra.mxu0 0.0
    %4767 = vmatprep.subr.mxu0 0.0
    %4768 = vmatpush1.xpose.msra.mxu0 0.0
    %4769 = vmatprep.subr.mxu0 0.0
    %4770 = vmatpush1.xpose.msra.mxu0 0.0
    %4771 = vmatprep.subr.mxu0 0.0
    %4772 = vmatpush1.xpose.msra.mxu0 0.0
    %4773 = vmatprep.subr.mxu0 0.0
    %4774 = vmatpush1.xpose.msra.mxu0 0.0
    %4775 = vmatprep.subr.mxu0 0.0
    %4776 = vmatpush1.xpose.msra.mxu0 0.0
    %4777 = vmatprep.subr.mxu0 0.0
    %4778 = vmatpush1.xpose.msra.mxu0 0.0
    %4779 = vmatprep.subr.mxu0 0.0
    %4780 = vmatpush1.xpose.msra.mxu0 0.0
    %4781 = vmatprep.subr.mxu0 0.0
    %4782 = vmatpush1.xpose.msra.mxu0 0.0
    %4783 = vmatprep.subr.mxu0 0.0
    %4784 = vmatpush1.xpose.msra.mxu0 0.0
    %4785 = vmatprep.subr.mxu0 0.0
    %4786 = vmatpush1.xpose.msra.mxu0 0.0
    %4787 = vmatprep.subr.mxu0 0.0
    %4788 = vmatpush1.xpose.msra.mxu0 0.0
    %4789 = vmatprep.subr.mxu0 0.0
    %4790 = vmatpush1.xpose.msra.mxu0 0.0
    %4791 = vmatprep.mubr.f32.mxu0 0.0
    %4792 = vmatmul.mubr.f32.gmra.mrb[0].mxu0 %v4722
    %v4793 = vpop.f32.mrb[0].mxu0
    %v4794 = vadd.f32 0.0, %v4793
    %v4795 = vpop.f32.mrb[0].mxu0
    %4796 = vdwg.mxu0
    %v4797 = vsel %vm2685, %v4794, -inf
    %4798 = vmax.xlane.f32.xlu0 %v4797
    %v4799 = vpop.xlane.xlu0 %4798
    %v4800 = vsub.f32 %v4794, %v4799
    %v4801 = vmul.f32 %v4800, 1.442695
    %v4802 = vpow.pop %v4801
    %v4803 = vsel %vm2685, %v4802, 0.0
    %4804 = vadd.xlane.f32.xlu0 %v4803
    %v4805 = vpop.xlane.xlu0 %4804
    %v4806 = vrcp.pop %v4805
    %v4807 = vmul.f32 %v4802, %v4806
    %v4809 = vsel %vm2685, %v4807, 0
    %4811 = vmatprep.subr.mxu0 0.0
    %4812 = vmatpush1.msra.mxu0 %v4716
    %4813 = vmatprep.subr.mxu0 0.0
    %4814 = vmatpush1.msra.mxu0 0.0
    %4815 = vmatprep.subr.mxu0 0.0
    %4816 = vmatpush1.msra.mxu0 0.0
    %4817 = vmatprep.subr.mxu0 0.0
    %4818 = vmatpush1.msra.mxu0 0.0
    %4819 = vmatprep.subr.mxu0 0.0
    %4820 = vmatpush1.msra.mxu0 0.0
    %4821 = vmatprep.subr.mxu0 0.0
    %4822 = vmatpush1.msra.mxu0 0.0
    %4823 = vmatprep.subr.mxu0 0.0
    %4824 = vmatpush1.msra.mxu0 0.0
    %4825 = vmatprep.subr.mxu0 0.0
    %4826 = vmatpush1.msra.mxu0 0.0
    %4827 = vmatprep.subr.mxu0 0.0
    %4828 = vmatpush1.msra.mxu0 0.0
    %4829 = vmatprep.subr.mxu0 0.0
    %4830 = vmatpush1.msra.mxu0 0.0
    %4831 = vmatprep.subr.mxu0 0.0
    %4832 = vmatpush1.msra.mxu0 0.0
    %4833 = vmatprep.subr.mxu0 0.0
    %4834 = vmatpush1.msra.mxu0 0.0
    %4835 = vmatprep.subr.mxu0 0.0
    %4836 = vmatpush1.msra.mxu0 0.0
    %4837 = vmatprep.subr.mxu0 0.0
    %4838 = vmatpush1.msra.mxu0 0.0
    %4839 = vmatprep.subr.mxu0 0.0
    %4840 = vmatpush1.msra.mxu0 0.0
    %4841 = vmatprep.subr.mxu0 0.0
    %4842 = vmatpush1.msra.mxu0 0.0
    %4843 = vmatprep.subr.mxu0 0.0
    %4844 = vmatpush1.msra.mxu0 0.0
    %4845 = vmatprep.subr.mxu0 0.0
    %4846 = vmatpush1.msra.mxu0 0.0
    %4847 = vmatprep.subr.mxu0 0.0
    %4848 = vmatpush1.msra.mxu0 0.0
    %4849 = vmatprep.subr.mxu0 0.0
    %4850 = vmatpush1.msra.mxu0 0.0
    %4851 = vmatprep.subr.mxu0 0.0
    %4852 = vmatpush1.msra.mxu0 0.0
    %4853 = vmatprep.subr.mxu0 0.0
    %4854 = vmatpush1.msra.mxu0 0.0
    %4855 = vmatprep.subr.mxu0 0.0
    %4856 = vmatpush1.msra.mxu0 0.0
    %4857 = vmatprep.subr.mxu0 0.0
    %4858 = vmatpush1.msra.mxu0 0.0
    %4859 = vmatprep.subr.mxu0 0.0
    %4860 = vmatpush1.msra.mxu0 0.0
    %4861 = vmatprep.subr.mxu0 0.0
    %4862 = vmatpush1.msra.mxu0 0.0
    %4863 = vmatprep.subr.mxu0 0.0
    %4864 = vmatpush1.msra.mxu0 0.0
    %4865 = vmatprep.subr.mxu0 0.0
    %4866 = vmatpush1.msra.mxu0 0.0
    %4867 = vmatprep.subr.mxu0 0.0
    %4868 = vmatpush1.msra.mxu0 0.0
    %4869 = vmatprep.subr.mxu0 0.0
    %4870 = vmatpush1.msra.mxu0 0.0
    %4871 = vmatprep.subr.mxu0 0.0
    %4872 = vmatpush1.msra.mxu0 0.0
    %4873 = vmatprep.subr.mxu0 0.0
    %4874 = vmatpush1.msra.mxu0 0.0
    %4875 = vmatprep.mubr.f32.mxu0 0.0
    %4876 = vmatmul.mubr.f32.gmra.mrb[0].mxu0 %v4809
    %v4877 = vpop.f32.mrb[0].mxu0
    %v4878 = vadd.f32 0.0, %v4877
    %v4879 = vpop.f32.mrb[0].mxu0
    %4880 = vdwg.mxu0
    %v4881 = vpack.c.bf16 %v4878, %v4878
    %s4882 = scalar_lea.vmem [#allocation30], 32
    %v4883 = vld [vmem:[%s4882] sm:$0xf]
    %v4884 = vld [vmem:[%s4882 + $0x4] sm:$0xf]
    %v4885 = vld [vmem:[%s4882 + $0x8] sm:$0xf]
    %v4886 = vld [vmem:[%s4882 + $0xc] sm:$0xf]
    %v4891 = vunpack.c.l.b16 %v4883
    %v4892 = vunpack.c.l.b16 %v4884
    %v4893 = vunpack.c.l.b16 %v4885
    %v4894 = vunpack.c.l.b16 %v4886
    %v4895 = vpack.c.b16 %v4892, %v4891
    %v4896 = vpack.c.b16 %v4894, %v4893
    %v4900 = vsel %vm2386, %v4881, 0
    %4902 = vmatprep.subr.bf16.mxu0 0
    %4903 = vmatpush1.bf16.msra.mxu0 %v4895
    %4904 = vmatprep.subr.bf16.mxu0 0
    %4905 = vmatpush1.bf16.msra.mxu0 %v4896
    %4906 = vmatprep.subr.bf16.mxu0 0
    %4907 = vmatpush1.bf16.msra.mxu0 0
    %4908 = vmatprep.subr.bf16.mxu0 0
    %4909 = vmatpush1.bf16.msra.mxu0 0
    %4910 = vmatprep.subr.bf16.mxu0 0
    %4911 = vmatpush1.bf16.msra.mxu0 0
    %4912 = vmatprep.subr.bf16.mxu0 0
    %4913 = vmatpush1.bf16.msra.mxu0 0
    %4914 = vmatprep.subr.bf16.mxu0 0
    %4915 = vmatpush1.bf16.msra.mxu0 0
    %4916 = vmatprep.subr.bf16.mxu0 0
    %4917 = vmatpush1.bf16.msra.mxu0 0
    %4918 = vmatprep.subr.bf16.mxu0 0
    %4919 = vmatpush1.bf16.msra.mxu0 0
    %4920 = vmatprep.subr.bf16.mxu0 0
    %4921 = vmatpush1.bf16.msra.mxu0 0
    %4922 = vmatprep.subr.bf16.mxu0 0
    %4923 = vmatpush1.bf16.msra.mxu0 0
    %4924 = vmatprep.subr.bf16.mxu0 0
    %4925 = vmatpush1.bf16.msra.mxu0 0
    %4926 = vmatprep.subr.bf16.mxu0 0
    %4927 = vmatpush1.bf16.msra.mxu0 0
    %4928 = vmatprep.subr.bf16.mxu0 0
    %4929 = vmatpush1.bf16.msra.mxu0 0
    %4930 = vmatprep.subr.bf16.mxu0 0
    %4931 = vmatpush1.bf16.msra.mxu0 0
    %4932 = vmatprep.subr.bf16.mxu0 0
    %4933 = vmatpush1.bf16.msra.mxu0 0
    %4934 = vmatprep.mubr.bf16.mxu0 0
    %4935 = vmatmul.mubr.bf16.gmra.mrb[0].mxu0 %v4900
    %v4936 = vpop.f32.mrb[0].mxu0
    %v4937 = vadd.f32 0.0, %v4936
    %v4938 = vpop.f32.mrb[0].mxu0
    %v4939 = vpop.f32.mrb[0].mxu0
    %v4940 = vpop.f32.mrb[0].mxu0
    %4941 = vdwg.mxu0
    %v4942 = vadd.f32 %v4377, %v4937
    %s4943 = scalar_lea.vmem %s41, 192
    %v4944 = vld [vmem:[%s4943] sm:$0xf]
    %v4945 = vld [vmem:[%s4943 + $0x4] sm:$0xf]
    %v4946 = vld [vmem:[%s4943 + $0x8] sm:$0xf]
    %v4947 = vld [vmem:[%s4943 + $0xc] sm:$0xf]
    %v4948 = vld [vmem:[%s4943 + $0x10] sm:$0xf]
    %v4949 = vld [vmem:[%s4943 + $0x14] sm:$0xf]
    %v4950 = vld [vmem:[%s4943 + $0x18] sm:$0xf]
    %v4951 = vld [vmem:[%s4943 + $0x1c] sm:$0xf]
    %v4952 = vld [vmem:[%s4943 + $0x20] sm:$0xf]
    %v4953 = vld [vmem:[%s4943 + $0x24] sm:$0xf]
    %v4954 = vld [vmem:[%s4943 + $0x28] sm:$0xf]
    %v4955 = vld [vmem:[%s4943 + $0x2c] sm:$0xf]
    %v4956 = vld [vmem:[%s4943 + $0x30] sm:$0xf]
    %v4957 = vld [vmem:[%s4943 + $0x34] sm:$0xf]
    %v4958 = vld [vmem:[%s4943 + $0x38] sm:$0xf]
    %v4959 = vld [vmem:[%s4943 + $0x3c] sm:$0xf]
    %s4960 = scalar_lea.vmem %s43, 3
    %v4961 = vld [vmem:[%s4960] sm:$0x1]
    %v4963 = vlaneseq
    %v4964 = vshrl.u32 %v4963, 7
    %v4965 = vsub.s32 0, %v4964
    %v4966 = vrot.slane %v4961, %v4965
    %v4984 = vunpack.c.l.b16 %v4944
    %v4985 = vunpack.c.l.b16 %v4945
    %v4986 = vunpack.c.l.b16 %v4946
    %v4987 = vunpack.c.l.b16 %v4947
    %v4988 = vunpack.c.l.b16 %v4948
    %v4989 = vunpack.c.l.b16 %v4949
    %v4990 = vunpack.c.l.b16 %v4950
    %v4991 = vunpack.c.l.b16 %v4951
    %v4992 = vunpack.c.l.b16 %v4952
    %v4993 = vunpack.c.l.b16 %v4953
    %v4994 = vunpack.c.l.b16 %v4954
    %v4995 = vunpack.c.l.b16 %v4955
    %v4996 = vunpack.c.l.b16 %v4956
    %v4997 = vunpack.c.l.b16 %v4957
    %v4998 = vunpack.c.l.b16 %v4958
    %v4999 = vunpack.c.l.b16 %v4959
    %v5000 = vpack.c.b16 %v4985, %v4984
    %v5001 = vpack.c.b16 %v4987, %v4986
    %v5002 = vpack.c.b16 %v4989, %v4988
    %v5003 = vpack.c.b16 %v4991, %v4990
    %v5004 = vpack.c.b16 %v4993, %v4992
    %v5005 = vpack.c.b16 %v4995, %v4994
    %v5006 = vpack.c.b16 %v4997, %v4996
    %v5007 = vpack.c.b16 %v4999, %v4998
    %5016 = vmatprep.subr.bf16.mxu0 0
    %5017 = vmatpush1.bf16.msra.mxu0 %v5000
    %5018 = vmatprep.subr.bf16.mxu0 0
    %5019 = vmatpush1.bf16.msra.mxu0 %v5001
    %5020 = vmatprep.subr.bf16.mxu0 0
    %5021 = vmatpush1.bf16.msra.mxu0 %v5002
    %5022 = vmatprep.subr.bf16.mxu0 0
    %5023 = vmatpush1.bf16.msra.mxu0 %v5003
    %5024 = vmatprep.subr.bf16.mxu0 0
    %5025 = vmatpush1.bf16.msra.mxu0 %v5004
    %5026 = vmatprep.subr.bf16.mxu0 0
    %5027 = vmatpush1.bf16.msra.mxu0 %v5005
    %5028 = vmatprep.subr.bf16.mxu0 0
    %5029 = vmatpush1.bf16.msra.mxu0 %v5006
    %5030 = vmatprep.subr.bf16.mxu0 0
    %5031 = vmatpush1.bf16.msra.mxu0 %v5007
    %5032 = vmatprep.subr.bf16.mxu0 0
    %5033 = vmatpush1.bf16.msra.mxu0 0
    %5034 = vmatprep.subr.bf16.mxu0 0
    %5035 = vmatpush1.bf16.msra.mxu0 0
    %5036 = vmatprep.subr.bf16.mxu0 0
    %5037 = vmatpush1.bf16.msra.mxu0 0
    %5038 = vmatprep.subr.bf16.mxu0 0
    %5039 = vmatpush1.bf16.msra.mxu0 0
    %5040 = vmatprep.subr.bf16.mxu0 0
    %5041 = vmatpush1.bf16.msra.mxu0 0
    %5042 = vmatprep.subr.bf16.mxu0 0
    %5043 = vmatpush1.bf16.msra.mxu0 0
    %5044 = vmatprep.subr.bf16.mxu0 0
    %5045 = vmatpush1.bf16.msra.mxu0 0
    %5046 = vmatprep.subr.bf16.mxu0 0
    %5047 = vmatpush1.bf16.msra.mxu0 0
    %5048 = vmatprep.mubr.bf16.mxu0 0
    %5049 = vmatmul.mubr.bf16.gmra.mrb[0].mxu0 %v3268
    %v5050 = vpop.f32.mrb[0].mxu0
    %v5051 = vadd.f32 %v4966, %v5050
    %v5052 = vpop.f32.mrb[0].mxu0
    %v5053 = vpop.f32.mrb[0].mxu0
    %v5054 = vpop.f32.mrb[0].mxu0
    %5055 = vdwg.mxu0
    %s5056 = scalar_lea.vmem %s45, 192
    %v5057 = vld [vmem:[%s5056] sm:$0xf]
    %v5058 = vld [vmem:[%s5056 + $0x4] sm:$0xf]
    %v5059 = vld [vmem:[%s5056 + $0x8] sm:$0xf]
    %v5060 = vld [vmem:[%s5056 + $0xc] sm:$0xf]
    %v5061 = vld [vmem:[%s5056 + $0x10] sm:$0xf]
    %v5062 = vld [vmem:[%s5056 + $0x14] sm:$0xf]
    %v5063 = vld [vmem:[%s5056 + $0x18] sm:$0xf]
    %v5064 = vld [vmem:[%s5056 + $0x1c] sm:$0xf]
    %v5065 = vld [vmem:[%s5056 + $0x20] sm:$0xf]
    %v5066 = vld [vmem:[%s5056 + $0x24] sm:$0xf]
    %v5067 = vld [vmem:[%s5056 + $0x28] sm:$0xf]
    %v5068 = vld [vmem:[%s5056 + $0x2c] sm:$0xf]
    %v5069 = vld [vmem:[%s5056 + $0x30] sm:$0xf]
    %v5070 = vld [vmem:[%s5056 + $0x34] sm:$0xf]
    %v5071 = vld [vmem:[%s5056 + $0x38] sm:$0xf]
    %v5072 = vld [vmem:[%s5056 + $0x3c] sm:$0xf]
    %s5073 = scalar_lea.vmem %s47, 3
    %v5074 = vld [vmem:[%s5073] sm:$0x1]
    %v5076 = vlaneseq
    %v5077 = vshrl.u32 %v5076, 7
    %v5078 = vsub.s32 0, %v5077
    %v5079 = vrot.slane %v5074, %v5078
    %v5097 = vunpack.c.l.b16 %v5057
    %v5098 = vunpack.c.l.b16 %v5058
    %v5099 = vunpack.c.l.b16 %v5059
    %v5100 = vunpack.c.l.b16 %v5060
    %v5101 = vunpack.c.l.b16 %v5061
    %v5102 = vunpack.c.l.b16 %v5062
    %v5103 = vunpack.c.l.b16 %v5063
    %v5104 = vunpack.c.l.b16 %v5064
    %v5105 = vunpack.c.l.b16 %v5065
    %v5106 = vunpack.c.l.b16 %v5066
    %v5107 = vunpack.c.l.b16 %v5067
    %v5108 = vunpack.c.l.b16 %v5068
    %v5109 = vunpack.c.l.b16 %v5069
    %v5110 = vunpack.c.l.b16 %v5070
    %v5111 = vunpack.c.l.b16 %v5071
    %v5112 = vunpack.c.l.b16 %v5072
    %v5113 = vpack.c.b16 %v5098, %v5097
    %v5114 = vpack.c.b16 %v5100, %v5099
    %v5115 = vpack.c.b16 %v5102, %v5101
    %v5116 = vpack.c.b16 %v5104, %v5103
    %v5117 = vpack.c.b16 %v5106, %v5105
    %v5118 = vpack.c.b16 %v5108, %v5107
    %v5119 = vpack.c.b16 %v5110, %v5109
    %v5120 = vpack.c.b16 %v5112, %v5111
    %5129 = vmatprep.subr.bf16.mxu0 0
    %5130 = vmatpush1.bf16.msra.mxu0 %v5113
    %5131 = vmatprep.subr.bf16.mxu0 0
    %5132 = vmatpush1.bf16.msra.mxu0 %v5114
    %5133 = vmatprep.subr.bf16.mxu0 0
    %5134 = vmatpush1.bf16.msra.mxu0 %v5115
    %5135 = vmatprep.subr.bf16.mxu0 0
    %5136 = vmatpush1.bf16.msra.mxu0 %v5116
    %5137 = vmatprep.subr.bf16.mxu0 0
    %5138 = vmatpush1.bf16.msra.mxu0 %v5117
    %5139 = vmatprep.subr.bf16.mxu0 0
    %5140 = vmatpush1.bf16.msra.mxu0 %v5118
    %5141 = vmatprep.subr.bf16.mxu0 0
    %5142 = vmatpush1.bf16.msra.mxu0 %v5119
    %5143 = vmatprep.subr.bf16.mxu0 0
    %5144 = vmatpush1.bf16.msra.mxu0 %v5120
    %5145 = vmatprep.subr.bf16.mxu0 0
    %5146 = vmatpush1.bf16.msra.mxu0 0
    %5147 = vmatprep.subr.bf16.mxu0 0
    %5148 = vmatpush1.bf16.msra.mxu0 0
    %5149 = vmatprep.subr.bf16.mxu0 0
    %5150 = vmatpush1.bf16.msra.mxu0 0
    %5151 = vmatprep.subr.bf16.mxu0 0
    %5152 = vmatpush1.bf16.msra.mxu0 0
    %5153 = vmatprep.subr.bf16.mxu0 0
    %5154 = vmatpush1.bf16.msra.mxu0 0
    %5155 = vmatprep.subr.bf16.mxu0 0
    %5156 = vmatpush1.bf16.msra.mxu0 0
    %5157 = vmatprep.subr.bf16.mxu0 0
    %5158 = vmatpush1.bf16.msra.mxu0 0
    %5159 = vmatprep.subr.bf16.mxu0 0
    %5160 = vmatpush1.bf16.msra.mxu0 0
    %5161 = vmatprep.mubr.bf16.mxu0 0
    %5162 = vmatmul.mubr.bf16.gmra.mrb[0].mxu0 %v3268
    %v5163 = vpop.f32.mrb[0].mxu0
    %v5164 = vadd.f32 %v5079, %v5163
    %v5165 = vpop.f32.mrb[0].mxu0
    %v5166 = vpop.f32.mrb[0].mxu0
    %v5167 = vpop.f32.mrb[0].mxu0
    %5168 = vdwg.mxu0
    %s5169 = scalar_lea.vmem %s49, 192
    %v5170 = vld [vmem:[%s5169] sm:$0xf]
    %v5171 = vld [vmem:[%s5169 + $0x4] sm:$0xf]
    %v5172 = vld [vmem:[%s5169 + $0x8] sm:$0xf]
    %v5173 = vld [vmem:[%s5169 + $0xc] sm:$0xf]
    %v5174 = vld [vmem:[%s5169 + $0x10] sm:$0xf]
    %v5175 = vld [vmem:[%s5169 + $0x14] sm:$0xf]
    %v5176 = vld [vmem:[%s5169 + $0x18] sm:$0xf]
    %v5177 = vld [vmem:[%s5169 + $0x1c] sm:$0xf]
    %v5178 = vld [vmem:[%s5169 + $0x20] sm:$0xf]
    %v5179 = vld [vmem:[%s5169 + $0x24] sm:$0xf]
    %v5180 = vld [vmem:[%s5169 + $0x28] sm:$0xf]
    %v5181 = vld [vmem:[%s5169 + $0x2c] sm:$0xf]
    %v5182 = vld [vmem:[%s5169 + $0x30] sm:$0xf]
    %v5183 = vld [vmem:[%s5169 + $0x34] sm:$0xf]
    %v5184 = vld [vmem:[%s5169 + $0x38] sm:$0xf]
    %v5185 = vld [vmem:[%s5169 + $0x3c] sm:$0xf]
    %s5186 = scalar_lea.vmem [#allocation28], 3
    %v5187 = vld [vmem:[%s5186] sm:$0x1]
    %v5189 = vlaneseq
    %v5190 = vshrl.u32 %v5189, 7
    %v5191 = vsub.s32 0, %v5190
    %v5192 = vrot.slane %v5187, %v5191
    %v5210 = vunpack.c.l.b16 %v5170
    %v5211 = vunpack.c.l.b16 %v5171
    %v5212 = vunpack.c.l.b16 %v5172
    %v5213 = vunpack.c.l.b16 %v5173
    %v5214 = vunpack.c.l.b16 %v5174
    %v5215 = vunpack.c.l.b16 %v5175
    %v5216 = vunpack.c.l.b16 %v5176
    %v5217 = vunpack.c.l.b16 %v5177
    %v5218 = vunpack.c.l.b16 %v5178
    %v5219 = vunpack.c.l.b16 %v5179
    %v5220 = vunpack.c.l.b16 %v5180
    %v5221 = vunpack.c.l.b16 %v5181
    %v5222 = vunpack.c.l.b16 %v5182
    %v5223 = vunpack.c.l.b16 %v5183
    %v5224 = vunpack.c.l.b16 %v5184
    %v5225 = vunpack.c.l.b16 %v5185
    %v5226 = vpack.c.b16 %v5211, %v5210
    %v5227 = vpack.c.b16 %v5213, %v5212
    %v5228 = vpack.c.b16 %v5215, %v5214
    %v5229 = vpack.c.b16 %v5217, %v5216
    %v5230 = vpack.c.b16 %v5219, %v5218
    %v5231 = vpack.c.b16 %v5221, %v5220
    %v5232 = vpack.c.b16 %v5223, %v5222
    %v5233 = vpack.c.b16 %v5225, %v5224
    %5242 = vmatprep.subr.bf16.mxu0 0
    %5243 = vmatpush1.bf16.msra.mxu0 %v5226
    %5244 = vmatprep.subr.bf16.mxu0 0
    %5245 = vmatpush1.bf16.msra.mxu0 %v5227
    %5246 = vmatprep.subr.bf16.mxu0 0
    %5247 = vmatpush1.bf16.msra.mxu0 %v5228
    %5248 = vmatprep.subr.bf16.mxu0 0
    %5249 = vmatpush1.bf16.msra.mxu0 %v5229
    %5250 = vmatprep.subr.bf16.mxu0 0
    %5251 = vmatpush1.bf16.msra.mxu0 %v5230
    %5252 = vmatprep.subr.bf16.mxu0 0
    %5253 = vmatpush1.bf16.msra.mxu0 %v5231
    %5254 = vmatprep.subr.bf16.mxu0 0
    %5255 = vmatpush1.bf16.msra.mxu0 %v5232
    %5256 = vmatprep.subr.bf16.mxu0 0
    %5257 = vmatpush1.bf16.msra.mxu0 %v5233
    %5258 = vmatprep.subr.bf16.mxu0 0
    %5259 = vmatpush1.bf16.msra.mxu0 0
    %5260 = vmatprep.subr.bf16.mxu0 0
    %5261 = vmatpush1.bf16.msra.mxu0 0
    %5262 = vmatprep.subr.bf16.mxu0 0
    %5263 = vmatpush1.bf16.msra.mxu0 0
    %5264 = vmatprep.subr.bf16.mxu0 0
    %5265 = vmatpush1.bf16.msra.mxu0 0
    %5266 = vmatprep.subr.bf16.mxu0 0
    %5267 = vmatpush1.bf16.msra.mxu0 0
    %5268 = vmatprep.subr.bf16.mxu0 0
    %5269 = vmatpush1.bf16.msra.mxu0 0
    %5270 = vmatprep.subr.bf16.mxu0 0
    %5271 = vmatpush1.bf16.msra.mxu0 0
    %5272 = vmatprep.subr.bf16.mxu0 0
    %5273 = vmatpush1.bf16.msra.mxu0 0
    %5274 = vmatprep.mubr.bf16.mxu0 0
    %5275 = vmatmul.mubr.bf16.gmra.mrb[0].mxu0 %v3268
    %v5276 = vpop.f32.mrb[0].mxu0
    %v5277 = vadd.f32 %v5192, %v5276
    %v5278 = vpop.f32.mrb[0].mxu0
    %v5279 = vpop.f32.mrb[0].mxu0
    %v5280 = vpop.f32.mrb[0].mxu0
    %5281 = vdwg.mxu0
    %v5283 = vsel %vm2386, %v5051, 0
    %v5286 = vsel %vm2386, %v5164, 0
    %5288 = vmatprep.subr.mxu0 0.0
    %5289 = vmatpush1.xpose.msra.mxu0 %v5286
    %5290 = vmatprep.subr.mxu0 0.0
    %5291 = vmatpush1.xpose.msra.mxu0 0.0
    %5292 = vmatprep.subr.mxu0 0.0
    %5293 = vmatpush1.xpose.msra.mxu0 0.0
    %5294 = vmatprep.subr.mxu0 0.0
    %5295 = vmatpush1.xpose.msra.mxu0 0.0
    %5296 = vmatprep.subr.mxu0 0.0
    %5297 = vmatpush1.xpose.msra.mxu0 0.0
    %5298 = vmatprep.subr.mxu0 0.0
    %5299 = vmatpush1.xpose.msra.mxu0 0.0
    %5300 = vmatprep.subr.mxu0 0.0
    %5301 = vmatpush1.xpose.msra.mxu0 0.0
    %5302 = vmatprep.subr.mxu0 0.0
    %5303 = vmatpush1.xpose.msra.mxu0 0.0
    %5304 = vmatprep.subr.mxu0 0.0
    %5305 = vmatpush1.xpose.msra.mxu0 0.0
    %5306 = vmatprep.subr.mxu0 0.0
    %5307 = vmatpush1.xpose.msra.mxu0 0.0
    %5308 = vmatprep.subr.mxu0 0.0
    %5309 = vmatpush1.xpose.msra.mxu0 0.0
    %5310 = vmatprep.subr.mxu0 0.0
    %5311 = vmatpush1.xpose.msra.mxu0 0.0
    %5312 = vmatprep.subr.mxu0 0.0
    %5313 = vmatpush1.xpose.msra.mxu0 0.0
    %5314 = vmatprep.subr.mxu0 0.0
    %5315 = vmatpush1.xpose.msra.mxu0 0.0
    %5316 = vmatprep.subr.mxu0 0.0
    %5317 = vmatpush1.xpose.msra.mxu0 0.0
    %5318 = vmatprep.subr.mxu0 0.0
    %5319 = vmatpush1.xpose.msra.mxu0 0.0
    %5320 = vmatprep.subr.mxu0 0.0
    %5321 = vmatpush1.xpose.msra.mxu0 0.0
    %5322 = vmatprep.subr.mxu0 0.0
    %5323 = vmatpush1.xpose.msra.mxu0 0.0
    %5324 = vmatprep.subr.mxu0 0.0
    %5325 = vmatpush1.xpose.msra.mxu0 0.0
    %5326 = vmatprep.subr.mxu0 0.0
    %5327 = vmatpush1.xpose.msra.mxu0 0.0
    %5328 = vmatprep.subr.mxu0 0.0
    %5329 = vmatpush1.xpose.msra.mxu0 0.0
    %5330 = vmatprep.subr.mxu0 0.0
    %5331 = vmatpush1.xpose.msra.mxu0 0.0
    %5332 = vmatprep.subr.mxu0 0.0
    %5333 = vmatpush1.xpose.msra.mxu0 0.0
    %5334 = vmatprep.subr.mxu0 0.0
    %5335 = vmatpush1.xpose.msra.mxu0 0.0
    %5336 = vmatprep.subr.mxu0 0.0
    %5337 = vmatpush1.xpose.msra.mxu0 0.0
    %5338 = vmatprep.subr.mxu0 0.0
    %5339 = vmatpush1.xpose.msra.mxu0 0.0
    %5340 = vmatprep.subr.mxu0 0.0
    %5341 = vmatpush1.xpose.msra.mxu0 0.0
    %5342 = vmatprep.subr.mxu0 0.0
    %5343 = vmatpush1.xpose.msra.mxu0 0.0
    %5344 = vmatprep.subr.mxu0 0.0
    %5345 = vmatpush1.xpose.msra.mxu0 0.0
    %5346 = vmatprep.subr.mxu0 0.0
    %5347 = vmatpush1.xpose.msra.mxu0 0.0
    %5348 = vmatprep.subr.mxu0 0.0
    %5349 = vmatpush1.xpose.msra.mxu0 0.0
    %5350 = vmatprep.subr.mxu0 0.0
    %5351 = vmatpush1.xpose.msra.mxu0 0.0
    %5352 = vmatprep.mubr.f32.mxu0 0.0
    %5353 = vmatmul.mubr.f32.gmra.mrb[0].mxu0 %v5283
    %v5354 = vpop.f32.mrb[0].mxu0
    %v5355 = vadd.f32 0.0, %v5354
    %v5356 = vpop.f32.mrb[0].mxu0
    %5357 = vdwg.mxu0
    %v5358 = vsel %vm2685, %v5355, -inf
    %5359 = vmax.xlane.f32.xlu0 %v5358
    %v5360 = vpop.xlane.xlu0 %5359
    %v5361 = vsub.f32 %v5355, %v5360
    %v5362 = vmul.f32 %v5361, 1.442695
    %v5363 = vpow.pop %v5362
    %v5364 = vsel %vm2685, %v5363, 0.0
    %5365 = vadd.xlane.f32.xlu0 %v5364
    %v5366 = vpop.xlane.xlu0 %5365
    %v5367 = vrcp.pop %v5366
    %v5368 = vmul.f32 %v5363, %v5367
    %v5370 = vsel %vm2685, %v5368, 0
    %5372 = vmatprep.subr.mxu0 0.0
    %5373 = vmatpush1.msra.mxu0 %v5277
    %5374 = vmatprep.subr.mxu0 0.0
    %5375 = vmatpush1.msra.mxu0 0.0
    %5376 = vmatprep.subr.mxu0 0.0
    %5377 = vmatpush1.msra.mxu0 0.0
    %5378 = vmatprep.subr.mxu0 0.0
    %5379 = vmatpush1.msra.mxu0 0.0
    %5380 = vmatprep.subr.mxu0 0.0
    %5381 = vmatpush1.msra.mxu0 0.0
    %5382 = vmatprep.subr.mxu0 0.0
    %5383 = vmatpush1.msra.mxu0 0.0
    %5384 = vmatprep.subr.mxu0 0.0
    %5385 = vmatpush1.msra.mxu0 0.0
    %5386 = vmatprep.subr.mxu0 0.0
    %5387 = vmatpush1.msra.mxu0 0.0
    %5388 = vmatprep.subr.mxu0 0.0
    %5389 = vmatpush1.msra.mxu0 0.0
    %5390 = vmatprep.subr.mxu0 0.0
    %5391 = vmatpush1.msra.mxu0 0.0
    %5392 = vmatprep.subr.mxu0 0.0
    %5393 = vmatpush1.msra.mxu0 0.0
    %5394 = vmatprep.subr.mxu0 0.0
    %5395 = vmatpush1.msra.mxu0 0.0
    %5396 = vmatprep.subr.mxu0 0.0
    %5397 = vmatpush1.msra.mxu0 0.0
    %5398 = vmatprep.subr.mxu0 0.0
    %5399 = vmatpush1.msra.mxu0 0.0
    %5400 = vmatprep.subr.mxu0 0.0
    %5401 = vmatpush1.msra.mxu0 0.0
    %5402 = vmatprep.subr.mxu0 0.0
    %5403 = vmatpush1.msra.mxu0 0.0
    %5404 = vmatprep.subr.mxu0 0.0
    %5405 = vmatpush1.msra.mxu0 0.0
    %5406 = vmatprep.subr.mxu0 0.0
    %5407 = vmatpush1.msra.mxu0 0.0
    %5408 = vmatprep.subr.mxu0 0.0
    %5409 = vmatpush1.msra.mxu0 0.0
    %5410 = vmatprep.subr.mxu0 0.0
    %5411 = vmatpush1.msra.mxu0 0.0
    %5412 = vmatprep.subr.mxu0 0.0
    %5413 = vmatpush1.msra.mxu0 0.0
    %5414 = vmatprep.subr.mxu0 0.0
    %5415 = vmatpush1.msra.mxu0 0.0
    %5416 = vmatprep.subr.mxu0 0.0
    %5417 = vmatpush1.msra.mxu0 0.0
    %5418 = vmatprep.subr.mxu0 0.0
    %5419 = vmatpush1.msra.mxu0 0.0
    %5420 = vmatprep.subr.mxu0 0.0
    %5421 = vmatpush1.msra.mxu0 0.0
    %5422 = vmatprep.subr.mxu0 0.0
    %5423 = vmatpush1.msra.mxu0 0.0
    %5424 = vmatprep.subr.mxu0 0.0
    %5425 = vmatpush1.msra.mxu0 0.0
    %5426 = vmatprep.subr.mxu0 0.0
    %5427 = vmatpush1.msra.mxu0 0.0
    %5428 = vmatprep.subr.mxu0 0.0
    %5429 = vmatpush1.msra.mxu0 0.0
    %5430 = vmatprep.subr.mxu0 0.0
    %5431 = vmatpush1.msra.mxu0 0.0
    %5432 = vmatprep.subr.mxu0 0.0
    %5433 = vmatpush1.msra.mxu0 0.0
    %5434 = vmatprep.subr.mxu0 0.0
    %5435 = vmatpush1.msra.mxu0 0.0
    %5436 = vmatprep.mubr.f32.mxu0 0.0
    %5437 = vmatmul.mubr.f32.gmra.mrb[0].mxu0 %v5370
    %v5438 = vpop.f32.mrb[0].mxu0
    %v5439 = vadd.f32 0.0, %v5438
    %v5440 = vpop.f32.mrb[0].mxu0
    %5441 = vdwg.mxu0
    %v5442 = vpack.c.bf16 %v5439, %v5439
    %s5443 = scalar_lea.vmem [#allocation30], 48
    %v5444 = vld [vmem:[%s5443] sm:$0xf]
    %v5445 = vld [vmem:[%s5443 + $0x4] sm:$0xf]
    %v5446 = vld [vmem:[%s5443 + $0x8] sm:$0xf]
    %v5447 = vld [vmem:[%s5443 + $0xc] sm:$0xf]
    %v5452 = vunpack.c.l.b16 %v5444
    %v5453 = vunpack.c.l.b16 %v5445
    %v5454 = vunpack.c.l.b16 %v5446
    %v5455 = vunpack.c.l.b16 %v5447
    %v5456 = vpack.c.b16 %v5453, %v5452
    %v5457 = vpack.c.b16 %v5455, %v5454
    %v5461 = vsel %vm2386, %v5442, 0
    %5463 = vmatprep.subr.bf16.mxu0 0
    %5464 = vmatpush1.bf16.msra.mxu0 %v5456
    %5465 = vmatprep.subr.bf16.mxu0 0
    %5466 = vmatpush1.bf16.msra.mxu0 %v5457
    %5467 = vmatprep.subr.bf16.mxu0 0
    %5468 = vmatpush1.bf16.msra.mxu0 0
    %5469 = vmatprep.subr.bf16.mxu0 0
    %5470 = vmatpush1.bf16.msra.mxu0 0
    %5471 = vmatprep.subr.bf16.mxu0 0
    %5472 = vmatpush1.bf16.msra.mxu0 0
    %5473 = vmatprep.subr.bf16.mxu0 0
    %5474 = vmatpush1.bf16.msra.mxu0 0
    %5475 = vmatprep.subr.bf16.mxu0 0
    %5476 = vmatpush1.bf16.msra.mxu0 0
    %5477 = vmatprep.subr.bf16.mxu0 0
    %5478 = vmatpush1.bf16.msra.mxu0 0
    %5479 = vmatprep.subr.bf16.mxu0 0
    %5480 = vmatpush1.bf16.msra.mxu0 0
    %5481 = vmatprep.subr.bf16.mxu0 0
    %5482 = vmatpush1.bf16.msra.mxu0 0
    %5483 = vmatprep.subr.bf16.mxu0 0
    %5484 = vmatpush1.bf16.msra.mxu0 0
    %5485 = vmatprep.subr.bf16.mxu0 0
    %5486 = vmatpush1.bf16.msra.mxu0 0
    %5487 = vmatprep.subr.bf16.mxu0 0
    %5488 = vmatpush1.bf16.msra.mxu0 0
    %5489 = vmatprep.subr.bf16.mxu0 0
    %5490 = vmatpush1.bf16.msra.mxu0 0
    %5491 = vmatprep.subr.bf16.mxu0 0
    %5492 = vmatpush1.bf16.msra.mxu0 0
    %5493 = vmatprep.subr.bf16.mxu0 0
    %5494 = vmatpush1.bf16.msra.mxu0 0
    %5495 = vmatprep.mubr.bf16.mxu0 0
    %5496 = vmatmul.mubr.bf16.gmra.mrb[0].mxu0 %v5461
    %v5497 = vpop.f32.mrb[0].mxu0
    %v5498 = vadd.f32 0.0, %v5497
    %v5499 = vpop.f32.mrb[0].mxu0
    %v5500 = vpop.f32.mrb[0].mxu0
    %v5501 = vpop.f32.mrb[0].mxu0
    %5502 = vdwg.mxu0
    %v5503 = vadd.f32 %v4942, %v5498
    %v5504 = vadd.f32 %v3239, %v5503
    %v5505 = vld [vmem:[#allocation31] sm:$0x1]
    %v5507 = vlaneseq
    %v5508 = vshrl.u32 %v5507, 7
    %v5509 = vsub.s32 0, %v5508
    %v5510 = vrot.slane %v5505, %v5509
    %v5512 = vadd.f32 %v5504, %v5510
    %s5513 = smul.u32 4, 4
    %s5514 = smul.u32 %s5513, 16
    %s5515 = sshll.u32 %s5514, 4
    %5516 = dma.done [#allocation6], %s5515
    %s5517 = smul.u32 4, 256
    %s5518 = smul.u32 %s5517, 1
    %s5519 = sshll.u32 %s5518, 4
    %5520 = dma.done %s716, %s5519
    %v5521 = vld [vmem:[#allocation21] sm:$0x1]
    %v5522 = vld [vmem:[#allocation22] sm:$0x1]
    %v5523 = vsel %vm2386, %v3238, 0.0
    %5524 = vadd.xlane.f32.xlu0 %v5523
    %v5525 = vpop.xlane.xlu0 %5524
    %v5526 = vmul.f32 %v5525, %v2390
    %v5527 = vsub.f32 %v3238, %v5526
    %v5528 = vmul.f32 %v5527, %v5527
    %v5529 = vsel %vm2386, %v5528, 0.0
    %5530 = vadd.xlane.f32.xlu0 %v5529
    %v5531 = vpop.xlane.xlu0 %5530
    %v5532 = vmul.f32 %v5531, %v2390
    %v5533 = vadd.f32 %v5532, 1e-05
    %v5534 = vrsqrt.pop %v5533
    %v5535 = vmul.f32 %v5527, %v5534
    %v5537 = vlaneseq
    %v5538 = vshrl.u32 %v5537, 7
    %v5539 = vsub.s32 0, %v5538
    %v5540 = vrot.slane %v5521, %v5539
    %v5542 = vmul.f32 %v5535, %v5540
    %v5544 = vlaneseq
    %v5545 = vshrl.u32 %v5544, 7
    %v5546 = vsub.s32 0, %v5545
    %v5547 = vrot.slane %v5522, %v5546
    %v5549 = vadd.f32 %v5542, %v5547
    %v5550 = vpack.c.bf16 %v5549, %v5549
    %v5551 = vld [vmem:[#allocation2] sm:$0xff]
    %v5552 = vld [vmem:[#allocation2 + $0x8] sm:$0xff]
    %v5553 = vld [vmem:[#allocation2 + $0x10] sm:$0xff]
    %v5554 = vld [vmem:[#allocation2 + $0x18] sm:$0xff]
    %v5555 = vld [vmem:[#allocation2 + $0x20] sm:$0xff]
    %v5556 = vld [vmem:[#allocation2 + $0x28] sm:$0xff]
    %v5557 = vld [vmem:[#allocation2 + $0x30] sm:$0xff]
    %v5558 = vld [vmem:[#allocation2 + $0x38] sm:$0xff]
    %v5559 = vld [vmem:[#allocation2 + $0x40] sm:$0xff]
    %v5560 = vld [vmem:[#allocation2 + $0x48] sm:$0xff]
    %v5561 = vld [vmem:[#allocation2 + $0x50] sm:$0xff]
    %v5562 = vld [vmem:[#allocation2 + $0x58] sm:$0xff]
    %v5563 = vld [vmem:[#allocation2 + $0x60] sm:$0xff]
    %v5564 = vld [vmem:[#allocation2 + $0x68] sm:$0xff]
    %v5565 = vld [vmem:[#allocation2 + $0x70] sm:$0xff]
    %v5566 = vld [vmem:[#allocation2 + $0x78] sm:$0xff]
    %v5567 = vld [vmem:[#allocation2 + $0x80] sm:$0xff]
    %v5568 = vld [vmem:[#allocation2 + $0x88] sm:$0xff]
    %v5569 = vld [vmem:[#allocation2 + $0x90] sm:$0xff]
    %v5570 = vld [vmem:[#allocation2 + $0x98] sm:$0xff]
    %v5571 = vld [vmem:[#allocation2 + $0xa0] sm:$0xff]
    %v5572 = vld [vmem:[#allocation2 + $0xa8] sm:$0xff]
    %v5573 = vld [vmem:[#allocation2 + $0xb0] sm:$0xff]
    %v5574 = vld [vmem:[#allocation2 + $0xb8] sm:$0xff]
    %v5575 = vld [vmem:[#allocation2 + $0xc0] sm:$0xff]
    %v5576 = vld [vmem:[#allocation2 + $0xc8] sm:$0xff]
    %v5577 = vld [vmem:[#allocation2 + $0xd0] sm:$0xff]
    %v5578 = vld [vmem:[#allocation2 + $0xd8] sm:$0xff]
    %v5579 = vld [vmem:[#allocation2 + $0xe0] sm:$0xff]
    %v5580 = vld [vmem:[#allocation2 + $0xe8] sm:$0xff]
    %v5581 = vld [vmem:[#allocation2 + $0xf0] sm:$0xff]
    %v5582 = vld [vmem:[#allocation2 + $0xf8] sm:$0xff]
    %v5583 = vld [vmem:[#allocation24] sm:$0xff]
    %v5584 = vld [vmem:[#allocation24 + $0x8] sm:$0xff]
    %v5587 = vlaneseq
    %v5588 = vshrl.u32 %v5587, 7
    %v5589 = vsub.s32 0, %v5588
    %v5590 = vrot.slane %v5583, %v5589
    %v5591 = vlaneseq
    %v5592 = vshrl.u32 %v5591, 7
    %v5593 = vsub.s32 1, %v5592
    %v5594 = vrot.slane %v5583, %v5593
    %v5595 = vlaneseq
    %v5596 = vshrl.u32 %v5595, 7
    %v5597 = vsub.s32 2, %v5596
    %v5598 = vrot.slane %v5583, %v5597
    %v5599 = vlaneseq
    %v5600 = vshrl.u32 %v5599, 7
    %v5601 = vsub.s32 3, %v5600
    %v5602 = vrot.slane %v5583, %v5601
    %v5603 = vlaneseq
    %v5604 = vshrl.u32 %v5603, 7
    %v5605 = vsub.s32 4, %v5604
    %v5606 = vrot.slane %v5583, %v5605
    %v5607 = vlaneseq
    %v5608 = vshrl.u32 %v5607, 7
    %v5609 = vsub.s32 5, %v5608
    %v5610 = vrot.slane %v5583, %v5609
    %v5611 = vlaneseq
    %v5612 = vshrl.u32 %v5611, 7
    %v5613 = vsub.s32 6, %v5612
    %v5614 = vrot.slane %v5583, %v5613
    %v5615 = vlaneseq
    %v5616 = vshrl.u32 %v5615, 7
    %v5617 = vsub.s32 7, %v5616
    %v5618 = vrot.slane %v5583, %v5617
    %v5619 = vlaneseq
    %v5620 = vshrl.u32 %v5619, 7
    %v5621 = vsub.s32 0, %v5620
    %v5622 = vrot.slane %v5584, %v5621
    %v5623 = vlaneseq
    %v5624 = vshrl.u32 %v5623, 7
    %v5625 = vsub.s32 1, %v5624
    %v5626 = vrot.slane %v5584, %v5625
    %v5627 = vlaneseq
    %v5628 = vshrl.u32 %v5627, 7
    %v5629 = vsub.s32 2, %v5628
    %v5630 = vrot.slane %v5584, %v5629
    %v5631 = vlaneseq
    %v5632 = vshrl.u32 %v5631, 7
    %v5633 = vsub.s32 3, %v5632
    %v5634 = vrot.slane %v5584, %v5633
    %v5635 = vlaneseq
    %v5636 = vshrl.u32 %v5635, 7
    %v5637 = vsub.s32 4, %v5636
    %v5638 = vrot.slane %v5584, %v5637
    %v5639 = vlaneseq
    %v5640 = vshrl.u32 %v5639, 7
    %v5641 = vsub.s32 5, %v5640
    %v5642 = vrot.slane %v5584, %v5641
    %v5643 = vlaneseq
    %v5644 = vshrl.u32 %v5643, 7
    %v5645 = vsub.s32 6, %v5644
    %v5646 = vrot.slane %v5584, %v5645
    %v5647 = vlaneseq
    %v5648 = vshrl.u32 %v5647, 7
    %v5649 = vsub.s32 7, %v5648
    %v5650 = vrot.slane %v5584, %v5649
    %v5668 = vsel %vm2386, %v5550, 0
    %5670 = vmatprep.subr.bf16.mxu0 %v5552
    %5671 = vmatpush1.bf16.msra.mxu0 %v5551
    %5672 = vmatprep.subr.bf16.mxu0 %v5568
    %5673 = vmatpush1.bf16.msra.mxu0 %v5567
    %5674 = vmatprep.subr.bf16.mxu0 0
    %5675 = vmatpush1.bf16.msra.mxu0 0
    %5676 = vmatprep.subr.bf16.mxu0 0
    %5677 = vmatpush1.bf16.msra.mxu0 0
    %5678 = vmatprep.subr.bf16.mxu0 0
    %5679 = vmatpush1.bf16.msra.mxu0 0
    %5680 = vmatprep.subr.bf16.mxu0 0
    %5681 = vmatpush1.bf16.msra.mxu0 0
    %5682 = vmatprep.subr.bf16.mxu0 0
    %5683 = vmatpush1.bf16.msra.mxu0 0
    %5684 = vmatprep.subr.bf16.mxu0 0
    %5685 = vmatpush1.bf16.msra.mxu0 0
    %5686 = vmatprep.subr.bf16.mxu0 0
    %5687 = vmatpush1.bf16.msra.mxu0 0
    %5688 = vmatprep.subr.bf16.mxu0 0
    %5689 = vmatpush1.bf16.msra.mxu0 0
    %5690 = vmatprep.subr.bf16.mxu0 0
    %5691 = vmatpush1.bf16.msra.mxu0 0
    %5692 = vmatprep.subr.bf16.mxu0 0
    %5693 = vmatpush1.bf16.msra.mxu0 0
    %5694 = vmatprep.subr.bf16.mxu0 0
    %5695 = vmatpush1.bf16.msra.mxu0 0
    %5696 = vmatprep.subr.bf16.mxu0 0
    %5697 = vmatpush1.bf16.msra.mxu0 0
    %5698 = vmatprep.subr.bf16.mxu0 0
    %5699 = vmatpush1.bf16.msra.mxu0 0
    %5700 = vmatprep.subr.bf16.mxu0 0
    %5701 = vmatpush1.bf16.msra.mxu0 0
    %5702 = vmatprep.mubr.bf16.mxu0 0
    %5703 = vmatmul.mubr.bf16.gmra.mrb[0].mxu0 %v5668
    %v5704 = vpop.f32.mrb[0].mxu0
    %v5705 = vadd.f32 %v5590, %v5704
    %v5706 = vpop.f32.mrb[0].mxu0
    %v5707 = vadd.f32 %v5594, %v5706
    %v5708 = vpop.f32.mrb[0].mxu0
    %v5709 = vpop.f32.mrb[0].mxu0
    %5710 = vdwg.mxu0
    %5711 = vmatprep.subr.bf16.mxu0 %v5554
    %5712 = vmatpush1.bf16.msra.mxu0 %v5553
    %5713 = vmatprep.subr.bf16.mxu0 %v5570
    %5714 = vmatpush1.bf16.msra.mxu0 %v5569
    %5715 = vmatprep.subr.bf16.mxu0 0
    %5716 = vmatpush1.bf16.msra.mxu0 0
    %5717 = vmatprep.subr.bf16.mxu0 0
    %5718 = vmatpush1.bf16.msra.mxu0 0
    %5719 = vmatprep.subr.bf16.mxu0 0
    %5720 = vmatpush1.bf16.msra.mxu0 0
    %5721 = vmatprep.subr.bf16.mxu0 0
    %5722 = vmatpush1.bf16.msra.mxu0 0
    %5723 = vmatprep.subr.bf16.mxu0 0
    %5724 = vmatpush1.bf16.msra.mxu0 0
    %5725 = vmatprep.subr.bf16.mxu0 0
    %5726 = vmatpush1.bf16.msra.mxu0 0
    %5727 = vmatprep.subr.bf16.mxu0 0
    %5728 = vmatpush1.bf16.msra.mxu0 0
    %5729 = vmatprep.subr.bf16.mxu0 0
    %5730 = vmatpush1.bf16.msra.mxu0 0
    %5731 = vmatprep.subr.bf16.mxu0 0
    %5732 = vmatpush1.bf16.msra.mxu0 0
    %5733 = vmatprep.subr.bf16.mxu0 0
    %5734 = vmatpush1.bf16.msra.mxu0 0
    %5735 = vmatprep.subr.bf16.mxu0 0
    %5736 = vmatpush1.bf16.msra.mxu0 0
    %5737 = vmatprep.subr.bf16.mxu0 0
    %5738 = vmatpush1.bf16.msra.mxu0 0
    %5739 = vmatprep.subr.bf16.mxu0 0
    %5740 = vmatpush1.bf16.msra.mxu0 0
    %5741 = vmatprep.subr.bf16.mxu0 0
    %5742 = vmatpush1.bf16.msra.mxu0 0
    %5743 = vmatprep.mubr.bf16.mxu0 0
    %5744 = vmatmul.mubr.bf16.gmra.mrb[0].mxu0 %v5668
    %v5745 = vpop.f32.mrb[0].mxu0
    %v5746 = vadd.f32 %v5598, %v5745
    %v5747 = vpop.f32.mrb[0].mxu0
    %v5748 = vadd.f32 %v5602, %v5747
    %v5749 = vpop.f32.mrb[0].mxu0
    %v5750 = vpop.f32.mrb[0].mxu0
    %5751 = vdwg.mxu0
    %5752 = vmatprep.subr.bf16.mxu0 %v5556
    %5753 = vmatpush1.bf16.msra.mxu0 %v5555
    %5754 = vmatprep.subr.bf16.mxu0 %v5572
    %5755 = vmatpush1.bf16.msra.mxu0 %v5571
    %5756 = vmatprep.subr.bf16.mxu0 0
    %5757 = vmatpush1.bf16.msra.mxu0 0
    %5758 = vmatprep.subr.bf16.mxu0 0
    %5759 = vmatpush1.bf16.msra.mxu0 0
    %5760 = vmatprep.subr.bf16.mxu0 0
    %5761 = vmatpush1.bf16.msra.mxu0 0
    %5762 = vmatprep.subr.bf16.mxu0 0
    %5763 = vmatpush1.bf16.msra.mxu0 0
    %5764 = vmatprep.subr.bf16.mxu0 0
    %5765 = vmatpush1.bf16.msra.mxu0 0
    %5766 = vmatprep.subr.bf16.mxu0 0
    %5767 = vmatpush1.bf16.msra.mxu0 0
    %5768 = vmatprep.subr.bf16.mxu0 0
    %5769 = vmatpush1.bf16.msra.mxu0 0
    %5770 = vmatprep.subr.bf16.mxu0 0
    %5771 = vmatpush1.bf16.msra.mxu0 0
    %5772 = vmatprep.subr.bf16.mxu0 0
    %5773 = vmatpush1.bf16.msra.mxu0 0
    %5774 = vmatprep.subr.bf16.mxu0 0
    %5775 = vmatpush1.bf16.msra.mxu0 0
    %5776 = vmatprep.subr.bf16.mxu0 0
    %5777 = vmatpush1.bf16.msra.mxu0 0
    %5778 = vmatprep.subr.bf16.mxu0 0
    %5779 = vmatpush1.bf16.msra.mxu0 0
    %5780 = vmatprep.subr.bf16.mxu0 0
    %5781 = vmatpush1.bf16.msra.mxu0 0
    %5782 = vmatprep.subr.bf16.mxu0 0
    %5783 = vmatpush1.bf16.msra.mxu0 0
    %5784 = vmatprep.mubr.bf16.mxu0 0
    %5785 = vmatmul.mubr.bf16.gmra.mrb[0].mxu0 %v5668
    %v5786 = vpop.f32.mrb[0].mxu0
    %v5787 = vadd.f32 %v5606, %v5786
    %v5788 = vpop.f32.mrb[0].mxu0
    %v5789 = vadd.f32 %v5610, %v5788
    %v5790 = vpop.f32.mrb[0].mxu0
    %v5791 = vpop.f32.mrb[0].mxu0
    %5792 = vdwg.mxu0
    %5793 = vmatprep.subr.bf16.mxu0 %v5558
    %5794 = vmatpush1.bf16.msra.mxu0 %v5557
    %5795 = vmatprep.subr.bf16.mxu0 %v5574
    %5796 = vmatpush1.bf16.msra.mxu0 %v5573
    %5797 = vmatprep.subr.bf16.mxu0 0
    %5798 = vmatpush1.bf16.msra.mxu0 0
    %5799 = vmatprep.subr.bf16.mxu0 0
    %5800 = vmatpush1.bf16.msra.mxu0 0
    %5801 = vmatprep.subr.bf16.mxu0 0
    %5802 = vmatpush1.bf16.msra.mxu0 0
    %5803 = vmatprep.subr.bf16.mxu0 0
    %5804 = vmatpush1.bf16.msra.mxu0 0
    %5805 = vmatprep.subr.bf16.mxu0 0
    %5806 = vmatpush1.bf16.msra.mxu0 0
    %5807 = vmatprep.subr.bf16.mxu0 0
    %5808 = vmatpush1.bf16.msra.mxu0 0
    %5809 = vmatprep.subr.bf16.mxu0 0
    %5810 = vmatpush1.bf16.msra.mxu0 0
    %5811 = vmatprep.subr.bf16.mxu0 0
    %5812 = vmatpush1.bf16.msra.mxu0 0
    %5813 = vmatprep.subr.bf16.mxu0 0
    %5814 = vmatpush1.bf16.msra.mxu0 0
    %5815 = vmatprep.subr.bf16.mxu0 0
    %5816 = vmatpush1.bf16.msra.mxu0 0
    %5817 = vmatprep.subr.bf16.mxu0 0
    %5818 = vmatpush1.bf16.msra.mxu0 0
    %5819 = vmatprep.subr.bf16.mxu0 0
    %5820 = vmatpush1.bf16.msra.mxu0 0
    %5821 = vmatprep.subr.bf16.mxu0 0
    %5822 = vmatpush1.bf16.msra.mxu0 0
    %5823 = vmatprep.subr.bf16.mxu0 0
    %5824 = vmatpush1.bf16.msra.mxu0 0
    %5825 = vmatprep.mubr.bf16.mxu0 0
    %5826 = vmatmul.mubr.bf16.gmra.mrb[0].mxu0 %v5668
    %v5827 = vpop.f32.mrb[0].mxu0
    %v5828 = vadd.f32 %v5614, %v5827
    %v5829 = vpop.f32.mrb[0].mxu0
    %v5830 = vadd.f32 %v5618, %v5829
    %v5831 = vpop.f32.mrb[0].mxu0
    %v5832 = vpop.f32.mrb[0].mxu0
    %5833 = vdwg.mxu0
    %5834 = vmatprep.subr.bf16.mxu0 %v5560
    %5835 = vmatpush1.bf16.msra.mxu0 %v5559
    %5836 = vmatprep.subr.bf16.mxu0 %v5576
    %5837 = vmatpush1.bf16.msra.mxu0 %v5575
    %5838 = vmatprep.subr.bf16.mxu0 0
    %5839 = vmatpush1.bf16.msra.mxu0 0
    %5840 = vmatprep.subr.bf16.mxu0 0
    %5841 = vmatpush1.bf16.msra.mxu0 0
    %5842 = vmatprep.subr.bf16.mxu0 0
    %5843 = vmatpush1.bf16.msra.mxu0 0
    %5844 = vmatprep.subr.bf16.mxu0 0
    %5845 = vmatpush1.bf16.msra.mxu0 0
    %5846 = vmatprep.subr.bf16.mxu0 0
    %5847 = vmatpush1.bf16.msra.mxu0 0
    %5848 = vmatprep.subr.bf16.mxu0 0
    %5849 = vmatpush1.bf16.msra.mxu0 0
    %5850 = vmatprep.subr.bf16.mxu0 0
    %5851 = vmatpush1.bf16.msra.mxu0 0
    %5852 = vmatprep.subr.bf16.mxu0 0
    %5853 = vmatpush1.bf16.msra.mxu0 0
    %5854 = vmatprep.subr.bf16.mxu0 0
    %5855 = vmatpush1.bf16.msra.mxu0 0
    %5856 = vmatprep.subr.bf16.mxu0 0
    %5857 = vmatpush1.bf16.msra.mxu0 0
    %5858 = vmatprep.subr.bf16.mxu0 0
    %5859 = vmatpush1.bf16.msra.mxu0 0
    %5860 = vmatprep.subr.bf16.mxu0 0
    %5861 = vmatpush1.bf16.msra.mxu0 0
    %5862 = vmatprep.subr.bf16.mxu0 0
    %5863 = vmatpush1.bf16.msra.mxu0 0
    %5864 = vmatprep.subr.bf16.mxu0 0
    %5865 = vmatpush1.bf16.msra.mxu0 0
    %5866 = vmatprep.mubr.bf16.mxu0 0
    %5867 = vmatmul.mubr.bf16.gmra.mrb[0].mxu0 %v5668
    %v5868 = vpop.f32.mrb[0].mxu0
    %v5869 = vadd.f32 %v5622, %v5868
    %v5870 = vpop.f32.mrb[0].mxu0
    %v5871 = vadd.f32 %v5626, %v5870
    %v5872 = vpop.f32.mrb[0].mxu0
    %v5873 = vpop.f32.mrb[0].mxu0
    %5874 = vdwg.mxu0
    %5875 = vmatprep.subr.bf16.mxu0 %v5562
    %5876 = vmatpush1.bf16.msra.mxu0 %v5561
    %5877 = vmatprep.subr.bf16.mxu0 %v5578
    %5878 = vmatpush1.bf16.msra.mxu0 %v5577
    %5879 = vmatprep.subr.bf16.mxu0 0
    %5880 = vmatpush1.bf16.msra.mxu0 0
    %5881 = vmatprep.subr.bf16.mxu0 0
    %5882 = vmatpush1.bf16.msra.mxu0 0
    %5883 = vmatprep.subr.bf16.mxu0 0
    %5884 = vmatpush1.bf16.msra.mxu0 0
    %5885 = vmatprep.subr.bf16.mxu0 0
    %5886 = vmatpush1.bf16.msra.mxu0 0
    %5887 = vmatprep.subr.bf16.mxu0 0
    %5888 = vmatpush1.bf16.msra.mxu0 0
    %5889 = vmatprep.subr.bf16.mxu0 0
    %5890 = vmatpush1.bf16.msra.mxu0 0
    %5891 = vmatprep.subr.bf16.mxu0 0
    %5892 = vmatpush1.bf16.msra.mxu0 0
    %5893 = vmatprep.subr.bf16.mxu0 0
    %5894 = vmatpush1.bf16.msra.mxu0 0
    %5895 = vmatprep.subr.bf16.mxu0 0
    %5896 = vmatpush1.bf16.msra.mxu0 0
    %5897 = vmatprep.subr.bf16.mxu0 0
    %5898 = vmatpush1.bf16.msra.mxu0 0
    %5899 = vmatprep.subr.bf16.mxu0 0
    %5900 = vmatpush1.bf16.msra.mxu0 0
    %5901 = vmatprep.subr.bf16.mxu0 0
    %5902 = vmatpush1.bf16.msra.mxu0 0
    %5903 = vmatprep.subr.bf16.mxu0 0
    %5904 = vmatpush1.bf16.msra.mxu0 0
    %5905 = vmatprep.subr.bf16.mxu0 0
    %5906 = vmatpush1.bf16.msra.mxu0 0
    %5907 = vmatprep.mubr.bf16.mxu0 0
    %5908 = vmatmul.mubr.bf16.gmra.mrb[0].mxu0 %v5668
    %v5909 = vpop.f32.mrb[0].mxu0
    %v5910 = vadd.f32 %v5630, %v5909
    %v5911 = vpop.f32.mrb[0].mxu0
    %v5912 = vadd.f32 %v5634, %v5911
    %v5913 = vpop.f32.mrb[0].mxu0
    %v5914 = vpop.f32.mrb[0].mxu0
    %5915 = vdwg.mxu0
    %5916 = vmatprep.subr.bf16.mxu0 %v5564
    %5917 = vmatpush1.bf16.msra.mxu0 %v5563
    %5918 = vmatprep.subr.bf16.mxu0 %v5580
    %5919 = vmatpush1.bf16.msra.mxu0 %v5579
    %5920 = vmatprep.subr.bf16.mxu0 0
    %5921 = vmatpush1.bf16.msra.mxu0 0
    %5922 = vmatprep.subr.bf16.mxu0 0
    %5923 = vmatpush1.bf16.msra.mxu0 0
    %5924 = vmatprep.subr.bf16.mxu0 0
    %5925 = vmatpush1.bf16.msra.mxu0 0
    %5926 = vmatprep.subr.bf16.mxu0 0
    %5927 = vmatpush1.bf16.msra.mxu0 0
    %5928 = vmatprep.subr.bf16.mxu0 0
    %5929 = vmatpush1.bf16.msra.mxu0 0
    %5930 = vmatprep.subr.bf16.mxu0 0
    %5931 = vmatpush1.bf16.msra.mxu0 0
    %5932 = vmatprep.subr.bf16.mxu0 0
    %5933 = vmatpush1.bf16.msra.mxu0 0
    %5934 = vmatprep.subr.bf16.mxu0 0
    %5935 = vmatpush1.bf16.msra.mxu0 0
    %5936 = vmatprep.subr.bf16.mxu0 0
    %5937 = vmatpush1.bf16.msra.mxu0 0
    %5938 = vmatprep.subr.bf16.mxu0 0
    %5939 = vmatpush1.bf16.msra.mxu0 0
    %5940 = vmatprep.subr.bf16.mxu0 0
    %5941 = vmatpush1.bf16.msra.mxu0 0
    %5942 = vmatprep.subr.bf16.mxu0 0
    %5943 = vmatpush1.bf16.msra.mxu0 0
    %5944 = vmatprep.subr.bf16.mxu0 0
    %5945 = vmatpush1.bf16.msra.mxu0 0
    %5946 = vmatprep.subr.bf16.mxu0 0
    %5947 = vmatpush1.bf16.msra.mxu0 0
    %5948 = vmatprep.mubr.bf16.mxu0 0
    %5949 = vmatmul.mubr.bf16.gmra.mrb[0].mxu0 %v5668
    %v5950 = vpop.f32.mrb[0].mxu0
    %v5951 = vadd.f32 %v5638, %v5950
    %v5952 = vpop.f32.mrb[0].mxu0
    %v5953 = vadd.f32 %v5642, %v5952
    %v5954 = vpop.f32.mrb[0].mxu0
    %v5955 = vpop.f32.mrb[0].mxu0
    %5956 = vdwg.mxu0
    %5957 = vmatprep.subr.bf16.mxu0 %v5566
    %5958 = vmatpush1.bf16.msra.mxu0 %v5565
    %5959 = vmatprep.subr.bf16.mxu0 %v5582
    %5960 = vmatpush1.bf16.msra.mxu0 %v5581
    %5961 = vmatprep.subr.bf16.mxu0 0
    %5962 = vmatpush1.bf16.msra.mxu0 0
    %5963 = vmatprep.subr.bf16.mxu0 0
    %5964 = vmatpush1.bf16.msra.mxu0 0
    %5965 = vmatprep.subr.bf16.mxu0 0
    %5966 = vmatpush1.bf16.msra.mxu0 0
    %5967 = vmatprep.subr.bf16.mxu0 0
    %5968 = vmatpush1.bf16.msra.mxu0 0
    %5969 = vmatprep.subr.bf16.mxu0 0
    %5970 = vmatpush1.bf16.msra.mxu0 0
    %5971 = vmatprep.subr.bf16.mxu0 0
    %5972 = vmatpush1.bf16.msra.mxu0 0
    %5973 = vmatprep.subr.bf16.mxu0 0
    %5974 = vmatpush1.bf16.msra.mxu0 0
    %5975 = vmatprep.subr.bf16.mxu0 0
    %5976 = vmatpush1.bf16.msra.mxu0 0
    %5977 = vmatprep.subr.bf16.mxu0 0
    %5978 = vmatpush1.bf16.msra.mxu0 0
    %5979 = vmatprep.subr.bf16.mxu0 0
    %5980 = vmatpush1.bf16.msra.mxu0 0
    %5981 = vmatprep.subr.bf16.mxu0 0
    %5982 = vmatpush1.bf16.msra.mxu0 0
    %5983 = vmatprep.subr.bf16.mxu0 0
    %5984 = vmatpush1.bf16.msra.mxu0 0
    %5985 = vmatprep.subr.bf16.mxu0 0
    %5986 = vmatpush1.bf16.msra.mxu0 0
    %5987 = vmatprep.subr.bf16.mxu0 0
    %5988 = vmatpush1.bf16.msra.mxu0 0
    %5989 = vmatprep.mubr.bf16.mxu0 0
    %5990 = vmatmul.mubr.bf16.gmra.mrb[0].mxu0 %v5668
    %v5991 = vpop.f32.mrb[0].mxu0
    %v5992 = vadd.f32 %v5646, %v5991
    %v5993 = vpop.f32.mrb[0].mxu0
    %v5994 = vadd.f32 %v5650, %v5993
    %v5995 = vpop.f32.mrb[0].mxu0
    %v5996 = vpop.f32.mrb[0].mxu0
    %5997 = vdwg.mxu0
    %v5998 = vmax.f32 %v5705, 0.0
    %v5999 = vmax.f32 %v5707, 0.0
    %v6000 = vmax.f32 %v5746, 0.0
    %v6001 = vmax.f32 %v5748, 0.0
    %v6002 = vmax.f32 %v5787, 0.0
    %v6003 = vmax.f32 %v5789, 0.0
    %v6004 = vmax.f32 %v5828, 0.0
    %v6005 = vmax.f32 %v5830, 0.0
    %v6006 = vmax.f32 %v5869, 0.0
    %v6007 = vmax.f32 %v5871, 0.0
    %v6008 = vmax.f32 %v5910, 0.0
    %v6009 = vmax.f32 %v5912, 0.0
    %v6010 = vmax.f32 %v5951, 0.0
    %v6011 = vmax.f32 %v5953, 0.0
    %v6012 = vmax.f32 %v5992, 0.0
    %v6013 = vmax.f32 %v5994, 0.0
    %v6014 = vpack.c.bf16 %v5998, %v5998
    %v6015 = vpack.c.bf16 %v5999, %v5999
    %v6016 = vpack.c.bf16 %v6000, %v6000
    %v6017 = vpack.c.bf16 %v6001, %v6001
    %v6018 = vpack.c.bf16 %v6002, %v6002
    %v6019 = vpack.c.bf16 %v6003, %v6003
    %v6020 = vpack.c.bf16 %v6004, %v6004
    %v6021 = vpack.c.bf16 %v6005, %v6005
    %v6022 = vpack.c.bf16 %v6006, %v6006
    %v6023 = vpack.c.bf16 %v6007, %v6007
    %v6024 = vpack.c.bf16 %v6008, %v6008
    %v6025 = vpack.c.bf16 %v6009, %v6009
    %v6026 = vpack.c.bf16 %v6010, %v6010
    %v6027 = vpack.c.bf16 %v6011, %v6011
    %v6028 = vpack.c.bf16 %v6012, %v6012
    %v6029 = vpack.c.bf16 %v6013, %v6013
    %v6030 = vld [vmem:[#allocation3] sm:$0xff]
    %v6031 = vld [vmem:[#allocation3 + $0x8] sm:$0xff]
    %v6032 = vld [vmem:[#allocation3 + $0x10] sm:$0xff]
    %v6033 = vld [vmem:[#allocation3 + $0x18] sm:$0xff]
    %v6034 = vld [vmem:[#allocation3 + $0x20] sm:$0xff]
    %v6035 = vld [vmem:[#allocation3 + $0x28] sm:$0xff]
    %v6036 = vld [vmem:[#allocation3 + $0x30] sm:$0xff]
    %v6037 = vld [vmem:[#allocation3 + $0x38] sm:$0xff]
    %v6038 = vld [vmem:[#allocation3 + $0x40] sm:$0xff]
    %v6039 = vld [vmem:[#allocation3 + $0x48] sm:$0xff]
    %v6040 = vld [vmem:[#allocation3 + $0x50] sm:$0xff]
    %v6041 = vld [vmem:[#allocation3 + $0x58] sm:$0xff]
    %v6042 = vld [vmem:[#allocation3 + $0x60] sm:$0xff]
    %v6043 = vld [vmem:[#allocation3 + $0x68] sm:$0xff]
    %v6044 = vld [vmem:[#allocation3 + $0x70] sm:$0xff]
    %v6045 = vld [vmem:[#allocation3 + $0x78] sm:$0xff]
    %v6046 = vld [vmem:[#allocation3 + $0x80] sm:$0xff]
    %v6047 = vld [vmem:[#allocation3 + $0x88] sm:$0xff]
    %v6048 = vld [vmem:[#allocation3 + $0x90] sm:$0xff]
    %v6049 = vld [vmem:[#allocation3 + $0x98] sm:$0xff]
    %v6050 = vld [vmem:[#allocation3 + $0xa0] sm:$0xff]
    %v6051 = vld [vmem:[#allocation3 + $0xa8] sm:$0xff]
    %v6052 = vld [vmem:[#allocation3 + $0xb0] sm:$0xff]
    %v6053 = vld [vmem:[#allocation3 + $0xb8] sm:$0xff]
    %v6054 = vld [vmem:[#allocation3 + $0xc0] sm:$0xff]
    %v6055 = vld [vmem:[#allocation3 + $0xc8] sm:$0xff]
    %v6056 = vld [vmem:[#allocation3 + $0xd0] sm:$0xff]
    %v6057 = vld [vmem:[#allocation3 + $0xd8] sm:$0xff]
    %v6058 = vld [vmem:[#allocation3 + $0xe0] sm:$0xff]
    %v6059 = vld [vmem:[#allocation3 + $0xe8] sm:$0xff]
    %v6060 = vld [vmem:[#allocation3 + $0xf0] sm:$0xff]
    %v6061 = vld [vmem:[#allocation3 + $0xf8] sm:$0xff]
    %v6062 = vld [vmem:[#allocation3 + $0x100] sm:$0xff]
    %v6063 = vld [vmem:[#allocation3 + $0x108] sm:$0xff]
    %v6064 = vld [vmem:[#allocation3 + $0x110] sm:$0xff]
    %v6065 = vld [vmem:[#allocation3 + $0x118] sm:$0xff]
    %v6066 = vld [vmem:[#allocation3 + $0x120] sm:$0xff]
    %v6067 = vld [vmem:[#allocation3 + $0x128] sm:$0xff]
    %v6068 = vld [vmem:[#allocation3 + $0x130] sm:$0xff]
    %v6069 = vld [vmem:[#allocation3 + $0x138] sm:$0xff]
    %v6070 = vld [vmem:[#allocation3 + $0x140] sm:$0xff]
    %v6071 = vld [vmem:[#allocation3 + $0x148] sm:$0xff]
    %v6072 = vld [vmem:[#allocation3 + $0x150] sm:$0xff]
    %v6073 = vld [vmem:[#allocation3 + $0x158] sm:$0xff]
    %v6074 = vld [vmem:[#allocation3 + $0x160] sm:$0xff]
    %v6075 = vld [vmem:[#allocation3 + $0x168] sm:$0xff]
    %v6076 = vld [vmem:[#allocation3 + $0x170] sm:$0xff]
    %v6077 = vld [vmem:[#allocation3 + $0x178] sm:$0xff]
    %v6078 = vld [vmem:[#allocation3 + $0x180] sm:$0xff]
    %v6079 = vld [vmem:[#allocation3 + $0x188] sm:$0xff]
    %v6080 = vld [vmem:[#allocation3 + $0x190] sm:$0xff]
    %v6081 = vld [vmem:[#allocation3 + $0x198] sm:$0xff]
    %v6082 = vld [vmem:[#allocation3 + $0x1a0] sm:$0xff]
    %v6083 = vld [vmem:[#allocation3 + $0x1a8] sm:$0xff]
    %v6084 = vld [vmem:[#allocation3 + $0x1b0] sm:$0xff]
    %v6085 = vld [vmem:[#allocation3 + $0x1b8] sm:$0xff]
    %v6086 = vld [vmem:[#allocation3 + $0x1c0] sm:$0xff]
    %v6087 = vld [vmem:[#allocation3 + $0x1c8] sm:$0xff]
    %v6088 = vld [vmem:[#allocation3 + $0x1d0] sm:$0xff]
    %v6089 = vld [vmem:[#allocation3 + $0x1d8] sm:$0xff]
    %v6090 = vld [vmem:[#allocation3 + $0x1e0] sm:$0xff]
    %v6091 = vld [vmem:[#allocation3 + $0x1e8] sm:$0xff]
    %v6092 = vld [vmem:[#allocation3 + $0x1f0] sm:$0xff]
    %v6093 = vld [vmem:[#allocation3 + $0x1f8] sm:$0xff]
    %v6094 = vld [vmem:[#allocation3 + $0x200] sm:$0xff]
    %v6095 = vld [vmem:[#allocation3 + $0x208] sm:$0xff]
    %v6096 = vld [vmem:[#allocation3 + $0x210] sm:$0xff]
    %v6097 = vld [vmem:[#allocation3 + $0x218] sm:$0xff]
    %v6098 = vld [vmem:[#allocation3 + $0x220] sm:$0xff]
    %v6099 = vld [vmem:[#allocation3 + $0x228] sm:$0xff]
    %v6100 = vld [vmem:[#allocation3 + $0x230] sm:$0xff]
    %v6101 = vld [vmem:[#allocation3 + $0x238] sm:$0xff]
    %v6102 = vld [vmem:[#allocation3 + $0x240] sm:$0xff]
    %v6103 = vld [vmem:[#allocation3 + $0x248] sm:$0xff]
    %v6104 = vld [vmem:[#allocation3 + $0x250] sm:$0xff]
    %v6105 = vld [vmem:[#allocation3 + $0x258] sm:$0xff]
    %v6106 = vld [vmem:[#allocation3 + $0x260] sm:$0xff]
    %v6107 = vld [vmem:[#allocation3 + $0x268] sm:$0xff]
    %v6108 = vld [vmem:[#allocation3 + $0x270] sm:$0xff]
    %v6109 = vld [vmem:[#allocation3 + $0x278] sm:$0xff]
    %v6110 = vld [vmem:[#allocation3 + $0x280] sm:$0xff]
    %v6111 = vld [vmem:[#allocation3 + $0x288] sm:$0xff]
    %v6112 = vld [vmem:[#allocation3 + $0x290] sm:$0xff]
    %v6113 = vld [vmem:[#allocation3 + $0x298] sm:$0xff]
    %v6114 = vld [vmem:[#allocation3 + $0x2a0] sm:$0xff]
    %v6115 = vld [vmem:[#allocation3 + $0x2a8] sm:$0xff]
    %v6116 = vld [vmem:[#allocation3 + $0x2b0] sm:$0xff]
    %v6117 = vld [vmem:[#allocation3 + $0x2b8] sm:$0xff]
    %v6118 = vld [vmem:[#allocation3 + $0x2c0] sm:$0xff]
    %v6119 = vld [vmem:[#allocation3 + $0x2c8] sm:$0xff]
    %v6120 = vld [vmem:[#allocation3 + $0x2d0] sm:$0xff]
    %v6121 = vld [vmem:[#allocation3 + $0x2d8] sm:$0xff]
    %v6122 = vld [vmem:[#allocation3 + $0x2e0] sm:$0xff]
    %v6123 = vld [vmem:[#allocation3 + $0x2e8] sm:$0xff]
    %v6124 = vld [vmem:[#allocation3 + $0x2f0] sm:$0xff]
    %v6125 = vld [vmem:[#allocation3 + $0x2f8] sm:$0xff]
    %v6126 = vld [vmem:[#allocation3 + $0x300] sm:$0xff]
    %v6127 = vld [vmem:[#allocation3 + $0x308] sm:$0xff]
    %v6128 = vld [vmem:[#allocation3 + $0x310] sm:$0xff]
    %v6129 = vld [vmem:[#allocation3 + $0x318] sm:$0xff]
    %v6130 = vld [vmem:[#allocation3 + $0x320] sm:$0xff]
    %v6131 = vld [vmem:[#allocation3 + $0x328] sm:$0xff]
    %v6132 = vld [vmem:[#allocation3 + $0x330] sm:$0xff]
    %v6133 = vld [vmem:[#allocation3 + $0x338] sm:$0xff]
    %v6134 = vld [vmem:[#allocation3 + $0x340] sm:$0xff]
    %v6135 = vld [vmem:[#allocation3 + $0x348] sm:$0xff]
    %v6136 = vld [vmem:[#allocation3 + $0x350] sm:$0xff]
    %v6137 = vld [vmem:[#allocation3 + $0x358] sm:$0xff]
    %v6138 = vld [vmem:[#allocation3 + $0x360] sm:$0xff]
    %v6139 = vld [vmem:[#allocation3 + $0x368] sm:$0xff]
    %v6140 = vld [vmem:[#allocation3 + $0x370] sm:$0xff]
    %v6141 = vld [vmem:[#allocation3 + $0x378] sm:$0xff]
    %v6142 = vld [vmem:[#allocation3 + $0x380] sm:$0xff]
    %v6143 = vld [vmem:[#allocation3 + $0x388] sm:$0xff]
    %v6144 = vld [vmem:[#allocation3 + $0x390] sm:$0xff]
    %v6145 = vld [vmem:[#allocation3 + $0x398] sm:$0xff]
    %v6146 = vld [vmem:[#allocation3 + $0x3a0] sm:$0xff]
    %v6147 = vld [vmem:[#allocation3 + $0x3a8] sm:$0xff]
    %v6148 = vld [vmem:[#allocation3 + $0x3b0] sm:$0xff]
    %v6149 = vld [vmem:[#allocation3 + $0x3b8] sm:$0xff]
    %v6150 = vld [vmem:[#allocation3 + $0x3c0] sm:$0xff]
    %v6151 = vld [vmem:[#allocation3 + $0x3c8] sm:$0xff]
    %v6152 = vld [vmem:[#allocation3 + $0x3d0] sm:$0xff]
    %v6153 = vld [vmem:[#allocation3 + $0x3d8] sm:$0xff]
    %v6154 = vld [vmem:[#allocation3 + $0x3e0] sm:$0xff]
    %v6155 = vld [vmem:[#allocation3 + $0x3e8] sm:$0xff]
    %v6156 = vld [vmem:[#allocation3 + $0x3f0] sm:$0xff]
    %v6157 = vld [vmem:[#allocation3 + $0x3f8] sm:$0xff]
    %v6158 = vld [vmem:[#allocation25] sm:$0x1]
    %v6160 = vlaneseq
    %v6161 = vshrl.u32 %v6160, 7
    %v6162 = vsub.s32 0, %v6161
    %v6163 = vrot.slane %v6158, %v6162
    %6165 = vmatprep.subr.bf16.mxu0 0
    %6166 = vmatpush1.bf16.msra.mxu0 %v6030
    %6167 = vmatprep.subr.bf16.mxu0 0
    %6168 = vmatpush1.bf16.msra.mxu0 %v6031
    %6169 = vmatprep.subr.bf16.mxu0 0
    %6170 = vmatpush1.bf16.msra.mxu0 %v6032
    %6171 = vmatprep.subr.bf16.mxu0 0
    %6172 = vmatpush1.bf16.msra.mxu0 %v6033
    %6173 = vmatprep.subr.bf16.mxu0 0
    %6174 = vmatpush1.bf16.msra.mxu0 %v6034
    %6175 = vmatprep.subr.bf16.mxu0 0
    %6176 = vmatpush1.bf16.msra.mxu0 %v6035
    %6177 = vmatprep.subr.bf16.mxu0 0
    %6178 = vmatpush1.bf16.msra.mxu0 %v6036
    %6179 = vmatprep.subr.bf16.mxu0 0
    %6180 = vmatpush1.bf16.msra.mxu0 %v6037
    %6181 = vmatprep.subr.bf16.mxu0 0
    %6182 = vmatpush1.bf16.msra.mxu0 %v6038
    %6183 = vmatprep.subr.bf16.mxu0 0
    %6184 = vmatpush1.bf16.msra.mxu0 %v6039
    %6185 = vmatprep.subr.bf16.mxu0 0
    %6186 = vmatpush1.bf16.msra.mxu0 %v6040
    %6187 = vmatprep.subr.bf16.mxu0 0
    %6188 = vmatpush1.bf16.msra.mxu0 %v6041
    %6189 = vmatprep.subr.bf16.mxu0 0
    %6190 = vmatpush1.bf16.msra.mxu0 %v6042
    %6191 = vmatprep.subr.bf16.mxu0 0
    %6192 = vmatpush1.bf16.msra.mxu0 %v6043
    %6193 = vmatprep.subr.bf16.mxu0 0
    %6194 = vmatpush1.bf16.msra.mxu0 %v6044
    %6195 = vmatprep.subr.bf16.mxu0 0
    %6196 = vmatpush1.bf16.msra.mxu0 %v6045
    %6197 = vmatprep.mubr.bf16.mxu0 %v6015
    %6198 = vmatmul.mubr.bf16.gmra.mrb[0].mxu0 %v6014
    %v6199 = vpop.f32.mrb[0].mxu0
    %v6200 = vadd.f32 %v6163, %v6199
    %v6201 = vpop.f32.mrb[0].mxu0
    %v6202 = vpop.f32.mrb[0].mxu0
    %v6203 = vpop.f32.mrb[0].mxu0
    %6204 = vdwg.mxu0
    %6205 = vmatprep.subr.bf16.mxu0 0
    %6206 = vmatpush1.bf16.msra.mxu0 %v6046
    %6207 = vmatprep.subr.bf16.mxu0 0
    %6208 = vmatpush1.bf16.msra.mxu0 %v6047
    %6209 = vmatprep.subr.bf16.mxu0 0
    %6210 = vmatpush1.bf16.msra.mxu0 %v6048
    %6211 = vmatprep.subr.bf16.mxu0 0
    %6212 = vmatpush1.bf16.msra.mxu0 %v6049
    %6213 = vmatprep.subr.bf16.mxu0 0
    %6214 = vmatpush1.bf16.msra.mxu0 %v6050
    %6215 = vmatprep.subr.bf16.mxu0 0
    %6216 = vmatpush1.bf16.msra.mxu0 %v6051
    %6217 = vmatprep.subr.bf16.mxu0 0
    %6218 = vmatpush1.bf16.msra.mxu0 %v6052
    %6219 = vmatprep.subr.bf16.mxu0 0
    %6220 = vmatpush1.bf16.msra.mxu0 %v6053
    %6221 = vmatprep.subr.bf16.mxu0 0
    %6222 = vmatpush1.bf16.msra.mxu0 %v6054
    %6223 = vmatprep.subr.bf16.mxu0 0
    %6224 = vmatpush1.bf16.msra.mxu0 %v6055
    %6225 = vmatprep.subr.bf16.mxu0 0
    %6226 = vmatpush1.bf16.msra.mxu0 %v6056
    %6227 = vmatprep.subr.bf16.mxu0 0
    %6228 = vmatpush1.bf16.msra.mxu0 %v6057
    %6229 = vmatprep.subr.bf16.mxu0 0
    %6230 = vmatpush1.bf16.msra.mxu0 %v6058
    %6231 = vmatprep.subr.bf16.mxu0 0
    %6232 = vmatpush1.bf16.msra.mxu0 %v6059
    %6233 = vmatprep.subr.bf16.mxu0 0
    %6234 = vmatpush1.bf16.msra.mxu0 %v6060
    %6235 = vmatprep.subr.bf16.mxu0 0
    %6236 = vmatpush1.bf16.msra.mxu0 %v6061
    %6237 = vmatprep.mubr.bf16.mxu0 %v6017
    %6238 = vmatmul.mubr.bf16.gmra.mrb[0].mxu0 %v6016
    %v6239 = vpop.f32.mrb[0].mxu0
    %v6240 = vadd.f32 %v6200, %v6239
    %v6241 = vpop.f32.mrb[0].mxu0
    %v6242 = vpop.f32.mrb[0].mxu0
    %v6243 = vpop.f32.mrb[0].mxu0
    %6244 = vdwg.mxu0
    %6245 = vmatprep.subr.bf16.mxu0 0
    %6246 = vmatpush1.bf16.msra.mxu0 %v6062
    %6247 = vmatprep.subr.bf16.mxu0 0
    %6248 = vmatpush1.bf16.msra.mxu0 %v6063
    %6249 = vmatprep.subr.bf16.mxu0 0
    %6250 = vmatpush1.bf16.msra.mxu0 %v6064
    %6251 = vmatprep.subr.bf16.mxu0 0
    %6252 = vmatpush1.bf16.msra.mxu0 %v6065
    %6253 = vmatprep.subr.bf16.mxu0 0
    %6254 = vmatpush1.bf16.msra.mxu0 %v6066
    %6255 = vmatprep.subr.bf16.mxu0 0
    %6256 = vmatpush1.bf16.msra.mxu0 %v6067
    %6257 = vmatprep.subr.bf16.mxu0 0
    %6258 = vmatpush1.bf16.msra.mxu0 %v6068
    %6259 = vmatprep.subr.bf16.mxu0 0
    %6260 = vmatpush1.bf16.msra.mxu0 %v6069
    %6261 = vmatprep.subr.bf16.mxu0 0
    %6262 = vmatpush1.bf16.msra.mxu0 %v6070
    %6263 = vmatprep.subr.bf16.mxu0 0
    %6264 = vmatpush1.bf16.msra.mxu0 %v6071
    %6265 = vmatprep.subr.bf16.mxu0 0
    %6266 = vmatpush1.bf16.msra.mxu0 %v6072
    %6267 = vmatprep.subr.bf16.mxu0 0
    %6268 = vmatpush1.bf16.msra.mxu0 %v6073
    %6269 = vmatprep.subr.bf16.mxu0 0
    %6270 = vmatpush1.bf16.msra.mxu0 %v6074
    %6271 = vmatprep.subr.bf16.mxu0 0
    %6272 = vmatpush1.bf16.msra.mxu0 %v6075
    %6273 = vmatprep.subr.bf16.mxu0 0
    %6274 = vmatpush1.bf16.msra.mxu0 %v6076
    %6275 = vmatprep.subr.bf16.mxu0 0
    %6276 = vmatpush1.bf16.msra.mxu0 %v6077
    %6277 = vmatprep.mubr.bf16.mxu0 %v6019
    %6278 = vmatmul.mubr.bf16.gmra.mrb[0].mxu0 %v6018
    %v6279 = vpop.f32.mrb[0].mxu0
    %v6280 = vadd.f32 %v6240, %v6279
    %v6281 = vpop.f32.mrb[0].mxu0
    %v6282 = vpop.f32.mrb[0].mxu0
    %v6283 = vpop.f32.mrb[0].mxu0
    %6284 = vdwg.mxu0
    %6285 = vmatprep.subr.bf16.mxu0 0
    %6286 = vmatpush1.bf16.msra.mxu0 %v6078
    %6287 = vmatprep.subr.bf16.mxu0 0
    %6288 = vmatpush1.bf16.msra.mxu0 %v6079
    %6289 = vmatprep.subr.bf16.mxu0 0
    %6290 = vmatpush1.bf16.msra.mxu0 %v6080
    %6291 = vmatprep.subr.bf16.mxu0 0
    %6292 = vmatpush1.bf16.msra.mxu0 %v6081
    %6293 = vmatprep.subr.bf16.mxu0 0
    %6294 = vmatpush1.bf16.msra.mxu0 %v6082
    %6295 = vmatprep.subr.bf16.mxu0 0
    %6296 = vmatpush1.bf16.msra.mxu0 %v6083
    %6297 = vmatprep.subr.bf16.mxu0 0
    %6298 = vmatpush1.bf16.msra.mxu0 %v6084
    %6299 = vmatprep.subr.bf16.mxu0 0
    %6300 = vmatpush1.bf16.msra.mxu0 %v6085
    %6301 = vmatprep.subr.bf16.mxu0 0
    %6302 = vmatpush1.bf16.msra.mxu0 %v6086
    %6303 = vmatprep.subr.bf16.mxu0 0
    %6304 = vmatpush1.bf16.msra.mxu0 %v6087
    %6305 = vmatprep.subr.bf16.mxu0 0
    %6306 = vmatpush1.bf16.msra.mxu0 %v6088
    %6307 = vmatprep.subr.bf16.mxu0 0
    %6308 = vmatpush1.bf16.msra.mxu0 %v6089
    %6309 = vmatprep.subr.bf16.mxu0 0
    %6310 = vmatpush1.bf16.msra.mxu0 %v6090
    %6311 = vmatprep.subr.bf16.mxu0 0
    %6312 = vmatpush1.bf16.msra.mxu0 %v6091
    %6313 = vmatprep.subr.bf16.mxu0 0
    %6314 = vmatpush1.bf16.msra.mxu0 %v6092
    %6315 = vmatprep.subr.bf16.mxu0 0
    %6316 = vmatpush1.bf16.msra.mxu0 %v6093
    %6317 = vmatprep.mubr.bf16.mxu0 %v6021
    %6318 = vmatmul.mubr.bf16.gmra.mrb[0].mxu0 %v6020
    %v6319 = vpop.f32.mrb[0].mxu0
    %v6320 = vadd.f32 %v6280, %v6319
    %v6321 = vpop.f32.mrb[0].mxu0
    %v6322 = vpop.f32.mrb[0].mxu0
    %v6323 = vpop.f32.mrb[0].mxu0
    %6324 = vdwg.mxu0
    %6325 = vmatprep.subr.bf16.mxu0 0
    %6326 = vmatpush1.bf16.msra.mxu0 %v6094
    %6327 = vmatprep.subr.bf16.mxu0 0
    %6328 = vmatpush1.bf16.msra.mxu0 %v6095
    %6329 = vmatprep.subr.bf16.mxu0 0
    %6330 = vmatpush1.bf16.msra.mxu0 %v6096
    %6331 = vmatprep.subr.bf16.mxu0 0
    %6332 = vmatpush1.bf16.msra.mxu0 %v6097
    %6333 = vmatprep.subr.bf16.mxu0 0
    %6334 = vmatpush1.bf16.msra.mxu0 %v6098
    %6335 = vmatprep.subr.bf16.mxu0 0
    %6336 = vmatpush1.bf16.msra.mxu0 %v6099
    %6337 = vmatprep.subr.bf16.mxu0 0
    %6338 = vmatpush1.bf16.msra.mxu0 %v6100
    %6339 = vmatprep.subr.bf16.mxu0 0
    %6340 = vmatpush1.bf16.msra.mxu0 %v6101
    %6341 = vmatprep.subr.bf16.mxu0 0
    %6342 = vmatpush1.bf16.msra.mxu0 %v6102
    %6343 = vmatprep.subr.bf16.mxu0 0
    %6344 = vmatpush1.bf16.msra.mxu0 %v6103
    %6345 = vmatprep.subr.bf16.mxu0 0
    %6346 = vmatpush1.bf16.msra.mxu0 %v6104
    %6347 = vmatprep.subr.bf16.mxu0 0
    %6348 = vmatpush1.bf16.msra.mxu0 %v6105
    %6349 = vmatprep.subr.bf16.mxu0 0
    %6350 = vmatpush1.bf16.msra.mxu0 %v6106
    %6351 = vmatprep.subr.bf16.mxu0 0
    %6352 = vmatpush1.bf16.msra.mxu0 %v6107
    %6353 = vmatprep.subr.bf16.mxu0 0
    %6354 = vmatpush1.bf16.msra.mxu0 %v6108
    %6355 = vmatprep.subr.bf16.mxu0 0
    %6356 = vmatpush1.bf16.msra.mxu0 %v6109
    %6357 = vmatprep.mubr.bf16.mxu0 %v6023
    %6358 = vmatmul.mubr.bf16.gmra.mrb[0].mxu0 %v6022
    %v6359 = vpop.f32.mrb[0].mxu0
    %v6360 = vadd.f32 %v6320, %v6359
    %v6361 = vpop.f32.mrb[0].mxu0
    %v6362 = vpop.f32.mrb[0].mxu0
    %v6363 = vpop.f32.mrb[0].mxu0
    %6364 = vdwg.mxu0
    %6365 = vmatprep.subr.bf16.mxu0 0
    %6366 = vmatpush1.bf16.msra.mxu0 %v6110
    %6367 = vmatprep.subr.bf16.mxu0 0
    %6368 = vmatpush1.bf16.msra.mxu0 %v6111
    %6369 = vmatprep.subr.bf16.mxu0 0
    %6370 = vmatpush1.bf16.msra.mxu0 %v6112
    %6371 = vmatprep.subr.bf16.mxu0 0
    %6372 = vmatpush1.bf16.msra.mxu0 %v6113
    %6373 = vmatprep.subr.bf16.mxu0 0
    %6374 = vmatpush1.bf16.msra.mxu0 %v6114
    %6375 = vmatprep.subr.bf16.mxu0 0
    %6376 = vmatpush1.bf16.msra.mxu0 %v6115
    %6377 = vmatprep.subr.bf16.mxu0 0
    %6378 = vmatpush1.bf16.msra.mxu0 %v6116
    %6379 = vmatprep.subr.bf16.mxu0 0
    %6380 = vmatpush1.bf16.msra.mxu0 %v6117
    %6381 = vmatprep.subr.bf16.mxu0 0
    %6382 = vmatpush1.bf16.msra.mxu0 %v6118
    %6383 = vmatprep.subr.bf16.mxu0 0
    %6384 = vmatpush1.bf16.msra.mxu0 %v6119
    %6385 = vmatprep.subr.bf16.mxu0 0
    %6386 = vmatpush1.bf16.msra.mxu0 %v6120
    %6387 = vmatprep.subr.bf16.mxu0 0
    %6388 = vmatpush1.bf16.msra.mxu0 %v6121
    %6389 = vmatprep.subr.bf16.mxu0 0
    %6390 = vmatpush1.bf16.msra.mxu0 %v6122
    %6391 = vmatprep.subr.bf16.mxu0 0
    %6392 = vmatpush1.bf16.msra.mxu0 %v6123
    %6393 = vmatprep.subr.bf16.mxu0 0
    %6394 = vmatpush1.bf16.msra.mxu0 %v6124
    %6395 = vmatprep.subr.bf16.mxu0 0
    %6396 = vmatpush1.bf16.msra.mxu0 %v6125
    %6397 = vmatprep.mubr.bf16.mxu0 %v6025
    %6398 = vmatmul.mubr.bf16.gmra.mrb[0].mxu0 %v6024
    %v6399 = vpop.f32.mrb[0].mxu0
    %v6400 = vadd.f32 %v6360, %v6399
    %v6401 = vpop.f32.mrb[0].mxu0
    %v6402 = vpop.f32.mrb[0].mxu0
    %v6403 = vpop.f32.mrb[0].mxu0
    %6404 = vdwg.mxu0
    %6405 = vmatprep.subr.bf16.mxu0 0
    %6406 = vmatpush1.bf16.msra.mxu0 %v6126
    %6407 = vmatprep.subr.bf16.mxu0 0
    %6408 = vmatpush1.bf16.msra.mxu0 %v6127
    %6409 = vmatprep.subr.bf16.mxu0 0
    %6410 = vmatpush1.bf16.msra.mxu0 %v6128
    %6411 = vmatprep.subr.bf16.mxu0 0
    %6412 = vmatpush1.bf16.msra.mxu0 %v6129
    %6413 = vmatprep.subr.bf16.mxu0 0
    %6414 = vmatpush1.bf16.msra.mxu0 %v6130
    %6415 = vmatprep.subr.bf16.mxu0 0
    %6416 = vmatpush1.bf16.msra.mxu0 %v6131
    %6417 = vmatprep.subr.bf16.mxu0 0
    %6418 = vmatpush1.bf16.msra.mxu0 %v6132
    %6419 = vmatprep.subr.bf16.mxu0 0
    %6420 = vmatpush1.bf16.msra.mxu0 %v6133
    %6421 = vmatprep.subr.bf16.mxu0 0
    %6422 = vmatpush1.bf16.msra.mxu0 %v6134
    %6423 = vmatprep.subr.bf16.mxu0 0
    %6424 = vmatpush1.bf16.msra.mxu0 %v6135
    %6425 = vmatprep.subr.bf16.mxu0 0
    %6426 = vmatpush1.bf16.msra.mxu0 %v6136
    %6427 = vmatprep.subr.bf16.mxu0 0
    %6428 = vmatpush1.bf16.msra.mxu0 %v6137
    %6429 = vmatprep.subr.bf16.mxu0 0
    %6430 = vmatpush1.bf16.msra.mxu0 %v6138
    %6431 = vmatprep.subr.bf16.mxu0 0
    %6432 = vmatpush1.bf16.msra.mxu0 %v6139
    %6433 = vmatprep.subr.bf16.mxu0 0
    %6434 = vmatpush1.bf16.msra.mxu0 %v6140
    %6435 = vmatprep.subr.bf16.mxu0 0
    %6436 = vmatpush1.bf16.msra.mxu0 %v6141
    %6437 = vmatprep.mubr.bf16.mxu0 %v6027
    %6438 = vmatmul.mubr.bf16.gmra.mrb[0].mxu0 %v6026
    %v6439 = vpop.f32.mrb[0].mxu0
    %v6440 = vadd.f32 %v6400, %v6439
    %v6441 = vpop.f32.mrb[0].mxu0
    %v6442 = vpop.f32.mrb[0].mxu0
    %v6443 = vpop.f32.mrb[0].mxu0
    %6444 = vdwg.mxu0
    %6445 = vmatprep.subr.bf16.mxu0 0
    %6446 = vmatpush1.bf16.msra.mxu0 %v6142
    %6447 = vmatprep.subr.bf16.mxu0 0
    %6448 = vmatpush1.bf16.msra.mxu0 %v6143
    %6449 = vmatprep.subr.bf16.mxu0 0
    %6450 = vmatpush1.bf16.msra.mxu0 %v6144
    %6451 = vmatprep.subr.bf16.mxu0 0
    %6452 = vmatpush1.bf16.msra.mxu0 %v6145
    %6453 = vmatprep.subr.bf16.mxu0 0
    %6454 = vmatpush1.bf16.msra.mxu0 %v6146
    %6455 = vmatprep.subr.bf16.mxu0 0
    %6456 = vmatpush1.bf16.msra.mxu0 %v6147
    %6457 = vmatprep.subr.bf16.mxu0 0
    %6458 = vmatpush1.bf16.msra.mxu0 %v6148
    %6459 = vmatprep.subr.bf16.mxu0 0
    %6460 = vmatpush1.bf16.msra.mxu0 %v6149
    %6461 = vmatprep.subr.bf16.mxu0 0
    %6462 = vmatpush1.bf16.msra.mxu0 %v6150
    %6463 = vmatprep.subr.bf16.mxu0 0
    %6464 = vmatpush1.bf16.msra.mxu0 %v6151
    %6465 = vmatprep.subr.bf16.mxu0 0
    %6466 = vmatpush1.bf16.msra.mxu0 %v6152
    %6467 = vmatprep.subr.bf16.mxu0 0
    %6468 = vmatpush1.bf16.msra.mxu0 %v6153
    %6469 = vmatprep.subr.bf16.mxu0 0
    %6470 = vmatpush1.bf16.msra.mxu0 %v6154
    %6471 = vmatprep.subr.bf16.mxu0 0
    %6472 = vmatpush1.bf16.msra.mxu0 %v6155
    %6473 = vmatprep.subr.bf16.mxu0 0
    %6474 = vmatpush1.bf16.msra.mxu0 %v6156
    %6475 = vmatprep.subr.bf16.mxu0 0
    %6476 = vmatpush1.bf16.msra.mxu0 %v6157
    %6477 = vmatprep.mubr.bf16.mxu0 %v6029
    %6478 = vmatmul.mubr.bf16.gmra.mrb[0].mxu0 %v6028
    %v6479 = vpop.f32.mrb[0].mxu0
    %v6480 = vadd.f32 %v6440, %v6479
    %v6481 = vpop.f32.mrb[0].mxu0
    %v6482 = vpop.f32.mrb[0].mxu0
    %v6483 = vpop.f32.mrb[0].mxu0
    %6484 = vdwg.mxu0
    %v6485 = vadd.f32 %v3238, %v6480
    %s6486 = smul.u32 4, 16
    %s6487 = smul.u32 %s6486, 16
    %s6488 = sshll.u32 %s6487, 4
    %6489 = dma.done %s1013, %s6488
    %s6490 = sshll.u32 %s5518, 4
    %6491 = dma.done %s2086, %s6490
    %v6492 = vld [vmem:[#allocation33] sm:$0x1]
    %v6493 = vld [vmem:[#allocation34] sm:$0x1]
    %6494 = vadd.xlane.f32.xlu0 %v5512
    %v6495 = vpop.xlane.xlu0 %6494
    %v6496 = vmul.f32 %v6495, %v3244
    %v6497 = vsub.f32 %v5512, %v6496
    %v6498 = vmul.f32 %v6497, %v6497
    %6499 = vadd.xlane.f32.xlu0 %v6498
    %v6500 = vpop.xlane.xlu0 %6499
    %v6501 = vmul.f32 %v6500, %v3244
    %v6502 = vadd.f32 %v6501, 1e-05
    %v6503 = vrsqrt.pop %v6502
    %v6504 = vmul.f32 %v6497, %v6503
    %v6506 = vlaneseq
    %v6507 = vshrl.u32 %v6506, 7
    %v6508 = vsub.s32 0, %v6507
    %v6509 = vrot.slane %v6492, %v6508
    %v6511 = vmul.f32 %v6504, %v6509
    %v6513 = vlaneseq
    %v6514 = vshrl.u32 %v6513, 7
    %v6515 = vsub.s32 0, %v6514
    %v6516 = vrot.slane %v6493, %v6515
    %v6518 = vadd.f32 %v6511, %v6516
    %v6519 = vpack.c.bf16 %v6518, %v6518
    %v6520 = vld [vmem:[#allocation4] sm:$0xff]
    %v6521 = vld [vmem:[#allocation4 + $0x8] sm:$0xff]
    %v6522 = vld [vmem:[#allocation4 + $0x10] sm:$0xff]
    %v6523 = vld [vmem:[#allocation4 + $0x18] sm:$0xff]
    %v6524 = vld [vmem:[#allocation4 + $0x20] sm:$0xff]
    %v6525 = vld [vmem:[#allocation4 + $0x28] sm:$0xff]
    %v6526 = vld [vmem:[#allocation4 + $0x30] sm:$0xff]
    %v6527 = vld [vmem:[#allocation4 + $0x38] sm:$0xff]
    %v6528 = vld [vmem:[#allocation4 + $0x40] sm:$0xff]
    %v6529 = vld [vmem:[#allocation4 + $0x48] sm:$0xff]
    %v6530 = vld [vmem:[#allocation4 + $0x50] sm:$0xff]
    %v6531 = vld [vmem:[#allocation4 + $0x58] sm:$0xff]
    %v6532 = vld [vmem:[#allocation4 + $0x60] sm:$0xff]
    %v6533 = vld [vmem:[#allocation4 + $0x68] sm:$0xff]
    %v6534 = vld [vmem:[#allocation4 + $0x70] sm:$0xff]
    %v6535 = vld [vmem:[#allocation4 + $0x78] sm:$0xff]
    %v6536 = vld [vmem:[#allocation4 + $0x80] sm:$0xff]
    %v6537 = vld [vmem:[#allocation4 + $0x88] sm:$0xff]
    %v6538 = vld [vmem:[#allocation4 + $0x90] sm:$0xff]
    %v6539 = vld [vmem:[#allocation4 + $0x98] sm:$0xff]
    %v6540 = vld [vmem:[#allocation4 + $0xa0] sm:$0xff]
    %v6541 = vld [vmem:[#allocation4 + $0xa8] sm:$0xff]
    %v6542 = vld [vmem:[#allocation4 + $0xb0] sm:$0xff]
    %v6543 = vld [vmem:[#allocation4 + $0xb8] sm:$0xff]
    %v6544 = vld [vmem:[#allocation4 + $0xc0] sm:$0xff]
    %v6545 = vld [vmem:[#allocation4 + $0xc8] sm:$0xff]
    %v6546 = vld [vmem:[#allocation4 + $0xd0] sm:$0xff]
    %v6547 = vld [vmem:[#allocation4 + $0xd8] sm:$0xff]
    %v6548 = vld [vmem:[#allocation4 + $0xe0] sm:$0xff]
    %v6549 = vld [vmem:[#allocation4 + $0xe8] sm:$0xff]
    %v6550 = vld [vmem:[#allocation4 + $0xf0] sm:$0xff]
    %v6551 = vld [vmem:[#allocation4 + $0xf8] sm:$0xff]
    %v6552 = vld [vmem:[#allocation4 + $0x100] sm:$0xff]
    %v6553 = vld [vmem:[#allocation4 + $0x108] sm:$0xff]
    %v6554 = vld [vmem:[#allocation4 + $0x110] sm:$0xff]
    %v6555 = vld [vmem:[#allocation4 + $0x118] sm:$0xff]
    %v6556 = vld [vmem:[#allocation4 + $0x120] sm:$0xff]
    %v6557 = vld [vmem:[#allocation4 + $0x128] sm:$0xff]
    %v6558 = vld [vmem:[#allocation4 + $0x130] sm:$0xff]
    %v6559 = vld [vmem:[#allocation4 + $0x138] sm:$0xff]
    %v6560 = vld [vmem:[#allocation4 + $0x140] sm:$0xff]
    %v6561 = vld [vmem:[#allocation4 + $0x148] sm:$0xff]
    %v6562 = vld [vmem:[#allocation4 + $0x150] sm:$0xff]
    %v6563 = vld [vmem:[#allocation4 + $0x158] sm:$0xff]
    %v6564 = vld [vmem:[#allocation4 + $0x160] sm:$0xff]
    %v6565 = vld [vmem:[#allocation4 + $0x168] sm:$0xff]
    %v6566 = vld [vmem:[#allocation4 + $0x170] sm:$0xff]
    %v6567 = vld [vmem:[#allocation4 + $0x178] sm:$0xff]
    %v6568 = vld [vmem:[#allocation4 + $0x180] sm:$0xff]
    %v6569 = vld [vmem:[#allocation4 + $0x188] sm:$0xff]
    %v6570 = vld [vmem:[#allocation4 + $0x190] sm:$0xff]
    %v6571 = vld [vmem:[#allocation4 + $0x198] sm:$0xff]
    %v6572 = vld [vmem:[#allocation4 + $0x1a0] sm:$0xff]
    %v6573 = vld [vmem:[#allocation4 + $0x1a8] sm:$0xff]
    %v6574 = vld [vmem:[#allocation4 + $0x1b0] sm:$0xff]
    %v6575 = vld [vmem:[#allocation4 + $0x1b8] sm:$0xff]
    %v6576 = vld [vmem:[#allocation4 + $0x1c0] sm:$0xff]
    %v6577 = vld [vmem:[#allocation4 + $0x1c8] sm:$0xff]
    %v6578 = vld [vmem:[#allocation4 + $0x1d0] sm:$0xff]
    %v6579 = vld [vmem:[#allocation4 + $0x1d8] sm:$0xff]
    %v6580 = vld [vmem:[#allocation4 + $0x1e0] sm:$0xff]
    %v6581 = vld [vmem:[#allocation4 + $0x1e8] sm:$0xff]
    %v6582 = vld [vmem:[#allocation4 + $0x1f0] sm:$0xff]
    %v6583 = vld [vmem:[#allocation4 + $0x1f8] sm:$0xff]
    %v6584 = vld [vmem:[#allocation4 + $0x200] sm:$0xff]
    %v6585 = vld [vmem:[#allocation4 + $0x208] sm:$0xff]
    %v6586 = vld [vmem:[#allocation4 + $0x210] sm:$0xff]
    %v6587 = vld [vmem:[#allocation4 + $0x218] sm:$0xff]
    %v6588 = vld [vmem:[#allocation4 + $0x220] sm:$0xff]
    %v6589 = vld [vmem:[#allocation4 + $0x228] sm:$0xff]
    %v6590 = vld [vmem:[#allocation4 + $0x230] sm:$0xff]
    %v6591 = vld [vmem:[#allocation4 + $0x238] sm:$0xff]
    %v6592 = vld [vmem:[#allocation4 + $0x240] sm:$0xff]
    %v6593 = vld [vmem:[#allocation4 + $0x248] sm:$0xff]
    %v6594 = vld [vmem:[#allocation4 + $0x250] sm:$0xff]
    %v6595 = vld [vmem:[#allocation4 + $0x258] sm:$0xff]
    %v6596 = vld [vmem:[#allocation4 + $0x260] sm:$0xff]
    %v6597 = vld [vmem:[#allocation4 + $0x268] sm:$0xff]
    %v6598 = vld [vmem:[#allocation4 + $0x270] sm:$0xff]
    %v6599 = vld [vmem:[#allocation4 + $0x278] sm:$0xff]
    %v6600 = vld [vmem:[#allocation4 + $0x280] sm:$0xff]
    %v6601 = vld [vmem:[#allocation4 + $0x288] sm:$0xff]
    %v6602 = vld [vmem:[#allocation4 + $0x290] sm:$0xff]
    %v6603 = vld [vmem:[#allocation4 + $0x298] sm:$0xff]
    %v6604 = vld [vmem:[#allocation4 + $0x2a0] sm:$0xff]
    %v6605 = vld [vmem:[#allocation4 + $0x2a8] sm:$0xff]
    %v6606 = vld [vmem:[#allocation4 + $0x2b0] sm:$0xff]
    %v6607 = vld [vmem:[#allocation4 + $0x2b8] sm:$0xff]
    %v6608 = vld [vmem:[#allocation4 + $0x2c0] sm:$0xff]
    %v6609 = vld [vmem:[#allocation4 + $0x2c8] sm:$0xff]
    %v6610 = vld [vmem:[#allocation4 + $0x2d0] sm:$0xff]
    %v6611 = vld [vmem:[#allocation4 + $0x2d8] sm:$0xff]
    %v6612 = vld [vmem:[#allocation4 + $0x2e0] sm:$0xff]
    %v6613 = vld [vmem:[#allocation4 + $0x2e8] sm:$0xff]
    %v6614 = vld [vmem:[#allocation4 + $0x2f0] sm:$0xff]
    %v6615 = vld [vmem:[#allocation4 + $0x2f8] sm:$0xff]
    %v6616 = vld [vmem:[#allocation4 + $0x300] sm:$0xff]
    %v6617 = vld [vmem:[#allocation4 + $0x308] sm:$0xff]
    %v6618 = vld [vmem:[#allocation4 + $0x310] sm:$0xff]
    %v6619 = vld [vmem:[#allocation4 + $0x318] sm:$0xff]
    %v6620 = vld [vmem:[#allocation4 + $0x320] sm:$0xff]
    %v6621 = vld [vmem:[#allocation4 + $0x328] sm:$0xff]
    %v6622 = vld [vmem:[#allocation4 + $0x330] sm:$0xff]
    %v6623 = vld [vmem:[#allocation4 + $0x338] sm:$0xff]
    %v6624 = vld [vmem:[#allocation4 + $0x340] sm:$0xff]
    %v6625 = vld [vmem:[#allocation4 + $0x348] sm:$0xff]
    %v6626 = vld [vmem:[#allocation4 + $0x350] sm:$0xff]
    %v6627 = vld [vmem:[#allocation4 + $0x358] sm:$0xff]
    %v6628 = vld [vmem:[#allocation4 + $0x360] sm:$0xff]
    %v6629 = vld [vmem:[#allocation4 + $0x368] sm:$0xff]
    %v6630 = vld [vmem:[#allocation4 + $0x370] sm:$0xff]
    %v6631 = vld [vmem:[#allocation4 + $0x378] sm:$0xff]
    %v6632 = vld [vmem:[#allocation4 + $0x380] sm:$0xff]
    %v6633 = vld [vmem:[#allocation4 + $0x388] sm:$0xff]
    %v6634 = vld [vmem:[#allocation4 + $0x390] sm:$0xff]
    %v6635 = vld [vmem:[#allocation4 + $0x398] sm:$0xff]
    %v6636 = vld [vmem:[#allocation4 + $0x3a0] sm:$0xff]
    %v6637 = vld [vmem:[#allocation4 + $0x3a8] sm:$0xff]
    %v6638 = vld [vmem:[#allocation4 + $0x3b0] sm:$0xff]
    %v6639 = vld [vmem:[#allocation4 + $0x3b8] sm:$0xff]
    %v6640 = vld [vmem:[#allocation4 + $0x3c0] sm:$0xff]
    %v6641 = vld [vmem:[#allocation4 + $0x3c8] sm:$0xff]
    %v6642 = vld [vmem:[#allocation4 + $0x3d0] sm:$0xff]
    %v6643 = vld [vmem:[#allocation4 + $0x3d8] sm:$0xff]
    %v6644 = vld [vmem:[#allocation4 + $0x3e0] sm:$0xff]
    %v6645 = vld [vmem:[#allocation4 + $0x3e8] sm:$0xff]
    %v6646 = vld [vmem:[#allocation4 + $0x3f0] sm:$0xff]
    %v6647 = vld [vmem:[#allocation4 + $0x3f8] sm:$0xff]
    %v6648 = vld [vmem:[#allocation36] sm:$0xff]
    %v6649 = vld [vmem:[#allocation36 + $0x8] sm:$0xff]
    %v6652 = vlaneseq
    %v6653 = vshrl.u32 %v6652, 7
    %v6654 = vsub.s32 0, %v6653
    %v6655 = vrot.slane %v6648, %v6654
    %v6656 = vlaneseq
    %v6657 = vshrl.u32 %v6656, 7
    %v6658 = vsub.s32 1, %v6657
    %v6659 = vrot.slane %v6648, %v6658
    %v6660 = vlaneseq
    %v6661 = vshrl.u32 %v6660, 7
    %v6662 = vsub.s32 2, %v6661
    %v6663 = vrot.slane %v6648, %v6662
    %v6664 = vlaneseq
    %v6665 = vshrl.u32 %v6664, 7
    %v6666 = vsub.s32 3, %v6665
    %v6667 = vrot.slane %v6648, %v6666
    %v6668 = vlaneseq
    %v6669 = vshrl.u32 %v6668, 7
    %v6670 = vsub.s32 4, %v6669
    %v6671 = vrot.slane %v6648, %v6670
    %v6672 = vlaneseq
    %v6673 = vshrl.u32 %v6672, 7
    %v6674 = vsub.s32 5, %v6673
    %v6675 = vrot.slane %v6648, %v6674
    %v6676 = vlaneseq
    %v6677 = vshrl.u32 %v6676, 7
    %v6678 = vsub.s32 6, %v6677
    %v6679 = vrot.slane %v6648, %v6678
    %v6680 = vlaneseq
    %v6681 = vshrl.u32 %v6680, 7
    %v6682 = vsub.s32 7, %v6681
    %v6683 = vrot.slane %v6648, %v6682
    %v6684 = vlaneseq
    %v6685 = vshrl.u32 %v6684, 7
    %v6686 = vsub.s32 0, %v6685
    %v6687 = vrot.slane %v6649, %v6686
    %v6688 = vlaneseq
    %v6689 = vshrl.u32 %v6688, 7
    %v6690 = vsub.s32 1, %v6689
    %v6691 = vrot.slane %v6649, %v6690
    %v6692 = vlaneseq
    %v6693 = vshrl.u32 %v6692, 7
    %v6694 = vsub.s32 2, %v6693
    %v6695 = vrot.slane %v6649, %v6694
    %v6696 = vlaneseq
    %v6697 = vshrl.u32 %v6696, 7
    %v6698 = vsub.s32 3, %v6697
    %v6699 = vrot.slane %v6649, %v6698
    %v6700 = vlaneseq
    %v6701 = vshrl.u32 %v6700, 7
    %v6702 = vsub.s32 4, %v6701
    %v6703 = vrot.slane %v6649, %v6702
    %v6704 = vlaneseq
    %v6705 = vshrl.u32 %v6704, 7
    %v6706 = vsub.s32 5, %v6705
    %v6707 = vrot.slane %v6649, %v6706
    %v6708 = vlaneseq
    %v6709 = vshrl.u32 %v6708, 7
    %v6710 = vsub.s32 6, %v6709
    %v6711 = vrot.slane %v6649, %v6710
    %v6712 = vlaneseq
    %v6713 = vshrl.u32 %v6712, 7
    %v6714 = vsub.s32 7, %v6713
    %v6715 = vrot.slane %v6649, %v6714
    %6732 = vmatprep.subr.bf16.mxu0 %v6521
    %6733 = vmatpush1.bf16.msra.mxu0 %v6520
    %6734 = vmatprep.subr.bf16.mxu0 %v6537
    %6735 = vmatpush1.bf16.msra.mxu0 %v6536
    %6736 = vmatprep.subr.bf16.mxu0 %v6553
    %6737 = vmatpush1.bf16.msra.mxu0 %v6552
    %6738 = vmatprep.subr.bf16.mxu0 %v6569
    %6739 = vmatpush1.bf16.msra.mxu0 %v6568
    %6740 = vmatprep.subr.bf16.mxu0 %v6585
    %6741 = vmatpush1.bf16.msra.mxu0 %v6584
    %6742 = vmatprep.subr.bf16.mxu0 %v6601
    %6743 = vmatpush1.bf16.msra.mxu0 %v6600
    %6744 = vmatprep.subr.bf16.mxu0 %v6617
    %6745 = vmatpush1.bf16.msra.mxu0 %v6616
    %6746 = vmatprep.subr.bf16.mxu0 %v6633
    %6747 = vmatpush1.bf16.msra.mxu0 %v6632
    %6748 = vmatprep.subr.bf16.mxu0 0
    %6749 = vmatpush1.bf16.msra.mxu0 0
    %6750 = vmatprep.subr.bf16.mxu0 0
    %6751 = vmatpush1.bf16.msra.mxu0 0
    %6752 = vmatprep.subr.bf16.mxu0 0
    %6753 = vmatpush1.bf16.msra.mxu0 0
    %6754 = vmatprep.subr.bf16.mxu0 0
    %6755 = vmatpush1.bf16.msra.mxu0 0
    %6756 = vmatprep.subr.bf16.mxu0 0
    %6757 = vmatpush1.bf16.msra.mxu0 0
    %6758 = vmatprep.subr.bf16.mxu0 0
    %6759 = vmatpush1.bf16.msra.mxu0 0
    %6760 = vmatprep.subr.bf16.mxu0 0
    %6761 = vmatpush1.bf16.msra.mxu0 0
    %6762 = vmatprep.subr.bf16.mxu0 0
    %6763 = vmatpush1.bf16.msra.mxu0 0
    %6764 = vmatprep.mubr.bf16.mxu0 0
    %6765 = vmatmul.mubr.bf16.gmra.mrb[0].mxu0 %v6519
    %v6766 = vpop.f32.mrb[0].mxu0
    %v6767 = vadd.f32 %v6655, %v6766
    %v6768 = vpop.f32.mrb[0].mxu0
    %v6769 = vadd.f32 %v6659, %v6768
    %v6770 = vpop.f32.mrb[0].mxu0
    %v6771 = vpop.f32.mrb[0].mxu0
    %6772 = vdwg.mxu0
    %6773 = vmatprep.subr.bf16.mxu0 %v6523
    %6774 = vmatpush1.bf16.msra.mxu0 %v6522
    %6775 = vmatprep.subr.bf16.mxu0 %v6539
    %6776 = vmatpush1.bf16.msra.mxu0 %v6538
    %6777 = vmatprep.subr.bf16.mxu0 %v6555
    %6778 = vmatpush1.bf16.msra.mxu0 %v6554
    %6779 = vmatprep.subr.bf16.mxu0 %v6571
    %6780 = vmatpush1.bf16.msra.mxu0 %v6570
    %6781 = vmatprep.subr.bf16.mxu0 %v6587
    %6782 = vmatpush1.bf16.msra.mxu0 %v6586
    %6783 = vmatprep.subr.bf16.mxu0 %v6603
    %6784 = vmatpush1.bf16.msra.mxu0 %v6602
    %6785 = vmatprep.subr.bf16.mxu0 %v6619
    %6786 = vmatpush1.bf16.msra.mxu0 %v6618
    %6787 = vmatprep.subr.bf16.mxu0 %v6635
    %6788 = vmatpush1.bf16.msra.mxu0 %v6634
    %6789 = vmatprep.subr.bf16.mxu0 0
    %6790 = vmatpush1.bf16.msra.mxu0 0
    %6791 = vmatprep.subr.bf16.mxu0 0
    %6792 = vmatpush1.bf16.msra.mxu0 0
    %6793 = vmatprep.subr.bf16.mxu0 0
    %6794 = vmatpush1.bf16.msra.mxu0 0
    %6795 = vmatprep.subr.bf16.mxu0 0
    %6796 = vmatpush1.bf16.msra.mxu0 0
    %6797 = vmatprep.subr.bf16.mxu0 0
    %6798 = vmatpush1.bf16.msra.mxu0 0
    %6799 = vmatprep.subr.bf16.mxu0 0
    %6800 = vmatpush1.bf16.msra.mxu0 0
    %6801 = vmatprep.subr.bf16.mxu0 0
    %6802 = vmatpush1.bf16.msra.mxu0 0
    %6803 = vmatprep.subr.bf16.mxu0 0
    %6804 = vmatpush1.bf16.msra.mxu0 0
    %6805 = vmatprep.mubr.bf16.mxu0 0
    %6806 = vmatmul.mubr.bf16.gmra.mrb[0].mxu0 %v6519
    %v6807 = vpop.f32.mrb[0].mxu0
    %v6808 = vadd.f32 %v6663, %v6807
    %v6809 = vpop.f32.mrb[0].mxu0
    %v6810 = vadd.f32 %v6667, %v6809
    %v6811 = vpop.f32.mrb[0].mxu0
    %v6812 = vpop.f32.mrb[0].mxu0
    %6813 = vdwg.mxu0
    %6814 = vmatprep.subr.bf16.mxu0 %v6525
    %6815 = vmatpush1.bf16.msra.mxu0 %v6524
    %6816 = vmatprep.subr.bf16.mxu0 %v6541
    %6817 = vmatpush1.bf16.msra.mxu0 %v6540
    %6818 = vmatprep.subr.bf16.mxu0 %v6557
    %6819 = vmatpush1.bf16.msra.mxu0 %v6556
    %6820 = vmatprep.subr.bf16.mxu0 %v6573
    %6821 = vmatpush1.bf16.msra.mxu0 %v6572
    %6822 = vmatprep.subr.bf16.mxu0 %v6589
    %6823 = vmatpush1.bf16.msra.mxu0 %v6588
    %6824 = vmatprep.subr.bf16.mxu0 %v6605
    %6825 = vmatpush1.bf16.msra.mxu0 %v6604
    %6826 = vmatprep.subr.bf16.mxu0 %v6621
    %6827 = vmatpush1.bf16.msra.mxu0 %v6620
    %6828 = vmatprep.subr.bf16.mxu0 %v6637
    %6829 = vmatpush1.bf16.msra.mxu0 %v6636
    %6830 = vmatprep.subr.bf16.mxu0 0
    %6831 = vmatpush1.bf16.msra.mxu0 0
    %6832 = vmatprep.subr.bf16.mxu0 0
    %6833 = vmatpush1.bf16.msra.mxu0 0
    %6834 = vmatprep.subr.bf16.mxu0 0
    %6835 = vmatpush1.bf16.msra.mxu0 0
    %6836 = vmatprep.subr.bf16.mxu0 0
    %6837 = vmatpush1.bf16.msra.mxu0 0
    %6838 = vmatprep.subr.bf16.mxu0 0
    %6839 = vmatpush1.bf16.msra.mxu0 0
    %6840 = vmatprep.subr.bf16.mxu0 0
    %6841 = vmatpush1.bf16.msra.mxu0 0
    %6842 = vmatprep.subr.bf16.mxu0 0
    %6843 = vmatpush1.bf16.msra.mxu0 0
    %6844 = vmatprep.subr.bf16.mxu0 0
    %6845 = vmatpush1.bf16.msra.mxu0 0
    %6846 = vmatprep.mubr.bf16.mxu0 0
    %6847 = vmatmul.mubr.bf16.gmra.mrb[0].mxu0 %v6519
    %v6848 = vpop.f32.mrb[0].mxu0
    %v6849 = vadd.f32 %v6671, %v6848
    %v6850 = vpop.f32.mrb[0].mxu0
    %v6851 = vadd.f32 %v6675, %v6850
    %v6852 = vpop.f32.mrb[0].mxu0
    %v6853 = vpop.f32.mrb[0].mxu0
    %6854 = vdwg.mxu0
    %6855 = vmatprep.subr.bf16.mxu0 %v6527
    %6856 = vmatpush1.bf16.msra.mxu0 %v6526
    %6857 = vmatprep.subr.bf16.mxu0 %v6543
    %6858 = vmatpush1.bf16.msra.mxu0 %v6542
    %6859 = vmatprep.subr.bf16.mxu0 %v6559
    %6860 = vmatpush1.bf16.msra.mxu0 %v6558
    %6861 = vmatprep.subr.bf16.mxu0 %v6575
    %6862 = vmatpush1.bf16.msra.mxu0 %v6574
    %6863 = vmatprep.subr.bf16.mxu0 %v6591
    %6864 = vmatpush1.bf16.msra.mxu0 %v6590
    %6865 = vmatprep.subr.bf16.mxu0 %v6607
    %6866 = vmatpush1.bf16.msra.mxu0 %v6606
    %6867 = vmatprep.subr.bf16.mxu0 %v6623
    %6868 = vmatpush1.bf16.msra.mxu0 %v6622
    %6869 = vmatprep.subr.bf16.mxu0 %v6639
    %6870 = vmatpush1.bf16.msra.mxu0 %v6638
    %6871 = vmatprep.subr.bf16.mxu0 0
    %6872 = vmatpush1.bf16.msra.mxu0 0
    %6873 = vmatprep.subr.bf16.mxu0 0
    %6874 = vmatpush1.bf16.msra.mxu0 0
    %6875 = vmatprep.subr.bf16.mxu0 0
    %6876 = vmatpush1.bf16.msra.mxu0 0
    %6877 = vmatprep.subr.bf16.mxu0 0
    %6878 = vmatpush1.bf16.msra.mxu0 0
    %6879 = vmatprep.subr.bf16.mxu0 0
    %6880 = vmatpush1.bf16.msra.mxu0 0
    %6881 = vmatprep.subr.bf16.mxu0 0
    %6882 = vmatpush1.bf16.msra.mxu0 0
    %6883 = vmatprep.subr.bf16.mxu0 0
    %6884 = vmatpush1.bf16.msra.mxu0 0
    %6885 = vmatprep.subr.bf16.mxu0 0
    %6886 = vmatpush1.bf16.msra.mxu0 0
    %6887 = vmatprep.mubr.bf16.mxu0 0
    %6888 = vmatmul.mubr.bf16.gmra.mrb[0].mxu0 %v6519
    %v6889 = vpop.f32.mrb[0].mxu0
    %v6890 = vadd.f32 %v6679, %v6889
    %v6891 = vpop.f32.mrb[0].mxu0
    %v6892 = vadd.f32 %v6683, %v6891
    %v6893 = vpop.f32.mrb[0].mxu0
    %v6894 = vpop.f32.mrb[0].mxu0
    %6895 = vdwg.mxu0
    %6896 = vmatprep.subr.bf16.mxu0 %v6529
    %6897 = vmatpush1.bf16.msra.mxu0 %v6528
    %6898 = vmatprep.subr.bf16.mxu0 %v6545
    %6899 = vmatpush1.bf16.msra.mxu0 %v6544
    %6900 = vmatprep.subr.bf16.mxu0 %v6561
    %6901 = vmatpush1.bf16.msra.mxu0 %v6560
    %6902 = vmatprep.subr.bf16.mxu0 %v6577
    %6903 = vmatpush1.bf16.msra.mxu0 %v6576
    %6904 = vmatprep.subr.bf16.mxu0 %v6593
    %6905 = vmatpush1.bf16.msra.mxu0 %v6592
    %6906 = vmatprep.subr.bf16.mxu0 %v6609
    %6907 = vmatpush1.bf16.msra.mxu0 %v6608
    %6908 = vmatprep.subr.bf16.mxu0 %v6625
    %6909 = vmatpush1.bf16.msra.mxu0 %v6624
    %6910 = vmatprep.subr.bf16.mxu0 %v6641
    %6911 = vmatpush1.bf16.msra.mxu0 %v6640
    %6912 = vmatprep.subr.bf16.mxu0 0
    %6913 = vmatpush1.bf16.msra.mxu0 0
    %6914 = vmatprep.subr.bf16.mxu0 0
    %6915 = vmatpush1.bf16.msra.mxu0 0
    %6916 = vmatprep.subr.bf16.mxu0 0
    %6917 = vmatpush1.bf16.msra.mxu0 0
    %6918 = vmatprep.subr.bf16.mxu0 0
    %6919 = vmatpush1.bf16.msra.mxu0 0
    %6920 = vmatprep.subr.bf16.mxu0 0
    %6921 = vmatpush1.bf16.msra.mxu0 0
    %6922 = vmatprep.subr.bf16.mxu0 0
    %6923 = vmatpush1.bf16.msra.mxu0 0
    %6924 = vmatprep.subr.bf16.mxu0 0
    %6925 = vmatpush1.bf16.msra.mxu0 0
    %6926 = vmatprep.subr.bf16.mxu0 0
    %6927 = vmatpush1.bf16.msra.mxu0 0
    %6928 = vmatprep.mubr.bf16.mxu0 0
    %6929 = vmatmul.mubr.bf16.gmra.mrb[0].mxu0 %v6519
    %v6930 = vpop.f32.mrb[0].mxu0
    %v6931 = vadd.f32 %v6687, %v6930
    %v6932 = vpop.f32.mrb[0].mxu0
    %v6933 = vadd.f32 %v6691, %v6932
    %v6934 = vpop.f32.mrb[0].mxu0
    %v6935 = vpop.f32.mrb[0].mxu0
    %6936 = vdwg.mxu0
    %6937 = vmatprep.subr.bf16.mxu0 %v6531
    %6938 = vmatpush1.bf16.msra.mxu0 %v6530
    %6939 = vmatprep.subr.bf16.mxu0 %v6547
    %6940 = vmatpush1.bf16.msra.mxu0 %v6546
    %6941 = vmatprep.subr.bf16.mxu0 %v6563
    %6942 = vmatpush1.bf16.msra.mxu0 %v6562
    %6943 = vmatprep.subr.bf16.mxu0 %v6579
    %6944 = vmatpush1.bf16.msra.mxu0 %v6578
    %6945 = vmatprep.subr.bf16.mxu0 %v6595
    %6946 = vmatpush1.bf16.msra.mxu0 %v6594
    %6947 = vmatprep.subr.bf16.mxu0 %v6611
    %6948 = vmatpush1.bf16.msra.mxu0 %v6610
    %6949 = vmatprep.subr.bf16.mxu0 %v6627
    %6950 = vmatpush1.bf16.msra.mxu0 %v6626
    %6951 = vmatprep.subr.bf16.mxu0 %v6643
    %6952 = vmatpush1.bf16.msra.mxu0 %v6642
    %6953 = vmatprep.subr.bf16.mxu0 0
    %6954 = vmatpush1.bf16.msra.mxu0 0
    %6955 = vmatprep.subr.bf16.mxu0 0
    %6956 = vmatpush1.bf16.msra.mxu0 0
    %6957 = vmatprep.subr.bf16.mxu0 0
    %6958 = vmatpush1.bf16.msra.mxu0 0
    %6959 = vmatprep.subr.bf16.mxu0 0
    %6960 = vmatpush1.bf16.msra.mxu0 0
    %6961 = vmatprep.subr.bf16.mxu0 0
    %6962 = vmatpush1.bf16.msra.mxu0 0
    %6963 = vmatprep.subr.bf16.mxu0 0
    %6964 = vmatpush1.bf16.msra.mxu0 0
    %6965 = vmatprep.subr.bf16.mxu0 0
    %6966 = vmatpush1.bf16.msra.mxu0 0
    %6967 = vmatprep.subr.bf16.mxu0 0
    %6968 = vmatpush1.bf16.msra.mxu0 0
    %6969 = vmatprep.mubr.bf16.mxu0 0
    %6970 = vmatmul.mubr.bf16.gmra.mrb[0].mxu0 %v6519
    %v6971 = vpop.f32.mrb[0].mxu0
    %v6972 = vadd.f32 %v6695, %v6971
    %v6973 = vpop.f32.mrb[0].mxu0
    %v6974 = vadd.f32 %v6699, %v6973
    %v6975 = vpop.f32.mrb[0].mxu0
    %v6976 = vpop.f32.mrb[0].mxu0
    %6977 = vdwg.mxu0
    %6978 = vmatprep.subr.bf16.mxu0 %v6533
    %6979 = vmatpush1.bf16.msra.mxu0 %v6532
    %6980 = vmatprep.subr.bf16.mxu0 %v6549
    %6981 = vmatpush1.bf16.msra.mxu0 %v6548
    %6982 = vmatprep.subr.bf16.mxu0 %v6565
    %6983 = vmatpush1.bf16.msra.mxu0 %v6564
    %6984 = vmatprep.subr.bf16.mxu0 %v6581
    %6985 = vmatpush1.bf16.msra.mxu0 %v6580
    %6986 = vmatprep.subr.bf16.mxu0 %v6597
    %6987 = vmatpush1.bf16.msra.mxu0 %v6596
    %6988 = vmatprep.subr.bf16.mxu0 %v6613
    %6989 = vmatpush1.bf16.msra.mxu0 %v6612
    %6990 = vmatprep.subr.bf16.mxu0 %v6629
    %6991 = vmatpush1.bf16.msra.mxu0 %v6628
    %6992 = vmatprep.subr.bf16.mxu0 %v6645
    %6993 = vmatpush1.bf16.msra.mxu0 %v6644
    %6994 = vmatprep.subr.bf16.mxu0 0
    %6995 = vmatpush1.bf16.msra.mxu0 0
    %6996 = vmatprep.subr.bf16.mxu0 0
    %6997 = vmatpush1.bf16.msra.mxu0 0
    %6998 = vmatprep.subr.bf16.mxu0 0
    %6999 = vmatpush1.bf16.msra.mxu0 0
    %7000 = vmatprep.subr.bf16.mxu0 0
    %7001 = vmatpush1.bf16.msra.mxu0 0
    %7002 = vmatprep.subr.bf16.mxu0 0
    %7003 = vmatpush1.bf16.msra.mxu0 0
    %7004 = vmatprep.subr.bf16.mxu0 0
    %7005 = vmatpush1.bf16.msra.mxu0 0
    %7006 = vmatprep.subr.bf16.mxu0 0
    %7007 = vmatpush1.bf16.msra.mxu0 0
    %7008 = vmatprep.subr.bf16.mxu0 0
    %7009 = vmatpush1.bf16.msra.mxu0 0
    %7010 = vmatprep.mubr.bf16.mxu0 0
    %7011 = vmatmul.mubr.bf16.gmra.mrb[0].mxu0 %v6519
    %v7012 = vpop.f32.mrb[0].mxu0
    %v7013 = vadd.f32 %v6703, %v7012
    %v7014 = vpop.f32.mrb[0].mxu0
    %v7015 = vadd.f32 %v6707, %v7014
    %v7016 = vpop.f32.mrb[0].mxu0
    %v7017 = vpop.f32.mrb[0].mxu0
    %7018 = vdwg.mxu0
    %7019 = vmatprep.subr.bf16.mxu0 %v6535
    %7020 = vmatpush1.bf16.msra.mxu0 %v6534
    %7021 = vmatprep.subr.bf16.mxu0 %v6551
    %7022 = vmatpush1.bf16.msra.mxu0 %v6550
    %7023 = vmatprep.subr.bf16.mxu0 %v6567
    %7024 = vmatpush1.bf16.msra.mxu0 %v6566
    %7025 = vmatprep.subr.bf16.mxu0 %v6583
    %7026 = vmatpush1.bf16.msra.mxu0 %v6582
    %7027 = vmatprep.subr.bf16.mxu0 %v6599
    %7028 = vmatpush1.bf16.msra.mxu0 %v6598
    %7029 = vmatprep.subr.bf16.mxu0 %v6615
    %7030 = vmatpush1.bf16.msra.mxu0 %v6614
    %7031 = vmatprep.subr.bf16.mxu0 %v6631
    %7032 = vmatpush1.bf16.msra.mxu0 %v6630
    %7033 = vmatprep.subr.bf16.mxu0 %v6647
    %7034 = vmatpush1.bf16.msra.mxu0 %v6646
    %7035 = vmatprep.subr.bf16.mxu0 0
    %7036 = vmatpush1.bf16.msra.mxu0 0
    %7037 = vmatprep.subr.bf16.mxu0 0
    %7038 = vmatpush1.bf16.msra.mxu0 0
    %7039 = vmatprep.subr.bf16.mxu0 0
    %7040 = vmatpush1.bf16.msra.mxu0 0
    %7041 = vmatprep.subr.bf16.mxu0 0
    %7042 = vmatpush1.bf16.msra.mxu0 0
    %7043 = vmatprep.subr.bf16.mxu0 0
    %7044 = vmatpush1.bf16.msra.mxu0 0
    %7045 = vmatprep.subr.bf16.mxu0 0
    %7046 = vmatpush1.bf16.msra.mxu0 0
    %7047 = vmatprep.subr.bf16.mxu0 0
    %7048 = vmatpush1.bf16.msra.mxu0 0
    %7049 = vmatprep.subr.bf16.mxu0 0
    %7050 = vmatpush1.bf16.msra.mxu0 0
    %7051 = vmatprep.mubr.bf16.mxu0 0
    %7052 = vmatmul.mubr.bf16.gmra.mrb[0].mxu0 %v6519
    %v7053 = vpop.f32.mrb[0].mxu0
    %v7054 = vadd.f32 %v6711, %v7053
    %v7055 = vpop.f32.mrb[0].mxu0
    %v7056 = vadd.f32 %v6715, %v7055
    %v7057 = vpop.f32.mrb[0].mxu0
    %v7058 = vpop.f32.mrb[0].mxu0
    %7059 = vdwg.mxu0
    %v7060 = vmax.f32 %v6767, 0.0
    %v7061 = vmax.f32 %v6769, 0.0
    %v7062 = vmax.f32 %v6808, 0.0
    %v7063 = vmax.f32 %v6810, 0.0
    %v7064 = vmax.f32 %v6849, 0.0
    %v7065 = vmax.f32 %v6851, 0.0
    %v7066 = vmax.f32 %v6890, 0.0
    %v7067 = vmax.f32 %v6892, 0.0
    %v7068 = vmax.f32 %v6931, 0.0
    %v7069 = vmax.f32 %v6933, 0.0
    %v7070 = vmax.f32 %v6972, 0.0
    %v7071 = vmax.f32 %v6974, 0.0
    %v7072 = vmax.f32 %v7013, 0.0
    %v7073 = vmax.f32 %v7015, 0.0
    %v7074 = vmax.f32 %v7054, 0.0
    %v7075 = vmax.f32 %v7056, 0.0
    %v7076 = vpack.c.bf16 %v7060, %v7060
    %v7077 = vpack.c.bf16 %v7061, %v7061
    %v7078 = vpack.c.bf16 %v7062, %v7062
    %v7079 = vpack.c.bf16 %v7063, %v7063
    %v7080 = vpack.c.bf16 %v7064, %v7064
    %v7081 = vpack.c.bf16 %v7065, %v7065
    %v7082 = vpack.c.bf16 %v7066, %v7066
    %v7083 = vpack.c.bf16 %v7067, %v7067
    %v7084 = vpack.c.bf16 %v7068, %v7068
    %v7085 = vpack.c.bf16 %v7069, %v7069
    %v7086 = vpack.c.bf16 %v7070, %v7070
    %v7087 = vpack.c.bf16 %v7071, %v7071
    %v7088 = vpack.c.bf16 %v7072, %v7072
    %v7089 = vpack.c.bf16 %v7073, %v7073
    %v7090 = vpack.c.bf16 %v7074, %v7074
    %v7091 = vpack.c.bf16 %v7075, %v7075
    %v7092 = vld [vmem:[#allocation5] sm:$0xff]
    %v7093 = vld [vmem:[#allocation5 + $0x8] sm:$0xff]
    %v7094 = vld [vmem:[#allocation5 + $0x10] sm:$0xff]
    %v7095 = vld [vmem:[#allocation5 + $0x18] sm:$0xff]
    %v7096 = vld [vmem:[#allocation5 + $0x20] sm:$0xff]
    %v7097 = vld [vmem:[#allocation5 + $0x28] sm:$0xff]
    %v7098 = vld [vmem:[#allocation5 + $0x30] sm:$0xff]
    %v7099 = vld [vmem:[#allocation5 + $0x38] sm:$0xff]
    %v7100 = vld [vmem:[#allocation5 + $0x40] sm:$0xff]
    %v7101 = vld [vmem:[#allocation5 + $0x48] sm:$0xff]
    %v7102 = vld [vmem:[#allocation5 + $0x50] sm:$0xff]
    %v7103 = vld [vmem:[#allocation5 + $0x58] sm:$0xff]
    %v7104 = vld [vmem:[#allocation5 + $0x60] sm:$0xff]
    %v7105 = vld [vmem:[#allocation5 + $0x68] sm:$0xff]
    %v7106 = vld [vmem:[#allocation5 + $0x70] sm:$0xff]
    %v7107 = vld [vmem:[#allocation5 + $0x78] sm:$0xff]
    %v7108 = vld [vmem:[#allocation5 + $0x80] sm:$0xff]
    %v7109 = vld [vmem:[#allocation5 + $0x88] sm:$0xff]
    %v7110 = vld [vmem:[#allocation5 + $0x90] sm:$0xff]
    %v7111 = vld [vmem:[#allocation5 + $0x98] sm:$0xff]
    %v7112 = vld [vmem:[#allocation5 + $0xa0] sm:$0xff]
    %v7113 = vld [vmem:[#allocation5 + $0xa8] sm:$0xff]
    %v7114 = vld [vmem:[#allocation5 + $0xb0] sm:$0xff]
    %v7115 = vld [vmem:[#allocation5 + $0xb8] sm:$0xff]
    %v7116 = vld [vmem:[#allocation5 + $0xc0] sm:$0xff]
    %v7117 = vld [vmem:[#allocation5 + $0xc8] sm:$0xff]
    %v7118 = vld [vmem:[#allocation5 + $0xd0] sm:$0xff]
    %v7119 = vld [vmem:[#allocation5 + $0xd8] sm:$0xff]
    %v7120 = vld [vmem:[#allocation5 + $0xe0] sm:$0xff]
    %v7121 = vld [vmem:[#allocation5 + $0xe8] sm:$0xff]
    %v7122 = vld [vmem:[#allocation5 + $0xf0] sm:$0xff]
    %v7123 = vld [vmem:[#allocation5 + $0xf8] sm:$0xff]
    %v7124 = vld [vmem:[#allocation5 + $0x100] sm:$0xff]
    %v7125 = vld [vmem:[#allocation5 + $0x108] sm:$0xff]
    %v7126 = vld [vmem:[#allocation5 + $0x110] sm:$0xff]
    %v7127 = vld [vmem:[#allocation5 + $0x118] sm:$0xff]
    %v7128 = vld [vmem:[#allocation5 + $0x120] sm:$0xff]
    %v7129 = vld [vmem:[#allocation5 + $0x128] sm:$0xff]
    %v7130 = vld [vmem:[#allocation5 + $0x130] sm:$0xff]
    %v7131 = vld [vmem:[#allocation5 + $0x138] sm:$0xff]
    %v7132 = vld [vmem:[#allocation5 + $0x140] sm:$0xff]
    %v7133 = vld [vmem:[#allocation5 + $0x148] sm:$0xff]
    %v7134 = vld [vmem:[#allocation5 + $0x150] sm:$0xff]
    %v7135 = vld [vmem:[#allocation5 + $0x158] sm:$0xff]
    %v7136 = vld [vmem:[#allocation5 + $0x160] sm:$0xff]
    %v7137 = vld [vmem:[#allocation5 + $0x168] sm:$0xff]
    %v7138 = vld [vmem:[#allocation5 + $0x170] sm:$0xff]
    %v7139 = vld [vmem:[#allocation5 + $0x178] sm:$0xff]
    %v7140 = vld [vmem:[#allocation5 + $0x180] sm:$0xff]
    %v7141 = vld [vmem:[#allocation5 + $0x188] sm:$0xff]
    %v7142 = vld [vmem:[#allocation5 + $0x190] sm:$0xff]
    %v7143 = vld [vmem:[#allocation5 + $0x198] sm:$0xff]
    %v7144 = vld [vmem:[#allocation5 + $0x1a0] sm:$0xff]
    %v7145 = vld [vmem:[#allocation5 + $0x1a8] sm:$0xff]
    %v7146 = vld [vmem:[#allocation5 + $0x1b0] sm:$0xff]
    %v7147 = vld [vmem:[#allocation5 + $0x1b8] sm:$0xff]
    %v7148 = vld [vmem:[#allocation5 + $0x1c0] sm:$0xff]
    %v7149 = vld [vmem:[#allocation5 + $0x1c8] sm:$0xff]
    %v7150 = vld [vmem:[#allocation5 + $0x1d0] sm:$0xff]
    %v7151 = vld [vmem:[#allocation5 + $0x1d8] sm:$0xff]
    %v7152 = vld [vmem:[#allocation5 + $0x1e0] sm:$0xff]
    %v7153 = vld [vmem:[#allocation5 + $0x1e8] sm:$0xff]
    %v7154 = vld [vmem:[#allocation5 + $0x1f0] sm:$0xff]
    %v7155 = vld [vmem:[#allocation5 + $0x1f8] sm:$0xff]
    %v7156 = vld [vmem:[#allocation5 + $0x200] sm:$0xff]
    %v7157 = vld [vmem:[#allocation5 + $0x208] sm:$0xff]
    %v7158 = vld [vmem:[#allocation5 + $0x210] sm:$0xff]
    %v7159 = vld [vmem:[#allocation5 + $0x218] sm:$0xff]
    %v7160 = vld [vmem:[#allocation5 + $0x220] sm:$0xff]
    %v7161 = vld [vmem:[#allocation5 + $0x228] sm:$0xff]
    %v7162 = vld [vmem:[#allocation5 + $0x230] sm:$0xff]
    %v7163 = vld [vmem:[#allocation5 + $0x238] sm:$0xff]
    %v7164 = vld [vmem:[#allocation5 + $0x240] sm:$0xff]
    %v7165 = vld [vmem:[#allocation5 + $0x248] sm:$0xff]
    %v7166 = vld [vmem:[#allocation5 + $0x250] sm:$0xff]
    %v7167 = vld [vmem:[#allocation5 + $0x258] sm:$0xff]
    %v7168 = vld [vmem:[#allocation5 + $0x260] sm:$0xff]
    %v7169 = vld [vmem:[#allocation5 + $0x268] sm:$0xff]
    %v7170 = vld [vmem:[#allocation5 + $0x270] sm:$0xff]
    %v7171 = vld [vmem:[#allocation5 + $0x278] sm:$0xff]
    %v7172 = vld [vmem:[#allocation5 + $0x280] sm:$0xff]
    %v7173 = vld [vmem:[#allocation5 + $0x288] sm:$0xff]
    %v7174 = vld [vmem:[#allocation5 + $0x290] sm:$0xff]
    %v7175 = vld [vmem:[#allocation5 + $0x298] sm:$0xff]
    %v7176 = vld [vmem:[#allocation5 + $0x2a0] sm:$0xff]
    %v7177 = vld [vmem:[#allocation5 + $0x2a8] sm:$0xff]
    %v7178 = vld [vmem:[#allocation5 + $0x2b0] sm:$0xff]
    %v7179 = vld [vmem:[#allocation5 + $0x2b8] sm:$0xff]
    %v7180 = vld [vmem:[#allocation5 + $0x2c0] sm:$0xff]
    %v7181 = vld [vmem:[#allocation5 + $0x2c8] sm:$0xff]
    %v7182 = vld [vmem:[#allocation5 + $0x2d0] sm:$0xff]
    %v7183 = vld [vmem:[#allocation5 + $0x2d8] sm:$0xff]
    %v7184 = vld [vmem:[#allocation5 + $0x2e0] sm:$0xff]
    %v7185 = vld [vmem:[#allocation5 + $0x2e8] sm:$0xff]
    %v7186 = vld [vmem:[#allocation5 + $0x2f0] sm:$0xff]
    %v7187 = vld [vmem:[#allocation5 + $0x2f8] sm:$0xff]
    %v7188 = vld [vmem:[#allocation5 + $0x300] sm:$0xff]
    %v7189 = vld [vmem:[#allocation5 + $0x308] sm:$0xff]
    %v7190 = vld [vmem:[#allocation5 + $0x310] sm:$0xff]
    %v7191 = vld [vmem:[#allocation5 + $0x318] sm:$0xff]
    %v7192 = vld [vmem:[#allocation5 + $0x320] sm:$0xff]
    %v7193 = vld [vmem:[#allocation5 + $0x328] sm:$0xff]
    %v7194 = vld [vmem:[#allocation5 + $0x330] sm:$0xff]
    %v7195 = vld [vmem:[#allocation5 + $0x338] sm:$0xff]
    %v7196 = vld [vmem:[#allocation5 + $0x340] sm:$0xff]
    %v7197 = vld [vmem:[#allocation5 + $0x348] sm:$0xff]
    %v7198 = vld [vmem:[#allocation5 + $0x350] sm:$0xff]
    %v7199 = vld [vmem:[#allocation5 + $0x358] sm:$0xff]
    %v7200 = vld [vmem:[#allocation5 + $0x360] sm:$0xff]
    %v7201 = vld [vmem:[#allocation5 + $0x368] sm:$0xff]
    %v7202 = vld [vmem:[#allocation5 + $0x370] sm:$0xff]
    %v7203 = vld [vmem:[#allocation5 + $0x378] sm:$0xff]
    %v7204 = vld [vmem:[#allocation5 + $0x380] sm:$0xff]
    %v7205 = vld [vmem:[#allocation5 + $0x388] sm:$0xff]
    %v7206 = vld [vmem:[#allocation5 + $0x390] sm:$0xff]
    %v7207 = vld [vmem:[#allocation5 + $0x398] sm:$0xff]
    %v7208 = vld [vmem:[#allocation5 + $0x3a0] sm:$0xff]
    %v7209 = vld [vmem:[#allocation5 + $0x3a8] sm:$0xff]
    %v7210 = vld [vmem:[#allocation5 + $0x3b0] sm:$0xff]
    %v7211 = vld [vmem:[#allocation5 + $0x3b8] sm:$0xff]
    %v7212 = vld [vmem:[#allocation5 + $0x3c0] sm:$0xff]
    %v7213 = vld [vmem:[#allocation5 + $0x3c8] sm:$0xff]
    %v7214 = vld [vmem:[#allocation5 + $0x3d0] sm:$0xff]
    %v7215 = vld [vmem:[#allocation5 + $0x3d8] sm:$0xff]
    %v7216 = vld [vmem:[#allocation5 + $0x3e0] sm:$0xff]
    %v7217 = vld [vmem:[#allocation5 + $0x3e8] sm:$0xff]
    %v7218 = vld [vmem:[#allocation5 + $0x3f0] sm:$0xff]
    %v7219 = vld [vmem:[#allocation5 + $0x3f8] sm:$0xff]
    %v7220 = vld [vmem:[#allocation37] sm:$0x1]
    %v7222 = vlaneseq
    %v7223 = vshrl.u32 %v7222, 7
    %v7224 = vsub.s32 0, %v7223
    %v7225 = vrot.slane %v7220, %v7224
    %7227 = vmatprep.subr.bf16.mxu0 0
    %7228 = vmatpush1.bf16.msra.mxu0 %v7092
    %7229 = vmatprep.subr.bf16.mxu0 0
    %7230 = vmatpush1.bf16.msra.mxu0 %v7093
    %7231 = vmatprep.subr.bf16.mxu0 0
    %7232 = vmatpush1.bf16.msra.mxu0 %v7094
    %7233 = vmatprep.subr.bf16.mxu0 0
    %7234 = vmatpush1.bf16.msra.mxu0 %v7095
    %7235 = vmatprep.subr.bf16.mxu0 0
    %7236 = vmatpush1.bf16.msra.mxu0 %v7096
    %7237 = vmatprep.subr.bf16.mxu0 0
    %7238 = vmatpush1.bf16.msra.mxu0 %v7097
    %7239 = vmatprep.subr.bf16.mxu0 0
    %7240 = vmatpush1.bf16.msra.mxu0 %v7098
    %7241 = vmatprep.subr.bf16.mxu0 0
    %7242 = vmatpush1.bf16.msra.mxu0 %v7099
    %7243 = vmatprep.subr.bf16.mxu0 0
    %7244 = vmatpush1.bf16.msra.mxu0 %v7100
    %7245 = vmatprep.subr.bf16.mxu0 0
    %7246 = vmatpush1.bf16.msra.mxu0 %v7101
    %7247 = vmatprep.subr.bf16.mxu0 0
    %7248 = vmatpush1.bf16.msra.mxu0 %v7102
    %7249 = vmatprep.subr.bf16.mxu0 0
    %7250 = vmatpush1.bf16.msra.mxu0 %v7103
    %7251 = vmatprep.subr.bf16.mxu0 0
    %7252 = vmatpush1.bf16.msra.mxu0 %v7104
    %7253 = vmatprep.subr.bf16.mxu0 0
    %7254 = vmatpush1.bf16.msra.mxu0 %v7105
    %7255 = vmatprep.subr.bf16.mxu0 0
    %7256 = vmatpush1.bf16.msra.mxu0 %v7106
    %7257 = vmatprep.subr.bf16.mxu0 0
    %7258 = vmatpush1.bf16.msra.mxu0 %v7107
    %7259 = vmatprep.mubr.bf16.mxu0 %v7077
    %7260 = vmatmul.mubr.bf16.gmra.mrb[0].mxu0 %v7076
    %v7261 = vpop.f32.mrb[0].mxu0
    %v7262 = vadd.f32 %v7225, %v7261
    %v7263 = vpop.f32.mrb[0].mxu0
    %v7264 = vpop.f32.mrb[0].mxu0
    %v7265 = vpop.f32.mrb[0].mxu0
    %7266 = vdwg.mxu0
    %7267 = vmatprep.subr.bf16.mxu0 0
    %7268 = vmatpush1.bf16.msra.mxu0 %v7108
    %7269 = vmatprep.subr.bf16.mxu0 0
    %7270 = vmatpush1.bf16.msra.mxu0 %v7109
    %7271 = vmatprep.subr.bf16.mxu0 0
    %7272 = vmatpush1.bf16.msra.mxu0 %v7110
    %7273 = vmatprep.subr.bf16.mxu0 0
    %7274 = vmatpush1.bf16.msra.mxu0 %v7111
    %7275 = vmatprep.subr.bf16.mxu0 0
    %7276 = vmatpush1.bf16.msra.mxu0 %v7112
    %7277 = vmatprep.subr.bf16.mxu0 0
    %7278 = vmatpush1.bf16.msra.mxu0 %v7113
    %7279 = vmatprep.subr.bf16.mxu0 0
    %7280 = vmatpush1.bf16.msra.mxu0 %v7114
    %7281 = vmatprep.subr.bf16.mxu0 0
    %7282 = vmatpush1.bf16.msra.mxu0 %v7115
    %7283 = vmatprep.subr.bf16.mxu0 0
    %7284 = vmatpush1.bf16.msra.mxu0 %v7116
    %7285 = vmatprep.subr.bf16.mxu0 0
    %7286 = vmatpush1.bf16.msra.mxu0 %v7117
    %7287 = vmatprep.subr.bf16.mxu0 0
    %7288 = vmatpush1.bf16.msra.mxu0 %v7118
    %7289 = vmatprep.subr.bf16.mxu0 0
    %7290 = vmatpush1.bf16.msra.mxu0 %v7119
    %7291 = vmatprep.subr.bf16.mxu0 0
    %7292 = vmatpush1.bf16.msra.mxu0 %v7120
    %7293 = vmatprep.subr.bf16.mxu0 0
    %7294 = vmatpush1.bf16.msra.mxu0 %v7121
    %7295 = vmatprep.subr.bf16.mxu0 0
    %7296 = vmatpush1.bf16.msra.mxu0 %v7122
    %7297 = vmatprep.subr.bf16.mxu0 0
    %7298 = vmatpush1.bf16.msra.mxu0 %v7123
    %7299 = vmatprep.mubr.bf16.mxu0 %v7079
    %7300 = vmatmul.mubr.bf16.gmra.mrb[0].mxu0 %v7078
    %v7301 = vpop.f32.mrb[0].mxu0
    %v7302 = vadd.f32 %v7262, %v7301
    %v7303 = vpop.f32.mrb[0].mxu0
    %v7304 = vpop.f32.mrb[0].mxu0
    %v7305 = vpop.f32.mrb[0].mxu0
    %7306 = vdwg.mxu0
    %7307 = vmatprep.subr.bf16.mxu0 0
    %7308 = vmatpush1.bf16.msra.mxu0 %v7124
    %7309 = vmatprep.subr.bf16.mxu0 0
    %7310 = vmatpush1.bf16.msra.mxu0 %v7125
    %7311 = vmatprep.subr.bf16.mxu0 0
    %7312 = vmatpush1.bf16.msra.mxu0 %v7126
    %7313 = vmatprep.subr.bf16.mxu0 0
    %7314 = vmatpush1.bf16.msra.mxu0 %v7127
    %7315 = vmatprep.subr.bf16.mxu0 0
    %7316 = vmatpush1.bf16.msra.mxu0 %v7128
    %7317 = vmatprep.subr.bf16.mxu0 0
    %7318 = vmatpush1.bf16.msra.mxu0 %v7129
    %7319 = vmatprep.subr.bf16.mxu0 0
    %7320 = vmatpush1.bf16.msra.mxu0 %v7130
    %7321 = vmatprep.subr.bf16.mxu0 0
    %7322 = vmatpush1.bf16.msra.mxu0 %v7131
    %7323 = vmatprep.subr.bf16.mxu0 0
    %7324 = vmatpush1.bf16.msra.mxu0 %v7132
    %7325 = vmatprep.subr.bf16.mxu0 0
    %7326 = vmatpush1.bf16.msra.mxu0 %v7133
    %7327 = vmatprep.subr.bf16.mxu0 0
    %7328 = vmatpush1.bf16.msra.mxu0 %v7134
    %7329 = vmatprep.subr.bf16.mxu0 0
    %7330 = vmatpush1.bf16.msra.mxu0 %v7135
    %7331 = vmatprep.subr.bf16.mxu0 0
    %7332 = vmatpush1.bf16.msra.mxu0 %v7136
    %7333 = vmatprep.subr.bf16.mxu0 0
    %7334 = vmatpush1.bf16.msra.mxu0 %v7137
    %7335 = vmatprep.subr.bf16.mxu0 0
    %7336 = vmatpush1.bf16.msra.mxu0 %v7138
    %7337 = vmatprep.subr.bf16.mxu0 0
    %7338 = vmatpush1.bf16.msra.mxu0 %v7139
    %7339 = vmatprep.mubr.bf16.mxu0 %v7081
    %7340 = vmatmul.mubr.bf16.gmra.mrb[0].mxu0 %v7080
    %v7341 = vpop.f32.mrb[0].mxu0
    %v7342 = vadd.f32 %v7302, %v7341
    %v7343 = vpop.f32.mrb[0].mxu0
    %v7344 = vpop.f32.mrb[0].mxu0
    %v7345 = vpop.f32.mrb[0].mxu0
    %7346 = vdwg.mxu0
    %7347 = vmatprep.subr.bf16.mxu0 0
    %7348 = vmatpush1.bf16.msra.mxu0 %v7140
    %7349 = vmatprep.subr.bf16.mxu0 0
    %7350 = vmatpush1.bf16.msra.mxu0 %v7141
    %7351 = vmatprep.subr.bf16.mxu0 0
    %7352 = vmatpush1.bf16.msra.mxu0 %v7142
    %7353 = vmatprep.subr.bf16.mxu0 0
    %7354 = vmatpush1.bf16.msra.mxu0 %v7143
    %7355 = vmatprep.subr.bf16.mxu0 0
    %7356 = vmatpush1.bf16.msra.mxu0 %v7144
    %7357 = vmatprep.subr.bf16.mxu0 0
    %7358 = vmatpush1.bf16.msra.mxu0 %v7145
    %7359 = vmatprep.subr.bf16.mxu0 0
    %7360 = vmatpush1.bf16.msra.mxu0 %v7146
    %7361 = vmatprep.subr.bf16.mxu0 0
    %7362 = vmatpush1.bf16.msra.mxu0 %v7147
    %7363 = vmatprep.subr.bf16.mxu0 0
    %7364 = vmatpush1.bf16.msra.mxu0 %v7148
    %7365 = vmatprep.subr.bf16.mxu0 0
    %7366 = vmatpush1.bf16.msra.mxu0 %v7149
    %7367 = vmatprep.subr.bf16.mxu0 0
    %7368 = vmatpush1.bf16.msra.mxu0 %v7150
    %7369 = vmatprep.subr.bf16.mxu0 0
    %7370 = vmatpush1.bf16.msra.mxu0 %v7151
    %7371 = vmatprep.subr.bf16.mxu0 0
    %7372 = vmatpush1.bf16.msra.mxu0 %v7152
    %7373 = vmatprep.subr.bf16.mxu0 0
    %7374 = vmatpush1.bf16.msra.mxu0 %v7153
    %7375 = vmatprep.subr.bf16.mxu0 0
    %7376 = vmatpush1.bf16.msra.mxu0 %v7154
    %7377 = vmatprep.subr.bf16.mxu0 0
    %7378 = vmatpush1.bf16.msra.mxu0 %v7155
    %7379 = vmatprep.mubr.bf16.mxu0 %v7083
    %7380 = vmatmul.mubr.bf16.gmra.mrb[0].mxu0 %v7082
    %v7381 = vpop.f32.mrb[0].mxu0
    %v7382 = vadd.f32 %v7342, %v7381
    %v7383 = vpop.f32.mrb[0].mxu0
    %v7384 = vpop.f32.mrb[0].mxu0
    %v7385 = vpop.f32.mrb[0].mxu0
    %7386 = vdwg.mxu0
    %7387 = vmatprep.subr.bf16.mxu0 0
    %7388 = vmatpush1.bf16.msra.mxu0 %v7156
    %7389 = vmatprep.subr.bf16.mxu0 0
    %7390 = vmatpush1.bf16.msra.mxu0 %v7157
    %7391 = vmatprep.subr.bf16.mxu0 0
    %7392 = vmatpush1.bf16.msra.mxu0 %v7158
    %7393 = vmatprep.subr.bf16.mxu0 0
    %7394 = vmatpush1.bf16.msra.mxu0 %v7159
    %7395 = vmatprep.subr.bf16.mxu0 0
    %7396 = vmatpush1.bf16.msra.mxu0 %v7160
    %7397 = vmatprep.subr.bf16.mxu0 0
    %7398 = vmatpush1.bf16.msra.mxu0 %v7161
    %7399 = vmatprep.subr.bf16.mxu0 0
    %7400 = vmatpush1.bf16.msra.mxu0 %v7162
    %7401 = vmatprep.subr.bf16.mxu0 0
    %7402 = vmatpush1.bf16.msra.mxu0 %v7163
    %7403 = vmatprep.subr.bf16.mxu0 0
    %7404 = vmatpush1.bf16.msra.mxu0 %v7164
    %7405 = vmatprep.subr.bf16.mxu0 0
    %7406 = vmatpush1.bf16.msra.mxu0 %v7165
    %7407 = vmatprep.subr.bf16.mxu0 0
    %7408 = vmatpush1.bf16.msra.mxu0 %v7166
    %7409 = vmatprep.subr.bf16.mxu0 0
    %7410 = vmatpush1.bf16.msra.mxu0 %v7167
    %7411 = vmatprep.subr.bf16.mxu0 0
    %7412 = vmatpush1.bf16.msra.mxu0 %v7168
    %7413 = vmatprep.subr.bf16.mxu0 0
    %7414 = vmatpush1.bf16.msra.mxu0 %v7169
    %7415 = vmatprep.subr.bf16.mxu0 0
    %7416 = vmatpush1.bf16.msra.mxu0 %v7170
    %7417 = vmatprep.subr.bf16.mxu0 0
    %7418 = vmatpush1.bf16.msra.mxu0 %v7171
    %7419 = vmatprep.mubr.bf16.mxu0 %v7085
    %7420 = vmatmul.mubr.bf16.gmra.mrb[0].mxu0 %v7084
    %v7421 = vpop.f32.mrb[0].mxu0
    %v7422 = vadd.f32 %v7382, %v7421
    %v7423 = vpop.f32.mrb[0].mxu0
    %v7424 = vpop.f32.mrb[0].mxu0
    %v7425 = vpop.f32.mrb[0].mxu0
    %7426 = vdwg.mxu0
    %7427 = vmatprep.subr.bf16.mxu0 0
    %7428 = vmatpush1.bf16.msra.mxu0 %v7172
    %7429 = vmatprep.subr.bf16.mxu0 0
    %7430 = vmatpush1.bf16.msra.mxu0 %v7173
    %7431 = vmatprep.subr.bf16.mxu0 0
    %7432 = vmatpush1.bf16.msra.mxu0 %v7174
    %7433 = vmatprep.subr.bf16.mxu0 0
    %7434 = vmatpush1.bf16.msra.mxu0 %v7175
    %7435 = vmatprep.subr.bf16.mxu0 0
    %7436 = vmatpush1.bf16.msra.mxu0 %v7176
    %7437 = vmatprep.subr.bf16.mxu0 0
    %7438 = vmatpush1.bf16.msra.mxu0 %v7177
    %7439 = vmatprep.subr.bf16.mxu0 0
    %7440 = vmatpush1.bf16.msra.mxu0 %v7178
    %7441 = vmatprep.subr.bf16.mxu0 0
    %7442 = vmatpush1.bf16.msra.mxu0 %v7179
    %7443 = vmatprep.subr.bf16.mxu0 0
    %7444 = vmatpush1.bf16.msra.mxu0 %v7180
    %7445 = vmatprep.subr.bf16.mxu0 0
    %7446 = vmatpush1.bf16.msra.mxu0 %v7181
    %7447 = vmatprep.subr.bf16.mxu0 0
    %7448 = vmatpush1.bf16.msra.mxu0 %v7182
    %7449 = vmatprep.subr.bf16.mxu0 0
    %7450 = vmatpush1.bf16.msra.mxu0 %v7183
    %7451 = vmatprep.subr.bf16.mxu0 0
    %7452 = vmatpush1.bf16.msra.mxu0 %v7184
    %7453 = vmatprep.subr.bf16.mxu0 0
    %7454 = vmatpush1.bf16.msra.mxu0 %v7185
    %7455 = vmatprep.subr.bf16.mxu0 0
    %7456 = vmatpush1.bf16.msra.mxu0 %v7186
    %7457 = vmatprep.subr.bf16.mxu0 0
    %7458 = vmatpush1.bf16.msra.mxu0 %v7187
    %7459 = vmatprep.mubr.bf16.mxu0 %v7087
    %7460 = vmatmul.mubr.bf16.gmra.mrb[0].mxu0 %v7086
    %v7461 = vpop.f32.mrb[0].mxu0
    %v7462 = vadd.f32 %v7422, %v7461
    %v7463 = vpop.f32.mrb[0].mxu0
    %v7464 = vpop.f32.mrb[0].mxu0
    %v7465 = vpop.f32.mrb[0].mxu0
    %7466 = vdwg.mxu0
    %7467 = vmatprep.subr.bf16.mxu0 0
    %7468 = vmatpush1.bf16.msra.mxu0 %v7188
    %7469 = vmatprep.subr.bf16.mxu0 0
    %7470 = vmatpush1.bf16.msra.mxu0 %v7189
    %7471 = vmatprep.subr.bf16.mxu0 0
    %7472 = vmatpush1.bf16.msra.mxu0 %v7190
    %7473 = vmatprep.subr.bf16.mxu0 0
    %7474 = vmatpush1.bf16.msra.mxu0 %v7191
    %7475 = vmatprep.subr.bf16.mxu0 0
    %7476 = vmatpush1.bf16.msra.mxu0 %v7192
    %7477 = vmatprep.subr.bf16.mxu0 0
    %7478 = vmatpush1.bf16.msra.mxu0 %v7193
    %7479 = vmatprep.subr.bf16.mxu0 0
    %7480 = vmatpush1.bf16.msra.mxu0 %v7194
    %7481 = vmatprep.subr.bf16.mxu0 0
    %7482 = vmatpush1.bf16.msra.mxu0 %v7195
    %7483 = vmatprep.subr.bf16.mxu0 0
    %7484 = vmatpush1.bf16.msra.mxu0 %v7196
    %7485 = vmatprep.subr.bf16.mxu0 0
    %7486 = vmatpush1.bf16.msra.mxu0 %v7197
    %7487 = vmatprep.subr.bf16.mxu0 0
    %7488 = vmatpush1.bf16.msra.mxu0 %v7198
    %7489 = vmatprep.subr.bf16.mxu0 0
    %7490 = vmatpush1.bf16.msra.mxu0 %v7199
    %7491 = vmatprep.subr.bf16.mxu0 0
    %7492 = vmatpush1.bf16.msra.mxu0 %v7200
    %7493 = vmatprep.subr.bf16.mxu0 0
    %7494 = vmatpush1.bf16.msra.mxu0 %v7201
    %7495 = vmatprep.subr.bf16.mxu0 0
    %7496 = vmatpush1.bf16.msra.mxu0 %v7202
    %7497 = vmatprep.subr.bf16.mxu0 0
    %7498 = vmatpush1.bf16.msra.mxu0 %v7203
    %7499 = vmatprep.mubr.bf16.mxu0 %v7089
    %7500 = vmatmul.mubr.bf16.gmra.mrb[0].mxu0 %v7088
    %v7501 = vpop.f32.mrb[0].mxu0
    %v7502 = vadd.f32 %v7462, %v7501
    %v7503 = vpop.f32.mrb[0].mxu0
    %v7504 = vpop.f32.mrb[0].mxu0
    %v7505 = vpop.f32.mrb[0].mxu0
    %7506 = vdwg.mxu0
    %7507 = vmatprep.subr.bf16.mxu0 0
    %7508 = vmatpush1.bf16.msra.mxu0 %v7204
    %7509 = vmatprep.subr.bf16.mxu0 0
    %7510 = vmatpush1.bf16.msra.mxu0 %v7205
    %7511 = vmatprep.subr.bf16.mxu0 0
    %7512 = vmatpush1.bf16.msra.mxu0 %v7206
    %7513 = vmatprep.subr.bf16.mxu0 0
    %7514 = vmatpush1.bf16.msra.mxu0 %v7207
    %7515 = vmatprep.subr.bf16.mxu0 0
    %7516 = vmatpush1.bf16.msra.mxu0 %v7208
    %7517 = vmatprep.subr.bf16.mxu0 0
    %7518 = vmatpush1.bf16.msra.mxu0 %v7209
    %7519 = vmatprep.subr.bf16.mxu0 0
    %7520 = vmatpush1.bf16.msra.mxu0 %v7210
    %7521 = vmatprep.subr.bf16.mxu0 0
    %7522 = vmatpush1.bf16.msra.mxu0 %v7211
    %7523 = vmatprep.subr.bf16.mxu0 0
    %7524 = vmatpush1.bf16.msra.mxu0 %v7212
    %7525 = vmatprep.subr.bf16.mxu0 0
    %7526 = vmatpush1.bf16.msra.mxu0 %v7213
    %7527 = vmatprep.subr.bf16.mxu0 0
    %7528 = vmatpush1.bf16.msra.mxu0 %v7214
    %7529 = vmatprep.subr.bf16.mxu0 0
    %7530 = vmatpush1.bf16.msra.mxu0 %v7215
    %7531 = vmatprep.subr.bf16.mxu0 0
    %7532 = vmatpush1.bf16.msra.mxu0 %v7216
    %7533 = vmatprep.subr.bf16.mxu0 0
    %7534 = vmatpush1.bf16.msra.mxu0 %v7217
    %7535 = vmatprep.subr.bf16.mxu0 0
    %7536 = vmatpush1.bf16.msra.mxu0 %v7218
    %7537 = vmatprep.subr.bf16.mxu0 0
    %7538 = vmatpush1.bf16.msra.mxu0 %v7219
    %7539 = vmatprep.mubr.bf16.mxu0 %v7091
    %7540 = vmatmul.mubr.bf16.gmra.mrb[0].mxu0 %v7090
    %v7541 = vpop.f32.mrb[0].mxu0
    %v7542 = vadd.f32 %v7502, %v7541
    %v7543 = vpop.f32.mrb[0].mxu0
    %v7544 = vpop.f32.mrb[0].mxu0
    %v7545 = vpop.f32.mrb[0].mxu0
    %7546 = vdwg.mxu0
    %v7547 = vadd.f32 %v5512, %v7542
    %v7548 = vld [vmem:[%s69] sm:$0xff]
    %v7549 = vld [vmem:[%s69 + $0x8] sm:$0xff]
    %v7550 = vld [vmem:[%s69 + $0x10] sm:$0xff]
    %v7551 = vld [vmem:[%s69 + $0x18] sm:$0xff]
    %v7552 = vld [vmem:[%s71] sm:$0xff]
    %v7553 = vld [vmem:[%s71 + $0x8] sm:$0xff]
    %v7554 = vld [vmem:[%s71 + $0x10] sm:$0xff]
    %v7555 = vld [vmem:[%s71 + $0x18] sm:$0xff]
    %v7556 = vld [vmem:[%s71 + $0x20] sm:$0xff]
    %v7557 = vld [vmem:[%s71 + $0x28] sm:$0xff]
    %v7558 = vld [vmem:[%s71 + $0x30] sm:$0xff]
    %v7559 = vld [vmem:[%s71 + $0x38] sm:$0xff]
    %v7560 = vld [vmem:[%s71 + $0x40] sm:$0xff]
    %v7561 = vld [vmem:[%s71 + $0x48] sm:$0xff]
    %v7562 = vld [vmem:[%s71 + $0x50] sm:$0xff]
    %v7563 = vld [vmem:[%s71 + $0x58] sm:$0xff]
    %v7564 = vld [vmem:[%s71 + $0x60] sm:$0xff]
    %v7565 = vld [vmem:[%s71 + $0x68] sm:$0xff]
    %v7566 = vld [vmem:[%s71 + $0x70] sm:$0xff]
    %v7567 = vld [vmem:[%s71 + $0x78] sm:$0xff]
    %7568 = vmatprep.subr.mxu0 0.0
    %7569 = vmatpush1.msra.mxu0 %v7552
    %7570 = vmatprep.subr.mxu0 0.0
    %7571 = vmatpush1.msra.mxu0 %v7553
    %7572 = vmatprep.subr.mxu0 0.0
    %7573 = vmatpush1.msra.mxu0 %v7554
    %7574 = vmatprep.subr.mxu0 0.0
    %7575 = vmatpush1.msra.mxu0 %v7555
    %7576 = vmatprep.subr.mxu0 0.0
    %7577 = vmatpush1.msra.mxu0 %v7556
    %7578 = vmatprep.subr.mxu0 0.0
    %7579 = vmatpush1.msra.mxu0 %v7557
    %7580 = vmatprep.subr.mxu0 0.0
    %7581 = vmatpush1.msra.mxu0 %v7558
    %7582 = vmatprep.subr.mxu0 0.0
    %7583 = vmatpush1.msra.mxu0 %v7559
    %7584 = vmatprep.subr.mxu0 0.0
    %7585 = vmatpush1.msra.mxu0 %v7560
    %7586 = vmatprep.subr.mxu0 0.0
    %7587 = vmatpush1.msra.mxu0 %v7561
    %7588 = vmatprep.subr.mxu0 0.0
    %7589 = vmatpush1.msra.mxu0 %v7562
    %7590 = vmatprep.subr.mxu0 0.0
    %7591 = vmatpush1.msra.mxu0 %v7563
    %7592 = vmatprep.subr.mxu0 0.0
    %7593 = vmatpush1.msra.mxu0 %v7564
    %7594 = vmatprep.subr.mxu0 0.0
    %7595 = vmatpush1.msra.mxu0 %v7565
    %7596 = vmatprep.subr.mxu0 0.0
    %7597 = vmatpush1.msra.mxu0 %v7566
    %7598 = vmatprep.subr.mxu0 0.0
    %7599 = vmatpush1.msra.mxu0 %v7567
    %7600 = vmatprep.subr.mxu0 0.0
    %7601 = vmatpush1.msra.mxu0 0.0
    %7602 = vmatprep.subr.mxu0 0.0
    %7603 = vmatpush1.msra.mxu0 0.0
    %7604 = vmatprep.subr.mxu0 0.0
    %7605 = vmatpush1.msra.mxu0 0.0
    %7606 = vmatprep.subr.mxu0 0.0
    %7607 = vmatpush1.msra.mxu0 0.0
    %7608 = vmatprep.subr.mxu0 0.0
    %7609 = vmatpush1.msra.mxu0 0.0
    %7610 = vmatprep.subr.mxu0 0.0
    %7611 = vmatpush1.msra.mxu0 0.0
    %7612 = vmatprep.subr.mxu0 0.0
    %7613 = vmatpush1.msra.mxu0 0.0
    %7614 = vmatprep.subr.mxu0 0.0
    %7615 = vmatpush1.msra.mxu0 0.0
    %7616 = vmatprep.subr.mxu0 0.0
    %7617 = vmatpush1.msra.mxu0 0.0
    %7618 = vmatprep.subr.mxu0 0.0
    %7619 = vmatpush1.msra.mxu0 0.0
    %7620 = vmatprep.subr.mxu0 0.0
    %7621 = vmatpush1.msra.mxu0 0.0
    %7622 = vmatprep.subr.mxu0 0.0
    %7623 = vmatpush1.msra.mxu0 0.0
    %7624 = vmatprep.subr.mxu0 0.0
    %7625 = vmatpush1.msra.mxu0 0.0
    %7626 = vmatprep.subr.mxu0 0.0
    %7627 = vmatpush1.msra.mxu0 0.0
    %7628 = vmatprep.subr.mxu0 0.0
    %7629 = vmatpush1.msra.mxu0 0.0
    %7630 = vmatprep.subr.mxu0 0.0
    %7631 = vmatpush1.msra.mxu0 0.0
    %7632 = vmatprep.mubr.f32.mxu0 0.0
    %7633 = vmatmul.mubr.f32.gmra.mrb[0].mxu0 %v7547
    %v7634 = vpop.f32.mrb[0].mxu0
    %v7635 = vadd.f32 0.0, %v7634
    %v7636 = vpop.f32.mrb[0].mxu0
    %7637 = vdwg.mxu0
    %v7639 = vsel %vm2386, %v6485, 0
    %7641 = vmatprep.subr.mxu0 0.0
    %7642 = vmatpush1.msra.mxu0 %v7548
    %7643 = vmatprep.subr.mxu0 0.0
    %7644 = vmatpush1.msra.mxu0 %v7549
    %7645 = vmatprep.subr.mxu0 0.0
    %7646 = vmatpush1.msra.mxu0 %v7550
    %7647 = vmatprep.subr.mxu0 0.0
    %7648 = vmatpush1.msra.mxu0 %v7551
    %7649 = vmatprep.subr.mxu0 0.0
    %7650 = vmatpush1.msra.mxu0 0.0
    %7651 = vmatprep.subr.mxu0 0.0
    %7652 = vmatpush1.msra.mxu0 0.0
    %7653 = vmatprep.subr.mxu0 0.0
    %7654 = vmatpush1.msra.mxu0 0.0
    %7655 = vmatprep.subr.mxu0 0.0
    %7656 = vmatpush1.msra.mxu0 0.0
    %7657 = vmatprep.subr.mxu0 0.0
    %7658 = vmatpush1.msra.mxu0 0.0
    %7659 = vmatprep.subr.mxu0 0.0
    %7660 = vmatpush1.msra.mxu0 0.0
    %7661 = vmatprep.subr.mxu0 0.0
    %7662 = vmatpush1.msra.mxu0 0.0
    %7663 = vmatprep.subr.mxu0 0.0
    %7664 = vmatpush1.msra.mxu0 0.0
    %7665 = vmatprep.subr.mxu0 0.0
    %7666 = vmatpush1.msra.mxu0 0.0
    %7667 = vmatprep.subr.mxu0 0.0
    %7668 = vmatpush1.msra.mxu0 0.0
    %7669 = vmatprep.subr.mxu0 0.0
    %7670 = vmatpush1.msra.mxu0 0.0
    %7671 = vmatprep.subr.mxu0 0.0
    %7672 = vmatpush1.msra.mxu0 0.0
    %7673 = vmatprep.subr.mxu0 0.0
    %7674 = vmatpush1.msra.mxu0 0.0
    %7675 = vmatprep.subr.mxu0 0.0
    %7676 = vmatpush1.msra.mxu0 0.0
    %7677 = vmatprep.subr.mxu0 0.0
    %7678 = vmatpush1.msra.mxu0 0.0
    %7679 = vmatprep.subr.mxu0 0.0
    %7680 = vmatpush1.msra.mxu0 0.0
    %7681 = vmatprep.subr.mxu0 0.0
    %7682 = vmatpush1.msra.mxu0 0.0
    %7683 = vmatprep.subr.mxu0 0.0
    %7684 = vmatpush1.msra.mxu0 0.0
    %7685 = vmatprep.subr.mxu0 0.0
    %7686 = vmatpush1.msra.mxu0 0.0
    %7687 = vmatprep.subr.mxu0 0.0
    %7688 = vmatpush1.msra.mxu0 0.0
    %7689 = vmatprep.subr.mxu0 0.0
    %7690 = vmatpush1.msra.mxu0 0.0
    %7691 = vmatprep.subr.mxu0 0.0
    %7692 = vmatpush1.msra.mxu0 0.0
    %7693 = vmatprep.subr.mxu0 0.0
    %7694 = vmatpush1.msra.mxu0 0.0
    %7695 = vmatprep.subr.mxu0 0.0
    %7696 = vmatpush1.msra.mxu0 0.0
    %7697 = vmatprep.subr.mxu0 0.0
    %7698 = vmatpush1.msra.mxu0 0.0
    %7699 = vmatprep.subr.mxu0 0.0
    %7700 = vmatpush1.msra.mxu0 0.0
    %7701 = vmatprep.subr.mxu0 0.0
    %7702 = vmatpush1.msra.mxu0 0.0
    %7703 = vmatprep.subr.mxu0 0.0
    %7704 = vmatpush1.msra.mxu0 0.0
    %7705 = vmatprep.mubr.f32.mxu0 0.0
    %7706 = vmatmul.mubr.f32.gmra.mrb[0].mxu0 %v7639
    %v7707 = vpop.f32.mrb[0].mxu0
    %v7708 = vadd.f32 %v7635, %v7707
    %v7709 = vpop.f32.mrb[0].mxu0
    %7710 = vdwg.mxu0
    %v7711 = vld [vmem:[%s73] sm:$0x1]
    %v7713 = vlaneseq
    %v7714 = vshrl.u32 %v7713, 7
    %v7715 = vsub.s32 0, %v7714
    %v7716 = vrot.slane %v7711, %v7715
    %v7718 = vadd.f32 %v7708, %v7716
    %v7719 = vmax.f32 %v7718, 0.0
    %v7720 = vld [vmem:[#allocation39] sm:$0xff]
    %v7721 = vld [vmem:[#allocation39 + $0x8] sm:$0xff]
    %v7722 = vld [vmem:[#allocation39 + $0x10] sm:$0xff]
    %v7723 = vld [vmem:[#allocation39 + $0x18] sm:$0xff]
    %v7724 = vld [vmem:[#allocation39 + $0x20] sm:$0xff]
    %v7725 = vld [vmem:[#allocation39 + $0x28] sm:$0xff]
    %v7726 = vld [vmem:[#allocation39 + $0x30] sm:$0xff]
    %v7727 = vld [vmem:[#allocation39 + $0x38] sm:$0xff]
    %v7728 = vld [vmem:[#allocation39 + $0x40] sm:$0xff]
    %v7729 = vld [vmem:[#allocation39 + $0x48] sm:$0xff]
    %v7730 = vld [vmem:[#allocation39 + $0x50] sm:$0x3f]
    %v7731 = vld [vmem:[%s77] sm:$0x1]
    %v7733 = vlaneseq
    %v7734 = vshrl.u32 %v7733, 7
    %v7735 = vsub.s32 0, %v7734
    %v7736 = vrot.slane %v7731, %v7735
    %vm7738 = vcmask 703488
    %v7740 = vsel %vm7738, %v7719, 0
    %vm7742 = vcmask 1045504
    %v7744 = vsel %vm7742, %v7730, 0
    %7746 = vmatprep.subr.mxu0 0.0
    %7747 = vmatpush1.msra.mxu0 %v7720
    %7748 = vmatprep.subr.mxu0 0.0
    %7749 = vmatpush1.msra.mxu0 %v7721
    %7750 = vmatprep.subr.mxu0 0.0
    %7751 = vmatpush1.msra.mxu0 %v7722
    %7752 = vmatprep.subr.mxu0 0.0
    %7753 = vmatpush1.msra.mxu0 %v7723
    %7754 = vmatprep.subr.mxu0 0.0
    %7755 = vmatpush1.msra.mxu0 %v7724
    %7756 = vmatprep.subr.mxu0 0.0
    %7757 = vmatpush1.msra.mxu0 %v7725
    %7758 = vmatprep.subr.mxu0 0.0
    %7759 = vmatpush1.msra.mxu0 %v7726
    %7760 = vmatprep.subr.mxu0 0.0
    %7761 = vmatpush1.msra.mxu0 %v7727
    %7762 = vmatprep.subr.mxu0 0.0
    %7763 = vmatpush1.msra.mxu0 %v7728
    %7764 = vmatprep.subr.mxu0 0.0
    %7765 = vmatpush1.msra.mxu0 %v7729
    %7766 = vmatprep.subr.mxu0 0.0
    %7767 = vmatpush1.msra.mxu0 %v7744
    %7768 = vmatprep.subr.mxu0 0.0
    %7769 = vmatpush1.msra.mxu0 0.0
    %7770 = vmatprep.subr.mxu0 0.0
    %7771 = vmatpush1.msra.mxu0 0.0
    %7772 = vmatprep.subr.mxu0 0.0
    %7773 = vmatpush1.msra.mxu0 0.0
    %7774 = vmatprep.subr.mxu0 0.0
    %7775 = vmatpush1.msra.mxu0 0.0
    %7776 = vmatprep.subr.mxu0 0.0
    %7777 = vmatpush1.msra.mxu0 0.0
    %7778 = vmatprep.subr.mxu0 0.0
    %7779 = vmatpush1.msra.mxu0 0.0
    %7780 = vmatprep.subr.mxu0 0.0
    %7781 = vmatpush1.msra.mxu0 0.0
    %7782 = vmatprep.subr.mxu0 0.0
    %7783 = vmatpush1.msra.mxu0 0.0
    %7784 = vmatprep.subr.mxu0 0.0
    %7785 = vmatpush1.msra.mxu0 0.0
    %7786 = vmatprep.subr.mxu0 0.0
    %7787 = vmatpush1.msra.mxu0 0.0
    %7788 = vmatprep.subr.mxu0 0.0
    %7789 = vmatpush1.msra.mxu0 0.0
    %7790 = vmatprep.subr.mxu0 0.0
    %7791 = vmatpush1.msra.mxu0 0.0
    %7792 = vmatprep.subr.mxu0 0.0
    %7793 = vmatpush1.msra.mxu0 0.0
    %7794 = vmatprep.subr.mxu0 0.0
    %7795 = vmatpush1.msra.mxu0 0.0
    %7796 = vmatprep.subr.mxu0 0.0
    %7797 = vmatpush1.msra.mxu0 0.0
    %7798 = vmatprep.subr.mxu0 0.0
    %7799 = vmatpush1.msra.mxu0 0.0
    %7800 = vmatprep.subr.mxu0 0.0
    %7801 = vmatpush1.msra.mxu0 0.0
    %7802 = vmatprep.subr.mxu0 0.0
    %7803 = vmatpush1.msra.mxu0 0.0
    %7804 = vmatprep.subr.mxu0 0.0
    %7805 = vmatpush1.msra.mxu0 0.0
    %7806 = vmatprep.subr.mxu0 0.0
    %7807 = vmatpush1.msra.mxu0 0.0
    %7808 = vmatprep.subr.mxu0 0.0
    %7809 = vmatpush1.msra.mxu0 0.0
    %7810 = vmatprep.mubr.f32.mxu0 0.0
    %7811 = vmatmul.mubr.f32.gmra.mrb[0].mxu0 %v7740
    %v7812 = vpop.f32.mrb[0].mxu0
    %v7813 = vadd.f32 %v7736, %v7812
    %v7814 = vpop.f32.mrb[0].mxu0
    %7815 = vdwg.mxu0
    %7816 = vst [vmem:[#allocation40] sm:$0xff] %v7813
    // Predicated region
    $region368: #{tpu_custom_call.1} parent=1 // pred_check
      _
    $region369: #{tpu_custom_call.1} parent=1 // pred_check_branch
      %7818 = sbr.rel (0) target = $region371
    $region370: #{tpu_custom_call.1} parent=1 // pred_region
      %s7820 = ssub.s32 128, 128
      %7821 = vsyncadd [#allocation9], %s7820
      %s7823 = sshll.u32 [#allocation40], 4
      %s7824 = int_to_ptr.vmem [resolvable:$true] %s7823
      %7826 = dma.vmem_to_hbm [thread:$0]  %s7824, 128, %s79, [#allocation9]
    $region371: #{tpu_custom_call.1} parent=1 // pred_fallthru
      _
    // Predicated region
    $region372: #{tpu_custom_call.1} parent=1 // pred_check
      _
    $region373: #{tpu_custom_call.1} parent=1 // pred_check_branch
      %7828 = sbr.rel (0) target = $region375
    $region374: #{tpu_custom_call.1} parent=1 // pred_region
      %7829 = dma.done [#allocation9], 128
    $region375: #{tpu_custom_call.1} parent=1 // pred_fallthru
      _
    %7830 = vsyncpa [#allocation8], 1
    %7831 = vsyncpa [#allocation11], 1
    %7832 = vsyncpa [#allocation14], 1
    %7833 = vsyncpa [#allocation17], 1
    %7834 = vsyncpa [#allocation20], 1
    %7835 = vsyncpa [#allocation23], 1
    %7836 = vsyncpa [#allocation26], 1
    %7837 = vsyncpa [#allocation29], 1
    %7838 = vsyncpa [#allocation32], 1
    %7839 = vsyncpa [#allocation35], 1
    %7840 = vsyncpa [#allocation38], 1
    %7841 = vsyncpa [#allocation9], 1
  %7842 = vsyncmov [#allocation6]
  %s7843 = vpop.sfrf %7842
  %p7844 = scmp.eq.s32.totalorder %s7843, 0
  %p7845 = pneg %p7844
  %7847 = shalt.err (%p7845)
  %s7848 = scalar_lea.sflag [#allocation6], 1
  %7849 = vsyncmov %s7848
  %s7850 = vpop.sfrf %7849
  %p7851 = scmp.eq.s32.totalorder %s7850, 0
  %p7852 = pneg %p7851
  %7854 = shalt.err (%p7852)
  %s7855 = scalar_lea.sflag [#allocation6], 2
  %7856 = vsyncmov %s7855
  %s7857 = vpop.sfrf %7856
  %p7858 = scmp.eq.s32.totalorder %s7857, 0
  %p7859 = pneg %p7858
  %7861 = shalt.err (%p7859)
  %s7862 = scalar_lea.sflag [#allocation6], 3
  %7863 = vsyncmov %s7862
  %s7864 = vpop.sfrf %7863
  %p7865 = scmp.eq.s32.totalorder %s7864, 0
  %p7866 = pneg %p7865
  %7868 = shalt.err (%p7866)

</llo_original>
